<compile_context>
chip_gen: v5e
topology: v5e:2x2
jax: 0.10.0
libtpu: 0.0.40
codegen_flags: <defaults>
</compile_context>

<pallas_src>
import math

import jax
import jax.numpy as jnp
from jax.experimental import pallas as pl
from jax.experimental.pallas import tpu as pltpu


_KH = _KW = 5
_POOL2_M = 22 * 22            # conv2 pooled spatial size per image
_POOL2_PAD = 512              # padded to a multiple of 128 for aligned lane slicing
_VMEM_LIMIT = 32 * 1024 * 1024


# ---------------- lane-tile chooser (multiple-of-128 tiles, >= min_steps grid steps) ----

def _choose_lane_tile(m_total, bytes_per_lane, budget_bytes=8 * 1024 * 1024, min_steps=4):
    cands = [t for t in range(128, m_total + 1, 128) if m_total % t == 0]
    if not cands:
        return m_total                                     # block == full dim always legal
    fits = [t for t in cands if 2 * t * bytes_per_lane <= budget_bytes] or [cands[0]]
    for steps in (min_steps, 2, 1):
        pref = [t for t in fits if m_total // t >= steps]
        if pref:
            return max(pref)
    return max(fits)


# ---------------- kernel A: conv1 (weight-stationary) + bias + ReLU + 2x2 maxpool --------

def _conv_pool_kernel(p_ref, w_ref, b_ref, o_ref):
    # p_ref: (4, K, tm) bf16 pool-corner patches; w_ref: (OC, K) bf16; b_ref: (OC, 1) f32
    w = w_ref[...]

    def corner(c):
        return jnp.dot(w, p_ref[c], preferred_element_type=jnp.float32)   # (OC, tm) f32

    # max over the 4 pool-window corners == MaxPool2d(2,2) of the conv output;
    # relu(max(x)+b) == pool(relu(conv+b)) exactly (monotonicity).
    m = jnp.maximum(jnp.maximum(corner(0), corner(1)),
                    jnp.maximum(corner(2), corner(3)))
    o_ref[...] = jnp.maximum(m + b_ref[...], 0.0).astype(o_ref.dtype)


def conv1_relu_pool(patches, w_mat, b_col):
    """patches: (4, K, M) bf16; w_mat: (OC, K) bf16; b_col: (OC, 1) f32 -> (OC, M) bf16."""
    _, k, m_total = patches.shape
    oc = w_mat.shape[0]
    tm = _choose_lane_tile(m_total, bytes_per_lane=4 * k * 2 + oc * 2)
    return pl.pallas_call(
        _conv_pool_kernel,
        out_shape=jax.ShapeDtypeStruct((oc, m_total), jnp.bfloat16),
        grid=(m_total // tm,),
        in_specs=[pl.BlockSpec((4, k, tm), lambda i: (0, 0, i)),
                  pl.BlockSpec((oc, k), lambda i: (0, 0)),
                  pl.BlockSpec((oc, 1), lambda i: (0, 0))],
        out_specs=pl.BlockSpec((oc, tm), lambda i: (0, i)),
        compiler_params=pltpu.CompilerParams(
            dimension_semantics=("parallel",), vmem_limit_bytes=_VMEM_LIMIT),
    )(patches, w_mat, b_col)


# ---------------- kernel B: conv2 + bias + ReLU + pool + full FC chain, one image/step ---

def _conv2_fc_kernel(p_ref, w2_ref, b2_ref, w1_ref, b1_ref, wf2_ref, bf2_ref,
                     wa_ref, ba_ref, wb_ref, bb_ref, o_ref):
    p = p_ref[0]                                           # (K2, 4*MP) bf16, 4 corners lane-stacked
    mp = p.shape[1] // 4                                   # 512 (484 valid + 28 zero-padded)

    # one MXU stream for all 4 corners
    y = jnp.dot(w2_ref[...], p, preferred_element_type=jnp.float32)    # (16, 4*MP) f32
    m = jnp.maximum(jnp.maximum(y[:, 0 * mp:1 * mp], y[:, 1 * mp:2 * mp]),
                    jnp.maximum(y[:, 2 * mp:3 * mp], y[:, 3 * mp:4 * mp]))  # (16, MP)
    act = jnp.maximum(m + b2_ref[...], 0.0).astype(jnp.bfloat16)       # pooled conv2, (16, 512)

    # fc1: contract over (channel, spatial) as 16 accumulated row-matmuls; the 28 padded
    # lanes hit zero rows of the pre-padded fc1 weight, contributing exactly 0.
    h = b1_ref[...]                                        # (1, 120) f32
    for c in range(act.shape[0]):
        h = h + jnp.dot(act[c:c + 1, :], w1_ref[c], preferred_element_type=jnp.float32)
    h = jnp.maximum(h, 0.0)

    def dense(v, w_ref, b_ref, relu):
        z = jnp.dot(v.astype(jnp.bfloat16), w_ref[...],
                    preferred_element_type=jnp.float32) + b_ref[...]
        return jnp.maximum(z, 0.0) if relu else z

    h = dense(h, wf2_ref, bf2_ref, True)                   # (1, 84)
    h = dense(h, wa_ref, ba_ref, True)                     # (1, 10)
    o_ref[0] = dense(h, wb_ref, bb_ref, False)             # (1, 2) f32


def _resident(arr):
    nd = arr.ndim
    return pl.BlockSpec(arr.shape, lambda i, _nd=nd: (0,) * _nd)


def conv2_fc_chain(patches, kp):
    """patches: (N, K2, 4*_POOL2_PAD) bf16 -> (N, 1, 2) f32 logits."""
    n, k, mlanes = patches.shape
    return pl.pallas_call(
        _conv2_fc_kernel,
        out_shape=jax.ShapeDtypeStruct((n, 1, 2), jnp.float32),
        grid=(n,),
        in_specs=[pl.BlockSpec((1, k, mlanes), lambda i: (i, 0, 0)),
                  _resident(kp["conv2_w"]), _resident(kp["conv2_b"]),
                  _resident(kp["fc1_w"]), _resident(kp["fc1_b"]),
                  _resident(kp["fc2_w"]), _resident(kp["fc2_b"]),
                  _resident(kp["fca_w"]), _resident(kp["fca_b"]),
                  _resident(kp["fcb_w"]), _resident(kp["fcb_b"])],
        out_specs=pl.BlockSpec((1, 1, 2), lambda i: (i, 0, 0)),
        compiler_params=pltpu.CompilerParams(
            dimension_semantics=("parallel",), vmem_limit_bytes=_VMEM_LIMIT),
    )(patches, kp["conv2_w"], kp["conv2_b"], kp["fc1_w"], kp["fc1_b"],
      kp["fc2_w"], kp["fc2_b"], kp["fca_w"], kp["fca_b"], kp["fcb_w"], kp["fcb_b"])


# ---------------- XLA glue: transposed pool-corner im2col (runs on the small activations) -

def _conv1_patches(x_nhwc):
    """x: (N,H,W,C) bf16 -> (4, KH*KW*C, N*OH2*OW2); rows (i,j,ic), cols (n,y2,x2)."""
    n, h, w, c = x_nhwc.shape
    oh2, ow2 = (h - _KH + 1) // 2, (w - _KW + 1) // 2
    corners = []
    for a in range(2):
        for b in range(2):
            pieces = [x_nhwc[:, a + i:a + i + 2 * oh2:2, b + j:b + j + 2 * ow2:2, :]
                      for i in range(_KH) for j in range(_KW)]       # (N,OH2,OW2,C) each
            p = jnp.stack(pieces, axis=0)                            # (25, N, OH2, OW2, C)
            p = jnp.transpose(p, (0, 4, 1, 2, 3))                    # (25, C, N, OH2, OW2)
            corners.append(p.reshape(_KH * _KW * c, n * oh2 * ow2))
    return jnp.stack(corners, axis=0), (n, oh2, ow2)


def _conv2_patches(y1_cnhw):
    """y1: (C1,N,H,W) bf16 -> (N, KH*KW*C1, 4*_POOL2_PAD), 4 corners lane-stacked+padded."""
    c, n, h, w = y1_cnhw.shape
    oh2, ow2 = (h - _KH + 1) // 2, (w - _KW + 1) // 2
    m = oh2 * ow2
    corners = []
    for a in range(2):
        for b in range(2):
            pieces = [y1_cnhw[:, :, a + i:a + i + 2 * oh2:2, b + j:b + j + 2 * ow2:2]
                      for i in range(_KH) for j in range(_KW)]       # (C1,N,OH2,OW2) each
            p = jnp.stack(pieces, axis=0).reshape(_KH * _KW * c, n, m)   # rows (i,j,ic)
            corners.append(jnp.pad(p, ((0, 0), (0, 0), (0, _POOL2_PAD - m))))
    pk = jnp.stack(corners, axis=2)                                  # (K2, N, 4, PAD)
    return jnp.transpose(pk, (1, 0, 2, 3)).reshape(n, _KH * _KW * c, 4 * _POOL2_PAD)


# ---------------- parameter preparation (one-time, outside the forward) -------------------

def prepare_params(p):
    def conv_w(w):        # torch OIHW -> (OC, kh*kw*IC), K row order (i, j, ic)
        oc = w.shape[0]
        return jnp.transpose(w, (0, 2, 3, 1)).reshape(oc, -1).astype(jnp.bfloat16)

    def col(b):
        return b.reshape(-1, 1).astype(jnp.float32)

    def row(b):
        return b.reshape(1, -1).astype(jnp.float32)

    # fc1: torch flatten order is (c, y, x); kernel B's pooled conv2 activation is laid out
    # (c, y*22+x) with the lane dim zero-padded 484 -> 512, so zero-pad fc1's rows to match.
    fc1 = jnp.transpose(p["fc1_w"].reshape(120, 16, _POOL2_M), (1, 2, 0))    # (16, 484, 120)
    fc1 = jnp.pad(fc1, ((0, 0), (0, _POOL2_PAD - _POOL2_M), (0, 0))).astype(jnp.bfloat16)

    return {
        "conv1_w": conv_w(p["conv1_w"]), "conv1_b": col(p["conv1_b"]),
        "conv2_w": conv_w(p["conv2_w"]), "conv2_b": col(p["conv2_b"]),
        "fc1_w": fc1, "fc1_b": row(p["fc1_b"]),
        "fc2_w": p["fc2_w"].T.astype(jnp.bfloat16), "fc2_b": row(p["fc2_b"]),
        "fca_w": p["fca_w"].T.astype(jnp.bfloat16), "fca_b": row(p["fca_b"]),
        "fcb_w": p["fcb_w"].T.astype(jnp.bfloat16), "fcb_b": row(p["fcb_b"]),
    }


# ---------------- CivilNet forward: 2 pallas_calls ---------------------------------------

def civilnet_forward(x_nchw, kp):
    n = x_nchw.shape[0]
    x = jnp.transpose(x_nchw, (0, 2, 3, 1)).astype(jnp.bfloat16)      # NHWC bf16
    p1, (_, oh1, ow1) = _conv1_patches(x)                             # (4, 75, N*48*48)
    y1 = conv1_relu_pool(p1, kp["conv1_w"], kp["conv1_b"])            # (6, N*48*48) bf16
    p2 = _conv2_patches(y1.reshape(6, n, oh1, ow1))                   # (N, 150, 2048) bf16
    return conv2_fc_chain(p2, kp).reshape(n, 2)                       # (N, 2) f32


# ---------------- plain-XLA reference mirroring the kernels' bf16 casting points ----------

def reference_forward(x_nchw, params):
    def conv(x, w, b):
        y = jax.lax.conv_general_dilated(
            x.astype(jnp.bfloat16), w.astype(jnp.bfloat16),
            window_strides=(1, 1), padding="VALID",
            dimension_numbers=("NCHW", "OIHW", "NCHW"),
            preferred_element_type=jnp.float32)
        return y + b[None, :, None, None]

    def pool(x):
        return jax.lax.reduce_window(x, -jnp.inf, jax.lax.max,
                                     (1, 1, 2, 2), (1, 1, 2, 2), "VALID")

    def dense(h, w, b):
        return jnp.dot(h.astype(jnp.bfloat16), w.T.astype(jnp.bfloat16),
                       preferred_element_type=jnp.float32) + b

    y = pool(jax.nn.relu(conv(x_nchw, params["conv1_w"], params["conv1_b"]))).astype(jnp.bfloat16)
    y = pool(jax.nn.relu(conv(y, params["conv2_w"], params["conv2_b"]))).astype(jnp.bfloat16)
    f = y.reshape(y.shape[0], -1)                                     # NCHW flatten, matches torch
    h = jax.nn.relu(dense(f, params["fc1_w"], params["fc1_b"]))
    h = jax.nn.relu(dense(h, params["fc2_w"], params["fc2_b"]))
    h = jax.nn.relu(dense(h, params["fca_w"], params["fca_b"]))
    return dense(h, params["fcb_w"], params["fcb_b"])


# ---------------- deterministic synthetic parameters (torch layout) ------------------------

def init_params(key):
    ks = jax.random.split(key, 12)

    def init(k, shape, fan_in):
        return jax.random.normal(k, shape, jnp.float32) / math.sqrt(fan_in)

    return {
        "conv1_w": init(ks[0], (6, 3, 5, 5), 3 * 5 * 5),
        "conv1_b": init(ks[1], (6,), 3 * 5 * 5),
        "conv2_w": init(ks[2], (16, 6, 5, 5), 6 * 5 * 5),
        "conv2_b": init(ks[3], (16,), 6 * 5 * 5),
        "fc1_w": init(ks[4], (120, 16 * 22 * 22), 16 * 22 * 22),
        "fc1_b": init(ks[5], (120,), 16 * 22 * 22),
        "fc2_w": init(ks[6], (84, 120), 120),
        "fc2_b": init(ks[7], (84,), 120),
        "fca_w": init(ks[8], (10, 84), 84),
        "fca_b": init(ks[9], (10,), 84),
        "fcb_w": init(ks[10], (2, 10), 10),
        "fcb_b": init(ks[11], (2,), 10),
    }


if __name__ == "__main__":
    key = jax.random.PRNGKey(0)
    k_x, k_p = jax.random.split(key)
    # fc1 = Linear(16*22*22, 120) forces 100x100 spatial input; batch kept small (2).
    x = jax.random.normal(k_x, (2, 3, 100, 100), jnp.float32)
    raw_params = init_params(k_p)
    params = prepare_params(raw_params)       # one-time weight permute/pad/cast (not per-forward)

    out = jax.block_until_ready(jax.jit(civilnet_forward)(x, params))
    assert out.shape == (2, 2), out.shape

    # Reference mirrors the kernel's bf16-operand / f32-accumulate casting points, so the
    # only expected deltas are accumulation-order effects; 1e-2 is a comfortable budget.
    ref = jax.block_until_ready(jax.jit(reference_forward)(x, raw_params))
    assert jnp.allclose(out, ref, rtol=1e-2, atol=1e-2), (out, ref)

    print("KERNEL_OK")
</pallas_src>

<mosaic_0001>
module attributes {stable_mosaic.version = 11 : i64} {
  func.func @_conv_pool_kernel(%arg0: i32, %arg1: memref<4x75x1152xbf16, #tpu.memory_space<vmem>>, %arg2: memref<6x75xbf16, #tpu.memory_space<vmem>>, %arg3: memref<6x1xf32, #tpu.memory_space<vmem>>, %arg4: memref<6x1152xbf16, #tpu.memory_space<vmem>>) attributes {dimension_semantics = [#tpu.dimension_semantics<parallel>], iteration_bounds = array<i64: 4>, scalar_prefetch = 0 : i64, scratch_operands = 0 : i64, tpu.core_type = #tpu.core_type<tc>, window_params = [{transform_indices = @transform_0, window_bounds = array<i64: 4, 75, 1152>}, {pipeline_mode = #tpu.pipeline_mode<synchronous>, transform_indices = @transform_1, window_bounds = array<i64: 6, 75>}, {pipeline_mode = #tpu.pipeline_mode<synchronous>, transform_indices = @transform_2, window_bounds = array<i64: 6, 1>}, {transform_indices = @transform_3, window_bounds = array<i64: 6, 1152>}]} {
    %c0 = arith.constant 0 : index
    %c0_0 = arith.constant 0 : index
    %0 = vector.load %arg2[%c0, %c0_0] : memref<6x75xbf16, #tpu.memory_space<vmem>>, vector<6x75xbf16>
    %c0_1 = arith.constant 0 : index
    %c0_2 = arith.constant 0 : index
    %c0_3 = arith.constant 0 : index
    %1 = vector.load %arg1[%c0_1, %c0_2, %c0_3] : memref<4x75x1152xbf16, #tpu.memory_space<vmem>>, vector<1x75x1152xbf16>
    %2 = vector.shape_cast %1 : vector<1x75x1152xbf16> to vector<75x1152xbf16>
    %cst = arith.constant dense<0.000000e+00> : vector<6x1152xf32>
    %3 = tpu.matmul %0, %2, %cst {dimension_numbers = #tpu.dot_dimension_numbers<[1], [0], [0], [1], [0, 0, 1, 1], [], []>} : vector<6x75xbf16>, vector<75x1152xbf16>, vector<6x1152xf32> -> vector<6x1152xf32>
    %c1 = arith.constant 1 : index
    %c0_4 = arith.constant 0 : index
    %c0_5 = arith.constant 0 : index
    %4 = vector.load %arg1[%c1, %c0_4, %c0_5] : memref<4x75x1152xbf16, #tpu.memory_space<vmem>>, vector<1x75x1152xbf16>
    %5 = vector.shape_cast %4 : vector<1x75x1152xbf16> to vector<75x1152xbf16>
    %cst_6 = arith.constant dense<0.000000e+00> : vector<6x1152xf32>
    %6 = tpu.matmul %0, %5, %cst_6 {dimension_numbers = #tpu.dot_dimension_numbers<[1], [0], [0], [1], [0, 0, 1, 1], [], []>} : vector<6x75xbf16>, vector<75x1152xbf16>, vector<6x1152xf32> -> vector<6x1152xf32>
    %7 = arith.maximumf %3, %6 : vector<6x1152xf32>
    %c2 = arith.constant 2 : index
    %c0_7 = arith.constant 0 : index
    %c0_8 = arith.constant 0 : index
    %8 = vector.load %arg1[%c2, %c0_7, %c0_8] : memref<4x75x1152xbf16, #tpu.memory_space<vmem>>, vector<1x75x1152xbf16>
    %9 = vector.shape_cast %8 : vector<1x75x1152xbf16> to vector<75x1152xbf16>
    %cst_9 = arith.constant dense<0.000000e+00> : vector<6x1152xf32>
    %10 = tpu.matmul %0, %9, %cst_9 {dimension_numbers = #tpu.dot_dimension_numbers<[1], [0], [0], [1], [0, 0, 1, 1], [], []>} : vector<6x75xbf16>, vector<75x1152xbf16>, vector<6x1152xf32> -> vector<6x1152xf32>
    %c3 = arith.constant 3 : index
    %c0_10 = arith.constant 0 : index
    %c0_11 = arith.constant 0 : index
    %11 = vector.load %arg1[%c3, %c0_10, %c0_11] : memref<4x75x1152xbf16, #tpu.memory_space<vmem>>, vector<1x75x1152xbf16>
    %12 = vector.shape_cast %11 : vector<1x75x1152xbf16> to vector<75x1152xbf16>
    %cst_12 = arith.constant dense<0.000000e+00> : vector<6x1152xf32>
    %13 = tpu.matmul %0, %12, %cst_12 {dimension_numbers = #tpu.dot_dimension_numbers<[1], [0], [0], [1], [0, 0, 1, 1], [], []>} : vector<6x75xbf16>, vector<75x1152xbf16>, vector<6x1152xf32> -> vector<6x1152xf32>
    %14 = arith.maximumf %10, %13 : vector<6x1152xf32>
    %15 = arith.maximumf %7, %14 : vector<6x1152xf32>
    %c0_13 = arith.constant 0 : index
    %c0_14 = arith.constant 0 : index
    %16 = vector.load %arg3[%c0_13, %c0_14] : memref<6x1xf32, #tpu.memory_space<vmem>>, vector<6x1xf32>
    %17 = vector.broadcast %16 : vector<6x1xf32> to vector<6x1152xf32>
    %18 = arith.addf %15, %17 : vector<6x1152xf32>
    %cst_15 = arith.constant 0.000000e+00 : f32
    %19 = vector.broadcast %cst_15 : f32 to vector<6x1152xf32>
    %20 = arith.maximumf %18, %19 : vector<6x1152xf32>
    %21 = arith.truncf %20 : vector<6x1152xf32> to vector<6x1152xbf16>
    %c0_16 = arith.constant 0 : index
    %c0_17 = arith.constant 0 : index
    %22 = vector.load %arg4[%c0_16, %c0_17] : memref<6x1152xbf16, #tpu.memory_space<vmem>>, vector<6x1152xbf16>
    tpu.vector_store %arg4[%c0_16, %c0_17], %21 {strides = array<i32>} : memref<6x1152xbf16, #tpu.memory_space<vmem>>, vector<6x1152xbf16>,
    return
  }
  func.func @transform_0(%arg0: i32) -> (i32, i32, i32) {
    %c0_i32 = arith.constant 0 : i32
    %c0_i32_0 = arith.constant 0 : i32
    %c0_i32_1 = arith.constant 0 : i32
    return %c0_i32, %c0_i32_0, %arg0 : i32, i32, i32
  }
  func.func @transform_1(%arg0: i32) -> (i32, i32) {
    %c0_i32 = arith.constant 0 : i32
    %c0_i32_0 = arith.constant 0 : i32
    %c0_i32_1 = arith.constant 0 : i32
    return %c0_i32, %c0_i32_0 : i32, i32
  }
  func.func @transform_2(%arg0: i32) -> (i32, i32) {
    %c0_i32 = arith.constant 0 : i32
    %c0_i32_0 = arith.constant 0 : i32
    %c0_i32_1 = arith.constant 0 : i32
    return %c0_i32, %c0_i32_0 : i32, i32
  }
  func.func @transform_3(%arg0: i32) -> (i32, i32) {
    %c0_i32 = arith.constant 0 : i32
    %c0_i32_0 = arith.constant 0 : i32
    return %c0_i32, %arg0 : i32, i32
  }
}

module attributes {stable_mosaic.version = 11 : i64} {
  func.func @_conv2_fc_kernel(%arg0: i32, %arg1: memref<1x150x2048xbf16, #tpu.memory_space<vmem>>, %arg2: memref<16x150xbf16, #tpu.memory_space<vmem>>, %arg3: memref<16x1xf32, #tpu.memory_space<vmem>>, %arg4: memref<16x512x120xbf16, #tpu.memory_space<vmem>>, %arg5: memref<1x120xf32, #tpu.memory_space<vmem>>, %arg6: memref<120x84xbf16, #tpu.memory_space<vmem>>, %arg7: memref<1x84xf32, #tpu.memory_space<vmem>>, %arg8: memref<84x10xbf16, #tpu.memory_space<vmem>>, %arg9: memref<1x10xf32, #tpu.memory_space<vmem>>, %arg10: memref<10x2xbf16, #tpu.memory_space<vmem>>, %arg11: memref<1x2xf32, #tpu.memory_space<vmem>>, %arg12: memref<1x1x2xf32, #tpu.memory_space<vmem>>) attributes {dimension_semantics = [#tpu.dimension_semantics<parallel>], iteration_bounds = array<i64: 2>, scalar_prefetch = 0 : i64, scratch_operands = 0 : i64, tpu.core_type = #tpu.core_type<tc>, window_params = [{transform_indices = @transform_0, window_bounds = array<i64: 1, 150, 2048>}, {pipeline_mode = #tpu.pipeline_mode<synchronous>, transform_indices = @transform_1, window_bounds = array<i64: 16, 150>}, {pipeline_mode = #tpu.pipeline_mode<synchronous>, transform_indices = @transform_2, window_bounds = array<i64: 16, 1>}, {pipeline_mode = #tpu.pipeline_mode<synchronous>, transform_indices = @transform_3, window_bounds = array<i64: 16, 512, 120>}, {pipeline_mode = #tpu.pipeline_mode<synchronous>, transform_indices = @transform_4, window_bounds = array<i64: 1, 120>}, {pipeline_mode = #tpu.pipeline_mode<synchronous>, transform_indices = @transform_5, window_bounds = array<i64: 120, 84>}, {pipeline_mode = #tpu.pipeline_mode<synchronous>, transform_indices = @transform_6, window_bounds = array<i64: 1, 84>}, {pipeline_mode = #tpu.pipeline_mode<synchronous>, transform_indices = @transform_7, window_bounds = array<i64: 84, 10>}, {pipeline_mode = #tpu.pipeline_mode<synchronous>, transform_indices = @transform_8, window_bounds = array<i64: 1, 10>}, {pipeline_mode = #tpu.pipeline_mode<synchronous>, transform_indices = @transform_9, window_bounds = array<i64: 10, 2>}, {pipeline_mode = #tpu.pipeline_mode<synchronous>, transform_indices = @transform_10, window_bounds = array<i64: 1, 2>}, {transform_indices = @transform_11, window_bounds = array<i64: 1, 1, 2>}]} {
    %c0 = arith.constant 0 : index
    %c0_0 = arith.constant 0 : index
    %c0_1 = arith.constant 0 : index
    %0 = vector.load %arg1[%c0, %c0_0, %c0_1] : memref<1x150x2048xbf16, #tpu.memory_space<vmem>>, vector<1x150x2048xbf16>
    %1 = vector.shape_cast %0 : vector<1x150x2048xbf16> to vector<150x2048xbf16>
    %c0_2 = arith.constant 0 : index
    %c0_3 = arith.constant 0 : index
    %2 = vector.load %arg2[%c0_2, %c0_3] : memref<16x150xbf16, #tpu.memory_space<vmem>>, vector<16x150xbf16>
    %cst = arith.constant dense<0.000000e+00> : vector<16x2048xf32>
    %3 = tpu.matmul %2, %1, %cst {dimension_numbers = #tpu.dot_dimension_numbers<[1], [0], [0], [1], [0, 0, 1, 1], [], []>} : vector<16x150xbf16>, vector<150x2048xbf16>, vector<16x2048xf32> -> vector<16x2048xf32>
    %4 = vector.extract_strided_slice %3 {offsets = [0, 0], sizes = [16, 512], strides = [1, 1]} : vector<16x2048xf32> to vector<16x512xf32>
    %5 = vector.extract_strided_slice %3 {offsets = [0, 512], sizes = [16, 512], strides = [1, 1]} : vector<16x2048xf32> to vector<16x512xf32>
    %6 = arith.maximumf %4, %5 : vector<16x512xf32>
    %7 = vector.extract_strided_slice %3 {offsets = [0, 1024], sizes = [16, 512], strides = [1, 1]} : vector<16x2048xf32> to vector<16x512xf32>
    %8 = vector.extract_strided_slice %3 {offsets = [0, 1536], sizes = [16, 512], strides = [1, 1]} : vector<16x2048xf32> to vector<16x512xf32>
    %9 = arith.maximumf %7, %8 : vector<16x512xf32>
    %10 = arith.maximumf %6, %9 : vector<16x512xf32>
    %c0_4 = arith.constant 0 : index
    %c0_5 = arith.constant 0 : index
    %11 = vector.load %arg3[%c0_4, %c0_5] : memref<16x1xf32, #tpu.memory_space<vmem>>, vector<16x1xf32>
    %12 = vector.broadcast %11 : vector<16x1xf32> to vector<16x512xf32>
    %13 = arith.addf %10, %12 : vector<16x512xf32>
    %cst_6 = arith.constant 0.000000e+00 : f32
    %14 = vector.broadcast %cst_6 : f32 to vector<16x512xf32>
    %15 = arith.maximumf %13, %14 : vector<16x512xf32>
    %16 = arith.truncf %15 : vector<16x512xf32> to vector<16x512xbf16>
    %c0_7 = arith.constant 0 : index
    %c0_8 = arith.constant 0 : index
    %17 = vector.load %arg5[%c0_7, %c0_8] : memref<1x120xf32, #tpu.memory_space<vmem>>, vector<1x120xf32>
    %18 = vector.extract_strided_slice %16 {offsets = [0, 0], sizes = [1, 512], strides = [1, 1]} : vector<16x512xbf16> to vector<1x512xbf16>
    %c0_9 = arith.constant 0 : index
    %c0_10 = arith.constant 0 : index
    %c0_11 = arith.constant 0 : index
    %19 = vector.load %arg4[%c0_9, %c0_10, %c0_11] : memref<16x512x120xbf16, #tpu.memory_space<vmem>>, vector<1x512x120xbf16>
    %20 = vector.shape_cast %19 : vector<1x512x120xbf16> to vector<512x120xbf16>
    %cst_12 = arith.constant dense<0.000000e+00> : vector<1x120xf32>
    %21 = tpu.matmul %18, %20, %cst_12 {dimension_numbers = #tpu.dot_dimension_numbers<[1], [0], [0], [1], [0, 0, 1, 1], [], []>} : vector<1x512xbf16>, vector<512x120xbf16>, vector<1x120xf32> -> vector<1x120xf32>
    %22 = arith.addf %17, %21 : vector<1x120xf32>
    %23 = vector.extract_strided_slice %16 {offsets = [1, 0], sizes = [1, 512], strides = [1, 1]} : vector<16x512xbf16> to vector<1x512xbf16>
    %c1 = arith.constant 1 : index
    %c0_13 = arith.constant 0 : index
    %c0_14 = arith.constant 0 : index
    %24 = vector.load %arg4[%c1, %c0_13, %c0_14] : memref<16x512x120xbf16, #tpu.memory_space<vmem>>, vector<1x512x120xbf16>
    %25 = vector.shape_cast %24 : vector<1x512x120xbf16> to vector<512x120xbf16>
    %cst_15 = arith.constant dense<0.000000e+00> : vector<1x120xf32>
    %26 = tpu.matmul %23, %25, %cst_15 {dimension_numbers = #tpu.dot_dimension_numbers<[1], [0], [0], [1], [0, 0, 1, 1], [], []>} : vector<1x512xbf16>, vector<512x120xbf16>, vector<1x120xf32> -> vector<1x120xf32>
    %27 = arith.addf %22, %26 : vector<1x120xf32>
    %28 = vector.extract_strided_slice %16 {offsets = [2, 0], sizes = [1, 512], strides = [1, 1]} : vector<16x512xbf16> to vector<1x512xbf16>
    %c2 = arith.constant 2 : index
    %c0_16 = arith.constant 0 : index
    %c0_17 = arith.constant 0 : index
    %29 = vector.load %arg4[%c2, %c0_16, %c0_17] : memref<16x512x120xbf16, #tpu.memory_space<vmem>>, vector<1x512x120xbf16>
    %30 = vector.shape_cast %29 : vector<1x512x120xbf16> to vector<512x120xbf16>
    %cst_18 = arith.constant dense<0.000000e+00> : vector<1x120xf32>
    %31 = tpu.matmul %28, %30, %cst_18 {dimension_numbers = #tpu.dot_dimension_numbers<[1], [0], [0], [1], [0, 0, 1, 1], [], []>} : vector<1x512xbf16>, vector<512x120xbf16>, vector<1x120xf32> -> vector<1x120xf32>
    %32 = arith.addf %27, %31 : vector<1x120xf32>
    %33 = vector.extract_strided_slice %16 {offsets = [3, 0], sizes = [1, 512], strides = [1, 1]} : vector<16x512xbf16> to vector<1x512xbf16>
    %c3 = arith.constant 3 : index
    %c0_19 = arith.constant 0 : index
    %c0_20 = arith.constant 0 : index
    %34 = vector.load %arg4[%c3, %c0_19, %c0_20] : memref<16x512x120xbf16, #tpu.memory_space<vmem>>, vector<1x512x120xbf16>
    %35 = vector.shape_cast %34 : vector<1x512x120xbf16> to vector<512x120xbf16>
    %cst_21 = arith.constant dense<0.000000e+00> : vector<1x120xf32>
    %36 = tpu.matmul %33, %35, %cst_21 {dimension_numbers = #tpu.dot_dimension_numbers<[1], [0], [0], [1], [0, 0, 1, 1], [], []>} : vector<1x512xbf16>, vector<512x120xbf16>, vector<1x120xf32> -> vector<1x120xf32>
    %37 = arith.addf %32, %36 : vector<1x120xf32>
    %38 = vector.extract_strided_slice %16 {offsets = [4, 0], sizes = [1, 512], strides = [1, 1]} : vector<16x512xbf16> to vector<1x512xbf16>
    %c4 = arith.constant 4 : index
    %c0_22 = arith.constant 0 : index
    %c0_23 = arith.constant 0 : index
    %39 = vector.load %arg4[%c4, %c0_22, %c0_23] : memref<16x512x120xbf16, #tpu.memory_space<vmem>>, vector<1x512x120xbf16>
    %40 = vector.shape_cast %39 : vector<1x512x120xbf16> to vector<512x120xbf16>
    %cst_24 = arith.constant dense<0.000000e+00> : vector<1x120xf32>
    %41 = tpu.matmul %38, %40, %cst_24 {dimension_numbers = #tpu.dot_dimension_numbers<[1], [0], [0], [1], [0, 0, 1, 1], [], []>} : vector<1x512xbf16>, vector<512x120xbf16>, vector<1x120xf32> -> vector<1x120xf32>
    %42 = arith.addf %37, %41 : vector<1x120xf32>
    %43 = vector.extract_strided_slice %16 {offsets = [5, 0], sizes = [1, 512], strides = [1, 1]} : vector<16x512xbf16> to vector<1x512xbf16>
    %c5 = arith.constant 5 : index
    %c0_25 = arith.constant 0 : index
    %c0_26 = arith.constant 0 : index
    %44 = vector.load %arg4[%c5, %c0_25, %c0_26] : memref<16x512x120xbf16, #tpu.memory_space<vmem>>, vector<1x512x120xbf16>
    %45 = vector.shape_cast %44 : vector<1x512x120xbf16> to vector<512x120xbf16>
    %cst_27 = arith.constant dense<0.000000e+00> : vector<1x120xf32>
    %46 = tpu.matmul %43, %45, %cst_27 {dimension_numbers = #tpu.dot_dimension_numbers<[1], [0], [0], [1], [0, 0, 1, 1], [], []>} : vector<1x512xbf16>, vector<512x120xbf16>, vector<1x120xf32> -> vector<1x120xf32>
    %47 = arith.addf %42, %46 : vector<1x120xf32>
    %48 = vector.extract_strided_slice %16 {offsets = [6, 0], sizes = [1, 512], strides = [1, 1]} : vector<16x512xbf16> to vector<1x512xbf16>
    %c6 = arith.constant 6 : index
    %c0_28 = arith.constant 0 : index
    %c0_29 = arith.constant 0 : index
    %49 = vector.load %arg4[%c6, %c0_28, %c0_29] : memref<16x512x120xbf16, #tpu.memory_space<vmem>>, vector<1x512x120xbf16>
    %50 = vector.shape_cast %49 : vector<1x512x120xbf16> to vector<512x120xbf16>
    %cst_30 = arith.constant dense<0.000000e+00> : vector<1x120xf32>
    %51 = tpu.matmul %48, %50, %cst_30 {dimension_numbers = #tpu.dot_dimension_numbers<[1], [0], [0], [1], [0, 0, 1, 1], [], []>} : vector<1x512xbf16>, vector<512x120xbf16>, vector<1x120xf32> -> vector<1x120xf32>
    %52 = arith.addf %47, %51 : vector<1x120xf32>
    %53 = vector.extract_strided_slice %16 {offsets = [7, 0], sizes = [1, 512], strides = [1, 1]} : vector<16x512xbf16> to vector<1x512xbf16>
    %c7 = arith.constant 7 : index
    %c0_31 = arith.constant 0 : index
    %c0_32 = arith.constant 0 : index
    %54 = vector.load %arg4[%c7, %c0_31, %c0_32] : memref<16x512x120xbf16, #tpu.memory_space<vmem>>, vector<1x512x120xbf16>
    %55 = vector.shape_cast %54 : vector<1x512x120xbf16> to vector<512x120xbf16>
    %cst_33 = arith.constant dense<0.000000e+00> : vector<1x120xf32>
    %56 = tpu.matmul %53, %55, %cst_33 {dimension_numbers = #tpu.dot_dimension_numbers<[1], [0], [0], [1], [0, 0, 1, 1], [], []>} : vector<1x512xbf16>, vector<512x120xbf16>, vector<1x120xf32> -> vector<1x120xf32>
    %57 = arith.addf %52, %56 : vector<1x120xf32>
    %58 = vector.extract_strided_slice %16 {offsets = [8, 0], sizes = [1, 512], strides = [1, 1]} : vector<16x512xbf16> to vector<1x512xbf16>
    %c8 = arith.constant 8 : index
    %c0_34 = arith.constant 0 : index
    %c0_35 = arith.constant 0 : index
    %59 = vector.load %arg4[%c8, %c0_34, %c0_35] : memref<16x512x120xbf16, #tpu.memory_space<vmem>>, vector<1x512x120xbf16>
    %60 = vector.shape_cast %59 : vector<1x512x120xbf16> to vector<512x120xbf16>
    %cst_36 = arith.constant dense<0.000000e+00> : vector<1x120xf32>
    %61 = tpu.matmul %58, %60, %cst_36 {dimension_numbers = #tpu.dot_dimension_numbers<[1], [0], [0], [1], [0, 0, 1, 1], [], []>} : vector<1x512xbf16>, vector<512x120xbf16>, vector<1x120xf32> -> vector<1x120xf32>
    %62 = arith.addf %57, %61 : vector<1x120xf32>
    %63 = vector.extract_strided_slice %16 {offsets = [9, 0], sizes = [1, 512], strides = [1, 1]} : vector<16x512xbf16> to vector<1x512xbf16>
    %c9 = arith.constant 9 : index
    %c0_37 = arith.constant 0 : index
    %c0_38 = arith.constant 0 : index
    %64 = vector.load %arg4[%c9, %c0_37, %c0_38] : memref<16x512x120xbf16, #tpu.memory_space<vmem>>, vector<1x512x120xbf16>
    %65 = vector.shape_cast %64 : vector<1x512x120xbf16> to vector<512x120xbf16>
    %cst_39 = arith.constant dense<0.000000e+00> : vector<1x120xf32>
    %66 = tpu.matmul %63, %65, %cst_39 {dimension_numbers = #tpu.dot_dimension_numbers<[1], [0], [0], [1], [0, 0, 1, 1], [], []>} : vector<1x512xbf16>, vector<512x120xbf16>, vector<1x120xf32> -> vector<1x120xf32>
    %67 = arith.addf %62, %66 : vector<1x120xf32>
    %68 = vector.extract_strided_slice %16 {offsets = [10, 0], sizes = [1, 512], strides = [1, 1]} : vector<16x512xbf16> to vector<1x512xbf16>
    %c10 = arith.constant 10 : index
    %c0_40 = arith.constant 0 : index
    %c0_41 = arith.constant 0 : index
    %69 = vector.load %arg4[%c10, %c0_40, %c0_41] : memref<16x512x120xbf16, #tpu.memory_space<vmem>>, vector<1x512x120xbf16>
    %70 = vector.shape_cast %69 : vector<1x512x120xbf16> to vector<512x120xbf16>
    %cst_42 = arith.constant dense<0.000000e+00> : vector<1x120xf32>
    %71 = tpu.matmul %68, %70, %cst_42 {dimension_numbers = #tpu.dot_dimension_numbers<[1], [0], [0], [1], [0, 0, 1, 1], [], []>} : vector<1x512xbf16>, vector<512x120xbf16>, vector<1x120xf32> -> vector<1x120xf32>
    %72 = arith.addf %67, %71 : vector<1x120xf32>
    %73 = vector.extract_strided_slice %16 {offsets = [11, 0], sizes = [1, 512], strides = [1, 1]} : vector<16x512xbf16> to vector<1x512xbf16>
    %c11 = arith.constant 11 : index
    %c0_43 = arith.constant 0 : index
    %c0_44 = arith.constant 0 : index
    %74 = vector.load %arg4[%c11, %c0_43, %c0_44] : memref<16x512x120xbf16, #tpu.memory_space<vmem>>, vector<1x512x120xbf16>
    %75 = vector.shape_cast %74 : vector<1x512x120xbf16> to vector<512x120xbf16>
    %cst_45 = arith.constant dense<0.000000e+00> : vector<1x120xf32>
    %76 = tpu.matmul %73, %75, %cst_45 {dimension_numbers = #tpu.dot_dimension_numbers<[1], [0], [0], [1], [0, 0, 1, 1], [], []>} : vector<1x512xbf16>, vector<512x120xbf16>, vector<1x120xf32> -> vector<1x120xf32>
    %77 = arith.addf %72, %76 : vector<1x120xf32>
    %78 = vector.extract_strided_slice %16 {offsets = [12, 0], sizes = [1, 512], strides = [1, 1]} : vector<16x512xbf16> to vector<1x512xbf16>
    %c12 = arith.constant 12 : index
    %c0_46 = arith.constant 0 : index
    %c0_47 = arith.constant 0 : index
    %79 = vector.load %arg4[%c12, %c0_46, %c0_47] : memref<16x512x120xbf16, #tpu.memory_space<vmem>>, vector<1x512x120xbf16>
    %80 = vector.shape_cast %79 : vector<1x512x120xbf16> to vector<512x120xbf16>
    %cst_48 = arith.constant dense<0.000000e+00> : vector<1x120xf32>
    %81 = tpu.matmul %78, %80, %cst_48 {dimension_numbers = #tpu.dot_dimension_numbers<[1], [0], [0], [1], [0, 0, 1, 1], [], []>} : vector<1x512xbf16>, vector<512x120xbf16>, vector<1x120xf32> -> vector<1x120xf32>
    %82 = arith.addf %77, %81 : vector<1x120xf32>
    %83 = vector.extract_strided_slice %16 {offsets = [13, 0], sizes = [1, 512], strides = [1, 1]} : vector<16x512xbf16> to vector<1x512xbf16>
    %c13 = arith.constant 13 : index
    %c0_49 = arith.constant 0 : index
    %c0_50 = arith.constant 0 : index
    %84 = vector.load %arg4[%c13, %c0_49, %c0_50] : memref<16x512x120xbf16, #tpu.memory_space<vmem>>, vector<1x512x120xbf16>
    %85 = vector.shape_cast %84 : vector<1x512x120xbf16> to vector<512x120xbf16>
    %cst_51 = arith.constant dense<0.000000e+00> : vector<1x120xf32>
    %86 = tpu.matmul %83, %85, %cst_51 {dimension_numbers = #tpu.dot_dimension_numbers<[1], [0], [0], [1], [0, 0, 1, 1], [], []>} : vector<1x512xbf16>, vector<512x120xbf16>, vector<1x120xf32> -> vector<1x120xf32>
    %87 = arith.addf %82, %86 : vector<1x120xf32>
    %88 = vector.extract_strided_slice %16 {offsets = [14, 0], sizes = [1, 512], strides = [1, 1]} : vector<16x512xbf16> to vector<1x512xbf16>
    %c14 = arith.constant 14 : index
    %c0_52 = arith.constant 0 : index
    %c0_53 = arith.constant 0 : index
    %89 = vector.load %arg4[%c14, %c0_52, %c0_53] : memref<16x512x120xbf16, #tpu.memory_space<vmem>>, vector<1x512x120xbf16>
    %90 = vector.shape_cast %89 : vector<1x512x120xbf16> to vector<512x120xbf16>
    %cst_54 = arith.constant dense<0.000000e+00> : vector<1x120xf32>
    %91 = tpu.matmul %88, %90, %cst_54 {dimension_numbers = #tpu.dot_dimension_numbers<[1], [0], [0], [1], [0, 0, 1, 1], [], []>} : vector<1x512xbf16>, vector<512x120xbf16>, vector<1x120xf32> -> vector<1x120xf32>
    %92 = arith.addf %87, %91 : vector<1x120xf32>
    %93 = vector.extract_strided_slice %16 {offsets = [15, 0], sizes = [1, 512], strides = [1, 1]} : vector<16x512xbf16> to vector<1x512xbf16>
    %c15 = arith.constant 15 : index
    %c0_55 = arith.constant 0 : index
    %c0_56 = arith.constant 0 : index
    %94 = vector.load %arg4[%c15, %c0_55, %c0_56] : memref<16x512x120xbf16, #tpu.memory_space<vmem>>, vector<1x512x120xbf16>
    %95 = vector.shape_cast %94 : vector<1x512x120xbf16> to vector<512x120xbf16>
    %cst_57 = arith.constant dense<0.000000e+00> : vector<1x120xf32>
    %96 = tpu.matmul %93, %95, %cst_57 {dimension_numbers = #tpu.dot_dimension_numbers<[1], [0], [0], [1], [0, 0, 1, 1], [], []>} : vector<1x512xbf16>, vector<512x120xbf16>, vector<1x120xf32> -> vector<1x120xf32>
    %97 = arith.addf %92, %96 : vector<1x120xf32>
    %cst_58 = arith.constant 0.000000e+00 : f32
    %98 = vector.broadcast %cst_58 : f32 to vector<1x120xf32>
    %99 = arith.maximumf %97, %98 : vector<1x120xf32>
    %100 = arith.truncf %99 : vector<1x120xf32> to vector<1x120xbf16>
    %c0_59 = arith.constant 0 : index
    %c0_60 = arith.constant 0 : index
    %101 = vector.load %arg6[%c0_59, %c0_60] : memref<120x84xbf16, #tpu.memory_space<vmem>>, vector<120x84xbf16>
    %cst_61 = arith.constant dense<0.000000e+00> : vector<1x84xf32>
    %102 = tpu.matmul %100, %101, %cst_61 {dimension_numbers = #tpu.dot_dimension_numbers<[1], [0], [0], [1], [0, 0, 1, 1], [], []>} : vector<1x120xbf16>, vector<120x84xbf16>, vector<1x84xf32> -> vector<1x84xf32>
    %c0_62 = arith.constant 0 : index
    %c0_63 = arith.constant 0 : index
    %103 = vector.load %arg7[%c0_62, %c0_63] : memref<1x84xf32, #tpu.memory_space<vmem>>, vector<1x84xf32>
    %104 = arith.addf %102, %103 : vector<1x84xf32>
    %cst_64 = arith.constant 0.000000e+00 : f32
    %105 = vector.broadcast %cst_64 : f32 to vector<1x84xf32>
    %106 = arith.maximumf %104, %105 : vector<1x84xf32>
    %107 = arith.truncf %106 : vector<1x84xf32> to vector<1x84xbf16>
    %c0_65 = arith.constant 0 : index
    %c0_66 = arith.constant 0 : index
    %108 = vector.load %arg8[%c0_65, %c0_66] : memref<84x10xbf16, #tpu.memory_space<vmem>>, vector<84x10xbf16>
    %cst_67 = arith.constant dense<0.000000e+00> : vector<1x10xf32>
    %109 = tpu.matmul %107, %108, %cst_67 {dimension_numbers = #tpu.dot_dimension_numbers<[1], [0], [0], [1], [0, 0, 1, 1], [], []>} : vector<1x84xbf16>, vector<84x10xbf16>, vector<1x10xf32> -> vector<1x10xf32>
    %c0_68 = arith.constant 0 : index
    %c0_69 = arith.constant 0 : index
    %110 = vector.load %arg9[%c0_68, %c0_69] : memref<1x10xf32, #tpu.memory_space<vmem>>, vector<1x10xf32>
    %111 = arith.addf %109, %110 : vector<1x10xf32>
    %cst_70 = arith.constant 0.000000e+00 : f32
    %112 = vector.broadcast %cst_70 : f32 to vector<1x10xf32>
    %113 = arith.maximumf %111, %112 : vector<1x10xf32>
    %114 = arith.truncf %113 : vector<1x10xf32> to vector<1x10xbf16>
    %c0_71 = arith.constant 0 : index
    %c0_72 = arith.constant 0 : index
    %115 = vector.load %arg10[%c0_71, %c0_72] : memref<10x2xbf16, #tpu.memory_space<vmem>>, vector<10x2xbf16>
    %cst_73 = arith.constant dense<0.000000e+00> : vector<1x2xf32>
    %116 = tpu.matmul %114, %115, %cst_73 {dimension_numbers = #tpu.dot_dimension_numbers<[1], [0], [0], [1], [0, 0, 1, 1], [], []>} : vector<1x10xbf16>, vector<10x2xbf16>, vector<1x2xf32> -> vector<1x2xf32>
    %c0_74 = arith.constant 0 : index
    %c0_75 = arith.constant 0 : index
    %117 = vector.load %arg11[%c0_74, %c0_75] : memref<1x2xf32, #tpu.memory_space<vmem>>, vector<1x2xf32>
    %118 = arith.addf %116, %117 : vector<1x2xf32>
    %c0_76 = arith.constant 0 : index
    %c0_77 = arith.constant 0 : index
    %c0_78 = arith.constant 0 : index
    %119 = vector.load %arg12[%c0_76, %c0_77, %c0_78] : memref<1x1x2xf32, #tpu.memory_space<vmem>>, vector<1x1x2xf32>
    %120 = vector.shape_cast %119 : vector<1x1x2xf32> to vector<1x2xf32>
    %121 = vector.shape_cast %118 : vector<1x2xf32> to vector<1x1x2xf32>
    tpu.vector_store %arg12[%c0_76, %c0_77, %c0_78], %121 {strides = array<i32>} : memref<1x1x2xf32, #tpu.memory_space<vmem>>, vector<1x1x2xf32>,
    return
  }
  func.func @transform_0(%arg0: i32) -> (i32, i32, i32) {
    %c0_i32 = arith.constant 0 : i32
    %c0_i32_0 = arith.constant 0 : i32
    %c0_i32_1 = arith.constant 0 : i32
    return %arg0, %c0_i32, %c0_i32_0 : i32, i32, i32
  }
  func.func @transform_1(%arg0: i32) -> (i32, i32) {
    %c0_i32 = arith.constant 0 : i32
    %c0_i32_0 = arith.constant 0 : i32
    %c0_i32_1 = arith.constant 0 : i32
    return %c0_i32, %c0_i32_0 : i32, i32
  }
  func.func @transform_2(%arg0: i32) -> (i32, i32) {
    %c0_i32 = arith.constant 0 : i32
    %c0_i32_0 = arith.constant 0 : i32
    %c0_i32_1 = arith.constant 0 : i32
    return %c0_i32, %c0_i32_0 : i32, i32
  }
  func.func @transform_3(%arg0: i32) -> (i32, i32, i32) {
    %c0_i32 = arith.constant 0 : i32
    %c0_i32_0 = arith.constant 0 : i32
    %c0_i32_1 = arith.constant 0 : i32
    %c0_i32_2 = arith.constant 0 : i32
    return %c0_i32, %c0_i32_0, %c0_i32_1 : i32, i32, i32
  }
  func.func @transform_4(%arg0: i32) -> (i32, i32) {
    %c0_i32 = arith.constant 0 : i32
    %c0_i32_0 = arith.constant 0 : i32
    %c0_i32_1 = arith.constant 0 : i32
    return %c0_i32, %c0_i32_0 : i32, i32
  }
  func.func @transform_5(%arg0: i32) -> (i32, i32) {
    %c0_i32 = arith.constant 0 : i32
    %c0_i32_0 = arith.constant 0 : i32
    %c0_i32_1 = arith.constant 0 : i32
    return %c0_i32, %c0_i32_0 : i32, i32
  }
  func.func @transform_6(%arg0: i32) -> (i32, i32) {
    %c0_i32 = arith.constant 0 : i32
    %c0_i32_0 = arith.constant 0 : i32
    %c0_i32_1 = arith.constant 0 : i32
    return %c0_i32, %c0_i32_0 : i32, i32
  }
  func.func @transform_7(%arg0: i32) -> (i32, i32) {
    %c0_i32 = arith.constant 0 : i32
    %c0_i32_0 = arith.constant 0 : i32
    %c0_i32_1 = arith.constant 0 : i32
    return %c0_i32, %c0_i32_0 : i32, i32
  }
  func.func @transform_8(%arg0: i32) -> (i32, i32) {
    %c0_i32 = arith.constant 0 : i32
    %c0_i32_0 = arith.constant 0 : i32
    %c0_i32_1 = arith.constant 0 : i32
    return %c0_i32, %c0_i32_0 : i32, i32
  }
  func.func @transform_9(%arg0: i32) -> (i32, i32) {
    %c0_i32 = arith.constant 0 : i32
    %c0_i32_0 = arith.constant 0 : i32
    %c0_i32_1 = arith.constant 0 : i32
    return %c0_i32, %c0_i32_0 : i32, i32
  }
  func.func @transform_10(%arg0: i32) -> (i32, i32) {
    %c0_i32 = arith.constant 0 : i32
    %c0_i32_0 = arith.constant 0 : i32
    %c0_i32_1 = arith.constant 0 : i32
    return %c0_i32, %c0_i32_0 : i32, i32
  }
  func.func @transform_11(%arg0: i32) -> (i32, i32, i32) {
    %c0_i32 = arith.constant 0 : i32
    %c0_i32_0 = arith.constant 0 : i32
    %c0_i32_1 = arith.constant 0 : i32
    return %arg0, %c0_i32, %c0_i32_0 : i32, i32, i32
  }
}

</mosaic_0001>

<llo_original>
// kernel: civilnet_forward.2
$region0: #{civilnet_forward.2}
  #allocation0 [shape = 'u32[]', space=smem, size = 0x4, offset = 0x4, fixed_abs, tag = 'smem constant byte address 0x4 - core index']
  #allocation1 [shape = 'u32[72,128]{1,0:T(1,128)}', space=vmem, size = 0x9000, scoped, tag = 'internal scratch']
  %s0 = inlined_call_operand.vmem [shape: bf16[4,75,4608], index: 0, kind: input, shape index: {}]
  %s1 = inlined_call_operand.vmem [shape: bf16[6,75], index: 1, kind: input, shape index: {}]
  %s2 = inlined_call_operand.vmem [shape: f32[6,1], index: 2, kind: input, shape index: {}]
  %s3 = inlined_call_operand.vmem [shape: bf16[6,4608], index: 3, kind: output, shape index: {}]
  %s4 = sld [smem:[#allocation0]]
  $region71: #{civilnet_forward.2} parent=0
    _
  %s6 = ssub.s32 1, %s4
  %s7 = scalar_select 0, %s6, %s4
  $region1: #{civilnet_forward.2} parent=0
    #allocation2 [shape = 'u8[1474560]{0}', space=vmem, size = 0x168000, scoped, tag = 'input window, operand 0']
    loop: start=0, step=1, limit=6
    $region2: #{civilnet_forward.2} parent=1 // loop_pre_header
      _
    $region3: #{civilnet_forward.2} parent=1 // loop_header
      %s9 = sphi 0, %s13
      %p10 = scmp.ge.s32.totalorder %s9, 6
      %s19 = sphi 0, %s21
      %s22 = sphi 0, %s19
      %s23 = sphi 0, %s22
      %s39 = sphi 0, %s23
      %s43 = sphi 0, %s43
      %s45 = sphi 0, %s43
      %s46 = sphi 0, %s45
      %s60 = sphi 0, %s46
      %s64 = sphi 0, %s64
      %s66 = sphi 0, %s64
      %s67 = sphi 0, %s66
      %s81 = sphi 0, %s67
      %s87 = sphi 0, %s89
      %s90 = sphi 0, %s87
      %s91 = sphi 0, %s90
      %s107 = sphi 0, %s91
    $region4: #{civilnet_forward.2} parent=1 // loop_header_branch
      %12 = sbr.rel (%p10) target = $region8
    $region5: #{civilnet_forward.2} parent=1 // loop_body
      %s14 = ssub.s32 %s9, 1
      %s15 = ssub.s32 %s9, 2
      %s16 = sadd.s32 %s9, 1
      %s17 = ssub.s32 %s9, %s16
      %p18 = scmp.eq.s32.totalorder %s17, 0
      %s20 = sadd.s32 %s19, 1
      %s21 = scalar_select %p18, %s19, %s20
      %p24 = pneg %p18
      %p25 = scmp.eq.s32.totalorder %s9, 3
      %p26 = por %p24, %p25
      %p27 = scmp.ne.s32.totalorder %s19, %s22
      %p28 = scmp.eq.s32.totalorder %s9, 0
      %p29 = por %p27, %p28
      %p30 = scmp.ne.s32.totalorder %s19, %s22
      %p31 = scmp.eq.s32.totalorder %s14, 3
      %p32 = por %p30, %p31
      %p33 = scmp.ne.s32.totalorder %s22, %s23
      %p34 = scmp.eq.s32.totalorder %s14, 0
      %p35 = por %p33, %p34
      %p36 = scmp.ne.s32.totalorder %s22, %s23
      %p37 = scmp.eq.s32.totalorder %s15, 3
      %p38 = por %p36, %p37
      %p40 = scmp.ne.s32.totalorder %s23, %s39
      %p41 = scmp.eq.s32.totalorder %s15, 0
      %p42 = por %p40, %p41
      %s44 = sadd.s32 %s43, 1
      %p47 = scmp.eq.s32.totalorder %s9, 3
      %p48 = scmp.ne.s32.totalorder %s43, %s45
      %p49 = scmp.eq.s32.totalorder %s9, 0
      %p50 = por %p48, %p49
      %p51 = scmp.ne.s32.totalorder %s43, %s45
      %p52 = scmp.eq.s32.totalorder %s14, 3
      %p53 = por %p51, %p52
      %p54 = scmp.ne.s32.totalorder %s45, %s46
      %p55 = scmp.eq.s32.totalorder %s14, 0
      %p56 = por %p54, %p55
      %p57 = scmp.ne.s32.totalorder %s45, %s46
      %p58 = scmp.eq.s32.totalorder %s15, 3
      %p59 = por %p57, %p58
      %p61 = scmp.ne.s32.totalorder %s46, %s60
      %p62 = scmp.eq.s32.totalorder %s15, 0
      %p63 = por %p61, %p62
      %s65 = sadd.s32 %s64, 1
      %p68 = scmp.eq.s32.totalorder %s9, 3
      %p69 = scmp.ne.s32.totalorder %s64, %s66
      %p70 = scmp.eq.s32.totalorder %s9, 0
      %p71 = por %p69, %p70
      %p72 = scmp.ne.s32.totalorder %s64, %s66
      %p73 = scmp.eq.s32.totalorder %s14, 3
      %p74 = por %p72, %p73
      %p75 = scmp.ne.s32.totalorder %s66, %s67
      %p76 = scmp.eq.s32.totalorder %s14, 0
      %p77 = por %p75, %p76
      %p78 = scmp.ne.s32.totalorder %s66, %s67
      %p79 = scmp.eq.s32.totalorder %s15, 3
      %p80 = por %p78, %p79
      %p82 = scmp.ne.s32.totalorder %s67, %s81
      %p83 = scmp.eq.s32.totalorder %s15, 0
      %p84 = por %p82, %p83
      %s85 = ssub.s32 %s9, %s16
      %p86 = scmp.eq.s32.totalorder %s85, 0
      %s88 = sadd.s32 %s87, 1
      %s89 = scalar_select %p86, %s87, %s88
      %p92 = pneg %p86
      %p93 = scmp.eq.s32.totalorder %s9, 3
      %p94 = por %p92, %p93
      %p95 = scmp.ne.s32.totalorder %s87, %s90
      %p96 = scmp.eq.s32.totalorder %s9, 0
      %p97 = por %p95, %p96
      %p98 = scmp.ne.s32.totalorder %s87, %s90
      %p99 = scmp.eq.s32.totalorder %s14, 3
      %p100 = por %p98, %p99
      %p101 = scmp.ne.s32.totalorder %s90, %s91
      %p102 = scmp.eq.s32.totalorder %s14, 0
      %p103 = por %p101, %p102
      %p104 = scmp.ne.s32.totalorder %s90, %s91
      %p105 = scmp.eq.s32.totalorder %s15, 3
      %p106 = por %p104, %p105
      %p108 = scmp.ne.s32.totalorder %s91, %s107
      %p109 = scmp.eq.s32.totalorder %s15, 0
      %p110 = por %p108, %p109
      %p111 = scmp.le.s32.totalorder 1, %s9
      %p112 = scmp.lt.s32.totalorder %s9, 5
      %p113 = pnand %p111, %p112
      %p114 = pneg %p113
      // Predicated region
      $region9: #{civilnet_forward.2} parent=5 // pred_check
        _
      $region10: #{civilnet_forward.2} parent=5 // pred_check_branch
        %116 = sbr.rel (%p113) target = $region12
      $region11: #{civilnet_forward.2} parent=5 // pred_region
        %s117 = ssub.s32 %s9, 1
        // Predicated region
        $region13: #{civilnet_forward.2} parent=11 // pred_check
          %p118 = pneg %p56
        $region14: #{civilnet_forward.2} parent=11 // pred_check_branch
          %120 = sbr.rel (%p118) target = $region16
        $region15: #{civilnet_forward.2} parent=11 // pred_region
          _
        $region16: #{civilnet_forward.2} parent=11 // pred_fallthru
          _
        // Predicated region
        $region17: #{civilnet_forward.2} parent=11 // pred_check
          %p121 = pneg %p77
        $region18: #{civilnet_forward.2} parent=11 // pred_check_branch
          %123 = sbr.rel (%p121) target = $region20
        $region19: #{civilnet_forward.2} parent=11 // pred_region
          _
        $region20: #{civilnet_forward.2} parent=11 // pred_fallthru
          _
      $region12: #{civilnet_forward.2} parent=5 // pred_fallthru
        _
      %p124 = scmp.lt.s32.totalorder %s9, 4
      // Predicated region
      $region21: #{civilnet_forward.2} parent=5 // pred_check
        %p125 = pneg %p124
      $region22: #{civilnet_forward.2} parent=5 // pred_check_branch
        %127 = sbr.rel (%p125) target = $region24
      $region23: #{civilnet_forward.2} parent=5 // pred_region
        // Predicated region
        $region25: #{civilnet_forward.2} parent=23 // pred_check
          %p128 = pneg %p29
        $region26: #{civilnet_forward.2} parent=23 // pred_check_branch
          %130 = sbr.rel (%p128) target = $region28
        $region27: #{civilnet_forward.2} parent=23 // pred_region
          %s131 = sand.u32 %s19, 1
          %s132 = sand.u32 %s19, 1
          %s133 = smul.addr %s132, 1440
          %s134 = scalar_lea.vmem [#allocation2], %s133
          %s135 = smul.u32 9, %s9
          %s136 = smul.addr %s135, 4
          %s137 = scalar_lea.vmem %s0, %s136
          // Predicated region
          $region29: #{civilnet_forward.2} parent=27 // pred_check
            _
          $region30: #{civilnet_forward.2} parent=27 // pred_check_branch
            %139 = sbr.rel (0) target = $region32
          $region31: #{civilnet_forward.2} parent=27 // pred_region
            // Predicated region
            $region33: #{civilnet_forward.2} parent=31 // pred_check
              _
            $region34: #{civilnet_forward.2} parent=31 // pred_check_branch
              %141 = sbr.rel (0) target = $region36
            $region35: #{civilnet_forward.2} parent=31 // pred_region
              %s142 = scalar_lea.vmem %s137, 32
              %s143 = scalar_lea.vmem %s134, 32 [#allocation2]
              loop: start=0, step=1, limit=1
              $region37: #{civilnet_forward.2} parent=35 // loop_pre_header
                _
              $region38: #{civilnet_forward.2} parent=35 // loop_header
                %s145 = sphi 0, %s149
                %p146 = scmp.ge.s32.totalorder %s145, 1
                %s150 = sphi %s137, %s137
                %s151 = sphi %s134, %s134
              $region39: #{civilnet_forward.2} parent=35 // loop_header_branch
                %148 = sbr.rel (%p146) target = $region43
              $region40: #{civilnet_forward.2} parent=35 // loop_body
                %v152 = vld [vmem:[%s150] sm:$0xff]
                %153 = vst [vmem:[%s151] sm:$0xff] %v152
                %v154 = vld [vmem:[%s150 + $0x8] sm:$0xff]
                %155 = vst [vmem:[%s151 + $0x8] sm:$0xff] %v154
                %v156 = vld [vmem:[%s150 + $0x10] sm:$0xff]
                %157 = vst [vmem:[%s151 + $0x10] sm:$0xff] %v156
                %v158 = vld [vmem:[%s150 + $0x18] sm:$0xff]
                %159 = vst [vmem:[%s151 + $0x18] sm:$0xff] %v158
                %v160 = vld [vmem:[%s150 + $0x90] sm:$0xff]
                %161 = vst [vmem:[%s151 + $0x24] sm:$0xff] %v160
                %v162 = vld [vmem:[%s150 + $0x98] sm:$0xff]
                %163 = vst [vmem:[%s151 + $0x2c] sm:$0xff] %v162
                %v164 = vld [vmem:[%s150 + $0xa0] sm:$0xff]
                %165 = vst [vmem:[%s151 + $0x34] sm:$0xff] %v164
                %v166 = vld [vmem:[%s150 + $0xa8] sm:$0xff]
                %167 = vst [vmem:[%s151 + $0x3c] sm:$0xff] %v166
                %v168 = vld [vmem:[%s150 + $0x120] sm:$0xff]
                %169 = vst [vmem:[%s151 + $0x48] sm:$0xff] %v168
                %v170 = vld [vmem:[%s150 + $0x128] sm:$0xff]
                %171 = vst [vmem:[%s151 + $0x50] sm:$0xff] %v170
                %v172 = vld [vmem:[%s150 + $0x130] sm:$0xff]
                %173 = vst [vmem:[%s151 + $0x58] sm:$0xff] %v172
                %v174 = vld [vmem:[%s150 + $0x138] sm:$0xff]
                %175 = vst [vmem:[%s151 + $0x60] sm:$0xff] %v174
                %v176 = vld [vmem:[%s150 + $0x1b0] sm:$0xff]
                %177 = vst [vmem:[%s151 + $0x6c] sm:$0xff] %v176
                %v178 = vld [vmem:[%s150 + $0x1b8] sm:$0xff]
                %179 = vst [vmem:[%s151 + $0x74] sm:$0xff] %v178
                %v180 = vld [vmem:[%s150 + $0x1c0] sm:$0xff]
                %181 = vst [vmem:[%s151 + $0x7c] sm:$0xff] %v180
                %v182 = vld [vmem:[%s150 + $0x1c8] sm:$0xff]
                %183 = vst [vmem:[%s151 + $0x84] sm:$0xff] %v182
                %v184 = vld [vmem:[%s150 + $0x240] sm:$0xff]
                %185 = vst [vmem:[%s151 + $0x90] sm:$0xff] %v184
                %v186 = vld [vmem:[%s150 + $0x248] sm:$0xff]
                %187 = vst [vmem:[%s151 + $0x98] sm:$0xff] %v186
                %v188 = vld [vmem:[%s150 + $0x250] sm:$0xff]
                %189 = vst [vmem:[%s151 + $0xa0] sm:$0xff] %v188
                %v190 = vld [vmem:[%s150 + $0x258] sm:$0xff]
                %191 = vst [vmem:[%s151 + $0xa8] sm:$0xff] %v190
                %v192 = vld [vmem:[%s150 + $0x2d0] sm:$0xff]
                %193 = vst [vmem:[%s151 + $0xb4] sm:$0xff] %v192
                %v194 = vld [vmem:[%s150 + $0x2d8] sm:$0xff]
                %195 = vst [vmem:[%s151 + $0xbc] sm:$0xff] %v194
                %v196 = vld [vmem:[%s150 + $0x2e0] sm:$0xff]
                %197 = vst [vmem:[%s151 + $0xc4] sm:$0xff] %v196
                %v198 = vld [vmem:[%s150 + $0x2e8] sm:$0xff]
                %199 = vst [vmem:[%s151 + $0xcc] sm:$0xff] %v198
                %v200 = vld [vmem:[%s150 + $0x360] sm:$0xff]
                %201 = vst [vmem:[%s151 + $0xd8] sm:$0xff] %v200
                %v202 = vld [vmem:[%s150 + $0x368] sm:$0xff]
                %203 = vst [vmem:[%s151 + $0xe0] sm:$0xff] %v202
                %v204 = vld [vmem:[%s150 + $0x370] sm:$0xff]
                %205 = vst [vmem:[%s151 + $0xe8] sm:$0xff] %v204
                %v206 = vld [vmem:[%s150 + $0x378] sm:$0xff]
                %207 = vst [vmem:[%s151 + $0xf0] sm:$0xff] %v206
                %v208 = vld [vmem:[%s150 + $0x3f0] sm:$0xff]
                %209 = vst [vmem:[%s151 + $0xfc] sm:$0xff] %v208
                %v210 = vld [vmem:[%s150 + $0x3f8] sm:$0xff]
                %211 = vst [vmem:[%s151 + $0x104] sm:$0xff] %v210
                %v212 = vld [vmem:[%s150 + $0x400] sm:$0xff]
                %213 = vst [vmem:[%s151 + $0x10c] sm:$0xff] %v212
                %v214 = vld [vmem:[%s150 + $0x408] sm:$0xff]
                %215 = vst [vmem:[%s151 + $0x114] sm:$0xff] %v214
                %v216 = vld [vmem:[%s150 + $0x480] sm:$0xff]
                %217 = vst [vmem:[%s151 + $0x120] sm:$0xff] %v216
                %v218 = vld [vmem:[%s150 + $0x488] sm:$0xff]
                %219 = vst [vmem:[%s151 + $0x128] sm:$0xff] %v218
                %v220 = vld [vmem:[%s150 + $0x490] sm:$0xff]
                %221 = vst [vmem:[%s151 + $0x130] sm:$0xff] %v220
                %v222 = vld [vmem:[%s150 + $0x498] sm:$0xff]
                %223 = vst [vmem:[%s151 + $0x138] sm:$0xff] %v222
                %v224 = vld [vmem:[%s150 + $0x510] sm:$0xff]
                %225 = vst [vmem:[%s151 + $0x144] sm:$0xff] %v224
                %v226 = vld [vmem:[%s150 + $0x518] sm:$0xff]
                %227 = vst [vmem:[%s151 + $0x14c] sm:$0xff] %v226
                %v228 = vld [vmem:[%s150 + $0x520] sm:$0xff]
                %229 = vst [vmem:[%s151 + $0x154] sm:$0xff] %v228
                %v230 = vld [vmem:[%s150 + $0x528] sm:$0xff]
                %231 = vst [vmem:[%s151 + $0x15c] sm:$0xff] %v230
                %v232 = vld [vmem:[%s150 + $0x5a0] sm:$0xff]
                %233 = vst [vmem:[%s151 + $0x168] sm:$0xff] %v232
                %v234 = vld [vmem:[%s150 + $0x5a8] sm:$0xff]
                %235 = vst [vmem:[%s151 + $0x170] sm:$0xff] %v234
                %v236 = vld [vmem:[%s150 + $0x5b0] sm:$0xff]
                %237 = vst [vmem:[%s151 + $0x178] sm:$0xff] %v236
                %v238 = vld [vmem:[%s150 + $0x5b8] sm:$0xff]
                %239 = vst [vmem:[%s151 + $0x180] sm:$0xff] %v238
                %v240 = vld [vmem:[%s150 + $0x630] sm:$0xff]
                %241 = vst [vmem:[%s151 + $0x18c] sm:$0xff] %v240
                %v242 = vld [vmem:[%s150 + $0x638] sm:$0xff]
                %243 = vst [vmem:[%s151 + $0x194] sm:$0xff] %v242
                %v244 = vld [vmem:[%s150 + $0x640] sm:$0xff]
                %245 = vst [vmem:[%s151 + $0x19c] sm:$0xff] %v244
                %v246 = vld [vmem:[%s150 + $0x648] sm:$0xff]
                %247 = vst [vmem:[%s151 + $0x1a4] sm:$0xff] %v246
                %v248 = vld [vmem:[%s150 + $0x6c0] sm:$0xff]
                %249 = vst [vmem:[%s151 + $0x1b0] sm:$0xff] %v248
                %v250 = vld [vmem:[%s150 + $0x6c8] sm:$0xff]
                %251 = vst [vmem:[%s151 + $0x1b8] sm:$0xff] %v250
                %v252 = vld [vmem:[%s150 + $0x6d0] sm:$0xff]
                %253 = vst [vmem:[%s151 + $0x1c0] sm:$0xff] %v252
                %v254 = vld [vmem:[%s150 + $0x6d8] sm:$0xff]
                %255 = vst [vmem:[%s151 + $0x1c8] sm:$0xff] %v254
                %v256 = vld [vmem:[%s150 + $0x750] sm:$0xff]
                %257 = vst [vmem:[%s151 + $0x1d4] sm:$0xff] %v256
                %v258 = vld [vmem:[%s150 + $0x758] sm:$0xff]
                %259 = vst [vmem:[%s151 + $0x1dc] sm:$0xff] %v258
                %v260 = vld [vmem:[%s150 + $0x760] sm:$0xff]
                %261 = vst [vmem:[%s151 + $0x1e4] sm:$0xff] %v260
                %v262 = vld [vmem:[%s150 + $0x768] sm:$0xff]
                %263 = vst [vmem:[%s151 + $0x1ec] sm:$0xff] %v262
                %v264 = vld [vmem:[%s150 + $0x7e0] sm:$0xff]
                %265 = vst [vmem:[%s151 + $0x1f8] sm:$0xff] %v264
                %v266 = vld [vmem:[%s150 + $0x7e8] sm:$0xff]
                %267 = vst [vmem:[%s151 + $0x200] sm:$0xff] %v266
                %v268 = vld [vmem:[%s150 + $0x7f0] sm:$0xff]
                %269 = vst [vmem:[%s151 + $0x208] sm:$0xff] %v268
                %v270 = vld [vmem:[%s150 + $0x7f8] sm:$0xff]
                %271 = vst [vmem:[%s151 + $0x210] sm:$0xff] %v270
                %v272 = vld [vmem:[%s150 + $0x870] sm:$0xff]
                %273 = vst [vmem:[%s151 + $0x21c] sm:$0xff] %v272
                %v274 = vld [vmem:[%s150 + $0x878] sm:$0xff]
                %275 = vst [vmem:[%s151 + $0x224] sm:$0xff] %v274
                %v276 = vld [vmem:[%s150 + $0x880] sm:$0xff]
                %277 = vst [vmem:[%s151 + $0x22c] sm:$0xff] %v276
                %v278 = vld [vmem:[%s150 + $0x888] sm:$0xff]
                %279 = vst [vmem:[%s151 + $0x234] sm:$0xff] %v278
                %v280 = vld [vmem:[%s150 + $0x900] sm:$0xff]
                %281 = vst [vmem:[%s151 + $0x240] sm:$0xff] %v280
                %v282 = vld [vmem:[%s150 + $0x908] sm:$0xff]
                %283 = vst [vmem:[%s151 + $0x248] sm:$0xff] %v282
                %v284 = vld [vmem:[%s150 + $0x910] sm:$0xff]
                %285 = vst [vmem:[%s151 + $0x250] sm:$0xff] %v284
                %v286 = vld [vmem:[%s150 + $0x918] sm:$0xff]
                %287 = vst [vmem:[%s151 + $0x258] sm:$0xff] %v286
                %v288 = vld [vmem:[%s150 + $0x990] sm:$0xff]
                %289 = vst [vmem:[%s151 + $0x264] sm:$0xff] %v288
                %v290 = vld [vmem:[%s150 + $0x998] sm:$0xff]
                %291 = vst [vmem:[%s151 + $0x26c] sm:$0xff] %v290
                %v292 = vld [vmem:[%s150 + $0x9a0] sm:$0xff]
                %293 = vst [vmem:[%s151 + $0x274] sm:$0xff] %v292
                %v294 = vld [vmem:[%s150 + $0x9a8] sm:$0xff]
                %295 = vst [vmem:[%s151 + $0x27c] sm:$0xff] %v294
                %v296 = vld [vmem:[%s150 + $0xa20] sm:$0xff]
                %297 = vst [vmem:[%s151 + $0x288] sm:$0xff] %v296
                %v298 = vld [vmem:[%s150 + $0xa28] sm:$0xff]
                %299 = vst [vmem:[%s151 + $0x290] sm:$0xff] %v298
                %v300 = vld [vmem:[%s150 + $0xa30] sm:$0xff]
                %301 = vst [vmem:[%s151 + $0x298] sm:$0xff] %v300
                %v302 = vld [vmem:[%s150 + $0xa38] sm:$0xff]
                %303 = vst [vmem:[%s151 + $0x2a0] sm:$0xff] %v302
                %v304 = vld [vmem:[%s150 + $0xab0] sm:$0xff]
                %305 = vst [vmem:[%s151 + $0x2ac] sm:$0xff] %v304
                %v306 = vld [vmem:[%s150 + $0xab8] sm:$0xff]
                %307 = vst [vmem:[%s151 + $0x2b4] sm:$0xff] %v306
                %v308 = vld [vmem:[%s150 + $0xac0] sm:$0xff]
                %309 = vst [vmem:[%s151 + $0x2bc] sm:$0xff] %v308
                %v310 = vld [vmem:[%s150 + $0xac8] sm:$0xff]
                %311 = vst [vmem:[%s151 + $0x2c4] sm:$0xff] %v310
                %v312 = vld [vmem:[%s150 + $0xb40] sm:$0xff]
                %313 = vst [vmem:[%s151 + $0x2d0] sm:$0xff] %v312
                %v314 = vld [vmem:[%s150 + $0xb48] sm:$0xff]
                %315 = vst [vmem:[%s151 + $0x2d8] sm:$0xff] %v314
                %v316 = vld [vmem:[%s150 + $0xb50] sm:$0xff]
                %317 = vst [vmem:[%s151 + $0x2e0] sm:$0xff] %v316
                %v318 = vld [vmem:[%s150 + $0xb58] sm:$0xff]
                %319 = vst [vmem:[%s151 + $0x2e8] sm:$0xff] %v318
                %v320 = vld [vmem:[%s150 + $0xbd0] sm:$0xff]
                %321 = vst [vmem:[%s151 + $0x2f4] sm:$0xff] %v320
                %v322 = vld [vmem:[%s150 + $0xbd8] sm:$0xff]
                %323 = vst [vmem:[%s151 + $0x2fc] sm:$0xff] %v322
                %v324 = vld [vmem:[%s150 + $0xbe0] sm:$0xff]
                %325 = vst [vmem:[%s151 + $0x304] sm:$0xff] %v324
                %v326 = vld [vmem:[%s150 + $0xbe8] sm:$0xff]
                %327 = vst [vmem:[%s151 + $0x30c] sm:$0xff] %v326
                %v328 = vld [vmem:[%s150 + $0xc60] sm:$0xff]
                %329 = vst [vmem:[%s151 + $0x318] sm:$0xff] %v328
                %v330 = vld [vmem:[%s150 + $0xc68] sm:$0xff]
                %331 = vst [vmem:[%s151 + $0x320] sm:$0xff] %v330
                %v332 = vld [vmem:[%s150 + $0xc70] sm:$0xff]
                %333 = vst [vmem:[%s151 + $0x328] sm:$0xff] %v332
                %v334 = vld [vmem:[%s150 + $0xc78] sm:$0xff]
                %335 = vst [vmem:[%s151 + $0x330] sm:$0xff] %v334
                %v336 = vld [vmem:[%s150 + $0xcf0] sm:$0xff]
                %337 = vst [vmem:[%s151 + $0x33c] sm:$0xff] %v336
                %v338 = vld [vmem:[%s150 + $0xcf8] sm:$0xff]
                %339 = vst [vmem:[%s151 + $0x344] sm:$0xff] %v338
                %v340 = vld [vmem:[%s150 + $0xd00] sm:$0xff]
                %341 = vst [vmem:[%s151 + $0x34c] sm:$0xff] %v340
                %v342 = vld [vmem:[%s150 + $0xd08] sm:$0xff]
                %343 = vst [vmem:[%s151 + $0x354] sm:$0xff] %v342
                %v344 = vld [vmem:[%s150 + $0xd80] sm:$0xff]
                %345 = vst [vmem:[%s151 + $0x360] sm:$0xff] %v344
                %v346 = vld [vmem:[%s150 + $0xd88] sm:$0xff]
                %347 = vst [vmem:[%s151 + $0x368] sm:$0xff] %v346
                %v348 = vld [vmem:[%s150 + $0xd90] sm:$0xff]
                %349 = vst [vmem:[%s151 + $0x370] sm:$0xff] %v348
                %v350 = vld [vmem:[%s150 + $0xd98] sm:$0xff]
                %351 = vst [vmem:[%s151 + $0x378] sm:$0xff] %v350
                %v352 = vld [vmem:[%s150 + $0xe10] sm:$0xff]
                %353 = vst [vmem:[%s151 + $0x384] sm:$0xff] %v352
                %v354 = vld [vmem:[%s150 + $0xe18] sm:$0xff]
                %355 = vst [vmem:[%s151 + $0x38c] sm:$0xff] %v354
                %v356 = vld [vmem:[%s150 + $0xe20] sm:$0xff]
                %357 = vst [vmem:[%s151 + $0x394] sm:$0xff] %v356
                %v358 = vld [vmem:[%s150 + $0xe28] sm:$0xff]
                %359 = vst [vmem:[%s151 + $0x39c] sm:$0xff] %v358
                %v360 = vld [vmem:[%s150 + $0xea0] sm:$0xff]
                %361 = vst [vmem:[%s151 + $0x3a8] sm:$0xff] %v360
                %v362 = vld [vmem:[%s150 + $0xea8] sm:$0xff]
                %363 = vst [vmem:[%s151 + $0x3b0] sm:$0xff] %v362
                %v364 = vld [vmem:[%s150 + $0xeb0] sm:$0xff]
                %365 = vst [vmem:[%s151 + $0x3b8] sm:$0xff] %v364
                %v366 = vld [vmem:[%s150 + $0xeb8] sm:$0xff]
                %367 = vst [vmem:[%s151 + $0x3c0] sm:$0xff] %v366
                %v368 = vld [vmem:[%s150 + $0xf30] sm:$0xff]
                %369 = vst [vmem:[%s151 + $0x3cc] sm:$0xff] %v368
                %v370 = vld [vmem:[%s150 + $0xf38] sm:$0xff]
                %371 = vst [vmem:[%s151 + $0x3d4] sm:$0xff] %v370
                %v372 = vld [vmem:[%s150 + $0xf40] sm:$0xff]
                %373 = vst [vmem:[%s151 + $0x3dc] sm:$0xff] %v372
                %v374 = vld [vmem:[%s150 + $0xf48] sm:$0xff]
                %375 = vst [vmem:[%s151 + $0x3e4] sm:$0xff] %v374
                %v376 = vld [vmem:[%s150 + $0xfc0] sm:$0xff]
                %377 = vst [vmem:[%s151 + $0x3f0] sm:$0xff] %v376
                %v378 = vld [vmem:[%s150 + $0xfc8] sm:$0xff]
                %379 = vst [vmem:[%s151 + $0x3f8] sm:$0xff] %v378
                %v380 = vld [vmem:[%s150 + $0xfd0] sm:$0xff]
                %381 = vst [vmem:[%s151 + $0x400] sm:$0xff] %v380
                %v382 = vld [vmem:[%s150 + $0xfd8] sm:$0xff]
                %383 = vst [vmem:[%s151 + $0x408] sm:$0xff] %v382
                %v384 = vld [vmem:[%s150 + $0x1050] sm:$0xff]
                %385 = vst [vmem:[%s151 + $0x414] sm:$0xff] %v384
                %v386 = vld [vmem:[%s150 + $0x1058] sm:$0xff]
                %387 = vst [vmem:[%s151 + $0x41c] sm:$0xff] %v386
                %v388 = vld [vmem:[%s150 + $0x1060] sm:$0xff]
                %389 = vst [vmem:[%s151 + $0x424] sm:$0xff] %v388
                %v390 = vld [vmem:[%s150 + $0x1068] sm:$0xff]
                %391 = vst [vmem:[%s151 + $0x42c] sm:$0xff] %v390
                %v392 = vld [vmem:[%s150 + $0x10e0] sm:$0xff]
                %393 = vst [vmem:[%s151 + $0x438] sm:$0xff] %v392
                %v394 = vld [vmem:[%s150 + $0x10e8] sm:$0xff]
                %395 = vst [vmem:[%s151 + $0x440] sm:$0xff] %v394
                %v396 = vld [vmem:[%s150 + $0x10f0] sm:$0xff]
                %397 = vst [vmem:[%s151 + $0x448] sm:$0xff] %v396
                %v398 = vld [vmem:[%s150 + $0x10f8] sm:$0xff]
                %399 = vst [vmem:[%s151 + $0x450] sm:$0xff] %v398
                %v400 = vld [vmem:[%s150 + $0x1170] sm:$0xff]
                %401 = vst [vmem:[%s151 + $0x45c] sm:$0xff] %v400
                %v402 = vld [vmem:[%s150 + $0x1178] sm:$0xff]
                %403 = vst [vmem:[%s151 + $0x464] sm:$0xff] %v402
                %v404 = vld [vmem:[%s150 + $0x1180] sm:$0xff]
                %405 = vst [vmem:[%s151 + $0x46c] sm:$0xff] %v404
                %v406 = vld [vmem:[%s150 + $0x1188] sm:$0xff]
                %407 = vst [vmem:[%s151 + $0x474] sm:$0xff] %v406
                %v408 = vld [vmem:[%s150 + $0x1200] sm:$0xff]
                %409 = vst [vmem:[%s151 + $0x480] sm:$0xff] %v408
                %v410 = vld [vmem:[%s150 + $0x1208] sm:$0xff]
                %411 = vst [vmem:[%s151 + $0x488] sm:$0xff] %v410
                %v412 = vld [vmem:[%s150 + $0x1210] sm:$0xff]
                %413 = vst [vmem:[%s151 + $0x490] sm:$0xff] %v412
                %v414 = vld [vmem:[%s150 + $0x1218] sm:$0xff]
                %415 = vst [vmem:[%s151 + $0x498] sm:$0xff] %v414
                %v416 = vld [vmem:[%s150 + $0x1290] sm:$0xff]
                %417 = vst [vmem:[%s151 + $0x4a4] sm:$0xff] %v416
                %v418 = vld [vmem:[%s150 + $0x1298] sm:$0xff]
                %419 = vst [vmem:[%s151 + $0x4ac] sm:$0xff] %v418
                %v420 = vld [vmem:[%s150 + $0x12a0] sm:$0xff]
                %421 = vst [vmem:[%s151 + $0x4b4] sm:$0xff] %v420
                %v422 = vld [vmem:[%s150 + $0x12a8] sm:$0xff]
                %423 = vst [vmem:[%s151 + $0x4bc] sm:$0xff] %v422
                %v424 = vld [vmem:[%s150 + $0x1320] sm:$0xff]
                %425 = vst [vmem:[%s151 + $0x4c8] sm:$0xff] %v424
                %v426 = vld [vmem:[%s150 + $0x1328] sm:$0xff]
                %427 = vst [vmem:[%s151 + $0x4d0] sm:$0xff] %v426
                %v428 = vld [vmem:[%s150 + $0x1330] sm:$0xff]
                %429 = vst [vmem:[%s151 + $0x4d8] sm:$0xff] %v428
                %v430 = vld [vmem:[%s150 + $0x1338] sm:$0xff]
                %431 = vst [vmem:[%s151 + $0x4e0] sm:$0xff] %v430
                %v432 = vld [vmem:[%s150 + $0x13b0] sm:$0xff]
                %433 = vst [vmem:[%s151 + $0x4ec] sm:$0xff] %v432
                %v434 = vld [vmem:[%s150 + $0x13b8] sm:$0xff]
                %435 = vst [vmem:[%s151 + $0x4f4] sm:$0xff] %v434
                %v436 = vld [vmem:[%s150 + $0x13c0] sm:$0xff]
                %437 = vst [vmem:[%s151 + $0x4fc] sm:$0xff] %v436
                %v438 = vld [vmem:[%s150 + $0x13c8] sm:$0xff]
                %439 = vst [vmem:[%s151 + $0x504] sm:$0xff] %v438
                %v440 = vld [vmem:[%s150 + $0x1440] sm:$0xff]
                %441 = vst [vmem:[%s151 + $0x510] sm:$0xff] %v440
                %v442 = vld [vmem:[%s150 + $0x1448] sm:$0xff]
                %443 = vst [vmem:[%s151 + $0x518] sm:$0xff] %v442
                %v444 = vld [vmem:[%s150 + $0x1450] sm:$0xff]
                %445 = vst [vmem:[%s151 + $0x520] sm:$0xff] %v444
                %v446 = vld [vmem:[%s150 + $0x1458] sm:$0xff]
                %447 = vst [vmem:[%s151 + $0x528] sm:$0xff] %v446
                %v448 = vld [vmem:[%s150 + $0x14d0] sm:$0xff]
                %449 = vst [vmem:[%s151 + $0x534] sm:$0xff] %v448
                %v450 = vld [vmem:[%s150 + $0x14d8] sm:$0xff]
                %451 = vst [vmem:[%s151 + $0x53c] sm:$0xff] %v450
                %v452 = vld [vmem:[%s150 + $0x14e0] sm:$0xff]
                %453 = vst [vmem:[%s151 + $0x544] sm:$0xff] %v452
                %v454 = vld [vmem:[%s150 + $0x14e8] sm:$0xff]
                %455 = vst [vmem:[%s151 + $0x54c] sm:$0xff] %v454
                %v456 = vld [vmem:[%s150 + $0x1560] sm:$0xff]
                %457 = vst [vmem:[%s151 + $0x558] sm:$0xff] %v456
                %v458 = vld [vmem:[%s150 + $0x1568] sm:$0xff]
                %459 = vst [vmem:[%s151 + $0x560] sm:$0xff] %v458
                %v460 = vld [vmem:[%s150 + $0x1570] sm:$0xff]
                %461 = vst [vmem:[%s151 + $0x568] sm:$0xff] %v460
                %v462 = vld [vmem:[%s150 + $0x1578] sm:$0xff]
                %463 = vst [vmem:[%s151 + $0x570] sm:$0xff] %v462
                %v464 = vld [vmem:[%s150 + $0x15f0] sm:$0xff]
                %465 = vst [vmem:[%s151 + $0x57c] sm:$0xff] %v464
                %v466 = vld [vmem:[%s150 + $0x15f8] sm:$0xff]
                %467 = vst [vmem:[%s151 + $0x584] sm:$0xff] %v466
                %v468 = vld [vmem:[%s150 + $0x1600] sm:$0xff]
                %469 = vst [vmem:[%s151 + $0x58c] sm:$0xff] %v468
                %v470 = vld [vmem:[%s150 + $0x1608] sm:$0xff]
                %471 = vst [vmem:[%s151 + $0x594] sm:$0xff] %v470
              $region41: #{civilnet_forward.2} parent=35 // loop_footer
                %s149 = sadd.s32 1, %s145
              $region42: #{civilnet_forward.2} parent=35 // loop_footer_branch
                %144 = sbr.rel target = $region38
              $region43: #{civilnet_forward.2} parent=35 // loop_exit
                _
              %s473 = ssub.s32 16, 1
              loop: start=0, step=1, limit=1
              $region44: #{civilnet_forward.2} parent=35 // loop_pre_header
                _
              $region45: #{civilnet_forward.2} parent=35 // loop_header
                %s475 = sphi 0, %s479
                %p476 = scmp.ge.s32.totalorder %s475, 1
                %s480 = sphi %s142, %s142
                %s481 = sphi %s143, %s143
              $region46: #{civilnet_forward.2} parent=35 // loop_header_branch
                %478 = sbr.rel (%p476) target = $region50
              $region47: #{civilnet_forward.2} parent=35 // loop_body
                %v482 = vld [vmem:[%s480] sm:%s473]
                %483 = vst [vmem:[%s481] sm:%s473] %v482
                %v484 = vld [vmem:[%s480 + $0x90] sm:%s473]
                %485 = vst [vmem:[%s481 + $0x24] sm:%s473] %v484
                %v486 = vld [vmem:[%s480 + $0x120] sm:%s473]
                %487 = vst [vmem:[%s481 + $0x48] sm:%s473] %v486
                %v488 = vld [vmem:[%s480 + $0x1b0] sm:%s473]
                %489 = vst [vmem:[%s481 + $0x6c] sm:%s473] %v488
                %v490 = vld [vmem:[%s480 + $0x240] sm:%s473]
                %491 = vst [vmem:[%s481 + $0x90] sm:%s473] %v490
                %v492 = vld [vmem:[%s480 + $0x2d0] sm:%s473]
                %493 = vst [vmem:[%s481 + $0xb4] sm:%s473] %v492
                %v494 = vld [vmem:[%s480 + $0x360] sm:%s473]
                %495 = vst [vmem:[%s481 + $0xd8] sm:%s473] %v494
                %v496 = vld [vmem:[%s480 + $0x3f0] sm:%s473]
                %497 = vst [vmem:[%s481 + $0xfc] sm:%s473] %v496
                %v498 = vld [vmem:[%s480 + $0x480] sm:%s473]
                %499 = vst [vmem:[%s481 + $0x120] sm:%s473] %v498
                %v500 = vld [vmem:[%s480 + $0x510] sm:%s473]
                %501 = vst [vmem:[%s481 + $0x144] sm:%s473] %v500
                %v502 = vld [vmem:[%s480 + $0x5a0] sm:%s473]
                %503 = vst [vmem:[%s481 + $0x168] sm:%s473] %v502
                %v504 = vld [vmem:[%s480 + $0x630] sm:%s473]
                %505 = vst [vmem:[%s481 + $0x18c] sm:%s473] %v504
                %v506 = vld [vmem:[%s480 + $0x6c0] sm:%s473]
                %507 = vst [vmem:[%s481 + $0x1b0] sm:%s473] %v506
                %v508 = vld [vmem:[%s480 + $0x750] sm:%s473]
                %509 = vst [vmem:[%s481 + $0x1d4] sm:%s473] %v508
                %v510 = vld [vmem:[%s480 + $0x7e0] sm:%s473]
                %511 = vst [vmem:[%s481 + $0x1f8] sm:%s473] %v510
                %v512 = vld [vmem:[%s480 + $0x870] sm:%s473]
                %513 = vst [vmem:[%s481 + $0x21c] sm:%s473] %v512
                %v514 = vld [vmem:[%s480 + $0x900] sm:%s473]
                %515 = vst [vmem:[%s481 + $0x240] sm:%s473] %v514
                %v516 = vld [vmem:[%s480 + $0x990] sm:%s473]
                %517 = vst [vmem:[%s481 + $0x264] sm:%s473] %v516
                %v518 = vld [vmem:[%s480 + $0xa20] sm:%s473]
                %519 = vst [vmem:[%s481 + $0x288] sm:%s473] %v518
                %v520 = vld [vmem:[%s480 + $0xab0] sm:%s473]
                %521 = vst [vmem:[%s481 + $0x2ac] sm:%s473] %v520
                %v522 = vld [vmem:[%s480 + $0xb40] sm:%s473]
                %523 = vst [vmem:[%s481 + $0x2d0] sm:%s473] %v522
                %v524 = vld [vmem:[%s480 + $0xbd0] sm:%s473]
                %525 = vst [vmem:[%s481 + $0x2f4] sm:%s473] %v524
                %v526 = vld [vmem:[%s480 + $0xc60] sm:%s473]
                %527 = vst [vmem:[%s481 + $0x318] sm:%s473] %v526
                %v528 = vld [vmem:[%s480 + $0xcf0] sm:%s473]
                %529 = vst [vmem:[%s481 + $0x33c] sm:%s473] %v528
                %v530 = vld [vmem:[%s480 + $0xd80] sm:%s473]
                %531 = vst [vmem:[%s481 + $0x360] sm:%s473] %v530
                %v532 = vld [vmem:[%s480 + $0xe10] sm:%s473]
                %533 = vst [vmem:[%s481 + $0x384] sm:%s473] %v532
                %v534 = vld [vmem:[%s480 + $0xea0] sm:%s473]
                %535 = vst [vmem:[%s481 + $0x3a8] sm:%s473] %v534
                %v536 = vld [vmem:[%s480 + $0xf30] sm:%s473]
                %537 = vst [vmem:[%s481 + $0x3cc] sm:%s473] %v536
                %v538 = vld [vmem:[%s480 + $0xfc0] sm:%s473]
                %539 = vst [vmem:[%s481 + $0x3f0] sm:%s473] %v538
                %v540 = vld [vmem:[%s480 + $0x1050] sm:%s473]
                %541 = vst [vmem:[%s481 + $0x414] sm:%s473] %v540
                %v542 = vld [vmem:[%s480 + $0x10e0] sm:%s473]
                %543 = vst [vmem:[%s481 + $0x438] sm:%s473] %v542
                %v544 = vld [vmem:[%s480 + $0x1170] sm:%s473]
                %545 = vst [vmem:[%s481 + $0x45c] sm:%s473] %v544
                %v546 = vld [vmem:[%s480 + $0x1200] sm:%s473]
                %547 = vst [vmem:[%s481 + $0x480] sm:%s473] %v546
                %v548 = vld [vmem:[%s480 + $0x1290] sm:%s473]
                %549 = vst [vmem:[%s481 + $0x4a4] sm:%s473] %v548
                %v550 = vld [vmem:[%s480 + $0x1320] sm:%s473]
                %551 = vst [vmem:[%s481 + $0x4c8] sm:%s473] %v550
                %v552 = vld [vmem:[%s480 + $0x13b0] sm:%s473]
                %553 = vst [vmem:[%s481 + $0x4ec] sm:%s473] %v552
                %v554 = vld [vmem:[%s480 + $0x1440] sm:%s473]
                %555 = vst [vmem:[%s481 + $0x510] sm:%s473] %v554
                %v556 = vld [vmem:[%s480 + $0x14d0] sm:%s473]
                %557 = vst [vmem:[%s481 + $0x534] sm:%s473] %v556
                %v558 = vld [vmem:[%s480 + $0x1560] sm:%s473]
                %559 = vst [vmem:[%s481 + $0x558] sm:%s473] %v558
                %v560 = vld [vmem:[%s480 + $0x15f0] sm:%s473]
                %561 = vst [vmem:[%s481 + $0x57c] sm:%s473] %v560
              $region48: #{civilnet_forward.2} parent=35 // loop_footer
                %s479 = sadd.s32 1, %s475
              $region49: #{civilnet_forward.2} parent=35 // loop_footer_branch
                %474 = sbr.rel target = $region45
              $region50: #{civilnet_forward.2} parent=35 // loop_exit
                _
            $region36: #{civilnet_forward.2} parent=31 // pred_fallthru
              _
          $region32: #{civilnet_forward.2} parent=27 // pred_fallthru
            _
          %562 = vnop
        $region28: #{civilnet_forward.2} parent=23 // pred_fallthru
          _
      $region24: #{civilnet_forward.2} parent=5 // pred_fallthru
        _
      %p563 = scmp.le.s32.totalorder 1, %s9
      %p564 = scmp.lt.s32.totalorder %s9, 5
      %p565 = pnand %p563, %p564
      %p566 = pneg %p565
      // Predicated region
      $region51: #{civilnet_forward.2} parent=5 // pred_check
        _
      $region52: #{civilnet_forward.2} parent=5 // pred_check_branch
        %568 = sbr.rel (%p565) target = $region54
      $region53: #{civilnet_forward.2} parent=5 // pred_region
        %s569 = ssub.s32 %s9, 1
        %s570 = sand.u32 %s22, 1
        %s571 = sand.u32 %s22, 1
        %s572 = smul.addr %s571, 1440
        %s573 = scalar_lea.vmem [#allocation2], %s572
        // Predicated region
        $region55: #{civilnet_forward.2} parent=53 // pred_check
          %p574 = pneg %p35
        $region56: #{civilnet_forward.2} parent=53 // pred_check_branch
          %576 = sbr.rel (%p574) target = $region58
        $region57: #{civilnet_forward.2} parent=53 // pred_region
          _
        $region58: #{civilnet_forward.2} parent=53 // pred_fallthru
          _
        %s577 = sand.u32 %s22, 1
        %s578 = sand.u32 %s22, 1
        %s579 = smul.addr %s578, 1440
        %s580 = scalar_lea.vmem [#allocation2], %s579
        %p581 = pneg %p35
        %p582 = pneg %p32
        %p583 = pneg %p56
        %p584 = pneg %p53
        %p585 = pneg %p77
        %p586 = pneg %p74
        %p587 = pneg %p103
        %p588 = pneg %p100
        %s589 = smul.u32 9, %s14
        %p590 = scmp.lt.s32.totalorder %s589, 35
        %s591 = scalar_select %p590, %s589, 35
        %s592 = smul.addr %s591, 4
        %s593 = scalar_lea.vmem %s3, %s592
        %s594 = smul.u32 9, %s14
        %s595 = smul.u32 9, %s14
        %p596 = scmp.lt.s32.totalorder %s595, 35
        %s597 = scalar_select %p596, %s595, 35
        %s598 = smul.addr %s597, 4
        %s599 = scalar_lea.vmem %s3, %s598
        %s600 = smul.u32 9, %s14
        %v602 = vld [vmem:[%s1] sm:$0x7]
        %v603 = vld [vmem:[%s573] sm:$0xff]
        %v604 = vld [vmem:[%s573 + $0x8] sm:$0xff]
        %v605 = vld [vmem:[%s573 + $0x10] sm:$0xff]
        %v606 = vld [vmem:[%s573 + $0x18] sm:$0xff]
        %v607 = vld [vmem:[%s573 + $0x20] sm:$0xf]
        %v608 = vld [vmem:[%s573 + $0x24] sm:$0xff]
        %v609 = vld [vmem:[%s573 + $0x2c] sm:$0xff]
        %v610 = vld [vmem:[%s573 + $0x34] sm:$0xff]
        %v611 = vld [vmem:[%s573 + $0x3c] sm:$0xff]
        %v612 = vld [vmem:[%s573 + $0x44] sm:$0xf]
        %v613 = vld [vmem:[%s573 + $0x48] sm:$0xff]
        %v614 = vld [vmem:[%s573 + $0x50] sm:$0xff]
        %v615 = vld [vmem:[%s573 + $0x58] sm:$0xff]
        %v616 = vld [vmem:[%s573 + $0x60] sm:$0xff]
        %v617 = vld [vmem:[%s573 + $0x68] sm:$0xf]
        %v618 = vld [vmem:[%s573 + $0x6c] sm:$0xff]
        %v619 = vld [vmem:[%s573 + $0x74] sm:$0xff]
        %v620 = vld [vmem:[%s573 + $0x7c] sm:$0xff]
        %v621 = vld [vmem:[%s573 + $0x84] sm:$0xff]
        %v622 = vld [vmem:[%s573 + $0x8c] sm:$0xf]
        %v623 = vld [vmem:[%s573 + $0x90] sm:$0xff]
        %v624 = vld [vmem:[%s573 + $0x98] sm:$0xff]
        %v625 = vld [vmem:[%s573 + $0xa0] sm:$0xff]
        %v626 = vld [vmem:[%s573 + $0xa8] sm:$0xff]
        %v627 = vld [vmem:[%s573 + $0xb0] sm:$0xf]
        %v628 = vld [vmem:[%s573 + $0xb4] sm:$0xff]
        %v629 = vld [vmem:[%s573 + $0xbc] sm:$0xff]
        %v630 = vld [vmem:[%s573 + $0xc4] sm:$0xff]
        %v631 = vld [vmem:[%s573 + $0xcc] sm:$0xff]
        %v632 = vld [vmem:[%s573 + $0xd4] sm:$0xf]
        %v633 = vld [vmem:[%s573 + $0xd8] sm:$0xff]
        %v634 = vld [vmem:[%s573 + $0xe0] sm:$0xff]
        %v635 = vld [vmem:[%s573 + $0xe8] sm:$0xff]
        %v636 = vld [vmem:[%s573 + $0xf0] sm:$0xff]
        %v637 = vld [vmem:[%s573 + $0xf8] sm:$0xf]
        %v638 = vld [vmem:[%s573 + $0xfc] sm:$0xff]
        %v639 = vld [vmem:[%s573 + $0x104] sm:$0xff]
        %v640 = vld [vmem:[%s573 + $0x10c] sm:$0xff]
        %v641 = vld [vmem:[%s573 + $0x114] sm:$0xff]
        %v642 = vld [vmem:[%s573 + $0x11c] sm:$0xf]
        %v643 = vld [vmem:[%s573 + $0x120] sm:$0xff]
        %v644 = vld [vmem:[%s573 + $0x128] sm:$0xff]
        %v645 = vld [vmem:[%s573 + $0x130] sm:$0xff]
        %v646 = vld [vmem:[%s573 + $0x138] sm:$0xff]
        %v647 = vld [vmem:[%s573 + $0x140] sm:$0xf]
        %v648 = vld [vmem:[%s573 + $0x144] sm:$0x33]
        %v649 = vld [vmem:[%s573 + $0x14c] sm:$0x33]
        %v650 = vld [vmem:[%s573 + $0x154] sm:$0x33]
        %v651 = vld [vmem:[%s573 + $0x15c] sm:$0x33]
        %v652 = vld [vmem:[%s573 + $0x164] sm:$0x3]
        %v703 = vunpack.c.l.b16 %v603
        %v704 = vunpack.c.h.b16 %v603
        %v705 = vunpack.c.l.b16 %v604
        %v706 = vunpack.c.h.b16 %v604
        %v707 = vunpack.c.l.b16 %v605
        %v708 = vunpack.c.h.b16 %v605
        %v709 = vunpack.c.l.b16 %v606
        %v710 = vunpack.c.h.b16 %v606
        %v711 = vunpack.c.l.b16 %v607
        %v712 = vunpack.c.l.b16 %v608
        %v713 = vunpack.c.h.b16 %v608
        %v714 = vunpack.c.l.b16 %v609
        %v715 = vunpack.c.h.b16 %v609
        %v716 = vunpack.c.l.b16 %v610
        %v717 = vunpack.c.h.b16 %v610
        %v718 = vunpack.c.l.b16 %v611
        %v719 = vunpack.c.h.b16 %v611
        %v720 = vunpack.c.l.b16 %v612
        %v721 = vunpack.c.l.b16 %v613
        %v722 = vunpack.c.h.b16 %v613
        %v723 = vunpack.c.l.b16 %v614
        %v724 = vunpack.c.h.b16 %v614
        %v725 = vunpack.c.l.b16 %v615
        %v726 = vunpack.c.h.b16 %v615
        %v727 = vunpack.c.l.b16 %v616
        %v728 = vunpack.c.h.b16 %v616
        %v729 = vunpack.c.l.b16 %v617
        %v730 = vunpack.c.l.b16 %v618
        %v731 = vunpack.c.h.b16 %v618
        %v732 = vunpack.c.l.b16 %v619
        %v733 = vunpack.c.h.b16 %v619
        %v734 = vunpack.c.l.b16 %v620
        %v735 = vunpack.c.h.b16 %v620
        %v736 = vunpack.c.l.b16 %v621
        %v737 = vunpack.c.h.b16 %v621
        %v738 = vunpack.c.l.b16 %v622
        %v739 = vunpack.c.l.b16 %v623
        %v740 = vunpack.c.h.b16 %v623
        %v741 = vunpack.c.l.b16 %v624
        %v742 = vunpack.c.h.b16 %v624
        %v743 = vunpack.c.l.b16 %v625
        %v744 = vunpack.c.h.b16 %v625
        %v745 = vunpack.c.l.b16 %v626
        %v746 = vunpack.c.h.b16 %v626
        %v747 = vunpack.c.l.b16 %v627
        %v748 = vunpack.c.l.b16 %v628
        %v749 = vunpack.c.h.b16 %v628
        %v750 = vunpack.c.l.b16 %v629
        %v751 = vunpack.c.h.b16 %v629
        %v752 = vunpack.c.l.b16 %v630
        %v753 = vunpack.c.h.b16 %v630
        %v754 = vunpack.c.l.b16 %v631
        %v755 = vunpack.c.h.b16 %v631
        %v756 = vunpack.c.l.b16 %v632
        %v757 = vunpack.c.l.b16 %v633
        %v758 = vunpack.c.h.b16 %v633
        %v759 = vunpack.c.l.b16 %v634
        %v760 = vunpack.c.h.b16 %v634
        %v761 = vunpack.c.l.b16 %v635
        %v762 = vunpack.c.h.b16 %v635
        %v763 = vunpack.c.l.b16 %v636
        %v764 = vunpack.c.h.b16 %v636
        %v765 = vunpack.c.l.b16 %v637
        %v766 = vunpack.c.l.b16 %v638
        %v767 = vunpack.c.h.b16 %v638
        %v768 = vunpack.c.l.b16 %v639
        %v769 = vunpack.c.h.b16 %v639
        %v770 = vunpack.c.l.b16 %v640
        %v771 = vunpack.c.h.b16 %v640
        %v772 = vunpack.c.l.b16 %v641
        %v773 = vunpack.c.h.b16 %v641
        %v774 = vunpack.c.l.b16 %v642
        %v775 = vunpack.c.l.b16 %v643
        %v776 = vunpack.c.h.b16 %v643
        %v777 = vunpack.c.l.b16 %v644
        %v778 = vunpack.c.h.b16 %v644
        %v779 = vunpack.c.l.b16 %v645
        %v780 = vunpack.c.h.b16 %v645
        %v781 = vunpack.c.l.b16 %v646
        %v782 = vunpack.c.h.b16 %v646
        %v783 = vunpack.c.l.b16 %v647
        %v784 = vunpack.c.l.b16 %v648
        %v785 = vunpack.c.h.b16 %v648
        %v786 = vunpack.c.l.b16 %v649
        %v787 = vunpack.c.h.b16 %v649
        %v788 = vunpack.c.l.b16 %v650
        %v789 = vunpack.c.h.b16 %v650
        %v790 = vunpack.c.l.b16 %v651
        %v791 = vunpack.c.h.b16 %v651
        %v792 = vunpack.c.l.b16 %v652
        %v793 = vpack.c.b16 %v712, %v703
        %v794 = vpack.c.b16 %v713, %v704
        %v795 = vpack.c.b16 %v714, %v705
        %v796 = vpack.c.b16 %v715, %v706
        %v797 = vpack.c.b16 %v716, %v707
        %v798 = vpack.c.b16 %v717, %v708
        %v799 = vpack.c.b16 %v718, %v709
        %v800 = vpack.c.b16 %v719, %v710
        %v801 = vpack.c.b16 %v720, %v711
        %v802 = vpack.c.b16 %v730, %v721
        %v803 = vpack.c.b16 %v731, %v722
        %v804 = vpack.c.b16 %v732, %v723
        %v805 = vpack.c.b16 %v733, %v724
        %v806 = vpack.c.b16 %v734, %v725
        %v807 = vpack.c.b16 %v735, %v726
        %v808 = vpack.c.b16 %v736, %v727
        %v809 = vpack.c.b16 %v737, %v728
        %v810 = vpack.c.b16 %v738, %v729
        %v811 = vpack.c.b16 %v748, %v739
        %v812 = vpack.c.b16 %v749, %v740
        %v813 = vpack.c.b16 %v750, %v741
        %v814 = vpack.c.b16 %v751, %v742
        %v815 = vpack.c.b16 %v752, %v743
        %v816 = vpack.c.b16 %v753, %v744
        %v817 = vpack.c.b16 %v754, %v745
        %v818 = vpack.c.b16 %v755, %v746
        %v819 = vpack.c.b16 %v756, %v747
        %v820 = vpack.c.b16 %v766, %v757
        %v821 = vpack.c.b16 %v767, %v758
        %v822 = vpack.c.b16 %v768, %v759
        %v823 = vpack.c.b16 %v769, %v760
        %v824 = vpack.c.b16 %v770, %v761
        %v825 = vpack.c.b16 %v771, %v762
        %v826 = vpack.c.b16 %v772, %v763
        %v827 = vpack.c.b16 %v773, %v764
        %v828 = vpack.c.b16 %v774, %v765
        %v829 = vpack.c.b16 %v784, %v775
        %v830 = vpack.c.b16 %v785, %v776
        %v831 = vpack.c.b16 %v786, %v777
        %v832 = vpack.c.b16 %v787, %v778
        %v833 = vpack.c.b16 %v788, %v779
        %v834 = vpack.c.b16 %v789, %v780
        %v835 = vpack.c.b16 %v790, %v781
        %v836 = vpack.c.b16 %v791, %v782
        %v837 = vpack.c.b16 %v792, %v783
        %vm874 = vcmask 613376
        %v876 = vsel %vm874, %v602, 0
        %vm878 = vcmask 1044480
        %vm879 = vcmask 1045504
        %v880 = vsel %vm878, 4294967295, 65535
        %v881 = vsel %vm879, %v880, 0
        %v883 = vand.u32 %v829, %v881
        %v886 = vand.u32 %v830, %v881
        %v889 = vand.u32 %v831, %v881
        %v892 = vand.u32 %v832, %v881
        %v895 = vand.u32 %v833, %v881
        %v898 = vand.u32 %v834, %v881
        %v901 = vand.u32 %v835, %v881
        %v904 = vand.u32 %v836, %v881
        %v907 = vand.u32 %v837, %v881
        %909 = vmatpush.bf16.msra.mxu0 0
        %910 = vmatpush.bf16.msra.mxu0 0
        %911 = vmatpush.bf16.msra.mxu0 0
        %912 = vmatpush.bf16.msra.mxu0 %v883
        %913 = vmatpush.bf16.msra.mxu0 %v820
        %914 = vmatpush.bf16.msra.mxu0 %v811
        %915 = vmatpush.bf16.msra.mxu0 %v802
        %916 = vmatpush.bf16.msra.mxu0 %v793
        %917 = vmatmul.bf16.gmra.mxu0 %v876
        %v918 = vpop.f32.mrf.mxu0
        %v919 = vadd.f32 0.0, %v918
        %v920 = vpop.f32.mrf.mxu0
        %921 = vdwg.mxu0
        %922 = vmatpush.bf16.msra.mxu0 0
        %923 = vmatpush.bf16.msra.mxu0 0
        %924 = vmatpush.bf16.msra.mxu0 0
        %925 = vmatpush.bf16.msra.mxu0 %v886
        %926 = vmatpush.bf16.msra.mxu0 %v821
        %927 = vmatpush.bf16.msra.mxu0 %v812
        %928 = vmatpush.bf16.msra.mxu0 %v803
        %929 = vmatpush.bf16.msra.mxu0 %v794
        %930 = vmatmul.bf16.gmra.mxu0 %v876
        %v931 = vpop.f32.mrf.mxu0
        %v932 = vadd.f32 0.0, %v931
        %v933 = vpop.f32.mrf.mxu0
        %934 = vdwg.mxu0
        %935 = vmatpush.bf16.msra.mxu0 0
        %936 = vmatpush.bf16.msra.mxu0 0
        %937 = vmatpush.bf16.msra.mxu0 0
        %938 = vmatpush.bf16.msra.mxu0 %v889
        %939 = vmatpush.bf16.msra.mxu0 %v822
        %940 = vmatpush.bf16.msra.mxu0 %v813
        %941 = vmatpush.bf16.msra.mxu0 %v804
        %942 = vmatpush.bf16.msra.mxu0 %v795
        %943 = vmatmul.bf16.gmra.mxu0 %v876
        %v944 = vpop.f32.mrf.mxu0
        %v945 = vadd.f32 0.0, %v944
        %v946 = vpop.f32.mrf.mxu0
        %947 = vdwg.mxu0
        %948 = vmatpush.bf16.msra.mxu0 0
        %949 = vmatpush.bf16.msra.mxu0 0
        %950 = vmatpush.bf16.msra.mxu0 0
        %951 = vmatpush.bf16.msra.mxu0 %v892
        %952 = vmatpush.bf16.msra.mxu0 %v823
        %953 = vmatpush.bf16.msra.mxu0 %v814
        %954 = vmatpush.bf16.msra.mxu0 %v805
        %955 = vmatpush.bf16.msra.mxu0 %v796
        %956 = vmatmul.bf16.gmra.mxu0 %v876
        %v957 = vpop.f32.mrf.mxu0
        %v958 = vadd.f32 0.0, %v957
        %v959 = vpop.f32.mrf.mxu0
        %960 = vdwg.mxu0
        %961 = vmatpush.bf16.msra.mxu0 0
        %962 = vmatpush.bf16.msra.mxu0 0
        %963 = vmatpush.bf16.msra.mxu0 0
        %964 = vmatpush.bf16.msra.mxu0 %v895
        %965 = vmatpush.bf16.msra.mxu0 %v824
        %966 = vmatpush.bf16.msra.mxu0 %v815
        %967 = vmatpush.bf16.msra.mxu0 %v806
        %968 = vmatpush.bf16.msra.mxu0 %v797
        %969 = vmatmul.bf16.gmra.mxu0 %v876
        %v970 = vpop.f32.mrf.mxu0
        %v971 = vadd.f32 0.0, %v970
        %v972 = vpop.f32.mrf.mxu0
        %973 = vdwg.mxu0
        %974 = vmatpush.bf16.msra.mxu0 0
        %975 = vmatpush.bf16.msra.mxu0 0
        %976 = vmatpush.bf16.msra.mxu0 0
        %977 = vmatpush.bf16.msra.mxu0 %v898
        %978 = vmatpush.bf16.msra.mxu0 %v825
        %979 = vmatpush.bf16.msra.mxu0 %v816
        %980 = vmatpush.bf16.msra.mxu0 %v807
        %981 = vmatpush.bf16.msra.mxu0 %v798
        %982 = vmatmul.bf16.gmra.mxu0 %v876
        %v983 = vpop.f32.mrf.mxu0
        %v984 = vadd.f32 0.0, %v983
        %v985 = vpop.f32.mrf.mxu0
        %986 = vdwg.mxu0
        %987 = vmatpush.bf16.msra.mxu0 0
        %988 = vmatpush.bf16.msra.mxu0 0
        %989 = vmatpush.bf16.msra.mxu0 0
        %990 = vmatpush.bf16.msra.mxu0 %v901
        %991 = vmatpush.bf16.msra.mxu0 %v826
        %992 = vmatpush.bf16.msra.mxu0 %v817
        %993 = vmatpush.bf16.msra.mxu0 %v808
        %994 = vmatpush.bf16.msra.mxu0 %v799
        %995 = vmatmul.bf16.gmra.mxu0 %v876
        %v996 = vpop.f32.mrf.mxu0
        %v997 = vadd.f32 0.0, %v996
        %v998 = vpop.f32.mrf.mxu0
        %999 = vdwg.mxu0
        %1000 = vmatpush.bf16.msra.mxu0 0
        %1001 = vmatpush.bf16.msra.mxu0 0
        %1002 = vmatpush.bf16.msra.mxu0 0
        %1003 = vmatpush.bf16.msra.mxu0 %v904
        %1004 = vmatpush.bf16.msra.mxu0 %v827
        %1005 = vmatpush.bf16.msra.mxu0 %v818
        %1006 = vmatpush.bf16.msra.mxu0 %v809
        %1007 = vmatpush.bf16.msra.mxu0 %v800
        %1008 = vmatmul.bf16.gmra.mxu0 %v876
        %v1009 = vpop.f32.mrf.mxu0
        %v1010 = vadd.f32 0.0, %v1009
        %v1011 = vpop.f32.mrf.mxu0
        %1012 = vdwg.mxu0
        %1013 = vmatpush.bf16.msra.mxu0 0
        %1014 = vmatpush.bf16.msra.mxu0 0
        %1015 = vmatpush.bf16.msra.mxu0 0
        %1016 = vmatpush.bf16.msra.mxu0 %v907
        %1017 = vmatpush.bf16.msra.mxu0 %v828
        %1018 = vmatpush.bf16.msra.mxu0 %v819
        %1019 = vmatpush.bf16.msra.mxu0 %v810
        %1020 = vmatpush.bf16.msra.mxu0 %v801
        %1021 = vmatmul.bf16.gmra.mxu0 %v876
        %v1022 = vpop.f32.mrf.mxu0
        %v1023 = vadd.f32 0.0, %v1022
        %v1024 = vpop.f32.mrf.mxu0
        %1025 = vdwg.mxu0
        %s1026 = scalar_lea.vmem %s573, 360 [#allocation2]
        %v1027 = vld [vmem:[%s1026] sm:$0xff]
        %v1028 = vld [vmem:[%s1026 + $0x8] sm:$0xff]
        %v1029 = vld [vmem:[%s1026 + $0x10] sm:$0xff]
        %v1030 = vld [vmem:[%s1026 + $0x18] sm:$0xff]
        %v1031 = vld [vmem:[%s1026 + $0x20] sm:$0xf]
        %v1032 = vld [vmem:[%s1026 + $0x24] sm:$0xff]
        %v1033 = vld [vmem:[%s1026 + $0x2c] sm:$0xff]
        %v1034 = vld [vmem:[%s1026 + $0x34] sm:$0xff]
        %v1035 = vld [vmem:[%s1026 + $0x3c] sm:$0xff]
        %v1036 = vld [vmem:[%s1026 + $0x44] sm:$0xf]
        %v1037 = vld [vmem:[%s1026 + $0x48] sm:$0xff]
        %v1038 = vld [vmem:[%s1026 + $0x50] sm:$0xff]
        %v1039 = vld [vmem:[%s1026 + $0x58] sm:$0xff]
        %v1040 = vld [vmem:[%s1026 + $0x60] sm:$0xff]
        %v1041 = vld [vmem:[%s1026 + $0x68] sm:$0xf]
        %v1042 = vld [vmem:[%s1026 + $0x6c] sm:$0xff]
        %v1043 = vld [vmem:[%s1026 + $0x74] sm:$0xff]
        %v1044 = vld [vmem:[%s1026 + $0x7c] sm:$0xff]
        %v1045 = vld [vmem:[%s1026 + $0x84] sm:$0xff]
        %v1046 = vld [vmem:[%s1026 + $0x8c] sm:$0xf]
        %v1047 = vld [vmem:[%s1026 + $0x90] sm:$0xff]
        %v1048 = vld [vmem:[%s1026 + $0x98] sm:$0xff]
        %v1049 = vld [vmem:[%s1026 + $0xa0] sm:$0xff]
        %v1050 = vld [vmem:[%s1026 + $0xa8] sm:$0xff]
        %v1051 = vld [vmem:[%s1026 + $0xb0] sm:$0xf]
        %v1052 = vld [vmem:[%s1026 + $0xb4] sm:$0xff]
        %v1053 = vld [vmem:[%s1026 + $0xbc] sm:$0xff]
        %v1054 = vld [vmem:[%s1026 + $0xc4] sm:$0xff]
        %v1055 = vld [vmem:[%s1026 + $0xcc] sm:$0xff]
        %v1056 = vld [vmem:[%s1026 + $0xd4] sm:$0xf]
        %v1057 = vld [vmem:[%s1026 + $0xd8] sm:$0xff]
        %v1058 = vld [vmem:[%s1026 + $0xe0] sm:$0xff]
        %v1059 = vld [vmem:[%s1026 + $0xe8] sm:$0xff]
        %v1060 = vld [vmem:[%s1026 + $0xf0] sm:$0xff]
        %v1061 = vld [vmem:[%s1026 + $0xf8] sm:$0xf]
        %v1062 = vld [vmem:[%s1026 + $0xfc] sm:$0xff]
        %v1063 = vld [vmem:[%s1026 + $0x104] sm:$0xff]
        %v1064 = vld [vmem:[%s1026 + $0x10c] sm:$0xff]
        %v1065 = vld [vmem:[%s1026 + $0x114] sm:$0xff]
        %v1066 = vld [vmem:[%s1026 + $0x11c] sm:$0xf]
        %v1067 = vld [vmem:[%s1026 + $0x120] sm:$0xff]
        %v1068 = vld [vmem:[%s1026 + $0x128] sm:$0xff]
        %v1069 = vld [vmem:[%s1026 + $0x130] sm:$0xff]
        %v1070 = vld [vmem:[%s1026 + $0x138] sm:$0xff]
        %v1071 = vld [vmem:[%s1026 + $0x140] sm:$0xf]
        %v1072 = vld [vmem:[%s1026 + $0x144] sm:$0x33]
        %v1073 = vld [vmem:[%s1026 + $0x14c] sm:$0x33]
        %v1074 = vld [vmem:[%s1026 + $0x154] sm:$0x33]
        %v1075 = vld [vmem:[%s1026 + $0x15c] sm:$0x33]
        %v1076 = vld [vmem:[%s1026 + $0x164] sm:$0x3]
        %v1127 = vunpack.c.l.b16 %v1027
        %v1128 = vunpack.c.h.b16 %v1027
        %v1129 = vunpack.c.l.b16 %v1028
        %v1130 = vunpack.c.h.b16 %v1028
        %v1131 = vunpack.c.l.b16 %v1029
        %v1132 = vunpack.c.h.b16 %v1029
        %v1133 = vunpack.c.l.b16 %v1030
        %v1134 = vunpack.c.h.b16 %v1030
        %v1135 = vunpack.c.l.b16 %v1031
        %v1136 = vunpack.c.l.b16 %v1032
        %v1137 = vunpack.c.h.b16 %v1032
        %v1138 = vunpack.c.l.b16 %v1033
        %v1139 = vunpack.c.h.b16 %v1033
        %v1140 = vunpack.c.l.b16 %v1034
        %v1141 = vunpack.c.h.b16 %v1034
        %v1142 = vunpack.c.l.b16 %v1035
        %v1143 = vunpack.c.h.b16 %v1035
        %v1144 = vunpack.c.l.b16 %v1036
        %v1145 = vunpack.c.l.b16 %v1037
        %v1146 = vunpack.c.h.b16 %v1037
        %v1147 = vunpack.c.l.b16 %v1038
        %v1148 = vunpack.c.h.b16 %v1038
        %v1149 = vunpack.c.l.b16 %v1039
        %v1150 = vunpack.c.h.b16 %v1039
        %v1151 = vunpack.c.l.b16 %v1040
        %v1152 = vunpack.c.h.b16 %v1040
        %v1153 = vunpack.c.l.b16 %v1041
        %v1154 = vunpack.c.l.b16 %v1042
        %v1155 = vunpack.c.h.b16 %v1042
        %v1156 = vunpack.c.l.b16 %v1043
        %v1157 = vunpack.c.h.b16 %v1043
        %v1158 = vunpack.c.l.b16 %v1044
        %v1159 = vunpack.c.h.b16 %v1044
        %v1160 = vunpack.c.l.b16 %v1045
        %v1161 = vunpack.c.h.b16 %v1045
        %v1162 = vunpack.c.l.b16 %v1046
        %v1163 = vunpack.c.l.b16 %v1047
        %v1164 = vunpack.c.h.b16 %v1047
        %v1165 = vunpack.c.l.b16 %v1048
        %v1166 = vunpack.c.h.b16 %v1048
        %v1167 = vunpack.c.l.b16 %v1049
        %v1168 = vunpack.c.h.b16 %v1049
        %v1169 = vunpack.c.l.b16 %v1050
        %v1170 = vunpack.c.h.b16 %v1050
        %v1171 = vunpack.c.l.b16 %v1051
        %v1172 = vunpack.c.l.b16 %v1052
        %v1173 = vunpack.c.h.b16 %v1052
        %v1174 = vunpack.c.l.b16 %v1053
        %v1175 = vunpack.c.h.b16 %v1053
        %v1176 = vunpack.c.l.b16 %v1054
        %v1177 = vunpack.c.h.b16 %v1054
        %v1178 = vunpack.c.l.b16 %v1055
        %v1179 = vunpack.c.h.b16 %v1055
        %v1180 = vunpack.c.l.b16 %v1056
        %v1181 = vunpack.c.l.b16 %v1057
        %v1182 = vunpack.c.h.b16 %v1057
        %v1183 = vunpack.c.l.b16 %v1058
        %v1184 = vunpack.c.h.b16 %v1058
        %v1185 = vunpack.c.l.b16 %v1059
        %v1186 = vunpack.c.h.b16 %v1059
        %v1187 = vunpack.c.l.b16 %v1060
        %v1188 = vunpack.c.h.b16 %v1060
        %v1189 = vunpack.c.l.b16 %v1061
        %v1190 = vunpack.c.l.b16 %v1062
        %v1191 = vunpack.c.h.b16 %v1062
        %v1192 = vunpack.c.l.b16 %v1063
        %v1193 = vunpack.c.h.b16 %v1063
        %v1194 = vunpack.c.l.b16 %v1064
        %v1195 = vunpack.c.h.b16 %v1064
        %v1196 = vunpack.c.l.b16 %v1065
        %v1197 = vunpack.c.h.b16 %v1065
        %v1198 = vunpack.c.l.b16 %v1066
        %v1199 = vunpack.c.l.b16 %v1067
        %v1200 = vunpack.c.h.b16 %v1067
        %v1201 = vunpack.c.l.b16 %v1068
        %v1202 = vunpack.c.h.b16 %v1068
        %v1203 = vunpack.c.l.b16 %v1069
        %v1204 = vunpack.c.h.b16 %v1069
        %v1205 = vunpack.c.l.b16 %v1070
        %v1206 = vunpack.c.h.b16 %v1070
        %v1207 = vunpack.c.l.b16 %v1071
        %v1208 = vunpack.c.l.b16 %v1072
        %v1209 = vunpack.c.h.b16 %v1072
        %v1210 = vunpack.c.l.b16 %v1073
        %v1211 = vunpack.c.h.b16 %v1073
        %v1212 = vunpack.c.l.b16 %v1074
        %v1213 = vunpack.c.h.b16 %v1074
        %v1214 = vunpack.c.l.b16 %v1075
        %v1215 = vunpack.c.h.b16 %v1075
        %v1216 = vunpack.c.l.b16 %v1076
        %v1217 = vpack.c.b16 %v1136, %v1127
        %v1218 = vpack.c.b16 %v1137, %v1128
        %v1219 = vpack.c.b16 %v1138, %v1129
        %v1220 = vpack.c.b16 %v1139, %v1130
        %v1221 = vpack.c.b16 %v1140, %v1131
        %v1222 = vpack.c.b16 %v1141, %v1132
        %v1223 = vpack.c.b16 %v1142, %v1133
        %v1224 = vpack.c.b16 %v1143, %v1134
        %v1225 = vpack.c.b16 %v1144, %v1135
        %v1226 = vpack.c.b16 %v1154, %v1145
        %v1227 = vpack.c.b16 %v1155, %v1146
        %v1228 = vpack.c.b16 %v1156, %v1147
        %v1229 = vpack.c.b16 %v1157, %v1148
        %v1230 = vpack.c.b16 %v1158, %v1149
        %v1231 = vpack.c.b16 %v1159, %v1150
        %v1232 = vpack.c.b16 %v1160, %v1151
        %v1233 = vpack.c.b16 %v1161, %v1152
        %v1234 = vpack.c.b16 %v1162, %v1153
        %v1235 = vpack.c.b16 %v1172, %v1163
        %v1236 = vpack.c.b16 %v1173, %v1164
        %v1237 = vpack.c.b16 %v1174, %v1165
        %v1238 = vpack.c.b16 %v1175, %v1166
        %v1239 = vpack.c.b16 %v1176, %v1167
        %v1240 = vpack.c.b16 %v1177, %v1168
        %v1241 = vpack.c.b16 %v1178, %v1169
        %v1242 = vpack.c.b16 %v1179, %v1170
        %v1243 = vpack.c.b16 %v1180, %v1171
        %v1244 = vpack.c.b16 %v1190, %v1181
        %v1245 = vpack.c.b16 %v1191, %v1182
        %v1246 = vpack.c.b16 %v1192, %v1183
        %v1247 = vpack.c.b16 %v1193, %v1184
        %v1248 = vpack.c.b16 %v1194, %v1185
        %v1249 = vpack.c.b16 %v1195, %v1186
        %v1250 = vpack.c.b16 %v1196, %v1187
        %v1251 = vpack.c.b16 %v1197, %v1188
        %v1252 = vpack.c.b16 %v1198, %v1189
        %v1253 = vpack.c.b16 %v1208, %v1199
        %v1254 = vpack.c.b16 %v1209, %v1200
        %v1255 = vpack.c.b16 %v1210, %v1201
        %v1256 = vpack.c.b16 %v1211, %v1202
        %v1257 = vpack.c.b16 %v1212, %v1203
        %v1258 = vpack.c.b16 %v1213, %v1204
        %v1259 = vpack.c.b16 %v1214, %v1205
        %v1260 = vpack.c.b16 %v1215, %v1206
        %v1261 = vpack.c.b16 %v1216, %v1207
        %v1299 = vand.u32 %v1253, %v881
        %v1302 = vand.u32 %v1254, %v881
        %v1305 = vand.u32 %v1255, %v881
        %v1308 = vand.u32 %v1256, %v881
        %v1311 = vand.u32 %v1257, %v881
        %v1314 = vand.u32 %v1258, %v881
        %v1317 = vand.u32 %v1259, %v881
        %v1320 = vand.u32 %v1260, %v881
        %v1323 = vand.u32 %v1261, %v881
        %1325 = vmatpush.bf16.msra.mxu0 0
        %1326 = vmatpush.bf16.msra.mxu0 0
        %1327 = vmatpush.bf16.msra.mxu0 0
        %1328 = vmatpush.bf16.msra.mxu0 %v1299
        %1329 = vmatpush.bf16.msra.mxu0 %v1244
        %1330 = vmatpush.bf16.msra.mxu0 %v1235
        %1331 = vmatpush.bf16.msra.mxu0 %v1226
        %1332 = vmatpush.bf16.msra.mxu0 %v1217
        %1333 = vmatmul.bf16.gmra.mxu0 %v876
        %v1334 = vpop.f32.mrf.mxu0
        %v1335 = vadd.f32 0.0, %v1334
        %v1336 = vpop.f32.mrf.mxu0
        %1337 = vdwg.mxu0
        %1338 = vmatpush.bf16.msra.mxu0 0
        %1339 = vmatpush.bf16.msra.mxu0 0
        %1340 = vmatpush.bf16.msra.mxu0 0
        %1341 = vmatpush.bf16.msra.mxu0 %v1302
        %1342 = vmatpush.bf16.msra.mxu0 %v1245
        %1343 = vmatpush.bf16.msra.mxu0 %v1236
        %1344 = vmatpush.bf16.msra.mxu0 %v1227
        %1345 = vmatpush.bf16.msra.mxu0 %v1218
        %1346 = vmatmul.bf16.gmra.mxu0 %v876
        %v1347 = vpop.f32.mrf.mxu0
        %v1348 = vadd.f32 0.0, %v1347
        %v1349 = vpop.f32.mrf.mxu0
        %1350 = vdwg.mxu0
        %1351 = vmatpush.bf16.msra.mxu0 0
        %1352 = vmatpush.bf16.msra.mxu0 0
        %1353 = vmatpush.bf16.msra.mxu0 0
        %1354 = vmatpush.bf16.msra.mxu0 %v1305
        %1355 = vmatpush.bf16.msra.mxu0 %v1246
        %1356 = vmatpush.bf16.msra.mxu0 %v1237
        %1357 = vmatpush.bf16.msra.mxu0 %v1228
        %1358 = vmatpush.bf16.msra.mxu0 %v1219
        %1359 = vmatmul.bf16.gmra.mxu0 %v876
        %v1360 = vpop.f32.mrf.mxu0
        %v1361 = vadd.f32 0.0, %v1360
        %v1362 = vpop.f32.mrf.mxu0
        %1363 = vdwg.mxu0
        %1364 = vmatpush.bf16.msra.mxu0 0
        %1365 = vmatpush.bf16.msra.mxu0 0
        %1366 = vmatpush.bf16.msra.mxu0 0
        %1367 = vmatpush.bf16.msra.mxu0 %v1308
        %1368 = vmatpush.bf16.msra.mxu0 %v1247
        %1369 = vmatpush.bf16.msra.mxu0 %v1238
        %1370 = vmatpush.bf16.msra.mxu0 %v1229
        %1371 = vmatpush.bf16.msra.mxu0 %v1220
        %1372 = vmatmul.bf16.gmra.mxu0 %v876
        %v1373 = vpop.f32.mrf.mxu0
        %v1374 = vadd.f32 0.0, %v1373
        %v1375 = vpop.f32.mrf.mxu0
        %1376 = vdwg.mxu0
        %1377 = vmatpush.bf16.msra.mxu0 0
        %1378 = vmatpush.bf16.msra.mxu0 0
        %1379 = vmatpush.bf16.msra.mxu0 0
        %1380 = vmatpush.bf16.msra.mxu0 %v1311
        %1381 = vmatpush.bf16.msra.mxu0 %v1248
        %1382 = vmatpush.bf16.msra.mxu0 %v1239
        %1383 = vmatpush.bf16.msra.mxu0 %v1230
        %1384 = vmatpush.bf16.msra.mxu0 %v1221
        %1385 = vmatmul.bf16.gmra.mxu0 %v876
        %v1386 = vpop.f32.mrf.mxu0
        %v1387 = vadd.f32 0.0, %v1386
        %v1388 = vpop.f32.mrf.mxu0
        %1389 = vdwg.mxu0
        %1390 = vmatpush.bf16.msra.mxu0 0
        %1391 = vmatpush.bf16.msra.mxu0 0
        %1392 = vmatpush.bf16.msra.mxu0 0
        %1393 = vmatpush.bf16.msra.mxu0 %v1314
        %1394 = vmatpush.bf16.msra.mxu0 %v1249
        %1395 = vmatpush.bf16.msra.mxu0 %v1240
        %1396 = vmatpush.bf16.msra.mxu0 %v1231
        %1397 = vmatpush.bf16.msra.mxu0 %v1222
        %1398 = vmatmul.bf16.gmra.mxu0 %v876
        %v1399 = vpop.f32.mrf.mxu0
        %v1400 = vadd.f32 0.0, %v1399
        %v1401 = vpop.f32.mrf.mxu0
        %1402 = vdwg.mxu0
        %1403 = vmatpush.bf16.msra.mxu0 0
        %1404 = vmatpush.bf16.msra.mxu0 0
        %1405 = vmatpush.bf16.msra.mxu0 0
        %1406 = vmatpush.bf16.msra.mxu0 %v1317
        %1407 = vmatpush.bf16.msra.mxu0 %v1250
        %1408 = vmatpush.bf16.msra.mxu0 %v1241
        %1409 = vmatpush.bf16.msra.mxu0 %v1232
        %1410 = vmatpush.bf16.msra.mxu0 %v1223
        %1411 = vmatmul.bf16.gmra.mxu0 %v876
        %v1412 = vpop.f32.mrf.mxu0
        %v1413 = vadd.f32 0.0, %v1412
        %v1414 = vpop.f32.mrf.mxu0
        %1415 = vdwg.mxu0
        %1416 = vmatpush.bf16.msra.mxu0 0
        %1417 = vmatpush.bf16.msra.mxu0 0
        %1418 = vmatpush.bf16.msra.mxu0 0
        %1419 = vmatpush.bf16.msra.mxu0 %v1320
        %1420 = vmatpush.bf16.msra.mxu0 %v1251
        %1421 = vmatpush.bf16.msra.mxu0 %v1242
        %1422 = vmatpush.bf16.msra.mxu0 %v1233
        %1423 = vmatpush.bf16.msra.mxu0 %v1224
        %1424 = vmatmul.bf16.gmra.mxu0 %v876
        %v1425 = vpop.f32.mrf.mxu0
        %v1426 = vadd.f32 0.0, %v1425
        %v1427 = vpop.f32.mrf.mxu0
        %1428 = vdwg.mxu0
        %1429 = vmatpush.bf16.msra.mxu0 0
        %1430 = vmatpush.bf16.msra.mxu0 0
        %1431 = vmatpush.bf16.msra.mxu0 0
        %1432 = vmatpush.bf16.msra.mxu0 %v1323
        %1433 = vmatpush.bf16.msra.mxu0 %v1252
        %1434 = vmatpush.bf16.msra.mxu0 %v1243
        %1435 = vmatpush.bf16.msra.mxu0 %v1234
        %1436 = vmatpush.bf16.msra.mxu0 %v1225
        %1437 = vmatmul.bf16.gmra.mxu0 %v876
        %v1438 = vpop.f32.mrf.mxu0
        %v1439 = vadd.f32 0.0, %v1438
        %v1440 = vpop.f32.mrf.mxu0
        %1441 = vdwg.mxu0
        %v1442 = vmax.f32 %v919, %v1335
        %v1443 = vmax.f32 %v932, %v1348
        %v1444 = vmax.f32 %v945, %v1361
        %v1445 = vmax.f32 %v958, %v1374
        %v1446 = vmax.f32 %v971, %v1387
        %v1447 = vmax.f32 %v984, %v1400
        %v1448 = vmax.f32 %v997, %v1413
        %v1449 = vmax.f32 %v1010, %v1426
        %v1450 = vmax.f32 %v1023, %v1439
        %s1451 = scalar_lea.vmem %s573, 720 [#allocation2]
        %v1452 = vld [vmem:[%s1451] sm:$0xff]
        %v1453 = vld [vmem:[%s1451 + $0x8] sm:$0xff]
        %v1454 = vld [vmem:[%s1451 + $0x10] sm:$0xff]
        %v1455 = vld [vmem:[%s1451 + $0x18] sm:$0xff]
        %v1456 = vld [vmem:[%s1451 + $0x20] sm:$0xf]
        %v1457 = vld [vmem:[%s1451 + $0x24] sm:$0xff]
        %v1458 = vld [vmem:[%s1451 + $0x2c] sm:$0xff]
        %v1459 = vld [vmem:[%s1451 + $0x34] sm:$0xff]
        %v1460 = vld [vmem:[%s1451 + $0x3c] sm:$0xff]
        %v1461 = vld [vmem:[%s1451 + $0x44] sm:$0xf]
        %v1462 = vld [vmem:[%s1451 + $0x48] sm:$0xff]
        %v1463 = vld [vmem:[%s1451 + $0x50] sm:$0xff]
        %v1464 = vld [vmem:[%s1451 + $0x58] sm:$0xff]
        %v1465 = vld [vmem:[%s1451 + $0x60] sm:$0xff]
        %v1466 = vld [vmem:[%s1451 + $0x68] sm:$0xf]
        %v1467 = vld [vmem:[%s1451 + $0x6c] sm:$0xff]
        %v1468 = vld [vmem:[%s1451 + $0x74] sm:$0xff]
        %v1469 = vld [vmem:[%s1451 + $0x7c] sm:$0xff]
        %v1470 = vld [vmem:[%s1451 + $0x84] sm:$0xff]
        %v1471 = vld [vmem:[%s1451 + $0x8c] sm:$0xf]
        %v1472 = vld [vmem:[%s1451 + $0x90] sm:$0xff]
        %v1473 = vld [vmem:[%s1451 + $0x98] sm:$0xff]
        %v1474 = vld [vmem:[%s1451 + $0xa0] sm:$0xff]
        %v1475 = vld [vmem:[%s1451 + $0xa8] sm:$0xff]
        %v1476 = vld [vmem:[%s1451 + $0xb0] sm:$0xf]
        %v1477 = vld [vmem:[%s1451 + $0xb4] sm:$0xff]
        %v1478 = vld [vmem:[%s1451 + $0xbc] sm:$0xff]
        %v1479 = vld [vmem:[%s1451 + $0xc4] sm:$0xff]
        %v1480 = vld [vmem:[%s1451 + $0xcc] sm:$0xff]
        %v1481 = vld [vmem:[%s1451 + $0xd4] sm:$0xf]
        %v1482 = vld [vmem:[%s1451 + $0xd8] sm:$0xff]
        %v1483 = vld [vmem:[%s1451 + $0xe0] sm:$0xff]
        %v1484 = vld [vmem:[%s1451 + $0xe8] sm:$0xff]
        %v1485 = vld [vmem:[%s1451 + $0xf0] sm:$0xff]
        %v1486 = vld [vmem:[%s1451 + $0xf8] sm:$0xf]
        %v1487 = vld [vmem:[%s1451 + $0xfc] sm:$0xff]
        %v1488 = vld [vmem:[%s1451 + $0x104] sm:$0xff]
        %v1489 = vld [vmem:[%s1451 + $0x10c] sm:$0xff]
        %v1490 = vld [vmem:[%s1451 + $0x114] sm:$0xff]
        %v1491 = vld [vmem:[%s1451 + $0x11c] sm:$0xf]
        %v1492 = vld [vmem:[%s1451 + $0x120] sm:$0xff]
        %v1493 = vld [vmem:[%s1451 + $0x128] sm:$0xff]
        %v1494 = vld [vmem:[%s1451 + $0x130] sm:$0xff]
        %v1495 = vld [vmem:[%s1451 + $0x138] sm:$0xff]
        %v1496 = vld [vmem:[%s1451 + $0x140] sm:$0xf]
        %v1497 = vld [vmem:[%s1451 + $0x144] sm:$0x33]
        %v1498 = vld [vmem:[%s1451 + $0x14c] sm:$0x33]
        %v1499 = vld [vmem:[%s1451 + $0x154] sm:$0x33]
        %v1500 = vld [vmem:[%s1451 + $0x15c] sm:$0x33]
        %v1501 = vld [vmem:[%s1451 + $0x164] sm:$0x3]
        %v1552 = vunpack.c.l.b16 %v1452
        %v1553 = vunpack.c.h.b16 %v1452
        %v1554 = vunpack.c.l.b16 %v1453
        %v1555 = vunpack.c.h.b16 %v1453
        %v1556 = vunpack.c.l.b16 %v1454
        %v1557 = vunpack.c.h.b16 %v1454
        %v1558 = vunpack.c.l.b16 %v1455
        %v1559 = vunpack.c.h.b16 %v1455
        %v1560 = vunpack.c.l.b16 %v1456
        %v1561 = vunpack.c.l.b16 %v1457
        %v1562 = vunpack.c.h.b16 %v1457
        %v1563 = vunpack.c.l.b16 %v1458
        %v1564 = vunpack.c.h.b16 %v1458
        %v1565 = vunpack.c.l.b16 %v1459
        %v1566 = vunpack.c.h.b16 %v1459
        %v1567 = vunpack.c.l.b16 %v1460
        %v1568 = vunpack.c.h.b16 %v1460
        %v1569 = vunpack.c.l.b16 %v1461
        %v1570 = vunpack.c.l.b16 %v1462
        %v1571 = vunpack.c.h.b16 %v1462
        %v1572 = vunpack.c.l.b16 %v1463
        %v1573 = vunpack.c.h.b16 %v1463
        %v1574 = vunpack.c.l.b16 %v1464
        %v1575 = vunpack.c.h.b16 %v1464
        %v1576 = vunpack.c.l.b16 %v1465
        %v1577 = vunpack.c.h.b16 %v1465
        %v1578 = vunpack.c.l.b16 %v1466
        %v1579 = vunpack.c.l.b16 %v1467
        %v1580 = vunpack.c.h.b16 %v1467
        %v1581 = vunpack.c.l.b16 %v1468
        %v1582 = vunpack.c.h.b16 %v1468
        %v1583 = vunpack.c.l.b16 %v1469
        %v1584 = vunpack.c.h.b16 %v1469
        %v1585 = vunpack.c.l.b16 %v1470
        %v1586 = vunpack.c.h.b16 %v1470
        %v1587 = vunpack.c.l.b16 %v1471
        %v1588 = vunpack.c.l.b16 %v1472
        %v1589 = vunpack.c.h.b16 %v1472
        %v1590 = vunpack.c.l.b16 %v1473
        %v1591 = vunpack.c.h.b16 %v1473
        %v1592 = vunpack.c.l.b16 %v1474
        %v1593 = vunpack.c.h.b16 %v1474
        %v1594 = vunpack.c.l.b16 %v1475
        %v1595 = vunpack.c.h.b16 %v1475
        %v1596 = vunpack.c.l.b16 %v1476
        %v1597 = vunpack.c.l.b16 %v1477
        %v1598 = vunpack.c.h.b16 %v1477
        %v1599 = vunpack.c.l.b16 %v1478
        %v1600 = vunpack.c.h.b16 %v1478
        %v1601 = vunpack.c.l.b16 %v1479
        %v1602 = vunpack.c.h.b16 %v1479
        %v1603 = vunpack.c.l.b16 %v1480
        %v1604 = vunpack.c.h.b16 %v1480
        %v1605 = vunpack.c.l.b16 %v1481
        %v1606 = vunpack.c.l.b16 %v1482
        %v1607 = vunpack.c.h.b16 %v1482
        %v1608 = vunpack.c.l.b16 %v1483
        %v1609 = vunpack.c.h.b16 %v1483
        %v1610 = vunpack.c.l.b16 %v1484
        %v1611 = vunpack.c.h.b16 %v1484
        %v1612 = vunpack.c.l.b16 %v1485
        %v1613 = vunpack.c.h.b16 %v1485
        %v1614 = vunpack.c.l.b16 %v1486
        %v1615 = vunpack.c.l.b16 %v1487
        %v1616 = vunpack.c.h.b16 %v1487
        %v1617 = vunpack.c.l.b16 %v1488
        %v1618 = vunpack.c.h.b16 %v1488
        %v1619 = vunpack.c.l.b16 %v1489
        %v1620 = vunpack.c.h.b16 %v1489
        %v1621 = vunpack.c.l.b16 %v1490
        %v1622 = vunpack.c.h.b16 %v1490
        %v1623 = vunpack.c.l.b16 %v1491
        %v1624 = vunpack.c.l.b16 %v1492
        %v1625 = vunpack.c.h.b16 %v1492
        %v1626 = vunpack.c.l.b16 %v1493
        %v1627 = vunpack.c.h.b16 %v1493
        %v1628 = vunpack.c.l.b16 %v1494
        %v1629 = vunpack.c.h.b16 %v1494
        %v1630 = vunpack.c.l.b16 %v1495
        %v1631 = vunpack.c.h.b16 %v1495
        %v1632 = vunpack.c.l.b16 %v1496
        %v1633 = vunpack.c.l.b16 %v1497
        %v1634 = vunpack.c.h.b16 %v1497
        %v1635 = vunpack.c.l.b16 %v1498
        %v1636 = vunpack.c.h.b16 %v1498
        %v1637 = vunpack.c.l.b16 %v1499
        %v1638 = vunpack.c.h.b16 %v1499
        %v1639 = vunpack.c.l.b16 %v1500
        %v1640 = vunpack.c.h.b16 %v1500
        %v1641 = vunpack.c.l.b16 %v1501
        %v1642 = vpack.c.b16 %v1561, %v1552
        %v1643 = vpack.c.b16 %v1562, %v1553
        %v1644 = vpack.c.b16 %v1563, %v1554
        %v1645 = vpack.c.b16 %v1564, %v1555
        %v1646 = vpack.c.b16 %v1565, %v1556
        %v1647 = vpack.c.b16 %v1566, %v1557
        %v1648 = vpack.c.b16 %v1567, %v1558
        %v1649 = vpack.c.b16 %v1568, %v1559
        %v1650 = vpack.c.b16 %v1569, %v1560
        %v1651 = vpack.c.b16 %v1579, %v1570
        %v1652 = vpack.c.b16 %v1580, %v1571
        %v1653 = vpack.c.b16 %v1581, %v1572
        %v1654 = vpack.c.b16 %v1582, %v1573
        %v1655 = vpack.c.b16 %v1583, %v1574
        %v1656 = vpack.c.b16 %v1584, %v1575
        %v1657 = vpack.c.b16 %v1585, %v1576
        %v1658 = vpack.c.b16 %v1586, %v1577
        %v1659 = vpack.c.b16 %v1587, %v1578
        %v1660 = vpack.c.b16 %v1597, %v1588
        %v1661 = vpack.c.b16 %v1598, %v1589
        %v1662 = vpack.c.b16 %v1599, %v1590
        %v1663 = vpack.c.b16 %v1600, %v1591
        %v1664 = vpack.c.b16 %v1601, %v1592
        %v1665 = vpack.c.b16 %v1602, %v1593
        %v1666 = vpack.c.b16 %v1603, %v1594
        %v1667 = vpack.c.b16 %v1604, %v1595
        %v1668 = vpack.c.b16 %v1605, %v1596
        %v1669 = vpack.c.b16 %v1615, %v1606
        %v1670 = vpack.c.b16 %v1616, %v1607
        %v1671 = vpack.c.b16 %v1617, %v1608
        %v1672 = vpack.c.b16 %v1618, %v1609
        %v1673 = vpack.c.b16 %v1619, %v1610
        %v1674 = vpack.c.b16 %v1620, %v1611
        %v1675 = vpack.c.b16 %v1621, %v1612
        %v1676 = vpack.c.b16 %v1622, %v1613
        %v1677 = vpack.c.b16 %v1623, %v1614
        %v1678 = vpack.c.b16 %v1633, %v1624
        %v1679 = vpack.c.b16 %v1634, %v1625
        %v1680 = vpack.c.b16 %v1635, %v1626
        %v1681 = vpack.c.b16 %v1636, %v1627
        %v1682 = vpack.c.b16 %v1637, %v1628
        %v1683 = vpack.c.b16 %v1638, %v1629
        %v1684 = vpack.c.b16 %v1639, %v1630
        %v1685 = vpack.c.b16 %v1640, %v1631
        %v1686 = vpack.c.b16 %v1641, %v1632
        %v1724 = vand.u32 %v1678, %v881
        %v1727 = vand.u32 %v1679, %v881
        %v1730 = vand.u32 %v1680, %v881
        %v1733 = vand.u32 %v1681, %v881
        %v1736 = vand.u32 %v1682, %v881
        %v1739 = vand.u32 %v1683, %v881
        %v1742 = vand.u32 %v1684, %v881
        %v1745 = vand.u32 %v1685, %v881
        %v1748 = vand.u32 %v1686, %v881
        %1750 = vmatpush.bf16.msra.mxu0 0
        %1751 = vmatpush.bf16.msra.mxu0 0
        %1752 = vmatpush.bf16.msra.mxu0 0
        %1753 = vmatpush.bf16.msra.mxu0 %v1724
        %1754 = vmatpush.bf16.msra.mxu0 %v1669
        %1755 = vmatpush.bf16.msra.mxu0 %v1660
        %1756 = vmatpush.bf16.msra.mxu0 %v1651
        %1757 = vmatpush.bf16.msra.mxu0 %v1642
        %1758 = vmatmul.bf16.gmra.mxu0 %v876
        %v1759 = vpop.f32.mrf.mxu0
        %v1760 = vadd.f32 0.0, %v1759
        %v1761 = vpop.f32.mrf.mxu0
        %1762 = vdwg.mxu0
        %1763 = vmatpush.bf16.msra.mxu0 0
        %1764 = vmatpush.bf16.msra.mxu0 0
        %1765 = vmatpush.bf16.msra.mxu0 0
        %1766 = vmatpush.bf16.msra.mxu0 %v1727
        %1767 = vmatpush.bf16.msra.mxu0 %v1670
        %1768 = vmatpush.bf16.msra.mxu0 %v1661
        %1769 = vmatpush.bf16.msra.mxu0 %v1652
        %1770 = vmatpush.bf16.msra.mxu0 %v1643
        %1771 = vmatmul.bf16.gmra.mxu0 %v876
        %v1772 = vpop.f32.mrf.mxu0
        %v1773 = vadd.f32 0.0, %v1772
        %v1774 = vpop.f32.mrf.mxu0
        %1775 = vdwg.mxu0
        %1776 = vmatpush.bf16.msra.mxu0 0
        %1777 = vmatpush.bf16.msra.mxu0 0
        %1778 = vmatpush.bf16.msra.mxu0 0
        %1779 = vmatpush.bf16.msra.mxu0 %v1730
        %1780 = vmatpush.bf16.msra.mxu0 %v1671
        %1781 = vmatpush.bf16.msra.mxu0 %v1662
        %1782 = vmatpush.bf16.msra.mxu0 %v1653
        %1783 = vmatpush.bf16.msra.mxu0 %v1644
        %1784 = vmatmul.bf16.gmra.mxu0 %v876
        %v1785 = vpop.f32.mrf.mxu0
        %v1786 = vadd.f32 0.0, %v1785
        %v1787 = vpop.f32.mrf.mxu0
        %1788 = vdwg.mxu0
        %1789 = vmatpush.bf16.msra.mxu0 0
        %1790 = vmatpush.bf16.msra.mxu0 0
        %1791 = vmatpush.bf16.msra.mxu0 0
        %1792 = vmatpush.bf16.msra.mxu0 %v1733
        %1793 = vmatpush.bf16.msra.mxu0 %v1672
        %1794 = vmatpush.bf16.msra.mxu0 %v1663
        %1795 = vmatpush.bf16.msra.mxu0 %v1654
        %1796 = vmatpush.bf16.msra.mxu0 %v1645
        %1797 = vmatmul.bf16.gmra.mxu0 %v876
        %v1798 = vpop.f32.mrf.mxu0
        %v1799 = vadd.f32 0.0, %v1798
        %v1800 = vpop.f32.mrf.mxu0
        %1801 = vdwg.mxu0
        %1802 = vmatpush.bf16.msra.mxu0 0
        %1803 = vmatpush.bf16.msra.mxu0 0
        %1804 = vmatpush.bf16.msra.mxu0 0
        %1805 = vmatpush.bf16.msra.mxu0 %v1736
        %1806 = vmatpush.bf16.msra.mxu0 %v1673
        %1807 = vmatpush.bf16.msra.mxu0 %v1664
        %1808 = vmatpush.bf16.msra.mxu0 %v1655
        %1809 = vmatpush.bf16.msra.mxu0 %v1646
        %1810 = vmatmul.bf16.gmra.mxu0 %v876
        %v1811 = vpop.f32.mrf.mxu0
        %v1812 = vadd.f32 0.0, %v1811
        %v1813 = vpop.f32.mrf.mxu0
        %1814 = vdwg.mxu0
        %1815 = vmatpush.bf16.msra.mxu0 0
        %1816 = vmatpush.bf16.msra.mxu0 0
        %1817 = vmatpush.bf16.msra.mxu0 0
        %1818 = vmatpush.bf16.msra.mxu0 %v1739
        %1819 = vmatpush.bf16.msra.mxu0 %v1674
        %1820 = vmatpush.bf16.msra.mxu0 %v1665
        %1821 = vmatpush.bf16.msra.mxu0 %v1656
        %1822 = vmatpush.bf16.msra.mxu0 %v1647
        %1823 = vmatmul.bf16.gmra.mxu0 %v876
        %v1824 = vpop.f32.mrf.mxu0
        %v1825 = vadd.f32 0.0, %v1824
        %v1826 = vpop.f32.mrf.mxu0
        %1827 = vdwg.mxu0
        %1828 = vmatpush.bf16.msra.mxu0 0
        %1829 = vmatpush.bf16.msra.mxu0 0
        %1830 = vmatpush.bf16.msra.mxu0 0
        %1831 = vmatpush.bf16.msra.mxu0 %v1742
        %1832 = vmatpush.bf16.msra.mxu0 %v1675
        %1833 = vmatpush.bf16.msra.mxu0 %v1666
        %1834 = vmatpush.bf16.msra.mxu0 %v1657
        %1835 = vmatpush.bf16.msra.mxu0 %v1648
        %1836 = vmatmul.bf16.gmra.mxu0 %v876
        %v1837 = vpop.f32.mrf.mxu0
        %v1838 = vadd.f32 0.0, %v1837
        %v1839 = vpop.f32.mrf.mxu0
        %1840 = vdwg.mxu0
        %1841 = vmatpush.bf16.msra.mxu0 0
        %1842 = vmatpush.bf16.msra.mxu0 0
        %1843 = vmatpush.bf16.msra.mxu0 0
        %1844 = vmatpush.bf16.msra.mxu0 %v1745
        %1845 = vmatpush.bf16.msra.mxu0 %v1676
        %1846 = vmatpush.bf16.msra.mxu0 %v1667
        %1847 = vmatpush.bf16.msra.mxu0 %v1658
        %1848 = vmatpush.bf16.msra.mxu0 %v1649
        %1849 = vmatmul.bf16.gmra.mxu0 %v876
        %v1850 = vpop.f32.mrf.mxu0
        %v1851 = vadd.f32 0.0, %v1850
        %v1852 = vpop.f32.mrf.mxu0
        %1853 = vdwg.mxu0
        %1854 = vmatpush.bf16.msra.mxu0 0
        %1855 = vmatpush.bf16.msra.mxu0 0
        %1856 = vmatpush.bf16.msra.mxu0 0
        %1857 = vmatpush.bf16.msra.mxu0 %v1748
        %1858 = vmatpush.bf16.msra.mxu0 %v1677
        %1859 = vmatpush.bf16.msra.mxu0 %v1668
        %1860 = vmatpush.bf16.msra.mxu0 %v1659
        %1861 = vmatpush.bf16.msra.mxu0 %v1650
        %1862 = vmatmul.bf16.gmra.mxu0 %v876
        %v1863 = vpop.f32.mrf.mxu0
        %v1864 = vadd.f32 0.0, %v1863
        %v1865 = vpop.f32.mrf.mxu0
        %1866 = vdwg.mxu0
        %s1867 = scalar_lea.vmem %s573, 1080 [#allocation2]
        %v1868 = vld [vmem:[%s1867] sm:$0xff]
        %v1869 = vld [vmem:[%s1867 + $0x8] sm:$0xff]
        %v1870 = vld [vmem:[%s1867 + $0x10] sm:$0xff]
        %v1871 = vld [vmem:[%s1867 + $0x18] sm:$0xff]
        %v1872 = vld [vmem:[%s1867 + $0x20] sm:$0xf]
        %v1873 = vld [vmem:[%s1867 + $0x24] sm:$0xff]
        %v1874 = vld [vmem:[%s1867 + $0x2c] sm:$0xff]
        %v1875 = vld [vmem:[%s1867 + $0x34] sm:$0xff]
        %v1876 = vld [vmem:[%s1867 + $0x3c] sm:$0xff]
        %v1877 = vld [vmem:[%s1867 + $0x44] sm:$0xf]
        %v1878 = vld [vmem:[%s1867 + $0x48] sm:$0xff]
        %v1879 = vld [vmem:[%s1867 + $0x50] sm:$0xff]
        %v1880 = vld [vmem:[%s1867 + $0x58] sm:$0xff]
        %v1881 = vld [vmem:[%s1867 + $0x60] sm:$0xff]
        %v1882 = vld [vmem:[%s1867 + $0x68] sm:$0xf]
        %v1883 = vld [vmem:[%s1867 + $0x6c] sm:$0xff]
        %v1884 = vld [vmem:[%s1867 + $0x74] sm:$0xff]
        %v1885 = vld [vmem:[%s1867 + $0x7c] sm:$0xff]
        %v1886 = vld [vmem:[%s1867 + $0x84] sm:$0xff]
        %v1887 = vld [vmem:[%s1867 + $0x8c] sm:$0xf]
        %v1888 = vld [vmem:[%s1867 + $0x90] sm:$0xff]
        %v1889 = vld [vmem:[%s1867 + $0x98] sm:$0xff]
        %v1890 = vld [vmem:[%s1867 + $0xa0] sm:$0xff]
        %v1891 = vld [vmem:[%s1867 + $0xa8] sm:$0xff]
        %v1892 = vld [vmem:[%s1867 + $0xb0] sm:$0xf]
        %v1893 = vld [vmem:[%s1867 + $0xb4] sm:$0xff]
        %v1894 = vld [vmem:[%s1867 + $0xbc] sm:$0xff]
        %v1895 = vld [vmem:[%s1867 + $0xc4] sm:$0xff]
        %v1896 = vld [vmem:[%s1867 + $0xcc] sm:$0xff]
        %v1897 = vld [vmem:[%s1867 + $0xd4] sm:$0xf]
        %v1898 = vld [vmem:[%s1867 + $0xd8] sm:$0xff]
        %v1899 = vld [vmem:[%s1867 + $0xe0] sm:$0xff]
        %v1900 = vld [vmem:[%s1867 + $0xe8] sm:$0xff]
        %v1901 = vld [vmem:[%s1867 + $0xf0] sm:$0xff]
        %v1902 = vld [vmem:[%s1867 + $0xf8] sm:$0xf]
        %v1903 = vld [vmem:[%s1867 + $0xfc] sm:$0xff]
        %v1904 = vld [vmem:[%s1867 + $0x104] sm:$0xff]
        %v1905 = vld [vmem:[%s1867 + $0x10c] sm:$0xff]
        %v1906 = vld [vmem:[%s1867 + $0x114] sm:$0xff]
        %v1907 = vld [vmem:[%s1867 + $0x11c] sm:$0xf]
        %v1908 = vld [vmem:[%s1867 + $0x120] sm:$0xff]
        %v1909 = vld [vmem:[%s1867 + $0x128] sm:$0xff]
        %v1910 = vld [vmem:[%s1867 + $0x130] sm:$0xff]
        %v1911 = vld [vmem:[%s1867 + $0x138] sm:$0xff]
        %v1912 = vld [vmem:[%s1867 + $0x140] sm:$0xf]
        %v1913 = vld [vmem:[%s1867 + $0x144] sm:$0x33]
        %v1914 = vld [vmem:[%s1867 + $0x14c] sm:$0x33]
        %v1915 = vld [vmem:[%s1867 + $0x154] sm:$0x33]
        %v1916 = vld [vmem:[%s1867 + $0x15c] sm:$0x33]
        %v1917 = vld [vmem:[%s1867 + $0x164] sm:$0x3]
        %v1968 = vunpack.c.l.b16 %v1868
        %v1969 = vunpack.c.h.b16 %v1868
        %v1970 = vunpack.c.l.b16 %v1869
        %v1971 = vunpack.c.h.b16 %v1869
        %v1972 = vunpack.c.l.b16 %v1870
        %v1973 = vunpack.c.h.b16 %v1870
        %v1974 = vunpack.c.l.b16 %v1871
        %v1975 = vunpack.c.h.b16 %v1871
        %v1976 = vunpack.c.l.b16 %v1872
        %v1977 = vunpack.c.l.b16 %v1873
        %v1978 = vunpack.c.h.b16 %v1873
        %v1979 = vunpack.c.l.b16 %v1874
        %v1980 = vunpack.c.h.b16 %v1874
        %v1981 = vunpack.c.l.b16 %v1875
        %v1982 = vunpack.c.h.b16 %v1875
        %v1983 = vunpack.c.l.b16 %v1876
        %v1984 = vunpack.c.h.b16 %v1876
        %v1985 = vunpack.c.l.b16 %v1877
        %v1986 = vunpack.c.l.b16 %v1878
        %v1987 = vunpack.c.h.b16 %v1878
        %v1988 = vunpack.c.l.b16 %v1879
        %v1989 = vunpack.c.h.b16 %v1879
        %v1990 = vunpack.c.l.b16 %v1880
        %v1991 = vunpack.c.h.b16 %v1880
        %v1992 = vunpack.c.l.b16 %v1881
        %v1993 = vunpack.c.h.b16 %v1881
        %v1994 = vunpack.c.l.b16 %v1882
        %v1995 = vunpack.c.l.b16 %v1883
        %v1996 = vunpack.c.h.b16 %v1883
        %v1997 = vunpack.c.l.b16 %v1884
        %v1998 = vunpack.c.h.b16 %v1884
        %v1999 = vunpack.c.l.b16 %v1885
        %v2000 = vunpack.c.h.b16 %v1885
        %v2001 = vunpack.c.l.b16 %v1886
        %v2002 = vunpack.c.h.b16 %v1886
        %v2003 = vunpack.c.l.b16 %v1887
        %v2004 = vunpack.c.l.b16 %v1888
        %v2005 = vunpack.c.h.b16 %v1888
        %v2006 = vunpack.c.l.b16 %v1889
        %v2007 = vunpack.c.h.b16 %v1889
        %v2008 = vunpack.c.l.b16 %v1890
        %v2009 = vunpack.c.h.b16 %v1890
        %v2010 = vunpack.c.l.b16 %v1891
        %v2011 = vunpack.c.h.b16 %v1891
        %v2012 = vunpack.c.l.b16 %v1892
        %v2013 = vunpack.c.l.b16 %v1893
        %v2014 = vunpack.c.h.b16 %v1893
        %v2015 = vunpack.c.l.b16 %v1894
        %v2016 = vunpack.c.h.b16 %v1894
        %v2017 = vunpack.c.l.b16 %v1895
        %v2018 = vunpack.c.h.b16 %v1895
        %v2019 = vunpack.c.l.b16 %v1896
        %v2020 = vunpack.c.h.b16 %v1896
        %v2021 = vunpack.c.l.b16 %v1897
        %v2022 = vunpack.c.l.b16 %v1898
        %v2023 = vunpack.c.h.b16 %v1898
        %v2024 = vunpack.c.l.b16 %v1899
        %v2025 = vunpack.c.h.b16 %v1899
        %v2026 = vunpack.c.l.b16 %v1900
        %v2027 = vunpack.c.h.b16 %v1900
        %v2028 = vunpack.c.l.b16 %v1901
        %v2029 = vunpack.c.h.b16 %v1901
        %v2030 = vunpack.c.l.b16 %v1902
        %v2031 = vunpack.c.l.b16 %v1903
        %v2032 = vunpack.c.h.b16 %v1903
        %v2033 = vunpack.c.l.b16 %v1904
        %v2034 = vunpack.c.h.b16 %v1904
        %v2035 = vunpack.c.l.b16 %v1905
        %v2036 = vunpack.c.h.b16 %v1905
        %v2037 = vunpack.c.l.b16 %v1906
        %v2038 = vunpack.c.h.b16 %v1906
        %v2039 = vunpack.c.l.b16 %v1907
        %v2040 = vunpack.c.l.b16 %v1908
        %v2041 = vunpack.c.h.b16 %v1908
        %v2042 = vunpack.c.l.b16 %v1909
        %v2043 = vunpack.c.h.b16 %v1909
        %v2044 = vunpack.c.l.b16 %v1910
        %v2045 = vunpack.c.h.b16 %v1910
        %v2046 = vunpack.c.l.b16 %v1911
        %v2047 = vunpack.c.h.b16 %v1911
        %v2048 = vunpack.c.l.b16 %v1912
        %v2049 = vunpack.c.l.b16 %v1913
        %v2050 = vunpack.c.h.b16 %v1913
        %v2051 = vunpack.c.l.b16 %v1914
        %v2052 = vunpack.c.h.b16 %v1914
        %v2053 = vunpack.c.l.b16 %v1915
        %v2054 = vunpack.c.h.b16 %v1915
        %v2055 = vunpack.c.l.b16 %v1916
        %v2056 = vunpack.c.h.b16 %v1916
        %v2057 = vunpack.c.l.b16 %v1917
        %v2058 = vpack.c.b16 %v1977, %v1968
        %v2059 = vpack.c.b16 %v1978, %v1969
        %v2060 = vpack.c.b16 %v1979, %v1970
        %v2061 = vpack.c.b16 %v1980, %v1971
        %v2062 = vpack.c.b16 %v1981, %v1972
        %v2063 = vpack.c.b16 %v1982, %v1973
        %v2064 = vpack.c.b16 %v1983, %v1974
        %v2065 = vpack.c.b16 %v1984, %v1975
        %v2066 = vpack.c.b16 %v1985, %v1976
        %v2067 = vpack.c.b16 %v1995, %v1986
        %v2068 = vpack.c.b16 %v1996, %v1987
        %v2069 = vpack.c.b16 %v1997, %v1988
        %v2070 = vpack.c.b16 %v1998, %v1989
        %v2071 = vpack.c.b16 %v1999, %v1990
        %v2072 = vpack.c.b16 %v2000, %v1991
        %v2073 = vpack.c.b16 %v2001, %v1992
        %v2074 = vpack.c.b16 %v2002, %v1993
        %v2075 = vpack.c.b16 %v2003, %v1994
        %v2076 = vpack.c.b16 %v2013, %v2004
        %v2077 = vpack.c.b16 %v2014, %v2005
        %v2078 = vpack.c.b16 %v2015, %v2006
        %v2079 = vpack.c.b16 %v2016, %v2007
        %v2080 = vpack.c.b16 %v2017, %v2008
        %v2081 = vpack.c.b16 %v2018, %v2009
        %v2082 = vpack.c.b16 %v2019, %v2010
        %v2083 = vpack.c.b16 %v2020, %v2011
        %v2084 = vpack.c.b16 %v2021, %v2012
        %v2085 = vpack.c.b16 %v2031, %v2022
        %v2086 = vpack.c.b16 %v2032, %v2023
        %v2087 = vpack.c.b16 %v2033, %v2024
        %v2088 = vpack.c.b16 %v2034, %v2025
        %v2089 = vpack.c.b16 %v2035, %v2026
        %v2090 = vpack.c.b16 %v2036, %v2027
        %v2091 = vpack.c.b16 %v2037, %v2028
        %v2092 = vpack.c.b16 %v2038, %v2029
        %v2093 = vpack.c.b16 %v2039, %v2030
        %v2094 = vpack.c.b16 %v2049, %v2040
        %v2095 = vpack.c.b16 %v2050, %v2041
        %v2096 = vpack.c.b16 %v2051, %v2042
        %v2097 = vpack.c.b16 %v2052, %v2043
        %v2098 = vpack.c.b16 %v2053, %v2044
        %v2099 = vpack.c.b16 %v2054, %v2045
        %v2100 = vpack.c.b16 %v2055, %v2046
        %v2101 = vpack.c.b16 %v2056, %v2047
        %v2102 = vpack.c.b16 %v2057, %v2048
        %v2140 = vand.u32 %v2094, %v881
        %v2143 = vand.u32 %v2095, %v881
        %v2146 = vand.u32 %v2096, %v881
        %v2149 = vand.u32 %v2097, %v881
        %v2152 = vand.u32 %v2098, %v881
        %v2155 = vand.u32 %v2099, %v881
        %v2158 = vand.u32 %v2100, %v881
        %v2161 = vand.u32 %v2101, %v881
        %v2164 = vand.u32 %v2102, %v881
        %2166 = vmatpush.bf16.msra.mxu0 0
        %2167 = vmatpush.bf16.msra.mxu0 0
        %2168 = vmatpush.bf16.msra.mxu0 0
        %2169 = vmatpush.bf16.msra.mxu0 %v2140
        %2170 = vmatpush.bf16.msra.mxu0 %v2085
        %2171 = vmatpush.bf16.msra.mxu0 %v2076
        %2172 = vmatpush.bf16.msra.mxu0 %v2067
        %2173 = vmatpush.bf16.msra.mxu0 %v2058
        %2174 = vmatmul.bf16.gmra.mxu0 %v876
        %v2175 = vpop.f32.mrf.mxu0
        %v2176 = vadd.f32 0.0, %v2175
        %v2177 = vpop.f32.mrf.mxu0
        %2178 = vdwg.mxu0
        %2179 = vmatpush.bf16.msra.mxu0 0
        %2180 = vmatpush.bf16.msra.mxu0 0
        %2181 = vmatpush.bf16.msra.mxu0 0
        %2182 = vmatpush.bf16.msra.mxu0 %v2143
        %2183 = vmatpush.bf16.msra.mxu0 %v2086
        %2184 = vmatpush.bf16.msra.mxu0 %v2077
        %2185 = vmatpush.bf16.msra.mxu0 %v2068
        %2186 = vmatpush.bf16.msra.mxu0 %v2059
        %2187 = vmatmul.bf16.gmra.mxu0 %v876
        %v2188 = vpop.f32.mrf.mxu0
        %v2189 = vadd.f32 0.0, %v2188
        %v2190 = vpop.f32.mrf.mxu0
        %2191 = vdwg.mxu0
        %2192 = vmatpush.bf16.msra.mxu0 0
        %2193 = vmatpush.bf16.msra.mxu0 0
        %2194 = vmatpush.bf16.msra.mxu0 0
        %2195 = vmatpush.bf16.msra.mxu0 %v2146
        %2196 = vmatpush.bf16.msra.mxu0 %v2087
        %2197 = vmatpush.bf16.msra.mxu0 %v2078
        %2198 = vmatpush.bf16.msra.mxu0 %v2069
        %2199 = vmatpush.bf16.msra.mxu0 %v2060
        %2200 = vmatmul.bf16.gmra.mxu0 %v876
        %v2201 = vpop.f32.mrf.mxu0
        %v2202 = vadd.f32 0.0, %v2201
        %v2203 = vpop.f32.mrf.mxu0
        %2204 = vdwg.mxu0
        %2205 = vmatpush.bf16.msra.mxu0 0
        %2206 = vmatpush.bf16.msra.mxu0 0
        %2207 = vmatpush.bf16.msra.mxu0 0
        %2208 = vmatpush.bf16.msra.mxu0 %v2149
        %2209 = vmatpush.bf16.msra.mxu0 %v2088
        %2210 = vmatpush.bf16.msra.mxu0 %v2079
        %2211 = vmatpush.bf16.msra.mxu0 %v2070
        %2212 = vmatpush.bf16.msra.mxu0 %v2061
        %2213 = vmatmul.bf16.gmra.mxu0 %v876
        %v2214 = vpop.f32.mrf.mxu0
        %v2215 = vadd.f32 0.0, %v2214
        %v2216 = vpop.f32.mrf.mxu0
        %2217 = vdwg.mxu0
        %2218 = vmatpush.bf16.msra.mxu0 0
        %2219 = vmatpush.bf16.msra.mxu0 0
        %2220 = vmatpush.bf16.msra.mxu0 0
        %2221 = vmatpush.bf16.msra.mxu0 %v2152
        %2222 = vmatpush.bf16.msra.mxu0 %v2089
        %2223 = vmatpush.bf16.msra.mxu0 %v2080
        %2224 = vmatpush.bf16.msra.mxu0 %v2071
        %2225 = vmatpush.bf16.msra.mxu0 %v2062
        %2226 = vmatmul.bf16.gmra.mxu0 %v876
        %v2227 = vpop.f32.mrf.mxu0
        %v2228 = vadd.f32 0.0, %v2227
        %v2229 = vpop.f32.mrf.mxu0
        %2230 = vdwg.mxu0
        %2231 = vmatpush.bf16.msra.mxu0 0
        %2232 = vmatpush.bf16.msra.mxu0 0
        %2233 = vmatpush.bf16.msra.mxu0 0
        %2234 = vmatpush.bf16.msra.mxu0 %v2155
        %2235 = vmatpush.bf16.msra.mxu0 %v2090
        %2236 = vmatpush.bf16.msra.mxu0 %v2081
        %2237 = vmatpush.bf16.msra.mxu0 %v2072
        %2238 = vmatpush.bf16.msra.mxu0 %v2063
        %2239 = vmatmul.bf16.gmra.mxu0 %v876
        %v2240 = vpop.f32.mrf.mxu0
        %v2241 = vadd.f32 0.0, %v2240
        %v2242 = vpop.f32.mrf.mxu0
        %2243 = vdwg.mxu0
        %2244 = vmatpush.bf16.msra.mxu0 0
        %2245 = vmatpush.bf16.msra.mxu0 0
        %2246 = vmatpush.bf16.msra.mxu0 0
        %2247 = vmatpush.bf16.msra.mxu0 %v2158
        %2248 = vmatpush.bf16.msra.mxu0 %v2091
        %2249 = vmatpush.bf16.msra.mxu0 %v2082
        %2250 = vmatpush.bf16.msra.mxu0 %v2073
        %2251 = vmatpush.bf16.msra.mxu0 %v2064
        %2252 = vmatmul.bf16.gmra.mxu0 %v876
        %v2253 = vpop.f32.mrf.mxu0
        %v2254 = vadd.f32 0.0, %v2253
        %v2255 = vpop.f32.mrf.mxu0
        %2256 = vdwg.mxu0
        %2257 = vmatpush.bf16.msra.mxu0 0
        %2258 = vmatpush.bf16.msra.mxu0 0
        %2259 = vmatpush.bf16.msra.mxu0 0
        %2260 = vmatpush.bf16.msra.mxu0 %v2161
        %2261 = vmatpush.bf16.msra.mxu0 %v2092
        %2262 = vmatpush.bf16.msra.mxu0 %v2083
        %2263 = vmatpush.bf16.msra.mxu0 %v2074
        %2264 = vmatpush.bf16.msra.mxu0 %v2065
        %2265 = vmatmul.bf16.gmra.mxu0 %v876
        %v2266 = vpop.f32.mrf.mxu0
        %v2267 = vadd.f32 0.0, %v2266
        %v2268 = vpop.f32.mrf.mxu0
        %2269 = vdwg.mxu0
        %2270 = vmatpush.bf16.msra.mxu0 0
        %2271 = vmatpush.bf16.msra.mxu0 0
        %2272 = vmatpush.bf16.msra.mxu0 0
        %2273 = vmatpush.bf16.msra.mxu0 %v2164
        %2274 = vmatpush.bf16.msra.mxu0 %v2093
        %2275 = vmatpush.bf16.msra.mxu0 %v2084
        %2276 = vmatpush.bf16.msra.mxu0 %v2075
        %2277 = vmatpush.bf16.msra.mxu0 %v2066
        %2278 = vmatmul.bf16.gmra.mxu0 %v876
        %v2279 = vpop.f32.mrf.mxu0
        %v2280 = vadd.f32 0.0, %v2279
        %v2281 = vpop.f32.mrf.mxu0
        %2282 = vdwg.mxu0
        %v2283 = vmax.f32 %v1760, %v2176
        %v2284 = vmax.f32 %v1773, %v2189
        %v2285 = vmax.f32 %v1786, %v2202
        %v2286 = vmax.f32 %v1799, %v2215
        %v2287 = vmax.f32 %v1812, %v2228
        %v2288 = vmax.f32 %v1825, %v2241
        %v2289 = vmax.f32 %v1838, %v2254
        %v2290 = vmax.f32 %v1851, %v2267
        %v2291 = vmax.f32 %v1864, %v2280
        %v2292 = vmax.f32 %v1442, %v2283
        %v2293 = vmax.f32 %v1443, %v2284
        %v2294 = vmax.f32 %v1444, %v2285
        %v2295 = vmax.f32 %v1445, %v2286
        %v2296 = vmax.f32 %v1446, %v2287
        %v2297 = vmax.f32 %v1447, %v2288
        %v2298 = vmax.f32 %v1448, %v2289
        %v2299 = vmax.f32 %v1449, %v2290
        %v2300 = vmax.f32 %v1450, %v2291
        %v2301 = vld [vmem:[%s2] sm:$0x3f]
        %2303 = vset.pattern.permute.xlu0 0
        %2304 = vperm.xlu0 %2303, %v2301
        %v2305 = vpop.permute.xlu0 %2304
        %v2307 = vadd.f32 %v2292, %v2305
        %v2308 = vadd.f32 %v2293, %v2305
        %v2309 = vadd.f32 %v2294, %v2305
        %v2310 = vadd.f32 %v2295, %v2305
        %v2311 = vadd.f32 %v2296, %v2305
        %v2312 = vadd.f32 %v2297, %v2305
        %v2313 = vadd.f32 %v2298, %v2305
        %v2314 = vadd.f32 %v2299, %v2305
        %v2315 = vadd.f32 %v2300, %v2305
        %v2316 = vmax.f32 %v2307, 0.0
        %v2317 = vmax.f32 %v2308, 0.0
        %v2318 = vmax.f32 %v2309, 0.0
        %v2319 = vmax.f32 %v2310, 0.0
        %v2320 = vmax.f32 %v2311, 0.0
        %v2321 = vmax.f32 %v2312, 0.0
        %v2322 = vmax.f32 %v2313, 0.0
        %v2323 = vmax.f32 %v2314, 0.0
        %v2324 = vmax.f32 %v2315, 0.0
        %v2325 = vpack.c.bf16 %v2317, %v2316
        %v2326 = vpack.c.bf16 %v2319, %v2318
        %v2327 = vpack.c.bf16 %v2321, %v2320
        %v2328 = vpack.c.bf16 %v2323, %v2322
        %v2329 = vpack.c.bf16 %v2324, %v2324
        %2330 = vst [vmem:[%s599] sm:$0x77] %v2325
        %2331 = vst [vmem:[%s599 + $0x8] sm:$0x77] %v2326
        %2332 = vst [vmem:[%s599 + $0x10] sm:$0x77] %v2327
        %2333 = vst [vmem:[%s599 + $0x18] sm:$0x77] %v2328
        %2334 = vst [vmem:[%s599 + $0x20] sm:$0x7] %v2329
        %s2335 = smul.u32 9, %s14
        %p2336 = scmp.lt.s32.totalorder %s2335, 35
        %s2337 = scalar_select %p2336, %s2335, 35
        %s2338 = smul.addr %s2337, 4
        %s2339 = scalar_lea.vmem %s3, %s2338
        // Predicated region
        $region59: #{civilnet_forward.2} parent=53 // pred_check
          %p2340 = pneg %p100
        $region60: #{civilnet_forward.2} parent=53 // pred_check_branch
          %2342 = sbr.rel (%p2340) target = $region62
        $region61: #{civilnet_forward.2} parent=53 // pred_region
          %s2343 = smul.u32 9, %s14
        $region62: #{civilnet_forward.2} parent=53 // pred_fallthru
          _
      $region54: #{civilnet_forward.2} parent=5 // pred_fallthru
        _
      %p2344 = scmp.le.s32.totalorder 2, %s9
      // Predicated region
      $region63: #{civilnet_forward.2} parent=5 // pred_check
        %p2345 = pneg %p2344
      $region64: #{civilnet_forward.2} parent=5 // pred_check_branch
        %2347 = sbr.rel (%p2345) target = $region66
      $region65: #{civilnet_forward.2} parent=5 // pred_region
        %s2348 = ssub.s32 %s9, 2
        // Predicated region
        $region67: #{civilnet_forward.2} parent=65 // pred_check
          %p2349 = pneg %p106
        $region68: #{civilnet_forward.2} parent=65 // pred_check_branch
          %2351 = sbr.rel (%p2349) target = $region70
        $region69: #{civilnet_forward.2} parent=65 // pred_region
          %s2352 = smul.u32 9, %s15
          %p2353 = scmp.lt.s32.totalorder %s2352, 35
          %s2354 = scalar_select %p2353, %s2352, 35
          %s2355 = smul.addr %s2354, 4
          %s2356 = scalar_lea.vmem %s3, %s2355
        $region70: #{civilnet_forward.2} parent=65 // pred_fallthru
          _
      $region66: #{civilnet_forward.2} parent=5 // pred_fallthru
        _
    $region6: #{civilnet_forward.2} parent=1 // loop_footer
      %s13 = sadd.s32 1, %s9
    $region7: #{civilnet_forward.2} parent=1 // loop_footer_branch
      %8 = sbr.rel target = $region3
    $region8: #{civilnet_forward.2} parent=1 // loop_exit
      _

// kernel: civilnet_forward.3
$region0: #{civilnet_forward.3}
  #allocation0 [shape = 'u32[]', space=smem, size = 0x4, offset = 0x4, fixed_abs, tag = 'smem constant byte address 0x4 - core index']
  #allocation1 [shape = 'u32[72,128]{1,0:T(1,128)}', space=vmem, size = 0x9000, scoped, tag = 'internal scratch']
  %s0 = inlined_call_operand.vmem [shape: bf16[2,150,2048], index: 0, kind: input, shape index: {}]
  %s1 = inlined_call_operand.vmem [shape: bf16[16,150], index: 1, kind: input, shape index: {}]
  %s2 = inlined_call_operand.vmem [shape: f32[16,1], index: 2, kind: input, shape index: {}]
  %s3 = inlined_call_operand.vmem [shape: bf16[16,512,120], index: 3, kind: input, shape index: {}]
  %s4 = inlined_call_operand.vmem [shape: f32[1,120], index: 4, kind: input, shape index: {}]
  %s5 = inlined_call_operand.vmem [shape: bf16[120,84], index: 5, kind: input, shape index: {}]
  %s6 = inlined_call_operand.vmem [shape: f32[1,84], index: 6, kind: input, shape index: {}]
  %s7 = inlined_call_operand.vmem [shape: bf16[84,10], index: 7, kind: input, shape index: {}]
  %s8 = inlined_call_operand.vmem [shape: f32[1,10], index: 8, kind: input, shape index: {}]
  %s9 = inlined_call_operand.vmem [shape: bf16[10,2], index: 9, kind: input, shape index: {}]
  %s10 = inlined_call_operand.vmem [shape: f32[1,2], index: 10, kind: input, shape index: {}]
  %s11 = inlined_call_operand.hbm [shape: f32[2,1,2], index: 11, kind: output, shape index: {}]
  %s12 = sld [smem:[#allocation0]]
  $region77: #{civilnet_forward.3} parent=0
    _
  %s14 = ssub.s32 1, %s12
  %s15 = scalar_select 0, %s14, %s12
  $region1: #{civilnet_forward.3} parent=0
    #allocation2 [shape = 'u8[1024]{0}', space=vmem, size = 0x400, scoped, tag = 'output window, operand 0']
    #allocation3 [shape = 's32[2]{0}', space=sflag, size = 0x8, scoped, tag = 'scoped memory for civilnet_forward.3']
    %16 = vsyncpa [#allocation3], 0
    %s17 = scalar_lea.sflag [#allocation3], 1
    %18 = vsyncpa %s17, 0
    loop: start=0, step=1, limit=4
    $region2: #{civilnet_forward.3} parent=1 // loop_pre_header
      _
    $region3: #{civilnet_forward.3} parent=1 // loop_header
      %s20 = sphi 0, %s24
      %p21 = scmp.ge.s32.totalorder %s20, 4
      %s30 = sphi 0, %s32
      %s33 = sphi 0, %s30
      %s34 = sphi 0, %s33
      %s50 = sphi 0, %s34
      %s54 = sphi 0, %s54
      %s56 = sphi 0, %s54
      %s57 = sphi 0, %s56
      %s71 = sphi 0, %s57
      %s75 = sphi 0, %s75
      %s77 = sphi 0, %s75
      %s78 = sphi 0, %s77
      %s92 = sphi 0, %s78
      %s96 = sphi 0, %s96
      %s98 = sphi 0, %s96
      %s99 = sphi 0, %s98
      %s113 = sphi 0, %s99
      %s117 = sphi 0, %s117
      %s119 = sphi 0, %s117
      %s120 = sphi 0, %s119
      %s134 = sphi 0, %s120
      %s138 = sphi 0, %s138
      %s140 = sphi 0, %s138
      %s141 = sphi 0, %s140
      %s155 = sphi 0, %s141
      %s159 = sphi 0, %s159
      %s161 = sphi 0, %s159
      %s162 = sphi 0, %s161
      %s176 = sphi 0, %s162
      %s180 = sphi 0, %s180
      %s182 = sphi 0, %s180
      %s183 = sphi 0, %s182
      %s197 = sphi 0, %s183
      %s201 = sphi 0, %s201
      %s203 = sphi 0, %s201
      %s204 = sphi 0, %s203
      %s218 = sphi 0, %s204
      %s222 = sphi 0, %s222
      %s224 = sphi 0, %s222
      %s225 = sphi 0, %s224
      %s239 = sphi 0, %s225
      %s243 = sphi 0, %s243
      %s245 = sphi 0, %s243
      %s246 = sphi 0, %s245
      %s260 = sphi 0, %s246
      %s266 = sphi 0, %s268
      %s269 = sphi 0, %s266
      %s270 = sphi 0, %s269
      %s286 = sphi 0, %s270
    $region4: #{civilnet_forward.3} parent=1 // loop_header_branch
      %23 = sbr.rel (%p21) target = $region8
    $region5: #{civilnet_forward.3} parent=1 // loop_body
      %s25 = ssub.s32 %s20, 1
      %s26 = ssub.s32 %s20, 2
      %s27 = sadd.s32 %s20, 1
      %s28 = ssub.s32 %s20, %s27
      %p29 = scmp.eq.s32.totalorder %s28, 0
      %s31 = sadd.s32 %s30, 1
      %s32 = scalar_select %p29, %s30, %s31
      %p35 = pneg %p29
      %p36 = scmp.eq.s32.totalorder %s20, 1
      %p37 = por %p35, %p36
      %p38 = scmp.ne.s32.totalorder %s30, %s33
      %p39 = scmp.eq.s32.totalorder %s20, 0
      %p40 = por %p38, %p39
      %p41 = scmp.ne.s32.totalorder %s30, %s33
      %p42 = scmp.eq.s32.totalorder %s25, 1
      %p43 = por %p41, %p42
      %p44 = scmp.ne.s32.totalorder %s33, %s34
      %p45 = scmp.eq.s32.totalorder %s25, 0
      %p46 = por %p44, %p45
      %p47 = scmp.ne.s32.totalorder %s33, %s34
      %p48 = scmp.eq.s32.totalorder %s26, 1
      %p49 = por %p47, %p48
      %p51 = scmp.ne.s32.totalorder %s34, %s50
      %p52 = scmp.eq.s32.totalorder %s26, 0
      %p53 = por %p51, %p52
      %s55 = sadd.s32 %s54, 1
      %p58 = scmp.eq.s32.totalorder %s20, 1
      %p59 = scmp.ne.s32.totalorder %s54, %s56
      %p60 = scmp.eq.s32.totalorder %s20, 0
      %p61 = por %p59, %p60
      %p62 = scmp.ne.s32.totalorder %s54, %s56
      %p63 = scmp.eq.s32.totalorder %s25, 1
      %p64 = por %p62, %p63
      %p65 = scmp.ne.s32.totalorder %s56, %s57
      %p66 = scmp.eq.s32.totalorder %s25, 0
      %p67 = por %p65, %p66
      %p68 = scmp.ne.s32.totalorder %s56, %s57
      %p69 = scmp.eq.s32.totalorder %s26, 1
      %p70 = por %p68, %p69
      %p72 = scmp.ne.s32.totalorder %s57, %s71
      %p73 = scmp.eq.s32.totalorder %s26, 0
      %p74 = por %p72, %p73
      %s76 = sadd.s32 %s75, 1
      %p79 = scmp.eq.s32.totalorder %s20, 1
      %p80 = scmp.ne.s32.totalorder %s75, %s77
      %p81 = scmp.eq.s32.totalorder %s20, 0
      %p82 = por %p80, %p81
      %p83 = scmp.ne.s32.totalorder %s75, %s77
      %p84 = scmp.eq.s32.totalorder %s25, 1
      %p85 = por %p83, %p84
      %p86 = scmp.ne.s32.totalorder %s77, %s78
      %p87 = scmp.eq.s32.totalorder %s25, 0
      %p88 = por %p86, %p87
      %p89 = scmp.ne.s32.totalorder %s77, %s78
      %p90 = scmp.eq.s32.totalorder %s26, 1
      %p91 = por %p89, %p90
      %p93 = scmp.ne.s32.totalorder %s78, %s92
      %p94 = scmp.eq.s32.totalorder %s26, 0
      %p95 = por %p93, %p94
      %s97 = sadd.s32 %s96, 1
      %p100 = scmp.eq.s32.totalorder %s20, 1
      %p101 = scmp.ne.s32.totalorder %s96, %s98
      %p102 = scmp.eq.s32.totalorder %s20, 0
      %p103 = por %p101, %p102
      %p104 = scmp.ne.s32.totalorder %s96, %s98
      %p105 = scmp.eq.s32.totalorder %s25, 1
      %p106 = por %p104, %p105
      %p107 = scmp.ne.s32.totalorder %s98, %s99
      %p108 = scmp.eq.s32.totalorder %s25, 0
      %p109 = por %p107, %p108
      %p110 = scmp.ne.s32.totalorder %s98, %s99
      %p111 = scmp.eq.s32.totalorder %s26, 1
      %p112 = por %p110, %p111
      %p114 = scmp.ne.s32.totalorder %s99, %s113
      %p115 = scmp.eq.s32.totalorder %s26, 0
      %p116 = por %p114, %p115
      %s118 = sadd.s32 %s117, 1
      %p121 = scmp.eq.s32.totalorder %s20, 1
      %p122 = scmp.ne.s32.totalorder %s117, %s119
      %p123 = scmp.eq.s32.totalorder %s20, 0
      %p124 = por %p122, %p123
      %p125 = scmp.ne.s32.totalorder %s117, %s119
      %p126 = scmp.eq.s32.totalorder %s25, 1
      %p127 = por %p125, %p126
      %p128 = scmp.ne.s32.totalorder %s119, %s120
      %p129 = scmp.eq.s32.totalorder %s25, 0
      %p130 = por %p128, %p129
      %p131 = scmp.ne.s32.totalorder %s119, %s120
      %p132 = scmp.eq.s32.totalorder %s26, 1
      %p133 = por %p131, %p132
      %p135 = scmp.ne.s32.totalorder %s120, %s134
      %p136 = scmp.eq.s32.totalorder %s26, 0
      %p137 = por %p135, %p136
      %s139 = sadd.s32 %s138, 1
      %p142 = scmp.eq.s32.totalorder %s20, 1
      %p143 = scmp.ne.s32.totalorder %s138, %s140
      %p144 = scmp.eq.s32.totalorder %s20, 0
      %p145 = por %p143, %p144
      %p146 = scmp.ne.s32.totalorder %s138, %s140
      %p147 = scmp.eq.s32.totalorder %s25, 1
      %p148 = por %p146, %p147
      %p149 = scmp.ne.s32.totalorder %s140, %s141
      %p150 = scmp.eq.s32.totalorder %s25, 0
      %p151 = por %p149, %p150
      %p152 = scmp.ne.s32.totalorder %s140, %s141
      %p153 = scmp.eq.s32.totalorder %s26, 1
      %p154 = por %p152, %p153
      %p156 = scmp.ne.s32.totalorder %s141, %s155
      %p157 = scmp.eq.s32.totalorder %s26, 0
      %p158 = por %p156, %p157
      %s160 = sadd.s32 %s159, 1
      %p163 = scmp.eq.s32.totalorder %s20, 1
      %p164 = scmp.ne.s32.totalorder %s159, %s161
      %p165 = scmp.eq.s32.totalorder %s20, 0
      %p166 = por %p164, %p165
      %p167 = scmp.ne.s32.totalorder %s159, %s161
      %p168 = scmp.eq.s32.totalorder %s25, 1
      %p169 = por %p167, %p168
      %p170 = scmp.ne.s32.totalorder %s161, %s162
      %p171 = scmp.eq.s32.totalorder %s25, 0
      %p172 = por %p170, %p171
      %p173 = scmp.ne.s32.totalorder %s161, %s162
      %p174 = scmp.eq.s32.totalorder %s26, 1
      %p175 = por %p173, %p174
      %p177 = scmp.ne.s32.totalorder %s162, %s176
      %p178 = scmp.eq.s32.totalorder %s26, 0
      %p179 = por %p177, %p178
      %s181 = sadd.s32 %s180, 1
      %p184 = scmp.eq.s32.totalorder %s20, 1
      %p185 = scmp.ne.s32.totalorder %s180, %s182
      %p186 = scmp.eq.s32.totalorder %s20, 0
      %p187 = por %p185, %p186
      %p188 = scmp.ne.s32.totalorder %s180, %s182
      %p189 = scmp.eq.s32.totalorder %s25, 1
      %p190 = por %p188, %p189
      %p191 = scmp.ne.s32.totalorder %s182, %s183
      %p192 = scmp.eq.s32.totalorder %s25, 0
      %p193 = por %p191, %p192
      %p194 = scmp.ne.s32.totalorder %s182, %s183
      %p195 = scmp.eq.s32.totalorder %s26, 1
      %p196 = por %p194, %p195
      %p198 = scmp.ne.s32.totalorder %s183, %s197
      %p199 = scmp.eq.s32.totalorder %s26, 0
      %p200 = por %p198, %p199
      %s202 = sadd.s32 %s201, 1
      %p205 = scmp.eq.s32.totalorder %s20, 1
      %p206 = scmp.ne.s32.totalorder %s201, %s203
      %p207 = scmp.eq.s32.totalorder %s20, 0
      %p208 = por %p206, %p207
      %p209 = scmp.ne.s32.totalorder %s201, %s203
      %p210 = scmp.eq.s32.totalorder %s25, 1
      %p211 = por %p209, %p210
      %p212 = scmp.ne.s32.totalorder %s203, %s204
      %p213 = scmp.eq.s32.totalorder %s25, 0
      %p214 = por %p212, %p213
      %p215 = scmp.ne.s32.totalorder %s203, %s204
      %p216 = scmp.eq.s32.totalorder %s26, 1
      %p217 = por %p215, %p216
      %p219 = scmp.ne.s32.totalorder %s204, %s218
      %p220 = scmp.eq.s32.totalorder %s26, 0
      %p221 = por %p219, %p220
      %s223 = sadd.s32 %s222, 1
      %p226 = scmp.eq.s32.totalorder %s20, 1
      %p227 = scmp.ne.s32.totalorder %s222, %s224
      %p228 = scmp.eq.s32.totalorder %s20, 0
      %p229 = por %p227, %p228
      %p230 = scmp.ne.s32.totalorder %s222, %s224
      %p231 = scmp.eq.s32.totalorder %s25, 1
      %p232 = por %p230, %p231
      %p233 = scmp.ne.s32.totalorder %s224, %s225
      %p234 = scmp.eq.s32.totalorder %s25, 0
      %p235 = por %p233, %p234
      %p236 = scmp.ne.s32.totalorder %s224, %s225
      %p237 = scmp.eq.s32.totalorder %s26, 1
      %p238 = por %p236, %p237
      %p240 = scmp.ne.s32.totalorder %s225, %s239
      %p241 = scmp.eq.s32.totalorder %s26, 0
      %p242 = por %p240, %p241
      %s244 = sadd.s32 %s243, 1
      %p247 = scmp.eq.s32.totalorder %s20, 1
      %p248 = scmp.ne.s32.totalorder %s243, %s245
      %p249 = scmp.eq.s32.totalorder %s20, 0
      %p250 = por %p248, %p249
      %p251 = scmp.ne.s32.totalorder %s243, %s245
      %p252 = scmp.eq.s32.totalorder %s25, 1
      %p253 = por %p251, %p252
      %p254 = scmp.ne.s32.totalorder %s245, %s246
      %p255 = scmp.eq.s32.totalorder %s25, 0
      %p256 = por %p254, %p255
      %p257 = scmp.ne.s32.totalorder %s245, %s246
      %p258 = scmp.eq.s32.totalorder %s26, 1
      %p259 = por %p257, %p258
      %p261 = scmp.ne.s32.totalorder %s246, %s260
      %p262 = scmp.eq.s32.totalorder %s26, 0
      %p263 = por %p261, %p262
      %s264 = ssub.s32 %s20, %s27
      %p265 = scmp.eq.s32.totalorder %s264, 0
      %s267 = sadd.s32 %s266, 1
      %s268 = scalar_select %p265, %s266, %s267
      %p271 = pneg %p265
      %p272 = scmp.eq.s32.totalorder %s20, 1
      %p273 = por %p271, %p272
      %p274 = scmp.ne.s32.totalorder %s266, %s269
      %p275 = scmp.eq.s32.totalorder %s20, 0
      %p276 = por %p274, %p275
      %p277 = scmp.ne.s32.totalorder %s266, %s269
      %p278 = scmp.eq.s32.totalorder %s25, 1
      %p279 = por %p277, %p278
      %p280 = scmp.ne.s32.totalorder %s269, %s270
      %p281 = scmp.eq.s32.totalorder %s25, 0
      %p282 = por %p280, %p281
      %p283 = scmp.ne.s32.totalorder %s269, %s270
      %p284 = scmp.eq.s32.totalorder %s26, 1
      %p285 = por %p283, %p284
      %p287 = scmp.ne.s32.totalorder %s270, %s286
      %p288 = scmp.eq.s32.totalorder %s26, 0
      %p289 = por %p287, %p288
      %p290 = scmp.le.s32.totalorder 1, %s20
      %p291 = scmp.lt.s32.totalorder %s20, 3
      %p292 = pnand %p290, %p291
      %p293 = pneg %p292
      // Predicated region
      $region9: #{civilnet_forward.3} parent=5 // pred_check
        _
      $region10: #{civilnet_forward.3} parent=5 // pred_check_branch
        %295 = sbr.rel (%p292) target = $region12
      $region11: #{civilnet_forward.3} parent=5 // pred_region
        %s296 = ssub.s32 %s20, 1
        // Predicated region
        $region13: #{civilnet_forward.3} parent=11 // pred_check
          %p297 = pneg %p67
        $region14: #{civilnet_forward.3} parent=11 // pred_check_branch
          %299 = sbr.rel (%p297) target = $region16
        $region15: #{civilnet_forward.3} parent=11 // pred_region
          _
        $region16: #{civilnet_forward.3} parent=11 // pred_fallthru
          _
        // Predicated region
        $region17: #{civilnet_forward.3} parent=11 // pred_check
          %p300 = pneg %p88
        $region18: #{civilnet_forward.3} parent=11 // pred_check_branch
          %302 = sbr.rel (%p300) target = $region20
        $region19: #{civilnet_forward.3} parent=11 // pred_region
          _
        $region20: #{civilnet_forward.3} parent=11 // pred_fallthru
          _
        // Predicated region
        $region21: #{civilnet_forward.3} parent=11 // pred_check
          %p303 = pneg %p109
        $region22: #{civilnet_forward.3} parent=11 // pred_check_branch
          %305 = sbr.rel (%p303) target = $region24
        $region23: #{civilnet_forward.3} parent=11 // pred_region
          _
        $region24: #{civilnet_forward.3} parent=11 // pred_fallthru
          _
        // Predicated region
        $region25: #{civilnet_forward.3} parent=11 // pred_check
          %p306 = pneg %p130
        $region26: #{civilnet_forward.3} parent=11 // pred_check_branch
          %308 = sbr.rel (%p306) target = $region28
        $region27: #{civilnet_forward.3} parent=11 // pred_region
          _
        $region28: #{civilnet_forward.3} parent=11 // pred_fallthru
          _
        // Predicated region
        $region29: #{civilnet_forward.3} parent=11 // pred_check
          %p309 = pneg %p151
        $region30: #{civilnet_forward.3} parent=11 // pred_check_branch
          %311 = sbr.rel (%p309) target = $region32
        $region31: #{civilnet_forward.3} parent=11 // pred_region
          _
        $region32: #{civilnet_forward.3} parent=11 // pred_fallthru
          _
        // Predicated region
        $region33: #{civilnet_forward.3} parent=11 // pred_check
          %p312 = pneg %p172
        $region34: #{civilnet_forward.3} parent=11 // pred_check_branch
          %314 = sbr.rel (%p312) target = $region36
        $region35: #{civilnet_forward.3} parent=11 // pred_region
          _
        $region36: #{civilnet_forward.3} parent=11 // pred_fallthru
          _
        // Predicated region
        $region37: #{civilnet_forward.3} parent=11 // pred_check
          %p315 = pneg %p193
        $region38: #{civilnet_forward.3} parent=11 // pred_check_branch
          %317 = sbr.rel (%p315) target = $region40
        $region39: #{civilnet_forward.3} parent=11 // pred_region
          _
        $region40: #{civilnet_forward.3} parent=11 // pred_fallthru
          _
        // Predicated region
        $region41: #{civilnet_forward.3} parent=11 // pred_check
          %p318 = pneg %p214
        $region42: #{civilnet_forward.3} parent=11 // pred_check_branch
          %320 = sbr.rel (%p318) target = $region44
        $region43: #{civilnet_forward.3} parent=11 // pred_region
          _
        $region44: #{civilnet_forward.3} parent=11 // pred_fallthru
          _
        // Predicated region
        $region45: #{civilnet_forward.3} parent=11 // pred_check
          %p321 = pneg %p235
        $region46: #{civilnet_forward.3} parent=11 // pred_check_branch
          %323 = sbr.rel (%p321) target = $region48
        $region47: #{civilnet_forward.3} parent=11 // pred_region
          _
        $region48: #{civilnet_forward.3} parent=11 // pred_fallthru
          _
        // Predicated region
        $region49: #{civilnet_forward.3} parent=11 // pred_check
          %p324 = pneg %p256
        $region50: #{civilnet_forward.3} parent=11 // pred_check_branch
          %326 = sbr.rel (%p324) target = $region52
        $region51: #{civilnet_forward.3} parent=11 // pred_region
          _
        $region52: #{civilnet_forward.3} parent=11 // pred_fallthru
          _
      $region12: #{civilnet_forward.3} parent=5 // pred_fallthru
        _
      %p327 = scmp.lt.s32.totalorder %s20, 2
      // Predicated region
      $region53: #{civilnet_forward.3} parent=5 // pred_check
        %p328 = pneg %p327
      $region54: #{civilnet_forward.3} parent=5 // pred_check_branch
        %330 = sbr.rel (%p328) target = $region56
      $region55: #{civilnet_forward.3} parent=5 // pred_region
        // Predicated region
        $region57: #{civilnet_forward.3} parent=55 // pred_check
          %p331 = pneg %p40
        $region58: #{civilnet_forward.3} parent=55 // pred_check_branch
          %333 = sbr.rel (%p331) target = $region60
        $region59: #{civilnet_forward.3} parent=55 // pred_region
          %p334 = scmp.lt.s32.totalorder %s20, 1
          %s335 = scalar_select %p334, %s20, 1
          %s336 = smul.addr %s335, 304
          %s337 = smul.addr %s336, 4
          %s338 = scalar_lea.vmem %s0, %s337
        $region60: #{civilnet_forward.3} parent=55 // pred_fallthru
          _
      $region56: #{civilnet_forward.3} parent=5 // pred_fallthru
        _
      %p339 = scmp.le.s32.totalorder 1, %s20
      %p340 = scmp.lt.s32.totalorder %s20, 3
      %p341 = pnand %p339, %p340
      %p342 = pneg %p341
      // Predicated region
      $region61: #{civilnet_forward.3} parent=5 // pred_check
        _
      $region62: #{civilnet_forward.3} parent=5 // pred_check_branch
        %344 = sbr.rel (%p341) target = $region64
      $region63: #{civilnet_forward.3} parent=5 // pred_region
        %s345 = ssub.s32 %s20, 1
        %p346 = scmp.lt.s32.totalorder %s25, 1
        %s347 = scalar_select %p346, %s25, 1
        %s348 = smul.addr %s347, 304
        %s349 = smul.addr %s348, 4
        %s350 = scalar_lea.vmem %s0, %s349
        %p351 = pneg %p46
        %p352 = pneg %p43
        %p353 = pneg %p67
        %p354 = pneg %p64
        %p355 = pneg %p88
        %p356 = pneg %p85
        %p357 = pneg %p109
        %p358 = pneg %p106
        %p359 = pneg %p130
        %p360 = pneg %p127
        %p361 = pneg %p151
        %p362 = pneg %p148
        %p363 = pneg %p172
        %p364 = pneg %p169
        %p365 = pneg %p193
        %p366 = pneg %p190
        %p367 = pneg %p214
        %p368 = pneg %p211
        %p369 = pneg %p235
        %p370 = pneg %p232
        %p371 = pneg %p256
        %p372 = pneg %p253
        %p373 = pneg %p282
        %p374 = pneg %p279
        %s375 = sand.u32 %s269, 1
        %s376 = scalar_lea.sflag [#allocation3], %s375
        %s377 = sand.u32 %s269, 1
        %s378 = scalar_lea.vmem [#allocation2], %s377
        %p379 = scmp.lt.s32.totalorder %s25, 1
        %s380 = scalar_select %p379, %s25, 1
        %s381 = smul.addr %s380, 304
        %s382 = smul.addr %s381, 4
        %s383 = scalar_lea.vmem %s0, %s382
        %v385 = vld [vmem:[%s383] sm:$0xff]
        %v386 = vld [vmem:[%s383 + $0x8] sm:$0xff]
        %v387 = vld [vmem:[%s383 + $0x10] sm:$0xff]
        %v388 = vld [vmem:[%s383 + $0x18] sm:$0xff]
        %v389 = vld [vmem:[%s383 + $0x20] sm:$0xff]
        %v390 = vld [vmem:[%s383 + $0x28] sm:$0xff]
        %v391 = vld [vmem:[%s383 + $0x30] sm:$0xff]
        %v392 = vld [vmem:[%s383 + $0x38] sm:$0xff]
        %v393 = vld [vmem:[%s383 + $0x40] sm:$0xff]
        %v394 = vld [vmem:[%s383 + $0x48] sm:$0xff]
        %v395 = vld [vmem:[%s383 + $0x50] sm:$0xff]
        %v396 = vld [vmem:[%s383 + $0x58] sm:$0xff]
        %v397 = vld [vmem:[%s383 + $0x60] sm:$0xff]
        %v398 = vld [vmem:[%s383 + $0x68] sm:$0xff]
        %v399 = vld [vmem:[%s383 + $0x70] sm:$0xff]
        %v400 = vld [vmem:[%s383 + $0x78] sm:$0xff]
        %v401 = vld [vmem:[%s383 + $0x80] sm:$0xff]
        %v402 = vld [vmem:[%s383 + $0x88] sm:$0xff]
        %v403 = vld [vmem:[%s383 + $0x90] sm:$0xff]
        %v404 = vld [vmem:[%s383 + $0x98] sm:$0xff]
        %v405 = vld [vmem:[%s383 + $0xa0] sm:$0xff]
        %v406 = vld [vmem:[%s383 + $0xa8] sm:$0xff]
        %v407 = vld [vmem:[%s383 + $0xb0] sm:$0xff]
        %v408 = vld [vmem:[%s383 + $0xb8] sm:$0xff]
        %v409 = vld [vmem:[%s383 + $0xc0] sm:$0xff]
        %v410 = vld [vmem:[%s383 + $0xc8] sm:$0xff]
        %v411 = vld [vmem:[%s383 + $0xd0] sm:$0xff]
        %v412 = vld [vmem:[%s383 + $0xd8] sm:$0xff]
        %v413 = vld [vmem:[%s383 + $0xe0] sm:$0xff]
        %v414 = vld [vmem:[%s383 + $0xe8] sm:$0xff]
        %v415 = vld [vmem:[%s383 + $0xf0] sm:$0xff]
        %v416 = vld [vmem:[%s383 + $0xf8] sm:$0xff]
        %v417 = vld [vmem:[%s383 + $0x100] sm:$0xff]
        %v418 = vld [vmem:[%s383 + $0x108] sm:$0xff]
        %v419 = vld [vmem:[%s383 + $0x110] sm:$0xff]
        %v420 = vld [vmem:[%s383 + $0x118] sm:$0xff]
        %v421 = vld [vmem:[%s383 + $0x120] sm:$0xff]
        %v422 = vld [vmem:[%s383 + $0x128] sm:$0xff]
        %v423 = vld [vmem:[%s383 + $0x130] sm:$0xff]
        %v424 = vld [vmem:[%s383 + $0x138] sm:$0xff]
        %v425 = vld [vmem:[%s383 + $0x140] sm:$0xff]
        %v426 = vld [vmem:[%s383 + $0x148] sm:$0xff]
        %v427 = vld [vmem:[%s383 + $0x150] sm:$0xff]
        %v428 = vld [vmem:[%s383 + $0x158] sm:$0xff]
        %v429 = vld [vmem:[%s383 + $0x160] sm:$0xff]
        %v430 = vld [vmem:[%s383 + $0x168] sm:$0xff]
        %v431 = vld [vmem:[%s383 + $0x170] sm:$0xff]
        %v432 = vld [vmem:[%s383 + $0x178] sm:$0xff]
        %v433 = vld [vmem:[%s383 + $0x180] sm:$0xff]
        %v434 = vld [vmem:[%s383 + $0x188] sm:$0xff]
        %v435 = vld [vmem:[%s383 + $0x190] sm:$0xff]
        %v436 = vld [vmem:[%s383 + $0x198] sm:$0xff]
        %v437 = vld [vmem:[%s383 + $0x1a0] sm:$0xff]
        %v438 = vld [vmem:[%s383 + $0x1a8] sm:$0xff]
        %v439 = vld [vmem:[%s383 + $0x1b0] sm:$0xff]
        %v440 = vld [vmem:[%s383 + $0x1b8] sm:$0xff]
        %v441 = vld [vmem:[%s383 + $0x1c0] sm:$0xff]
        %v442 = vld [vmem:[%s383 + $0x1c8] sm:$0xff]
        %v443 = vld [vmem:[%s383 + $0x1d0] sm:$0xff]
        %v444 = vld [vmem:[%s383 + $0x1d8] sm:$0xff]
        %v445 = vld [vmem:[%s383 + $0x1e0] sm:$0xff]
        %v446 = vld [vmem:[%s383 + $0x1e8] sm:$0xff]
        %v447 = vld [vmem:[%s383 + $0x1f0] sm:$0xff]
        %v448 = vld [vmem:[%s383 + $0x1f8] sm:$0xff]
        %v449 = vld [vmem:[%s383 + $0x200] sm:$0xff]
        %v450 = vld [vmem:[%s383 + $0x208] sm:$0xff]
        %v451 = vld [vmem:[%s383 + $0x210] sm:$0xff]
        %v452 = vld [vmem:[%s383 + $0x218] sm:$0xff]
        %v453 = vld [vmem:[%s383 + $0x220] sm:$0xff]
        %v454 = vld [vmem:[%s383 + $0x228] sm:$0xff]
        %v455 = vld [vmem:[%s383 + $0x230] sm:$0xff]
        %v456 = vld [vmem:[%s383 + $0x238] sm:$0xff]
        %v457 = vld [vmem:[%s383 + $0x240] sm:$0xff]
        %v458 = vld [vmem:[%s383 + $0x248] sm:$0xff]
        %v459 = vld [vmem:[%s383 + $0x250] sm:$0xff]
        %v460 = vld [vmem:[%s383 + $0x258] sm:$0xff]
        %v461 = vld [vmem:[%s383 + $0x260] sm:$0xff]
        %v462 = vld [vmem:[%s383 + $0x268] sm:$0xff]
        %v463 = vld [vmem:[%s383 + $0x270] sm:$0xff]
        %v464 = vld [vmem:[%s383 + $0x278] sm:$0xff]
        %v465 = vld [vmem:[%s383 + $0x280] sm:$0xff]
        %v466 = vld [vmem:[%s383 + $0x288] sm:$0xff]
        %v467 = vld [vmem:[%s383 + $0x290] sm:$0xff]
        %v468 = vld [vmem:[%s383 + $0x298] sm:$0xff]
        %v469 = vld [vmem:[%s383 + $0x2a0] sm:$0xff]
        %v470 = vld [vmem:[%s383 + $0x2a8] sm:$0xff]
        %v471 = vld [vmem:[%s383 + $0x2b0] sm:$0xff]
        %v472 = vld [vmem:[%s383 + $0x2b8] sm:$0xff]
        %v473 = vld [vmem:[%s383 + $0x2c0] sm:$0xff]
        %v474 = vld [vmem:[%s383 + $0x2c8] sm:$0xff]
        %v475 = vld [vmem:[%s383 + $0x2d0] sm:$0xff]
        %v476 = vld [vmem:[%s383 + $0x2d8] sm:$0xff]
        %v477 = vld [vmem:[%s383 + $0x2e0] sm:$0xff]
        %v478 = vld [vmem:[%s383 + $0x2e8] sm:$0xff]
        %v479 = vld [vmem:[%s383 + $0x2f0] sm:$0xff]
        %v480 = vld [vmem:[%s383 + $0x2f8] sm:$0xff]
        %v481 = vld [vmem:[%s383 + $0x300] sm:$0xff]
        %v482 = vld [vmem:[%s383 + $0x308] sm:$0xff]
        %v483 = vld [vmem:[%s383 + $0x310] sm:$0xff]
        %v484 = vld [vmem:[%s383 + $0x318] sm:$0xff]
        %v485 = vld [vmem:[%s383 + $0x320] sm:$0xff]
        %v486 = vld [vmem:[%s383 + $0x328] sm:$0xff]
        %v487 = vld [vmem:[%s383 + $0x330] sm:$0xff]
        %v488 = vld [vmem:[%s383 + $0x338] sm:$0xff]
        %v489 = vld [vmem:[%s383 + $0x340] sm:$0xff]
        %v490 = vld [vmem:[%s383 + $0x348] sm:$0xff]
        %v491 = vld [vmem:[%s383 + $0x350] sm:$0xff]
        %v492 = vld [vmem:[%s383 + $0x358] sm:$0xff]
        %v493 = vld [vmem:[%s383 + $0x360] sm:$0xff]
        %v494 = vld [vmem:[%s383 + $0x368] sm:$0xff]
        %v495 = vld [vmem:[%s383 + $0x370] sm:$0xff]
        %v496 = vld [vmem:[%s383 + $0x378] sm:$0xff]
        %v497 = vld [vmem:[%s383 + $0x380] sm:$0xff]
        %v498 = vld [vmem:[%s383 + $0x388] sm:$0xff]
        %v499 = vld [vmem:[%s383 + $0x390] sm:$0xff]
        %v500 = vld [vmem:[%s383 + $0x398] sm:$0xff]
        %v501 = vld [vmem:[%s383 + $0x3a0] sm:$0xff]
        %v502 = vld [vmem:[%s383 + $0x3a8] sm:$0xff]
        %v503 = vld [vmem:[%s383 + $0x3b0] sm:$0xff]
        %v504 = vld [vmem:[%s383 + $0x3b8] sm:$0xff]
        %v505 = vld [vmem:[%s383 + $0x3c0] sm:$0xff]
        %v506 = vld [vmem:[%s383 + $0x3c8] sm:$0xff]
        %v507 = vld [vmem:[%s383 + $0x3d0] sm:$0xff]
        %v508 = vld [vmem:[%s383 + $0x3d8] sm:$0xff]
        %v509 = vld [vmem:[%s383 + $0x3e0] sm:$0xff]
        %v510 = vld [vmem:[%s383 + $0x3e8] sm:$0xff]
        %v511 = vld [vmem:[%s383 + $0x3f0] sm:$0xff]
        %v512 = vld [vmem:[%s383 + $0x3f8] sm:$0xff]
        %v513 = vld [vmem:[%s383 + $0x400] sm:$0xff]
        %v514 = vld [vmem:[%s383 + $0x408] sm:$0xff]
        %v515 = vld [vmem:[%s383 + $0x410] sm:$0xff]
        %v516 = vld [vmem:[%s383 + $0x418] sm:$0xff]
        %v517 = vld [vmem:[%s383 + $0x420] sm:$0xff]
        %v518 = vld [vmem:[%s383 + $0x428] sm:$0xff]
        %v519 = vld [vmem:[%s383 + $0x430] sm:$0xff]
        %v520 = vld [vmem:[%s383 + $0x438] sm:$0xff]
        %v521 = vld [vmem:[%s383 + $0x440] sm:$0xff]
        %v522 = vld [vmem:[%s383 + $0x448] sm:$0xff]
        %v523 = vld [vmem:[%s383 + $0x450] sm:$0xff]
        %v524 = vld [vmem:[%s383 + $0x458] sm:$0xff]
        %v525 = vld [vmem:[%s383 + $0x460] sm:$0xff]
        %v526 = vld [vmem:[%s383 + $0x468] sm:$0xff]
        %v527 = vld [vmem:[%s383 + $0x470] sm:$0xff]
        %v528 = vld [vmem:[%s383 + $0x478] sm:$0xff]
        %v529 = vld [vmem:[%s383 + $0x480] sm:$0x77]
        %v530 = vld [vmem:[%s383 + $0x488] sm:$0x77]
        %v531 = vld [vmem:[%s383 + $0x490] sm:$0x77]
        %v532 = vld [vmem:[%s383 + $0x498] sm:$0x77]
        %v533 = vld [vmem:[%s383 + $0x4a0] sm:$0x77]
        %v534 = vld [vmem:[%s383 + $0x4a8] sm:$0x77]
        %v535 = vld [vmem:[%s383 + $0x4b0] sm:$0x77]
        %v536 = vld [vmem:[%s383 + $0x4b8] sm:$0x77]
        %v537 = vld [vmem:[%s1] sm:$0xff]
        %v538 = vld [vmem:[%s1 + $0x8] sm:$0xff]
        %v541 = vunpack.c.l.b16 %v537
        %v542 = vunpack.c.h.b16 %v537
        %v543 = vunpack.c.l.b16 %v538
        %v544 = vunpack.c.h.b16 %v538
        %v545 = vpack.c.b16 %v543, %v541
        %v546 = vpack.c.b16 %v544, %v542
        %v700 = vunpack.c.l.b16 %v385
        %v701 = vunpack.c.h.b16 %v385
        %v702 = vunpack.c.l.b16 %v386
        %v703 = vunpack.c.h.b16 %v386
        %v704 = vunpack.c.l.b16 %v387
        %v705 = vunpack.c.h.b16 %v387
        %v706 = vunpack.c.l.b16 %v388
        %v707 = vunpack.c.h.b16 %v388
        %v708 = vunpack.c.l.b16 %v389
        %v709 = vunpack.c.h.b16 %v389
        %v710 = vunpack.c.l.b16 %v390
        %v711 = vunpack.c.h.b16 %v390
        %v712 = vunpack.c.l.b16 %v391
        %v713 = vunpack.c.h.b16 %v391
        %v714 = vunpack.c.l.b16 %v392
        %v715 = vunpack.c.h.b16 %v392
        %v716 = vunpack.c.l.b16 %v393
        %v717 = vunpack.c.h.b16 %v393
        %v718 = vunpack.c.l.b16 %v394
        %v719 = vunpack.c.h.b16 %v394
        %v720 = vunpack.c.l.b16 %v395
        %v721 = vunpack.c.h.b16 %v395
        %v722 = vunpack.c.l.b16 %v396
        %v723 = vunpack.c.h.b16 %v396
        %v724 = vunpack.c.l.b16 %v397
        %v725 = vunpack.c.h.b16 %v397
        %v726 = vunpack.c.l.b16 %v398
        %v727 = vunpack.c.h.b16 %v398
        %v728 = vunpack.c.l.b16 %v399
        %v729 = vunpack.c.h.b16 %v399
        %v730 = vunpack.c.l.b16 %v400
        %v731 = vunpack.c.h.b16 %v400
        %v732 = vunpack.c.l.b16 %v401
        %v733 = vunpack.c.h.b16 %v401
        %v734 = vunpack.c.l.b16 %v402
        %v735 = vunpack.c.h.b16 %v402
        %v736 = vunpack.c.l.b16 %v403
        %v737 = vunpack.c.h.b16 %v403
        %v738 = vunpack.c.l.b16 %v404
        %v739 = vunpack.c.h.b16 %v404
        %v740 = vunpack.c.l.b16 %v405
        %v741 = vunpack.c.h.b16 %v405
        %v742 = vunpack.c.l.b16 %v406
        %v743 = vunpack.c.h.b16 %v406
        %v744 = vunpack.c.l.b16 %v407
        %v745 = vunpack.c.h.b16 %v407
        %v746 = vunpack.c.l.b16 %v408
        %v747 = vunpack.c.h.b16 %v408
        %v748 = vunpack.c.l.b16 %v409
        %v749 = vunpack.c.h.b16 %v409
        %v750 = vunpack.c.l.b16 %v410
        %v751 = vunpack.c.h.b16 %v410
        %v752 = vunpack.c.l.b16 %v411
        %v753 = vunpack.c.h.b16 %v411
        %v754 = vunpack.c.l.b16 %v412
        %v755 = vunpack.c.h.b16 %v412
        %v756 = vunpack.c.l.b16 %v413
        %v757 = vunpack.c.h.b16 %v413
        %v758 = vunpack.c.l.b16 %v414
        %v759 = vunpack.c.h.b16 %v414
        %v760 = vunpack.c.l.b16 %v415
        %v761 = vunpack.c.h.b16 %v415
        %v762 = vunpack.c.l.b16 %v416
        %v763 = vunpack.c.h.b16 %v416
        %v764 = vunpack.c.l.b16 %v417
        %v765 = vunpack.c.h.b16 %v417
        %v766 = vunpack.c.l.b16 %v418
        %v767 = vunpack.c.h.b16 %v418
        %v768 = vunpack.c.l.b16 %v419
        %v769 = vunpack.c.h.b16 %v419
        %v770 = vunpack.c.l.b16 %v420
        %v771 = vunpack.c.h.b16 %v420
        %v772 = vunpack.c.l.b16 %v421
        %v773 = vunpack.c.h.b16 %v421
        %v774 = vunpack.c.l.b16 %v422
        %v775 = vunpack.c.h.b16 %v422
        %v776 = vunpack.c.l.b16 %v423
        %v777 = vunpack.c.h.b16 %v423
        %v778 = vunpack.c.l.b16 %v424
        %v779 = vunpack.c.h.b16 %v424
        %v780 = vunpack.c.l.b16 %v425
        %v781 = vunpack.c.h.b16 %v425
        %v782 = vunpack.c.l.b16 %v426
        %v783 = vunpack.c.h.b16 %v426
        %v784 = vunpack.c.l.b16 %v427
        %v785 = vunpack.c.h.b16 %v427
        %v786 = vunpack.c.l.b16 %v428
        %v787 = vunpack.c.h.b16 %v428
        %v788 = vunpack.c.l.b16 %v429
        %v789 = vunpack.c.h.b16 %v429
        %v790 = vunpack.c.l.b16 %v430
        %v791 = vunpack.c.h.b16 %v430
        %v792 = vunpack.c.l.b16 %v431
        %v793 = vunpack.c.h.b16 %v431
        %v794 = vunpack.c.l.b16 %v432
        %v795 = vunpack.c.h.b16 %v432
        %v796 = vunpack.c.l.b16 %v433
        %v797 = vunpack.c.h.b16 %v433
        %v798 = vunpack.c.l.b16 %v434
        %v799 = vunpack.c.h.b16 %v434
        %v800 = vunpack.c.l.b16 %v435
        %v801 = vunpack.c.h.b16 %v435
        %v802 = vunpack.c.l.b16 %v436
        %v803 = vunpack.c.h.b16 %v436
        %v804 = vunpack.c.l.b16 %v437
        %v805 = vunpack.c.h.b16 %v437
        %v806 = vunpack.c.l.b16 %v438
        %v807 = vunpack.c.h.b16 %v438
        %v808 = vunpack.c.l.b16 %v439
        %v809 = vunpack.c.h.b16 %v439
        %v810 = vunpack.c.l.b16 %v440
        %v811 = vunpack.c.h.b16 %v440
        %v812 = vunpack.c.l.b16 %v441
        %v813 = vunpack.c.h.b16 %v441
        %v814 = vunpack.c.l.b16 %v442
        %v815 = vunpack.c.h.b16 %v442
        %v816 = vunpack.c.l.b16 %v443
        %v817 = vunpack.c.h.b16 %v443
        %v818 = vunpack.c.l.b16 %v444
        %v819 = vunpack.c.h.b16 %v444
        %v820 = vunpack.c.l.b16 %v445
        %v821 = vunpack.c.h.b16 %v445
        %v822 = vunpack.c.l.b16 %v446
        %v823 = vunpack.c.h.b16 %v446
        %v824 = vunpack.c.l.b16 %v447
        %v825 = vunpack.c.h.b16 %v447
        %v826 = vunpack.c.l.b16 %v448
        %v827 = vunpack.c.h.b16 %v448
        %v828 = vunpack.c.l.b16 %v449
        %v829 = vunpack.c.h.b16 %v449
        %v830 = vunpack.c.l.b16 %v450
        %v831 = vunpack.c.h.b16 %v450
        %v832 = vunpack.c.l.b16 %v451
        %v833 = vunpack.c.h.b16 %v451
        %v834 = vunpack.c.l.b16 %v452
        %v835 = vunpack.c.h.b16 %v452
        %v836 = vunpack.c.l.b16 %v453
        %v837 = vunpack.c.h.b16 %v453
        %v838 = vunpack.c.l.b16 %v454
        %v839 = vunpack.c.h.b16 %v454
        %v840 = vunpack.c.l.b16 %v455
        %v841 = vunpack.c.h.b16 %v455
        %v842 = vunpack.c.l.b16 %v456
        %v843 = vunpack.c.h.b16 %v456
        %v844 = vunpack.c.l.b16 %v457
        %v845 = vunpack.c.h.b16 %v457
        %v846 = vunpack.c.l.b16 %v458
        %v847 = vunpack.c.h.b16 %v458
        %v848 = vunpack.c.l.b16 %v459
        %v849 = vunpack.c.h.b16 %v459
        %v850 = vunpack.c.l.b16 %v460
        %v851 = vunpack.c.h.b16 %v460
        %v852 = vunpack.c.l.b16 %v461
        %v853 = vunpack.c.h.b16 %v461
        %v854 = vunpack.c.l.b16 %v462
        %v855 = vunpack.c.h.b16 %v462
        %v856 = vunpack.c.l.b16 %v463
        %v857 = vunpack.c.h.b16 %v463
        %v858 = vunpack.c.l.b16 %v464
        %v859 = vunpack.c.h.b16 %v464
        %v860 = vunpack.c.l.b16 %v465
        %v861 = vunpack.c.h.b16 %v465
        %v862 = vunpack.c.l.b16 %v466
        %v863 = vunpack.c.h.b16 %v466
        %v864 = vunpack.c.l.b16 %v467
        %v865 = vunpack.c.h.b16 %v467
        %v866 = vunpack.c.l.b16 %v468
        %v867 = vunpack.c.h.b16 %v468
        %v868 = vunpack.c.l.b16 %v469
        %v869 = vunpack.c.h.b16 %v469
        %v870 = vunpack.c.l.b16 %v470
        %v871 = vunpack.c.h.b16 %v470
        %v872 = vunpack.c.l.b16 %v471
        %v873 = vunpack.c.h.b16 %v471
        %v874 = vunpack.c.l.b16 %v472
        %v875 = vunpack.c.h.b16 %v472
        %v876 = vunpack.c.l.b16 %v473
        %v877 = vunpack.c.h.b16 %v473
        %v878 = vunpack.c.l.b16 %v474
        %v879 = vunpack.c.h.b16 %v474
        %v880 = vunpack.c.l.b16 %v475
        %v881 = vunpack.c.h.b16 %v475
        %v882 = vunpack.c.l.b16 %v476
        %v883 = vunpack.c.h.b16 %v476
        %v884 = vunpack.c.l.b16 %v477
        %v885 = vunpack.c.h.b16 %v477
        %v886 = vunpack.c.l.b16 %v478
        %v887 = vunpack.c.h.b16 %v478
        %v888 = vunpack.c.l.b16 %v479
        %v889 = vunpack.c.h.b16 %v479
        %v890 = vunpack.c.l.b16 %v480
        %v891 = vunpack.c.h.b16 %v480
        %v892 = vunpack.c.l.b16 %v481
        %v893 = vunpack.c.h.b16 %v481
        %v894 = vunpack.c.l.b16 %v482
        %v895 = vunpack.c.h.b16 %v482
        %v896 = vunpack.c.l.b16 %v483
        %v897 = vunpack.c.h.b16 %v483
        %v898 = vunpack.c.l.b16 %v484
        %v899 = vunpack.c.h.b16 %v484
        %v900 = vunpack.c.l.b16 %v485
        %v901 = vunpack.c.h.b16 %v485
        %v902 = vunpack.c.l.b16 %v486
        %v903 = vunpack.c.h.b16 %v486
        %v904 = vunpack.c.l.b16 %v487
        %v905 = vunpack.c.h.b16 %v487
        %v906 = vunpack.c.l.b16 %v488
        %v907 = vunpack.c.h.b16 %v488
        %v908 = vunpack.c.l.b16 %v489
        %v909 = vunpack.c.h.b16 %v489
        %v910 = vunpack.c.l.b16 %v490
        %v911 = vunpack.c.h.b16 %v490
        %v912 = vunpack.c.l.b16 %v491
        %v913 = vunpack.c.h.b16 %v491
        %v914 = vunpack.c.l.b16 %v492
        %v915 = vunpack.c.h.b16 %v492
        %v916 = vunpack.c.l.b16 %v493
        %v917 = vunpack.c.h.b16 %v493
        %v918 = vunpack.c.l.b16 %v494
        %v919 = vunpack.c.h.b16 %v494
        %v920 = vunpack.c.l.b16 %v495
        %v921 = vunpack.c.h.b16 %v495
        %v922 = vunpack.c.l.b16 %v496
        %v923 = vunpack.c.h.b16 %v496
        %v924 = vunpack.c.l.b16 %v497
        %v925 = vunpack.c.h.b16 %v497
        %v926 = vunpack.c.l.b16 %v498
        %v927 = vunpack.c.h.b16 %v498
        %v928 = vunpack.c.l.b16 %v499
        %v929 = vunpack.c.h.b16 %v499
        %v930 = vunpack.c.l.b16 %v500
        %v931 = vunpack.c.h.b16 %v500
        %v932 = vunpack.c.l.b16 %v501
        %v933 = vunpack.c.h.b16 %v501
        %v934 = vunpack.c.l.b16 %v502
        %v935 = vunpack.c.h.b16 %v502
        %v936 = vunpack.c.l.b16 %v503
        %v937 = vunpack.c.h.b16 %v503
        %v938 = vunpack.c.l.b16 %v504
        %v939 = vunpack.c.h.b16 %v504
        %v940 = vunpack.c.l.b16 %v505
        %v941 = vunpack.c.h.b16 %v505
        %v942 = vunpack.c.l.b16 %v506
        %v943 = vunpack.c.h.b16 %v506
        %v944 = vunpack.c.l.b16 %v507
        %v945 = vunpack.c.h.b16 %v507
        %v946 = vunpack.c.l.b16 %v508
        %v947 = vunpack.c.h.b16 %v508
        %v948 = vunpack.c.l.b16 %v509
        %v949 = vunpack.c.h.b16 %v509
        %v950 = vunpack.c.l.b16 %v510
        %v951 = vunpack.c.h.b16 %v510
        %v952 = vunpack.c.l.b16 %v511
        %v953 = vunpack.c.h.b16 %v511
        %v954 = vunpack.c.l.b16 %v512
        %v955 = vunpack.c.h.b16 %v512
        %v956 = vunpack.c.l.b16 %v513
        %v957 = vunpack.c.h.b16 %v513
        %v958 = vunpack.c.l.b16 %v514
        %v959 = vunpack.c.h.b16 %v514
        %v960 = vunpack.c.l.b16 %v515
        %v961 = vunpack.c.h.b16 %v515
        %v962 = vunpack.c.l.b16 %v516
        %v963 = vunpack.c.h.b16 %v516
        %v964 = vunpack.c.l.b16 %v517
        %v965 = vunpack.c.h.b16 %v517
        %v966 = vunpack.c.l.b16 %v518
        %v967 = vunpack.c.h.b16 %v518
        %v968 = vunpack.c.l.b16 %v519
        %v969 = vunpack.c.h.b16 %v519
        %v970 = vunpack.c.l.b16 %v520
        %v971 = vunpack.c.h.b16 %v520
        %v972 = vunpack.c.l.b16 %v521
        %v973 = vunpack.c.h.b16 %v521
        %v974 = vunpack.c.l.b16 %v522
        %v975 = vunpack.c.h.b16 %v522
        %v976 = vunpack.c.l.b16 %v523
        %v977 = vunpack.c.h.b16 %v523
        %v978 = vunpack.c.l.b16 %v524
        %v979 = vunpack.c.h.b16 %v524
        %v980 = vunpack.c.l.b16 %v525
        %v981 = vunpack.c.h.b16 %v525
        %v982 = vunpack.c.l.b16 %v526
        %v983 = vunpack.c.h.b16 %v526
        %v984 = vunpack.c.l.b16 %v527
        %v985 = vunpack.c.h.b16 %v527
        %v986 = vunpack.c.l.b16 %v528
        %v987 = vunpack.c.h.b16 %v528
        %v988 = vunpack.c.l.b16 %v529
        %v989 = vunpack.c.h.b16 %v529
        %v990 = vunpack.c.l.b16 %v530
        %v991 = vunpack.c.h.b16 %v530
        %v992 = vunpack.c.l.b16 %v531
        %v993 = vunpack.c.h.b16 %v531
        %v994 = vunpack.c.l.b16 %v532
        %v995 = vunpack.c.h.b16 %v532
        %v996 = vunpack.c.l.b16 %v533
        %v997 = vunpack.c.h.b16 %v533
        %v998 = vunpack.c.l.b16 %v534
        %v999 = vunpack.c.h.b16 %v534
        %v1000 = vunpack.c.l.b16 %v535
        %v1001 = vunpack.c.h.b16 %v535
        %v1002 = vunpack.c.l.b16 %v536
        %v1003 = vunpack.c.h.b16 %v536
        %v1004 = vpack.c.b16 %v716, %v700
        %v1005 = vpack.c.b16 %v717, %v701
        %v1006 = vpack.c.b16 %v718, %v702
        %v1007 = vpack.c.b16 %v719, %v703
        %v1008 = vpack.c.b16 %v720, %v704
        %v1009 = vpack.c.b16 %v721, %v705
        %v1010 = vpack.c.b16 %v722, %v706
        %v1011 = vpack.c.b16 %v723, %v707
        %v1012 = vpack.c.b16 %v724, %v708
        %v1013 = vpack.c.b16 %v725, %v709
        %v1014 = vpack.c.b16 %v726, %v710
        %v1015 = vpack.c.b16 %v727, %v711
        %v1016 = vpack.c.b16 %v728, %v712
        %v1017 = vpack.c.b16 %v729, %v713
        %v1018 = vpack.c.b16 %v730, %v714
        %v1019 = vpack.c.b16 %v731, %v715
        %v1020 = vpack.c.b16 %v748, %v732
        %v1021 = vpack.c.b16 %v749, %v733
        %v1022 = vpack.c.b16 %v750, %v734
        %v1023 = vpack.c.b16 %v751, %v735
        %v1024 = vpack.c.b16 %v752, %v736
        %v1025 = vpack.c.b16 %v753, %v737
        %v1026 = vpack.c.b16 %v754, %v738
        %v1027 = vpack.c.b16 %v755, %v739
        %v1028 = vpack.c.b16 %v756, %v740
        %v1029 = vpack.c.b16 %v757, %v741
        %v1030 = vpack.c.b16 %v758, %v742
        %v1031 = vpack.c.b16 %v759, %v743
        %v1032 = vpack.c.b16 %v760, %v744
        %v1033 = vpack.c.b16 %v761, %v745
        %v1034 = vpack.c.b16 %v762, %v746
        %v1035 = vpack.c.b16 %v763, %v747
        %v1036 = vpack.c.b16 %v780, %v764
        %v1037 = vpack.c.b16 %v781, %v765
        %v1038 = vpack.c.b16 %v782, %v766
        %v1039 = vpack.c.b16 %v783, %v767
        %v1040 = vpack.c.b16 %v784, %v768
        %v1041 = vpack.c.b16 %v785, %v769
        %v1042 = vpack.c.b16 %v786, %v770
        %v1043 = vpack.c.b16 %v787, %v771
        %v1044 = vpack.c.b16 %v788, %v772
        %v1045 = vpack.c.b16 %v789, %v773
        %v1046 = vpack.c.b16 %v790, %v774
        %v1047 = vpack.c.b16 %v791, %v775
        %v1048 = vpack.c.b16 %v792, %v776
        %v1049 = vpack.c.b16 %v793, %v777
        %v1050 = vpack.c.b16 %v794, %v778
        %v1051 = vpack.c.b16 %v795, %v779
        %v1052 = vpack.c.b16 %v812, %v796
        %v1053 = vpack.c.b16 %v813, %v797
        %v1054 = vpack.c.b16 %v814, %v798
        %v1055 = vpack.c.b16 %v815, %v799
        %v1056 = vpack.c.b16 %v816, %v800
        %v1057 = vpack.c.b16 %v817, %v801
        %v1058 = vpack.c.b16 %v818, %v802
        %v1059 = vpack.c.b16 %v819, %v803
        %v1060 = vpack.c.b16 %v820, %v804
        %v1061 = vpack.c.b16 %v821, %v805
        %v1062 = vpack.c.b16 %v822, %v806
        %v1063 = vpack.c.b16 %v823, %v807
        %v1064 = vpack.c.b16 %v824, %v808
        %v1065 = vpack.c.b16 %v825, %v809
        %v1066 = vpack.c.b16 %v826, %v810
        %v1067 = vpack.c.b16 %v827, %v811
        %v1068 = vpack.c.b16 %v844, %v828
        %v1069 = vpack.c.b16 %v845, %v829
        %v1070 = vpack.c.b16 %v846, %v830
        %v1071 = vpack.c.b16 %v847, %v831
        %v1072 = vpack.c.b16 %v848, %v832
        %v1073 = vpack.c.b16 %v849, %v833
        %v1074 = vpack.c.b16 %v850, %v834
        %v1075 = vpack.c.b16 %v851, %v835
        %v1076 = vpack.c.b16 %v852, %v836
        %v1077 = vpack.c.b16 %v853, %v837
        %v1078 = vpack.c.b16 %v854, %v838
        %v1079 = vpack.c.b16 %v855, %v839
        %v1080 = vpack.c.b16 %v856, %v840
        %v1081 = vpack.c.b16 %v857, %v841
        %v1082 = vpack.c.b16 %v858, %v842
        %v1083 = vpack.c.b16 %v859, %v843
        %v1084 = vpack.c.b16 %v876, %v860
        %v1085 = vpack.c.b16 %v877, %v861
        %v1086 = vpack.c.b16 %v878, %v862
        %v1087 = vpack.c.b16 %v879, %v863
        %v1088 = vpack.c.b16 %v880, %v864
        %v1089 = vpack.c.b16 %v881, %v865
        %v1090 = vpack.c.b16 %v882, %v866
        %v1091 = vpack.c.b16 %v883, %v867
        %v1092 = vpack.c.b16 %v884, %v868
        %v1093 = vpack.c.b16 %v885, %v869
        %v1094 = vpack.c.b16 %v886, %v870
        %v1095 = vpack.c.b16 %v887, %v871
        %v1096 = vpack.c.b16 %v888, %v872
        %v1097 = vpack.c.b16 %v889, %v873
        %v1098 = vpack.c.b16 %v890, %v874
        %v1099 = vpack.c.b16 %v891, %v875
        %v1100 = vpack.c.b16 %v908, %v892
        %v1101 = vpack.c.b16 %v909, %v893
        %v1102 = vpack.c.b16 %v910, %v894
        %v1103 = vpack.c.b16 %v911, %v895
        %v1104 = vpack.c.b16 %v912, %v896
        %v1105 = vpack.c.b16 %v913, %v897
        %v1106 = vpack.c.b16 %v914, %v898
        %v1107 = vpack.c.b16 %v915, %v899
        %v1108 = vpack.c.b16 %v916, %v900
        %v1109 = vpack.c.b16 %v917, %v901
        %v1110 = vpack.c.b16 %v918, %v902
        %v1111 = vpack.c.b16 %v919, %v903
        %v1112 = vpack.c.b16 %v920, %v904
        %v1113 = vpack.c.b16 %v921, %v905
        %v1114 = vpack.c.b16 %v922, %v906
        %v1115 = vpack.c.b16 %v923, %v907
        %v1116 = vpack.c.b16 %v940, %v924
        %v1117 = vpack.c.b16 %v941, %v925
        %v1118 = vpack.c.b16 %v942, %v926
        %v1119 = vpack.c.b16 %v943, %v927
        %v1120 = vpack.c.b16 %v944, %v928
        %v1121 = vpack.c.b16 %v945, %v929
        %v1122 = vpack.c.b16 %v946, %v930
        %v1123 = vpack.c.b16 %v947, %v931
        %v1124 = vpack.c.b16 %v948, %v932
        %v1125 = vpack.c.b16 %v949, %v933
        %v1126 = vpack.c.b16 %v950, %v934
        %v1127 = vpack.c.b16 %v951, %v935
        %v1128 = vpack.c.b16 %v952, %v936
        %v1129 = vpack.c.b16 %v953, %v937
        %v1130 = vpack.c.b16 %v954, %v938
        %v1131 = vpack.c.b16 %v955, %v939
        %v1132 = vpack.c.b16 %v972, %v956
        %v1133 = vpack.c.b16 %v973, %v957
        %v1134 = vpack.c.b16 %v974, %v958
        %v1135 = vpack.c.b16 %v975, %v959
        %v1136 = vpack.c.b16 %v976, %v960
        %v1137 = vpack.c.b16 %v977, %v961
        %v1138 = vpack.c.b16 %v978, %v962
        %v1139 = vpack.c.b16 %v979, %v963
        %v1140 = vpack.c.b16 %v980, %v964
        %v1141 = vpack.c.b16 %v981, %v965
        %v1142 = vpack.c.b16 %v982, %v966
        %v1143 = vpack.c.b16 %v983, %v967
        %v1144 = vpack.c.b16 %v984, %v968
        %v1145 = vpack.c.b16 %v985, %v969
        %v1146 = vpack.c.b16 %v986, %v970
        %v1147 = vpack.c.b16 %v987, %v971
        %v1148 = vpack.c.b16 %v988, %v988
        %v1149 = vpack.c.b16 %v989, %v989
        %v1150 = vpack.c.b16 %v990, %v990
        %v1151 = vpack.c.b16 %v991, %v991
        %v1152 = vpack.c.b16 %v992, %v992
        %v1153 = vpack.c.b16 %v993, %v993
        %v1154 = vpack.c.b16 %v994, %v994
        %v1155 = vpack.c.b16 %v995, %v995
        %v1156 = vpack.c.b16 %v996, %v996
        %v1157 = vpack.c.b16 %v997, %v997
        %v1158 = vpack.c.b16 %v998, %v998
        %v1159 = vpack.c.b16 %v999, %v999
        %v1160 = vpack.c.b16 %v1000, %v1000
        %v1161 = vpack.c.b16 %v1001, %v1001
        %v1162 = vpack.c.b16 %v1002, %v1002
        %v1163 = vpack.c.b16 %v1003, %v1003
        %vm1308 = vcmask 179200
        %v1310 = vsel %vm1308, %v546, 0
        %vm1312 = vcmask 1042432
        %v1314 = vsel %vm1312, %v1148, 0
        %v1317 = vsel %vm1312, %v1149, 0
        %v1320 = vsel %vm1312, %v1150, 0
        %v1323 = vsel %vm1312, %v1151, 0
        %v1326 = vsel %vm1312, %v1152, 0
        %v1329 = vsel %vm1312, %v1153, 0
        %v1332 = vsel %vm1312, %v1154, 0
        %v1335 = vsel %vm1312, %v1155, 0
        %v1338 = vsel %vm1312, %v1156, 0
        %v1341 = vsel %vm1312, %v1157, 0
        %v1344 = vsel %vm1312, %v1158, 0
        %v1347 = vsel %vm1312, %v1159, 0
        %v1350 = vsel %vm1312, %v1160, 0
        %v1353 = vsel %vm1312, %v1161, 0
        %v1356 = vsel %vm1312, %v1162, 0
        %v1359 = vsel %vm1312, %v1163, 0
        %1361 = vmatpush.bf16.msra.mxu0 %v1116
        %1362 = vmatpush.bf16.msra.mxu0 %v1100
        %1363 = vmatpush.bf16.msra.mxu0 %v1084
        %1364 = vmatpush.bf16.msra.mxu0 %v1068
        %1365 = vmatpush.bf16.msra.mxu0 %v1052
        %1366 = vmatpush.bf16.msra.mxu0 %v1036
        %1367 = vmatpush.bf16.msra.mxu0 %v1020
        %1368 = vmatpush.bf16.msra.mxu0 %v1004
        %1369 = vmatmul.bf16.gmra.mxu0 %v545
        %v1370 = vpop.f32.mrf.mxu0
        %v1371 = vadd.f32 0.0, %v1370
        %v1372 = vpop.f32.mrf.mxu0
        %v1373 = vadd.f32 0.0, %v1372
        %1374 = vdwg.mxu0
        %1375 = vmatpush.bf16.msra.mxu0 0
        %1376 = vmatpush.bf16.msra.mxu0 0
        %1377 = vmatpush.bf16.msra.mxu0 0
        %1378 = vmatpush.bf16.msra.mxu0 0
        %1379 = vmatpush.bf16.msra.mxu0 0
        %1380 = vmatpush.bf16.msra.mxu0 0
        %1381 = vmatpush.bf16.msra.mxu0 %v1314
        %1382 = vmatpush.bf16.msra.mxu0 %v1132
        %1383 = vmatmul.bf16.gmra.mxu0 %v1310
        %v1384 = vpop.f32.mrf.mxu0
        %v1385 = vadd.f32 %v1371, %v1384
        %v1386 = vpop.f32.mrf.mxu0
        %v1387 = vadd.f32 %v1373, %v1386
        %1388 = vdwg.mxu0
        %1389 = vmatpush.bf16.msra.mxu0 %v1117
        %1390 = vmatpush.bf16.msra.mxu0 %v1101
        %1391 = vmatpush.bf16.msra.mxu0 %v1085
        %1392 = vmatpush.bf16.msra.mxu0 %v1069
        %1393 = vmatpush.bf16.msra.mxu0 %v1053
        %1394 = vmatpush.bf16.msra.mxu0 %v1037
        %1395 = vmatpush.bf16.msra.mxu0 %v1021
        %1396 = vmatpush.bf16.msra.mxu0 %v1005
        %1397 = vmatmul.bf16.gmra.mxu0 %v545
        %v1398 = vpop.f32.mrf.mxu0
        %v1399 = vadd.f32 0.0, %v1398
        %v1400 = vpop.f32.mrf.mxu0
        %v1401 = vadd.f32 0.0, %v1400
        %1402 = vdwg.mxu0
        %1403 = vmatpush.bf16.msra.mxu0 0
        %1404 = vmatpush.bf16.msra.mxu0 0
        %1405 = vmatpush.bf16.msra.mxu0 0
        %1406 = vmatpush.bf16.msra.mxu0 0
        %1407 = vmatpush.bf16.msra.mxu0 0
        %1408 = vmatpush.bf16.msra.mxu0 0
        %1409 = vmatpush.bf16.msra.mxu0 %v1317
        %1410 = vmatpush.bf16.msra.mxu0 %v1133
        %1411 = vmatmul.bf16.gmra.mxu0 %v1310
        %v1412 = vpop.f32.mrf.mxu0
        %v1413 = vadd.f32 %v1399, %v1412
        %v1414 = vpop.f32.mrf.mxu0
        %v1415 = vadd.f32 %v1401, %v1414
        %1416 = vdwg.mxu0
        %1417 = vmatpush.bf16.msra.mxu0 %v1118
        %1418 = vmatpush.bf16.msra.mxu0 %v1102
        %1419 = vmatpush.bf16.msra.mxu0 %v1086
        %1420 = vmatpush.bf16.msra.mxu0 %v1070
        %1421 = vmatpush.bf16.msra.mxu0 %v1054
        %1422 = vmatpush.bf16.msra.mxu0 %v1038
        %1423 = vmatpush.bf16.msra.mxu0 %v1022
        %1424 = vmatpush.bf16.msra.mxu0 %v1006
        %1425 = vmatmul.bf16.gmra.mxu0 %v545
        %v1426 = vpop.f32.mrf.mxu0
        %v1427 = vadd.f32 0.0, %v1426
        %v1428 = vpop.f32.mrf.mxu0
        %v1429 = vadd.f32 0.0, %v1428
        %1430 = vdwg.mxu0
        %1431 = vmatpush.bf16.msra.mxu0 0
        %1432 = vmatpush.bf16.msra.mxu0 0
        %1433 = vmatpush.bf16.msra.mxu0 0
        %1434 = vmatpush.bf16.msra.mxu0 0
        %1435 = vmatpush.bf16.msra.mxu0 0
        %1436 = vmatpush.bf16.msra.mxu0 0
        %1437 = vmatpush.bf16.msra.mxu0 %v1320
        %1438 = vmatpush.bf16.msra.mxu0 %v1134
        %1439 = vmatmul.bf16.gmra.mxu0 %v1310
        %v1440 = vpop.f32.mrf.mxu0
        %v1441 = vadd.f32 %v1427, %v1440
        %v1442 = vpop.f32.mrf.mxu0
        %v1443 = vadd.f32 %v1429, %v1442
        %1444 = vdwg.mxu0
        %1445 = vmatpush.bf16.msra.mxu0 %v1119
        %1446 = vmatpush.bf16.msra.mxu0 %v1103
        %1447 = vmatpush.bf16.msra.mxu0 %v1087
        %1448 = vmatpush.bf16.msra.mxu0 %v1071
        %1449 = vmatpush.bf16.msra.mxu0 %v1055
        %1450 = vmatpush.bf16.msra.mxu0 %v1039
        %1451 = vmatpush.bf16.msra.mxu0 %v1023
        %1452 = vmatpush.bf16.msra.mxu0 %v1007
        %1453 = vmatmul.bf16.gmra.mxu0 %v545
        %v1454 = vpop.f32.mrf.mxu0
        %v1455 = vadd.f32 0.0, %v1454
        %v1456 = vpop.f32.mrf.mxu0
        %v1457 = vadd.f32 0.0, %v1456
        %1458 = vdwg.mxu0
        %1459 = vmatpush.bf16.msra.mxu0 0
        %1460 = vmatpush.bf16.msra.mxu0 0
        %1461 = vmatpush.bf16.msra.mxu0 0
        %1462 = vmatpush.bf16.msra.mxu0 0
        %1463 = vmatpush.bf16.msra.mxu0 0
        %1464 = vmatpush.bf16.msra.mxu0 0
        %1465 = vmatpush.bf16.msra.mxu0 %v1323
        %1466 = vmatpush.bf16.msra.mxu0 %v1135
        %1467 = vmatmul.bf16.gmra.mxu0 %v1310
        %v1468 = vpop.f32.mrf.mxu0
        %v1469 = vadd.f32 %v1455, %v1468
        %v1470 = vpop.f32.mrf.mxu0
        %v1471 = vadd.f32 %v1457, %v1470
        %1472 = vdwg.mxu0
        %1473 = vmatpush.bf16.msra.mxu0 %v1120
        %1474 = vmatpush.bf16.msra.mxu0 %v1104
        %1475 = vmatpush.bf16.msra.mxu0 %v1088
        %1476 = vmatpush.bf16.msra.mxu0 %v1072
        %1477 = vmatpush.bf16.msra.mxu0 %v1056
        %1478 = vmatpush.bf16.msra.mxu0 %v1040
        %1479 = vmatpush.bf16.msra.mxu0 %v1024
        %1480 = vmatpush.bf16.msra.mxu0 %v1008
        %1481 = vmatmul.bf16.gmra.mxu0 %v545
        %v1482 = vpop.f32.mrf.mxu0
        %v1483 = vadd.f32 0.0, %v1482
        %v1484 = vpop.f32.mrf.mxu0
        %v1485 = vadd.f32 0.0, %v1484
        %1486 = vdwg.mxu0
        %1487 = vmatpush.bf16.msra.mxu0 0
        %1488 = vmatpush.bf16.msra.mxu0 0
        %1489 = vmatpush.bf16.msra.mxu0 0
        %1490 = vmatpush.bf16.msra.mxu0 0
        %1491 = vmatpush.bf16.msra.mxu0 0
        %1492 = vmatpush.bf16.msra.mxu0 0
        %1493 = vmatpush.bf16.msra.mxu0 %v1326
        %1494 = vmatpush.bf16.msra.mxu0 %v1136
        %1495 = vmatmul.bf16.gmra.mxu0 %v1310
        %v1496 = vpop.f32.mrf.mxu0
        %v1497 = vadd.f32 %v1483, %v1496
        %v1498 = vpop.f32.mrf.mxu0
        %v1499 = vadd.f32 %v1485, %v1498
        %1500 = vdwg.mxu0
        %1501 = vmatpush.bf16.msra.mxu0 %v1121
        %1502 = vmatpush.bf16.msra.mxu0 %v1105
        %1503 = vmatpush.bf16.msra.mxu0 %v1089
        %1504 = vmatpush.bf16.msra.mxu0 %v1073
        %1505 = vmatpush.bf16.msra.mxu0 %v1057
        %1506 = vmatpush.bf16.msra.mxu0 %v1041
        %1507 = vmatpush.bf16.msra.mxu0 %v1025
        %1508 = vmatpush.bf16.msra.mxu0 %v1009
        %1509 = vmatmul.bf16.gmra.mxu0 %v545
        %v1510 = vpop.f32.mrf.mxu0
        %v1511 = vadd.f32 0.0, %v1510
        %v1512 = vpop.f32.mrf.mxu0
        %v1513 = vadd.f32 0.0, %v1512
        %1514 = vdwg.mxu0
        %1515 = vmatpush.bf16.msra.mxu0 0
        %1516 = vmatpush.bf16.msra.mxu0 0
        %1517 = vmatpush.bf16.msra.mxu0 0
        %1518 = vmatpush.bf16.msra.mxu0 0
        %1519 = vmatpush.bf16.msra.mxu0 0
        %1520 = vmatpush.bf16.msra.mxu0 0
        %1521 = vmatpush.bf16.msra.mxu0 %v1329
        %1522 = vmatpush.bf16.msra.mxu0 %v1137
        %1523 = vmatmul.bf16.gmra.mxu0 %v1310
        %v1524 = vpop.f32.mrf.mxu0
        %v1525 = vadd.f32 %v1511, %v1524
        %v1526 = vpop.f32.mrf.mxu0
        %v1527 = vadd.f32 %v1513, %v1526
        %1528 = vdwg.mxu0
        %1529 = vmatpush.bf16.msra.mxu0 %v1122
        %1530 = vmatpush.bf16.msra.mxu0 %v1106
        %1531 = vmatpush.bf16.msra.mxu0 %v1090
        %1532 = vmatpush.bf16.msra.mxu0 %v1074
        %1533 = vmatpush.bf16.msra.mxu0 %v1058
        %1534 = vmatpush.bf16.msra.mxu0 %v1042
        %1535 = vmatpush.bf16.msra.mxu0 %v1026
        %1536 = vmatpush.bf16.msra.mxu0 %v1010
        %1537 = vmatmul.bf16.gmra.mxu0 %v545
        %v1538 = vpop.f32.mrf.mxu0
        %v1539 = vadd.f32 0.0, %v1538
        %v1540 = vpop.f32.mrf.mxu0
        %v1541 = vadd.f32 0.0, %v1540
        %1542 = vdwg.mxu0
        %1543 = vmatpush.bf16.msra.mxu0 0
        %1544 = vmatpush.bf16.msra.mxu0 0
        %1545 = vmatpush.bf16.msra.mxu0 0
        %1546 = vmatpush.bf16.msra.mxu0 0
        %1547 = vmatpush.bf16.msra.mxu0 0
        %1548 = vmatpush.bf16.msra.mxu0 0
        %1549 = vmatpush.bf16.msra.mxu0 %v1332
        %1550 = vmatpush.bf16.msra.mxu0 %v1138
        %1551 = vmatmul.bf16.gmra.mxu0 %v1310
        %v1552 = vpop.f32.mrf.mxu0
        %v1553 = vadd.f32 %v1539, %v1552
        %v1554 = vpop.f32.mrf.mxu0
        %v1555 = vadd.f32 %v1541, %v1554
        %1556 = vdwg.mxu0
        %1557 = vmatpush.bf16.msra.mxu0 %v1123
        %1558 = vmatpush.bf16.msra.mxu0 %v1107
        %1559 = vmatpush.bf16.msra.mxu0 %v1091
        %1560 = vmatpush.bf16.msra.mxu0 %v1075
        %1561 = vmatpush.bf16.msra.mxu0 %v1059
        %1562 = vmatpush.bf16.msra.mxu0 %v1043
        %1563 = vmatpush.bf16.msra.mxu0 %v1027
        %1564 = vmatpush.bf16.msra.mxu0 %v1011
        %1565 = vmatmul.bf16.gmra.mxu0 %v545
        %v1566 = vpop.f32.mrf.mxu0
        %v1567 = vadd.f32 0.0, %v1566
        %v1568 = vpop.f32.mrf.mxu0
        %v1569 = vadd.f32 0.0, %v1568
        %1570 = vdwg.mxu0
        %1571 = vmatpush.bf16.msra.mxu0 0
        %1572 = vmatpush.bf16.msra.mxu0 0
        %1573 = vmatpush.bf16.msra.mxu0 0
        %1574 = vmatpush.bf16.msra.mxu0 0
        %1575 = vmatpush.bf16.msra.mxu0 0
        %1576 = vmatpush.bf16.msra.mxu0 0
        %1577 = vmatpush.bf16.msra.mxu0 %v1335
        %1578 = vmatpush.bf16.msra.mxu0 %v1139
        %1579 = vmatmul.bf16.gmra.mxu0 %v1310
        %v1580 = vpop.f32.mrf.mxu0
        %v1581 = vadd.f32 %v1567, %v1580
        %v1582 = vpop.f32.mrf.mxu0
        %v1583 = vadd.f32 %v1569, %v1582
        %1584 = vdwg.mxu0
        %1585 = vmatpush.bf16.msra.mxu0 %v1124
        %1586 = vmatpush.bf16.msra.mxu0 %v1108
        %1587 = vmatpush.bf16.msra.mxu0 %v1092
        %1588 = vmatpush.bf16.msra.mxu0 %v1076
        %1589 = vmatpush.bf16.msra.mxu0 %v1060
        %1590 = vmatpush.bf16.msra.mxu0 %v1044
        %1591 = vmatpush.bf16.msra.mxu0 %v1028
        %1592 = vmatpush.bf16.msra.mxu0 %v1012
        %1593 = vmatmul.bf16.gmra.mxu0 %v545
        %v1594 = vpop.f32.mrf.mxu0
        %v1595 = vadd.f32 0.0, %v1594
        %v1596 = vpop.f32.mrf.mxu0
        %v1597 = vadd.f32 0.0, %v1596
        %1598 = vdwg.mxu0
        %1599 = vmatpush.bf16.msra.mxu0 0
        %1600 = vmatpush.bf16.msra.mxu0 0
        %1601 = vmatpush.bf16.msra.mxu0 0
        %1602 = vmatpush.bf16.msra.mxu0 0
        %1603 = vmatpush.bf16.msra.mxu0 0
        %1604 = vmatpush.bf16.msra.mxu0 0
        %1605 = vmatpush.bf16.msra.mxu0 %v1338
        %1606 = vmatpush.bf16.msra.mxu0 %v1140
        %1607 = vmatmul.bf16.gmra.mxu0 %v1310
        %v1608 = vpop.f32.mrf.mxu0
        %v1609 = vadd.f32 %v1595, %v1608
        %v1610 = vpop.f32.mrf.mxu0
        %v1611 = vadd.f32 %v1597, %v1610
        %1612 = vdwg.mxu0
        %1613 = vmatpush.bf16.msra.mxu0 %v1125
        %1614 = vmatpush.bf16.msra.mxu0 %v1109
        %1615 = vmatpush.bf16.msra.mxu0 %v1093
        %1616 = vmatpush.bf16.msra.mxu0 %v1077
        %1617 = vmatpush.bf16.msra.mxu0 %v1061
        %1618 = vmatpush.bf16.msra.mxu0 %v1045
        %1619 = vmatpush.bf16.msra.mxu0 %v1029
        %1620 = vmatpush.bf16.msra.mxu0 %v1013
        %1621 = vmatmul.bf16.gmra.mxu0 %v545
        %v1622 = vpop.f32.mrf.mxu0
        %v1623 = vadd.f32 0.0, %v1622
        %v1624 = vpop.f32.mrf.mxu0
        %v1625 = vadd.f32 0.0, %v1624
        %1626 = vdwg.mxu0
        %1627 = vmatpush.bf16.msra.mxu0 0
        %1628 = vmatpush.bf16.msra.mxu0 0
        %1629 = vmatpush.bf16.msra.mxu0 0
        %1630 = vmatpush.bf16.msra.mxu0 0
        %1631 = vmatpush.bf16.msra.mxu0 0
        %1632 = vmatpush.bf16.msra.mxu0 0
        %1633 = vmatpush.bf16.msra.mxu0 %v1341
        %1634 = vmatpush.bf16.msra.mxu0 %v1141
        %1635 = vmatmul.bf16.gmra.mxu0 %v1310
        %v1636 = vpop.f32.mrf.mxu0
        %v1637 = vadd.f32 %v1623, %v1636
        %v1638 = vpop.f32.mrf.mxu0
        %v1639 = vadd.f32 %v1625, %v1638
        %1640 = vdwg.mxu0
        %1641 = vmatpush.bf16.msra.mxu0 %v1126
        %1642 = vmatpush.bf16.msra.mxu0 %v1110
        %1643 = vmatpush.bf16.msra.mxu0 %v1094
        %1644 = vmatpush.bf16.msra.mxu0 %v1078
        %1645 = vmatpush.bf16.msra.mxu0 %v1062
        %1646 = vmatpush.bf16.msra.mxu0 %v1046
        %1647 = vmatpush.bf16.msra.mxu0 %v1030
        %1648 = vmatpush.bf16.msra.mxu0 %v1014
        %1649 = vmatmul.bf16.gmra.mxu0 %v545
        %v1650 = vpop.f32.mrf.mxu0
        %v1651 = vadd.f32 0.0, %v1650
        %v1652 = vpop.f32.mrf.mxu0
        %v1653 = vadd.f32 0.0, %v1652
        %1654 = vdwg.mxu0
        %1655 = vmatpush.bf16.msra.mxu0 0
        %1656 = vmatpush.bf16.msra.mxu0 0
        %1657 = vmatpush.bf16.msra.mxu0 0
        %1658 = vmatpush.bf16.msra.mxu0 0
        %1659 = vmatpush.bf16.msra.mxu0 0
        %1660 = vmatpush.bf16.msra.mxu0 0
        %1661 = vmatpush.bf16.msra.mxu0 %v1344
        %1662 = vmatpush.bf16.msra.mxu0 %v1142
        %1663 = vmatmul.bf16.gmra.mxu0 %v1310
        %v1664 = vpop.f32.mrf.mxu0
        %v1665 = vadd.f32 %v1651, %v1664
        %v1666 = vpop.f32.mrf.mxu0
        %v1667 = vadd.f32 %v1653, %v1666
        %1668 = vdwg.mxu0
        %1669 = vmatpush.bf16.msra.mxu0 %v1127
        %1670 = vmatpush.bf16.msra.mxu0 %v1111
        %1671 = vmatpush.bf16.msra.mxu0 %v1095
        %1672 = vmatpush.bf16.msra.mxu0 %v1079
        %1673 = vmatpush.bf16.msra.mxu0 %v1063
        %1674 = vmatpush.bf16.msra.mxu0 %v1047
        %1675 = vmatpush.bf16.msra.mxu0 %v1031
        %1676 = vmatpush.bf16.msra.mxu0 %v1015
        %1677 = vmatmul.bf16.gmra.mxu0 %v545
        %v1678 = vpop.f32.mrf.mxu0
        %v1679 = vadd.f32 0.0, %v1678
        %v1680 = vpop.f32.mrf.mxu0
        %v1681 = vadd.f32 0.0, %v1680
        %1682 = vdwg.mxu0
        %1683 = vmatpush.bf16.msra.mxu0 0
        %1684 = vmatpush.bf16.msra.mxu0 0
        %1685 = vmatpush.bf16.msra.mxu0 0
        %1686 = vmatpush.bf16.msra.mxu0 0
        %1687 = vmatpush.bf16.msra.mxu0 0
        %1688 = vmatpush.bf16.msra.mxu0 0
        %1689 = vmatpush.bf16.msra.mxu0 %v1347
        %1690 = vmatpush.bf16.msra.mxu0 %v1143
        %1691 = vmatmul.bf16.gmra.mxu0 %v1310
        %v1692 = vpop.f32.mrf.mxu0
        %v1693 = vadd.f32 %v1679, %v1692
        %v1694 = vpop.f32.mrf.mxu0
        %v1695 = vadd.f32 %v1681, %v1694
        %1696 = vdwg.mxu0
        %1697 = vmatpush.bf16.msra.mxu0 %v1128
        %1698 = vmatpush.bf16.msra.mxu0 %v1112
        %1699 = vmatpush.bf16.msra.mxu0 %v1096
        %1700 = vmatpush.bf16.msra.mxu0 %v1080
        %1701 = vmatpush.bf16.msra.mxu0 %v1064
        %1702 = vmatpush.bf16.msra.mxu0 %v1048
        %1703 = vmatpush.bf16.msra.mxu0 %v1032
        %1704 = vmatpush.bf16.msra.mxu0 %v1016
        %1705 = vmatmul.bf16.gmra.mxu0 %v545
        %v1706 = vpop.f32.mrf.mxu0
        %v1707 = vadd.f32 0.0, %v1706
        %v1708 = vpop.f32.mrf.mxu0
        %v1709 = vadd.f32 0.0, %v1708
        %1710 = vdwg.mxu0
        %1711 = vmatpush.bf16.msra.mxu0 0
        %1712 = vmatpush.bf16.msra.mxu0 0
        %1713 = vmatpush.bf16.msra.mxu0 0
        %1714 = vmatpush.bf16.msra.mxu0 0
        %1715 = vmatpush.bf16.msra.mxu0 0
        %1716 = vmatpush.bf16.msra.mxu0 0
        %1717 = vmatpush.bf16.msra.mxu0 %v1350
        %1718 = vmatpush.bf16.msra.mxu0 %v1144
        %1719 = vmatmul.bf16.gmra.mxu0 %v1310
        %v1720 = vpop.f32.mrf.mxu0
        %v1721 = vadd.f32 %v1707, %v1720
        %v1722 = vpop.f32.mrf.mxu0
        %v1723 = vadd.f32 %v1709, %v1722
        %1724 = vdwg.mxu0
        %1725 = vmatpush.bf16.msra.mxu0 %v1129
        %1726 = vmatpush.bf16.msra.mxu0 %v1113
        %1727 = vmatpush.bf16.msra.mxu0 %v1097
        %1728 = vmatpush.bf16.msra.mxu0 %v1081
        %1729 = vmatpush.bf16.msra.mxu0 %v1065
        %1730 = vmatpush.bf16.msra.mxu0 %v1049
        %1731 = vmatpush.bf16.msra.mxu0 %v1033
        %1732 = vmatpush.bf16.msra.mxu0 %v1017
        %1733 = vmatmul.bf16.gmra.mxu0 %v545
        %v1734 = vpop.f32.mrf.mxu0
        %v1735 = vadd.f32 0.0, %v1734
        %v1736 = vpop.f32.mrf.mxu0
        %v1737 = vadd.f32 0.0, %v1736
        %1738 = vdwg.mxu0
        %1739 = vmatpush.bf16.msra.mxu0 0
        %1740 = vmatpush.bf16.msra.mxu0 0
        %1741 = vmatpush.bf16.msra.mxu0 0
        %1742 = vmatpush.bf16.msra.mxu0 0
        %1743 = vmatpush.bf16.msra.mxu0 0
        %1744 = vmatpush.bf16.msra.mxu0 0
        %1745 = vmatpush.bf16.msra.mxu0 %v1353
        %1746 = vmatpush.bf16.msra.mxu0 %v1145
        %1747 = vmatmul.bf16.gmra.mxu0 %v1310
        %v1748 = vpop.f32.mrf.mxu0
        %v1749 = vadd.f32 %v1735, %v1748
        %v1750 = vpop.f32.mrf.mxu0
        %v1751 = vadd.f32 %v1737, %v1750
        %1752 = vdwg.mxu0
        %1753 = vmatpush.bf16.msra.mxu0 %v1130
        %1754 = vmatpush.bf16.msra.mxu0 %v1114
        %1755 = vmatpush.bf16.msra.mxu0 %v1098
        %1756 = vmatpush.bf16.msra.mxu0 %v1082
        %1757 = vmatpush.bf16.msra.mxu0 %v1066
        %1758 = vmatpush.bf16.msra.mxu0 %v1050
        %1759 = vmatpush.bf16.msra.mxu0 %v1034
        %1760 = vmatpush.bf16.msra.mxu0 %v1018
        %1761 = vmatmul.bf16.gmra.mxu0 %v545
        %v1762 = vpop.f32.mrf.mxu0
        %v1763 = vadd.f32 0.0, %v1762
        %v1764 = vpop.f32.mrf.mxu0
        %v1765 = vadd.f32 0.0, %v1764
        %1766 = vdwg.mxu0
        %1767 = vmatpush.bf16.msra.mxu0 0
        %1768 = vmatpush.bf16.msra.mxu0 0
        %1769 = vmatpush.bf16.msra.mxu0 0
        %1770 = vmatpush.bf16.msra.mxu0 0
        %1771 = vmatpush.bf16.msra.mxu0 0
        %1772 = vmatpush.bf16.msra.mxu0 0
        %1773 = vmatpush.bf16.msra.mxu0 %v1356
        %1774 = vmatpush.bf16.msra.mxu0 %v1146
        %1775 = vmatmul.bf16.gmra.mxu0 %v1310
        %v1776 = vpop.f32.mrf.mxu0
        %v1777 = vadd.f32 %v1763, %v1776
        %v1778 = vpop.f32.mrf.mxu0
        %v1779 = vadd.f32 %v1765, %v1778
        %1780 = vdwg.mxu0
        %1781 = vmatpush.bf16.msra.mxu0 %v1131
        %1782 = vmatpush.bf16.msra.mxu0 %v1115
        %1783 = vmatpush.bf16.msra.mxu0 %v1099
        %1784 = vmatpush.bf16.msra.mxu0 %v1083
        %1785 = vmatpush.bf16.msra.mxu0 %v1067
        %1786 = vmatpush.bf16.msra.mxu0 %v1051
        %1787 = vmatpush.bf16.msra.mxu0 %v1035
        %1788 = vmatpush.bf16.msra.mxu0 %v1019
        %1789 = vmatmul.bf16.gmra.mxu0 %v545
        %v1790 = vpop.f32.mrf.mxu0
        %v1791 = vadd.f32 0.0, %v1790
        %v1792 = vpop.f32.mrf.mxu0
        %v1793 = vadd.f32 0.0, %v1792
        %1794 = vdwg.mxu0
        %1795 = vmatpush.bf16.msra.mxu0 0
        %1796 = vmatpush.bf16.msra.mxu0 0
        %1797 = vmatpush.bf16.msra.mxu0 0
        %1798 = vmatpush.bf16.msra.mxu0 0
        %1799 = vmatpush.bf16.msra.mxu0 0
        %1800 = vmatpush.bf16.msra.mxu0 0
        %1801 = vmatpush.bf16.msra.mxu0 %v1359
        %1802 = vmatpush.bf16.msra.mxu0 %v1147
        %1803 = vmatmul.bf16.gmra.mxu0 %v1310
        %v1804 = vpop.f32.mrf.mxu0
        %v1805 = vadd.f32 %v1791, %v1804
        %v1806 = vpop.f32.mrf.mxu0
        %v1807 = vadd.f32 %v1793, %v1806
        %1808 = vdwg.mxu0
        %v1809 = vmax.f32 %v1385, %v1497
        %v1810 = vmax.f32 %v1413, %v1525
        %v1811 = vmax.f32 %v1441, %v1553
        %v1812 = vmax.f32 %v1469, %v1581
        %v1813 = vmax.f32 %v1387, %v1499
        %v1814 = vmax.f32 %v1415, %v1527
        %v1815 = vmax.f32 %v1443, %v1555
        %v1816 = vmax.f32 %v1471, %v1583
        %v1817 = vmax.f32 %v1609, %v1721
        %v1818 = vmax.f32 %v1637, %v1749
        %v1819 = vmax.f32 %v1665, %v1777
        %v1820 = vmax.f32 %v1693, %v1805
        %v1821 = vmax.f32 %v1611, %v1723
        %v1822 = vmax.f32 %v1639, %v1751
        %v1823 = vmax.f32 %v1667, %v1779
        %v1824 = vmax.f32 %v1695, %v1807
        %v1825 = vmax.f32 %v1809, %v1817
        %v1826 = vmax.f32 %v1810, %v1818
        %v1827 = vmax.f32 %v1811, %v1819
        %v1828 = vmax.f32 %v1812, %v1820
        %v1829 = vmax.f32 %v1813, %v1821
        %v1830 = vmax.f32 %v1814, %v1822
        %v1831 = vmax.f32 %v1815, %v1823
        %v1832 = vmax.f32 %v1816, %v1824
        %v1833 = vld [vmem:[%s2] sm:$0xff]
        %v1834 = vld [vmem:[%s2 + $0x8] sm:$0xff]
        %1836 = vset.pattern.permute.xlu0 0
        %1837 = vperm.xlu0 %1836, %v1833
        %v1838 = vpop.permute.xlu0 %1837
        %1841 = vset.pattern.permute.xlu0 0
        %1842 = vperm.xlu0 %1841, %v1834
        %v1843 = vpop.permute.xlu0 %1842
        %v1845 = vadd.f32 %v1825, %v1838
        %v1846 = vadd.f32 %v1826, %v1838
        %v1847 = vadd.f32 %v1827, %v1838
        %v1848 = vadd.f32 %v1828, %v1838
        %v1849 = vadd.f32 %v1829, %v1843
        %v1850 = vadd.f32 %v1830, %v1843
        %v1851 = vadd.f32 %v1831, %v1843
        %v1852 = vadd.f32 %v1832, %v1843
        %v1853 = vmax.f32 %v1845, 0.0
        %v1854 = vmax.f32 %v1846, 0.0
        %v1855 = vmax.f32 %v1847, 0.0
        %v1856 = vmax.f32 %v1848, 0.0
        %v1857 = vmax.f32 %v1849, 0.0
        %v1858 = vmax.f32 %v1850, 0.0
        %v1859 = vmax.f32 %v1851, 0.0
        %v1860 = vmax.f32 %v1852, 0.0
        %v1861 = vpack.c.bf16 %v1854, %v1853
        %v1862 = vpack.c.bf16 %v1856, %v1855
        %v1863 = vpack.c.bf16 %v1858, %v1857
        %v1864 = vpack.c.bf16 %v1860, %v1859
        %v1865 = vld [vmem:[%s4] sm:$0x1]
        %v1866 = vld [vmem:[%s3] sm:$0xf]
        %v1867 = vld [vmem:[%s3 + $0x4] sm:$0xf]
        %v1868 = vld [vmem:[%s3 + $0x8] sm:$0xf]
        %v1869 = vld [vmem:[%s3 + $0xc] sm:$0xf]
        %v1870 = vld [vmem:[%s3 + $0x10] sm:$0xf]
        %v1871 = vld [vmem:[%s3 + $0x14] sm:$0xf]
        %v1872 = vld [vmem:[%s3 + $0x18] sm:$0xf]
        %v1873 = vld [vmem:[%s3 + $0x1c] sm:$0xf]
        %v1874 = vld [vmem:[%s3 + $0x20] sm:$0xf]
        %v1875 = vld [vmem:[%s3 + $0x24] sm:$0xf]
        %v1876 = vld [vmem:[%s3 + $0x28] sm:$0xf]
        %v1877 = vld [vmem:[%s3 + $0x2c] sm:$0xf]
        %v1878 = vld [vmem:[%s3 + $0x30] sm:$0xf]
        %v1879 = vld [vmem:[%s3 + $0x34] sm:$0xf]
        %v1880 = vld [vmem:[%s3 + $0x38] sm:$0xf]
        %v1881 = vld [vmem:[%s3 + $0x3c] sm:$0xf]
        %v1882 = vld [vmem:[%s3 + $0x40] sm:$0xf]
        %v1883 = vld [vmem:[%s3 + $0x44] sm:$0xf]
        %v1884 = vld [vmem:[%s3 + $0x48] sm:$0xf]
        %v1885 = vld [vmem:[%s3 + $0x4c] sm:$0xf]
        %v1886 = vld [vmem:[%s3 + $0x50] sm:$0xf]
        %v1887 = vld [vmem:[%s3 + $0x54] sm:$0xf]
        %v1888 = vld [vmem:[%s3 + $0x58] sm:$0xf]
        %v1889 = vld [vmem:[%s3 + $0x5c] sm:$0xf]
        %v1890 = vld [vmem:[%s3 + $0x60] sm:$0xf]
        %v1891 = vld [vmem:[%s3 + $0x64] sm:$0xf]
        %v1892 = vld [vmem:[%s3 + $0x68] sm:$0xf]
        %v1893 = vld [vmem:[%s3 + $0x6c] sm:$0xf]
        %v1894 = vld [vmem:[%s3 + $0x70] sm:$0xf]
        %v1895 = vld [vmem:[%s3 + $0x74] sm:$0xf]
        %v1896 = vld [vmem:[%s3 + $0x78] sm:$0xf]
        %v1897 = vld [vmem:[%s3 + $0x7c] sm:$0xf]
        %v1898 = vld [vmem:[%s3 + $0x80] sm:$0xf]
        %v1899 = vld [vmem:[%s3 + $0x84] sm:$0xf]
        %v1900 = vld [vmem:[%s3 + $0x88] sm:$0xf]
        %v1901 = vld [vmem:[%s3 + $0x8c] sm:$0xf]
        %v1902 = vld [vmem:[%s3 + $0x90] sm:$0xf]
        %v1903 = vld [vmem:[%s3 + $0x94] sm:$0xf]
        %v1904 = vld [vmem:[%s3 + $0x98] sm:$0xf]
        %v1905 = vld [vmem:[%s3 + $0x9c] sm:$0xf]
        %v1906 = vld [vmem:[%s3 + $0xa0] sm:$0xf]
        %v1907 = vld [vmem:[%s3 + $0xa4] sm:$0xf]
        %v1908 = vld [vmem:[%s3 + $0xa8] sm:$0xf]
        %v1909 = vld [vmem:[%s3 + $0xac] sm:$0xf]
        %v1910 = vld [vmem:[%s3 + $0xb0] sm:$0xf]
        %v1911 = vld [vmem:[%s3 + $0xb4] sm:$0xf]
        %v1912 = vld [vmem:[%s3 + $0xb8] sm:$0xf]
        %v1913 = vld [vmem:[%s3 + $0xbc] sm:$0xf]
        %v1914 = vld [vmem:[%s3 + $0xc0] sm:$0xf]
        %v1915 = vld [vmem:[%s3 + $0xc4] sm:$0xf]
        %v1916 = vld [vmem:[%s3 + $0xc8] sm:$0xf]
        %v1917 = vld [vmem:[%s3 + $0xcc] sm:$0xf]
        %v1918 = vld [vmem:[%s3 + $0xd0] sm:$0xf]
        %v1919 = vld [vmem:[%s3 + $0xd4] sm:$0xf]
        %v1920 = vld [vmem:[%s3 + $0xd8] sm:$0xf]
        %v1921 = vld [vmem:[%s3 + $0xdc] sm:$0xf]
        %v1922 = vld [vmem:[%s3 + $0xe0] sm:$0xf]
        %v1923 = vld [vmem:[%s3 + $0xe4] sm:$0xf]
        %v1924 = vld [vmem:[%s3 + $0xe8] sm:$0xf]
        %v1925 = vld [vmem:[%s3 + $0xec] sm:$0xf]
        %v1926 = vld [vmem:[%s3 + $0xf0] sm:$0xf]
        %v1927 = vld [vmem:[%s3 + $0xf4] sm:$0xf]
        %v1928 = vld [vmem:[%s3 + $0xf8] sm:$0xf]
        %v1929 = vld [vmem:[%s3 + $0xfc] sm:$0xf]
        %v1932 = vunpack.c.l.b16 %v1861
        %v1933 = vunpack.c.h.b16 %v1861
        %v1934 = vunpack.c.l.b16 %v1862
        %v1935 = vunpack.c.h.b16 %v1862
        %v1936 = vpack.c.b16 %v1932, %v1932
        %v1937 = vpack.c.b16 %v1933, %v1933
        %v1938 = vpack.c.b16 %v1934, %v1934
        %v1939 = vpack.c.b16 %v1935, %v1935
        %v2008 = vunpack.c.l.b16 %v1866
        %v2009 = vunpack.c.l.b16 %v1867
        %v2010 = vunpack.c.l.b16 %v1868
        %v2011 = vunpack.c.l.b16 %v1869
        %v2012 = vunpack.c.l.b16 %v1870
        %v2013 = vunpack.c.l.b16 %v1871
        %v2014 = vunpack.c.l.b16 %v1872
        %v2015 = vunpack.c.l.b16 %v1873
        %v2016 = vunpack.c.l.b16 %v1874
        %v2017 = vunpack.c.l.b16 %v1875
        %v2018 = vunpack.c.l.b16 %v1876
        %v2019 = vunpack.c.l.b16 %v1877
        %v2020 = vunpack.c.l.b16 %v1878
        %v2021 = vunpack.c.l.b16 %v1879
        %v2022 = vunpack.c.l.b16 %v1880
        %v2023 = vunpack.c.l.b16 %v1881
        %v2024 = vunpack.c.l.b16 %v1882
        %v2025 = vunpack.c.l.b16 %v1883
        %v2026 = vunpack.c.l.b16 %v1884
        %v2027 = vunpack.c.l.b16 %v1885
        %v2028 = vunpack.c.l.b16 %v1886
        %v2029 = vunpack.c.l.b16 %v1887
        %v2030 = vunpack.c.l.b16 %v1888
        %v2031 = vunpack.c.l.b16 %v1889
        %v2032 = vunpack.c.l.b16 %v1890
        %v2033 = vunpack.c.l.b16 %v1891
        %v2034 = vunpack.c.l.b16 %v1892
        %v2035 = vunpack.c.l.b16 %v1893
        %v2036 = vunpack.c.l.b16 %v1894
        %v2037 = vunpack.c.l.b16 %v1895
        %v2038 = vunpack.c.l.b16 %v1896
        %v2039 = vunpack.c.l.b16 %v1897
        %v2040 = vunpack.c.l.b16 %v1898
        %v2041 = vunpack.c.l.b16 %v1899
        %v2042 = vunpack.c.l.b16 %v1900
        %v2043 = vunpack.c.l.b16 %v1901
        %v2044 = vunpack.c.l.b16 %v1902
        %v2045 = vunpack.c.l.b16 %v1903
        %v2046 = vunpack.c.l.b16 %v1904
        %v2047 = vunpack.c.l.b16 %v1905
        %v2048 = vunpack.c.l.b16 %v1906
        %v2049 = vunpack.c.l.b16 %v1907
        %v2050 = vunpack.c.l.b16 %v1908
        %v2051 = vunpack.c.l.b16 %v1909
        %v2052 = vunpack.c.l.b16 %v1910
        %v2053 = vunpack.c.l.b16 %v1911
        %v2054 = vunpack.c.l.b16 %v1912
        %v2055 = vunpack.c.l.b16 %v1913
        %v2056 = vunpack.c.l.b16 %v1914
        %v2057 = vunpack.c.l.b16 %v1915
        %v2058 = vunpack.c.l.b16 %v1916
        %v2059 = vunpack.c.l.b16 %v1917
        %v2060 = vunpack.c.l.b16 %v1918
        %v2061 = vunpack.c.l.b16 %v1919
        %v2062 = vunpack.c.l.b16 %v1920
        %v2063 = vunpack.c.l.b16 %v1921
        %v2064 = vunpack.c.l.b16 %v1922
        %v2065 = vunpack.c.l.b16 %v1923
        %v2066 = vunpack.c.l.b16 %v1924
        %v2067 = vunpack.c.l.b16 %v1925
        %v2068 = vunpack.c.l.b16 %v1926
        %v2069 = vunpack.c.l.b16 %v1927
        %v2070 = vunpack.c.l.b16 %v1928
        %v2071 = vunpack.c.l.b16 %v1929
        %v2072 = vpack.c.b16 %v2009, %v2008
        %v2073 = vpack.c.b16 %v2011, %v2010
        %v2074 = vpack.c.b16 %v2013, %v2012
        %v2075 = vpack.c.b16 %v2015, %v2014
        %v2076 = vpack.c.b16 %v2017, %v2016
        %v2077 = vpack.c.b16 %v2019, %v2018
        %v2078 = vpack.c.b16 %v2021, %v2020
        %v2079 = vpack.c.b16 %v2023, %v2022
        %v2080 = vpack.c.b16 %v2025, %v2024
        %v2081 = vpack.c.b16 %v2027, %v2026
        %v2082 = vpack.c.b16 %v2029, %v2028
        %v2083 = vpack.c.b16 %v2031, %v2030
        %v2084 = vpack.c.b16 %v2033, %v2032
        %v2085 = vpack.c.b16 %v2035, %v2034
        %v2086 = vpack.c.b16 %v2037, %v2036
        %v2087 = vpack.c.b16 %v2039, %v2038
        %v2088 = vpack.c.b16 %v2041, %v2040
        %v2089 = vpack.c.b16 %v2043, %v2042
        %v2090 = vpack.c.b16 %v2045, %v2044
        %v2091 = vpack.c.b16 %v2047, %v2046
        %v2092 = vpack.c.b16 %v2049, %v2048
        %v2093 = vpack.c.b16 %v2051, %v2050
        %v2094 = vpack.c.b16 %v2053, %v2052
        %v2095 = vpack.c.b16 %v2055, %v2054
        %v2096 = vpack.c.b16 %v2057, %v2056
        %v2097 = vpack.c.b16 %v2059, %v2058
        %v2098 = vpack.c.b16 %v2061, %v2060
        %v2099 = vpack.c.b16 %v2063, %v2062
        %v2100 = vpack.c.b16 %v2065, %v2064
        %v2101 = vpack.c.b16 %v2067, %v2066
        %v2102 = vpack.c.b16 %v2069, %v2068
        %v2103 = vpack.c.b16 %v2071, %v2070
        %2136 = vmatpush.bf16.msra.mxu0 %v2079
        %2137 = vmatpush.bf16.msra.mxu0 %v2078
        %2138 = vmatpush.bf16.msra.mxu0 %v2077
        %2139 = vmatpush.bf16.msra.mxu0 %v2076
        %2140 = vmatpush.bf16.msra.mxu0 %v2075
        %2141 = vmatpush.bf16.msra.mxu0 %v2074
        %2142 = vmatpush.bf16.msra.mxu0 %v2073
        %2143 = vmatpush.bf16.msra.mxu0 %v2072
        %2144 = vmatmul.bf16.gmra.mxu0 %v1936
        %v2145 = vpop.f32.mrf.mxu0
        %v2146 = vadd.f32 0.0, %v2145
        %v2147 = vpop.f32.mrf.mxu0
        %2148 = vdwg.mxu0
        %2149 = vmatpush.bf16.msra.mxu0 %v2087
        %2150 = vmatpush.bf16.msra.mxu0 %v2086
        %2151 = vmatpush.bf16.msra.mxu0 %v2085
        %2152 = vmatpush.bf16.msra.mxu0 %v2084
        %2153 = vmatpush.bf16.msra.mxu0 %v2083
        %2154 = vmatpush.bf16.msra.mxu0 %v2082
        %2155 = vmatpush.bf16.msra.mxu0 %v2081
        %2156 = vmatpush.bf16.msra.mxu0 %v2080
        %2157 = vmatmul.bf16.gmra.mxu0 %v1937
        %v2158 = vpop.f32.mrf.mxu0
        %v2159 = vadd.f32 %v2146, %v2158
        %v2160 = vpop.f32.mrf.mxu0
        %2161 = vdwg.mxu0
        %2162 = vmatpush.bf16.msra.mxu0 %v2095
        %2163 = vmatpush.bf16.msra.mxu0 %v2094
        %2164 = vmatpush.bf16.msra.mxu0 %v2093
        %2165 = vmatpush.bf16.msra.mxu0 %v2092
        %2166 = vmatpush.bf16.msra.mxu0 %v2091
        %2167 = vmatpush.bf16.msra.mxu0 %v2090
        %2168 = vmatpush.bf16.msra.mxu0 %v2089
        %2169 = vmatpush.bf16.msra.mxu0 %v2088
        %2170 = vmatmul.bf16.gmra.mxu0 %v1938
        %v2171 = vpop.f32.mrf.mxu0
        %v2172 = vadd.f32 %v2159, %v2171
        %v2173 = vpop.f32.mrf.mxu0
        %2174 = vdwg.mxu0
        %2175 = vmatpush.bf16.msra.mxu0 %v2103
        %2176 = vmatpush.bf16.msra.mxu0 %v2102
        %2177 = vmatpush.bf16.msra.mxu0 %v2101
        %2178 = vmatpush.bf16.msra.mxu0 %v2100
        %2179 = vmatpush.bf16.msra.mxu0 %v2099
        %2180 = vmatpush.bf16.msra.mxu0 %v2098
        %2181 = vmatpush.bf16.msra.mxu0 %v2097
        %2182 = vmatpush.bf16.msra.mxu0 %v2096
        %2183 = vmatmul.bf16.gmra.mxu0 %v1939
        %v2184 = vpop.f32.mrf.mxu0
        %v2185 = vadd.f32 %v2172, %v2184
        %v2186 = vpop.f32.mrf.mxu0
        %2187 = vdwg.mxu0
        %v2188 = vadd.f32 %v1865, %v2185
        %s2189 = scalar_lea.vmem %s3, 256
        %v2190 = vld [vmem:[%s2189] sm:$0xf]
        %v2191 = vld [vmem:[%s2189 + $0x4] sm:$0xf]
        %v2192 = vld [vmem:[%s2189 + $0x8] sm:$0xf]
        %v2193 = vld [vmem:[%s2189 + $0xc] sm:$0xf]
        %v2194 = vld [vmem:[%s2189 + $0x10] sm:$0xf]
        %v2195 = vld [vmem:[%s2189 + $0x14] sm:$0xf]
        %v2196 = vld [vmem:[%s2189 + $0x18] sm:$0xf]
        %v2197 = vld [vmem:[%s2189 + $0x1c] sm:$0xf]
        %v2198 = vld [vmem:[%s2189 + $0x20] sm:$0xf]
        %v2199 = vld [vmem:[%s2189 + $0x24] sm:$0xf]
        %v2200 = vld [vmem:[%s2189 + $0x28] sm:$0xf]
        %v2201 = vld [vmem:[%s2189 + $0x2c] sm:$0xf]
        %v2202 = vld [vmem:[%s2189 + $0x30] sm:$0xf]
        %v2203 = vld [vmem:[%s2189 + $0x34] sm:$0xf]
        %v2204 = vld [vmem:[%s2189 + $0x38] sm:$0xf]
        %v2205 = vld [vmem:[%s2189 + $0x3c] sm:$0xf]
        %v2206 = vld [vmem:[%s2189 + $0x40] sm:$0xf]
        %v2207 = vld [vmem:[%s2189 + $0x44] sm:$0xf]
        %v2208 = vld [vmem:[%s2189 + $0x48] sm:$0xf]
        %v2209 = vld [vmem:[%s2189 + $0x4c] sm:$0xf]
        %v2210 = vld [vmem:[%s2189 + $0x50] sm:$0xf]
        %v2211 = vld [vmem:[%s2189 + $0x54] sm:$0xf]
        %v2212 = vld [vmem:[%s2189 + $0x58] sm:$0xf]
        %v2213 = vld [vmem:[%s2189 + $0x5c] sm:$0xf]
        %v2214 = vld [vmem:[%s2189 + $0x60] sm:$0xf]
        %v2215 = vld [vmem:[%s2189 + $0x64] sm:$0xf]
        %v2216 = vld [vmem:[%s2189 + $0x68] sm:$0xf]
        %v2217 = vld [vmem:[%s2189 + $0x6c] sm:$0xf]
        %v2218 = vld [vmem:[%s2189 + $0x70] sm:$0xf]
        %v2219 = vld [vmem:[%s2189 + $0x74] sm:$0xf]
        %v2220 = vld [vmem:[%s2189 + $0x78] sm:$0xf]
        %v2221 = vld [vmem:[%s2189 + $0x7c] sm:$0xf]
        %v2222 = vld [vmem:[%s2189 + $0x80] sm:$0xf]
        %v2223 = vld [vmem:[%s2189 + $0x84] sm:$0xf]
        %v2224 = vld [vmem:[%s2189 + $0x88] sm:$0xf]
        %v2225 = vld [vmem:[%s2189 + $0x8c] sm:$0xf]
        %v2226 = vld [vmem:[%s2189 + $0x90] sm:$0xf]
        %v2227 = vld [vmem:[%s2189 + $0x94] sm:$0xf]
        %v2228 = vld [vmem:[%s2189 + $0x98] sm:$0xf]
        %v2229 = vld [vmem:[%s2189 + $0x9c] sm:$0xf]
        %v2230 = vld [vmem:[%s2189 + $0xa0] sm:$0xf]
        %v2231 = vld [vmem:[%s2189 + $0xa4] sm:$0xf]
        %v2232 = vld [vmem:[%s2189 + $0xa8] sm:$0xf]
        %v2233 = vld [vmem:[%s2189 + $0xac] sm:$0xf]
        %v2234 = vld [vmem:[%s2189 + $0xb0] sm:$0xf]
        %v2235 = vld [vmem:[%s2189 + $0xb4] sm:$0xf]
        %v2236 = vld [vmem:[%s2189 + $0xb8] sm:$0xf]
        %v2237 = vld [vmem:[%s2189 + $0xbc] sm:$0xf]
        %v2238 = vld [vmem:[%s2189 + $0xc0] sm:$0xf]
        %v2239 = vld [vmem:[%s2189 + $0xc4] sm:$0xf]
        %v2240 = vld [vmem:[%s2189 + $0xc8] sm:$0xf]
        %v2241 = vld [vmem:[%s2189 + $0xcc] sm:$0xf]
        %v2242 = vld [vmem:[%s2189 + $0xd0] sm:$0xf]
        %v2243 = vld [vmem:[%s2189 + $0xd4] sm:$0xf]
        %v2244 = vld [vmem:[%s2189 + $0xd8] sm:$0xf]
        %v2245 = vld [vmem:[%s2189 + $0xdc] sm:$0xf]
        %v2246 = vld [vmem:[%s2189 + $0xe0] sm:$0xf]
        %v2247 = vld [vmem:[%s2189 + $0xe4] sm:$0xf]
        %v2248 = vld [vmem:[%s2189 + $0xe8] sm:$0xf]
        %v2249 = vld [vmem:[%s2189 + $0xec] sm:$0xf]
        %v2250 = vld [vmem:[%s2189 + $0xf0] sm:$0xf]
        %v2251 = vld [vmem:[%s2189 + $0xf4] sm:$0xf]
        %v2252 = vld [vmem:[%s2189 + $0xf8] sm:$0xf]
        %v2253 = vld [vmem:[%s2189 + $0xfc] sm:$0xf]
        %v2255 = vshrl.u32 %v1936, 16
        %v2258 = vshrl.u32 %v1937, 16
        %v2261 = vshrl.u32 %v1938, 16
        %v2264 = vshrl.u32 %v1939, 16
        %v2334 = vunpack.c.l.b16 %v2190
        %v2335 = vunpack.c.l.b16 %v2191
        %v2336 = vunpack.c.l.b16 %v2192
        %v2337 = vunpack.c.l.b16 %v2193
        %v2338 = vunpack.c.l.b16 %v2194
        %v2339 = vunpack.c.l.b16 %v2195
        %v2340 = vunpack.c.l.b16 %v2196
        %v2341 = vunpack.c.l.b16 %v2197
        %v2342 = vunpack.c.l.b16 %v2198
        %v2343 = vunpack.c.l.b16 %v2199
        %v2344 = vunpack.c.l.b16 %v2200
        %v2345 = vunpack.c.l.b16 %v2201
        %v2346 = vunpack.c.l.b16 %v2202
        %v2347 = vunpack.c.l.b16 %v2203
        %v2348 = vunpack.c.l.b16 %v2204
        %v2349 = vunpack.c.l.b16 %v2205
        %v2350 = vunpack.c.l.b16 %v2206
        %v2351 = vunpack.c.l.b16 %v2207
        %v2352 = vunpack.c.l.b16 %v2208
        %v2353 = vunpack.c.l.b16 %v2209
        %v2354 = vunpack.c.l.b16 %v2210
        %v2355 = vunpack.c.l.b16 %v2211
        %v2356 = vunpack.c.l.b16 %v2212
        %v2357 = vunpack.c.l.b16 %v2213
        %v2358 = vunpack.c.l.b16 %v2214
        %v2359 = vunpack.c.l.b16 %v2215
        %v2360 = vunpack.c.l.b16 %v2216
        %v2361 = vunpack.c.l.b16 %v2217
        %v2362 = vunpack.c.l.b16 %v2218
        %v2363 = vunpack.c.l.b16 %v2219
        %v2364 = vunpack.c.l.b16 %v2220
        %v2365 = vunpack.c.l.b16 %v2221
        %v2366 = vunpack.c.l.b16 %v2222
        %v2367 = vunpack.c.l.b16 %v2223
        %v2368 = vunpack.c.l.b16 %v2224
        %v2369 = vunpack.c.l.b16 %v2225
        %v2370 = vunpack.c.l.b16 %v2226
        %v2371 = vunpack.c.l.b16 %v2227
        %v2372 = vunpack.c.l.b16 %v2228
        %v2373 = vunpack.c.l.b16 %v2229
        %v2374 = vunpack.c.l.b16 %v2230
        %v2375 = vunpack.c.l.b16 %v2231
        %v2376 = vunpack.c.l.b16 %v2232
        %v2377 = vunpack.c.l.b16 %v2233
        %v2378 = vunpack.c.l.b16 %v2234
        %v2379 = vunpack.c.l.b16 %v2235
        %v2380 = vunpack.c.l.b16 %v2236
        %v2381 = vunpack.c.l.b16 %v2237
        %v2382 = vunpack.c.l.b16 %v2238
        %v2383 = vunpack.c.l.b16 %v2239
        %v2384 = vunpack.c.l.b16 %v2240
        %v2385 = vunpack.c.l.b16 %v2241
        %v2386 = vunpack.c.l.b16 %v2242
        %v2387 = vunpack.c.l.b16 %v2243
        %v2388 = vunpack.c.l.b16 %v2244
        %v2389 = vunpack.c.l.b16 %v2245
        %v2390 = vunpack.c.l.b16 %v2246
        %v2391 = vunpack.c.l.b16 %v2247
        %v2392 = vunpack.c.l.b16 %v2248
        %v2393 = vunpack.c.l.b16 %v2249
        %v2394 = vunpack.c.l.b16 %v2250
        %v2395 = vunpack.c.l.b16 %v2251
        %v2396 = vunpack.c.l.b16 %v2252
        %v2397 = vunpack.c.l.b16 %v2253
        %v2398 = vpack.c.b16 %v2335, %v2334
        %v2399 = vpack.c.b16 %v2337, %v2336
        %v2400 = vpack.c.b16 %v2339, %v2338
        %v2401 = vpack.c.b16 %v2341, %v2340
        %v2402 = vpack.c.b16 %v2343, %v2342
        %v2403 = vpack.c.b16 %v2345, %v2344
        %v2404 = vpack.c.b16 %v2347, %v2346
        %v2405 = vpack.c.b16 %v2349, %v2348
        %v2406 = vpack.c.b16 %v2351, %v2350
        %v2407 = vpack.c.b16 %v2353, %v2352
        %v2408 = vpack.c.b16 %v2355, %v2354
        %v2409 = vpack.c.b16 %v2357, %v2356
        %v2410 = vpack.c.b16 %v2359, %v2358
        %v2411 = vpack.c.b16 %v2361, %v2360
        %v2412 = vpack.c.b16 %v2363, %v2362
        %v2413 = vpack.c.b16 %v2365, %v2364
        %v2414 = vpack.c.b16 %v2367, %v2366
        %v2415 = vpack.c.b16 %v2369, %v2368
        %v2416 = vpack.c.b16 %v2371, %v2370
        %v2417 = vpack.c.b16 %v2373, %v2372
        %v2418 = vpack.c.b16 %v2375, %v2374
        %v2419 = vpack.c.b16 %v2377, %v2376
        %v2420 = vpack.c.b16 %v2379, %v2378
        %v2421 = vpack.c.b16 %v2381, %v2380
        %v2422 = vpack.c.b16 %v2383, %v2382
        %v2423 = vpack.c.b16 %v2385, %v2384
        %v2424 = vpack.c.b16 %v2387, %v2386
        %v2425 = vpack.c.b16 %v2389, %v2388
        %v2426 = vpack.c.b16 %v2391, %v2390
        %v2427 = vpack.c.b16 %v2393, %v2392
        %v2428 = vpack.c.b16 %v2395, %v2394
        %v2429 = vpack.c.b16 %v2397, %v2396
        %2462 = vmatpush.bf16.msra.mxu0 %v2405
        %2463 = vmatpush.bf16.msra.mxu0 %v2404
        %2464 = vmatpush.bf16.msra.mxu0 %v2403
        %2465 = vmatpush.bf16.msra.mxu0 %v2402
        %2466 = vmatpush.bf16.msra.mxu0 %v2401
        %2467 = vmatpush.bf16.msra.mxu0 %v2400
        %2468 = vmatpush.bf16.msra.mxu0 %v2399
        %2469 = vmatpush.bf16.msra.mxu0 %v2398
        %2470 = vmatmul.bf16.gmra.mxu0 %v2255
        %v2471 = vpop.f32.mrf.mxu0
        %v2472 = vadd.f32 0.0, %v2471
        %v2473 = vpop.f32.mrf.mxu0
        %2474 = vdwg.mxu0
        %2475 = vmatpush.bf16.msra.mxu0 %v2413
        %2476 = vmatpush.bf16.msra.mxu0 %v2412
        %2477 = vmatpush.bf16.msra.mxu0 %v2411
        %2478 = vmatpush.bf16.msra.mxu0 %v2410
        %2479 = vmatpush.bf16.msra.mxu0 %v2409
        %2480 = vmatpush.bf16.msra.mxu0 %v2408
        %2481 = vmatpush.bf16.msra.mxu0 %v2407
        %2482 = vmatpush.bf16.msra.mxu0 %v2406
        %2483 = vmatmul.bf16.gmra.mxu0 %v2258
        %v2484 = vpop.f32.mrf.mxu0
        %v2485 = vadd.f32 %v2472, %v2484
        %v2486 = vpop.f32.mrf.mxu0
        %2487 = vdwg.mxu0
        %2488 = vmatpush.bf16.msra.mxu0 %v2421
        %2489 = vmatpush.bf16.msra.mxu0 %v2420
        %2490 = vmatpush.bf16.msra.mxu0 %v2419
        %2491 = vmatpush.bf16.msra.mxu0 %v2418
        %2492 = vmatpush.bf16.msra.mxu0 %v2417
        %2493 = vmatpush.bf16.msra.mxu0 %v2416
        %2494 = vmatpush.bf16.msra.mxu0 %v2415
        %2495 = vmatpush.bf16.msra.mxu0 %v2414
        %2496 = vmatmul.bf16.gmra.mxu0 %v2261
        %v2497 = vpop.f32.mrf.mxu0
        %v2498 = vadd.f32 %v2485, %v2497
        %v2499 = vpop.f32.mrf.mxu0
        %2500 = vdwg.mxu0
        %2501 = vmatpush.bf16.msra.mxu0 %v2429
        %2502 = vmatpush.bf16.msra.mxu0 %v2428
        %2503 = vmatpush.bf16.msra.mxu0 %v2427
        %2504 = vmatpush.bf16.msra.mxu0 %v2426
        %2505 = vmatpush.bf16.msra.mxu0 %v2425
        %2506 = vmatpush.bf16.msra.mxu0 %v2424
        %2507 = vmatpush.bf16.msra.mxu0 %v2423
        %2508 = vmatpush.bf16.msra.mxu0 %v2422
        %2509 = vmatmul.bf16.gmra.mxu0 %v2264
        %v2510 = vpop.f32.mrf.mxu0
        %v2511 = vadd.f32 %v2498, %v2510
        %v2512 = vpop.f32.mrf.mxu0
        %2513 = vdwg.mxu0
        %v2514 = vadd.f32 %v2188, %v2511
        %s2515 = scalar_lea.vmem %s3, 512
        %v2516 = vld [vmem:[%s2515] sm:$0xf]
        %v2517 = vld [vmem:[%s2515 + $0x4] sm:$0xf]
        %v2518 = vld [vmem:[%s2515 + $0x8] sm:$0xf]
        %v2519 = vld [vmem:[%s2515 + $0xc] sm:$0xf]
        %v2520 = vld [vmem:[%s2515 + $0x10] sm:$0xf]
        %v2521 = vld [vmem:[%s2515 + $0x14] sm:$0xf]
        %v2522 = vld [vmem:[%s2515 + $0x18] sm:$0xf]
        %v2523 = vld [vmem:[%s2515 + $0x1c] sm:$0xf]
        %v2524 = vld [vmem:[%s2515 + $0x20] sm:$0xf]
        %v2525 = vld [vmem:[%s2515 + $0x24] sm:$0xf]
        %v2526 = vld [vmem:[%s2515 + $0x28] sm:$0xf]
        %v2527 = vld [vmem:[%s2515 + $0x2c] sm:$0xf]
        %v2528 = vld [vmem:[%s2515 + $0x30] sm:$0xf]
        %v2529 = vld [vmem:[%s2515 + $0x34] sm:$0xf]
        %v2530 = vld [vmem:[%s2515 + $0x38] sm:$0xf]
        %v2531 = vld [vmem:[%s2515 + $0x3c] sm:$0xf]
        %v2532 = vld [vmem:[%s2515 + $0x40] sm:$0xf]
        %v2533 = vld [vmem:[%s2515 + $0x44] sm:$0xf]
        %v2534 = vld [vmem:[%s2515 + $0x48] sm:$0xf]
        %v2535 = vld [vmem:[%s2515 + $0x4c] sm:$0xf]
        %v2536 = vld [vmem:[%s2515 + $0x50] sm:$0xf]
        %v2537 = vld [vmem:[%s2515 + $0x54] sm:$0xf]
        %v2538 = vld [vmem:[%s2515 + $0x58] sm:$0xf]
        %v2539 = vld [vmem:[%s2515 + $0x5c] sm:$0xf]
        %v2540 = vld [vmem:[%s2515 + $0x60] sm:$0xf]
        %v2541 = vld [vmem:[%s2515 + $0x64] sm:$0xf]
        %v2542 = vld [vmem:[%s2515 + $0x68] sm:$0xf]
        %v2543 = vld [vmem:[%s2515 + $0x6c] sm:$0xf]
        %v2544 = vld [vmem:[%s2515 + $0x70] sm:$0xf]
        %v2545 = vld [vmem:[%s2515 + $0x74] sm:$0xf]
        %v2546 = vld [vmem:[%s2515 + $0x78] sm:$0xf]
        %v2547 = vld [vmem:[%s2515 + $0x7c] sm:$0xf]
        %v2548 = vld [vmem:[%s2515 + $0x80] sm:$0xf]
        %v2549 = vld [vmem:[%s2515 + $0x84] sm:$0xf]
        %v2550 = vld [vmem:[%s2515 + $0x88] sm:$0xf]
        %v2551 = vld [vmem:[%s2515 + $0x8c] sm:$0xf]
        %v2552 = vld [vmem:[%s2515 + $0x90] sm:$0xf]
        %v2553 = vld [vmem:[%s2515 + $0x94] sm:$0xf]
        %v2554 = vld [vmem:[%s2515 + $0x98] sm:$0xf]
        %v2555 = vld [vmem:[%s2515 + $0x9c] sm:$0xf]
        %v2556 = vld [vmem:[%s2515 + $0xa0] sm:$0xf]
        %v2557 = vld [vmem:[%s2515 + $0xa4] sm:$0xf]
        %v2558 = vld [vmem:[%s2515 + $0xa8] sm:$0xf]
        %v2559 = vld [vmem:[%s2515 + $0xac] sm:$0xf]
        %v2560 = vld [vmem:[%s2515 + $0xb0] sm:$0xf]
        %v2561 = vld [vmem:[%s2515 + $0xb4] sm:$0xf]
        %v2562 = vld [vmem:[%s2515 + $0xb8] sm:$0xf]
        %v2563 = vld [vmem:[%s2515 + $0xbc] sm:$0xf]
        %v2564 = vld [vmem:[%s2515 + $0xc0] sm:$0xf]
        %v2565 = vld [vmem:[%s2515 + $0xc4] sm:$0xf]
        %v2566 = vld [vmem:[%s2515 + $0xc8] sm:$0xf]
        %v2567 = vld [vmem:[%s2515 + $0xcc] sm:$0xf]
        %v2568 = vld [vmem:[%s2515 + $0xd0] sm:$0xf]
        %v2569 = vld [vmem:[%s2515 + $0xd4] sm:$0xf]
        %v2570 = vld [vmem:[%s2515 + $0xd8] sm:$0xf]
        %v2571 = vld [vmem:[%s2515 + $0xdc] sm:$0xf]
        %v2572 = vld [vmem:[%s2515 + $0xe0] sm:$0xf]
        %v2573 = vld [vmem:[%s2515 + $0xe4] sm:$0xf]
        %v2574 = vld [vmem:[%s2515 + $0xe8] sm:$0xf]
        %v2575 = vld [vmem:[%s2515 + $0xec] sm:$0xf]
        %v2576 = vld [vmem:[%s2515 + $0xf0] sm:$0xf]
        %v2577 = vld [vmem:[%s2515 + $0xf4] sm:$0xf]
        %v2578 = vld [vmem:[%s2515 + $0xf8] sm:$0xf]
        %v2579 = vld [vmem:[%s2515 + $0xfc] sm:$0xf]
        %v2580 = vrot.slane %v1936, 1
        %v2581 = vrot.slane %v1937, 1
        %v2582 = vrot.slane %v1938, 1
        %v2583 = vrot.slane %v1939, 1
        %v2652 = vunpack.c.l.b16 %v2516
        %v2653 = vunpack.c.l.b16 %v2517
        %v2654 = vunpack.c.l.b16 %v2518
        %v2655 = vunpack.c.l.b16 %v2519
        %v2656 = vunpack.c.l.b16 %v2520
        %v2657 = vunpack.c.l.b16 %v2521
        %v2658 = vunpack.c.l.b16 %v2522
        %v2659 = vunpack.c.l.b16 %v2523
        %v2660 = vunpack.c.l.b16 %v2524
        %v2661 = vunpack.c.l.b16 %v2525
        %v2662 = vunpack.c.l.b16 %v2526
        %v2663 = vunpack.c.l.b16 %v2527
        %v2664 = vunpack.c.l.b16 %v2528
        %v2665 = vunpack.c.l.b16 %v2529
        %v2666 = vunpack.c.l.b16 %v2530
        %v2667 = vunpack.c.l.b16 %v2531
        %v2668 = vunpack.c.l.b16 %v2532
        %v2669 = vunpack.c.l.b16 %v2533
        %v2670 = vunpack.c.l.b16 %v2534
        %v2671 = vunpack.c.l.b16 %v2535
        %v2672 = vunpack.c.l.b16 %v2536
        %v2673 = vunpack.c.l.b16 %v2537
        %v2674 = vunpack.c.l.b16 %v2538
        %v2675 = vunpack.c.l.b16 %v2539
        %v2676 = vunpack.c.l.b16 %v2540
        %v2677 = vunpack.c.l.b16 %v2541
        %v2678 = vunpack.c.l.b16 %v2542
        %v2679 = vunpack.c.l.b16 %v2543
        %v2680 = vunpack.c.l.b16 %v2544
        %v2681 = vunpack.c.l.b16 %v2545
        %v2682 = vunpack.c.l.b16 %v2546
        %v2683 = vunpack.c.l.b16 %v2547
        %v2684 = vunpack.c.l.b16 %v2548
        %v2685 = vunpack.c.l.b16 %v2549
        %v2686 = vunpack.c.l.b16 %v2550
        %v2687 = vunpack.c.l.b16 %v2551
        %v2688 = vunpack.c.l.b16 %v2552
        %v2689 = vunpack.c.l.b16 %v2553
        %v2690 = vunpack.c.l.b16 %v2554
        %v2691 = vunpack.c.l.b16 %v2555
        %v2692 = vunpack.c.l.b16 %v2556
        %v2693 = vunpack.c.l.b16 %v2557
        %v2694 = vunpack.c.l.b16 %v2558
        %v2695 = vunpack.c.l.b16 %v2559
        %v2696 = vunpack.c.l.b16 %v2560
        %v2697 = vunpack.c.l.b16 %v2561
        %v2698 = vunpack.c.l.b16 %v2562
        %v2699 = vunpack.c.l.b16 %v2563
        %v2700 = vunpack.c.l.b16 %v2564
        %v2701 = vunpack.c.l.b16 %v2565
        %v2702 = vunpack.c.l.b16 %v2566
        %v2703 = vunpack.c.l.b16 %v2567
        %v2704 = vunpack.c.l.b16 %v2568
        %v2705 = vunpack.c.l.b16 %v2569
        %v2706 = vunpack.c.l.b16 %v2570
        %v2707 = vunpack.c.l.b16 %v2571
        %v2708 = vunpack.c.l.b16 %v2572
        %v2709 = vunpack.c.l.b16 %v2573
        %v2710 = vunpack.c.l.b16 %v2574
        %v2711 = vunpack.c.l.b16 %v2575
        %v2712 = vunpack.c.l.b16 %v2576
        %v2713 = vunpack.c.l.b16 %v2577
        %v2714 = vunpack.c.l.b16 %v2578
        %v2715 = vunpack.c.l.b16 %v2579
        %v2716 = vpack.c.b16 %v2653, %v2652
        %v2717 = vpack.c.b16 %v2655, %v2654
        %v2718 = vpack.c.b16 %v2657, %v2656
        %v2719 = vpack.c.b16 %v2659, %v2658
        %v2720 = vpack.c.b16 %v2661, %v2660
        %v2721 = vpack.c.b16 %v2663, %v2662
        %v2722 = vpack.c.b16 %v2665, %v2664
        %v2723 = vpack.c.b16 %v2667, %v2666
        %v2724 = vpack.c.b16 %v2669, %v2668
        %v2725 = vpack.c.b16 %v2671, %v2670
        %v2726 = vpack.c.b16 %v2673, %v2672
        %v2727 = vpack.c.b16 %v2675, %v2674
        %v2728 = vpack.c.b16 %v2677, %v2676
        %v2729 = vpack.c.b16 %v2679, %v2678
        %v2730 = vpack.c.b16 %v2681, %v2680
        %v2731 = vpack.c.b16 %v2683, %v2682
        %v2732 = vpack.c.b16 %v2685, %v2684
        %v2733 = vpack.c.b16 %v2687, %v2686
        %v2734 = vpack.c.b16 %v2689, %v2688
        %v2735 = vpack.c.b16 %v2691, %v2690
        %v2736 = vpack.c.b16 %v2693, %v2692
        %v2737 = vpack.c.b16 %v2695, %v2694
        %v2738 = vpack.c.b16 %v2697, %v2696
        %v2739 = vpack.c.b16 %v2699, %v2698
        %v2740 = vpack.c.b16 %v2701, %v2700
        %v2741 = vpack.c.b16 %v2703, %v2702
        %v2742 = vpack.c.b16 %v2705, %v2704
        %v2743 = vpack.c.b16 %v2707, %v2706
        %v2744 = vpack.c.b16 %v2709, %v2708
        %v2745 = vpack.c.b16 %v2711, %v2710
        %v2746 = vpack.c.b16 %v2713, %v2712
        %v2747 = vpack.c.b16 %v2715, %v2714
        %2780 = vmatpush.bf16.msra.mxu0 %v2723
        %2781 = vmatpush.bf16.msra.mxu0 %v2722
        %2782 = vmatpush.bf16.msra.mxu0 %v2721
        %2783 = vmatpush.bf16.msra.mxu0 %v2720
        %2784 = vmatpush.bf16.msra.mxu0 %v2719
        %2785 = vmatpush.bf16.msra.mxu0 %v2718
        %2786 = vmatpush.bf16.msra.mxu0 %v2717
        %2787 = vmatpush.bf16.msra.mxu0 %v2716
        %2788 = vmatmul.bf16.gmra.mxu0 %v2580
        %v2789 = vpop.f32.mrf.mxu0
        %v2790 = vadd.f32 0.0, %v2789
        %v2791 = vpop.f32.mrf.mxu0
        %2792 = vdwg.mxu0
        %2793 = vmatpush.bf16.msra.mxu0 %v2731
        %2794 = vmatpush.bf16.msra.mxu0 %v2730
        %2795 = vmatpush.bf16.msra.mxu0 %v2729
        %2796 = vmatpush.bf16.msra.mxu0 %v2728
        %2797 = vmatpush.bf16.msra.mxu0 %v2727
        %2798 = vmatpush.bf16.msra.mxu0 %v2726
        %2799 = vmatpush.bf16.msra.mxu0 %v2725
        %2800 = vmatpush.bf16.msra.mxu0 %v2724
        %2801 = vmatmul.bf16.gmra.mxu0 %v2581
        %v2802 = vpop.f32.mrf.mxu0
        %v2803 = vadd.f32 %v2790, %v2802
        %v2804 = vpop.f32.mrf.mxu0
        %2805 = vdwg.mxu0
        %2806 = vmatpush.bf16.msra.mxu0 %v2739
        %2807 = vmatpush.bf16.msra.mxu0 %v2738
        %2808 = vmatpush.bf16.msra.mxu0 %v2737
        %2809 = vmatpush.bf16.msra.mxu0 %v2736
        %2810 = vmatpush.bf16.msra.mxu0 %v2735
        %2811 = vmatpush.bf16.msra.mxu0 %v2734
        %2812 = vmatpush.bf16.msra.mxu0 %v2733
        %2813 = vmatpush.bf16.msra.mxu0 %v2732
        %2814 = vmatmul.bf16.gmra.mxu0 %v2582
        %v2815 = vpop.f32.mrf.mxu0
        %v2816 = vadd.f32 %v2803, %v2815
        %v2817 = vpop.f32.mrf.mxu0
        %2818 = vdwg.mxu0
        %2819 = vmatpush.bf16.msra.mxu0 %v2747
        %2820 = vmatpush.bf16.msra.mxu0 %v2746
        %2821 = vmatpush.bf16.msra.mxu0 %v2745
        %2822 = vmatpush.bf16.msra.mxu0 %v2744
        %2823 = vmatpush.bf16.msra.mxu0 %v2743
        %2824 = vmatpush.bf16.msra.mxu0 %v2742
        %2825 = vmatpush.bf16.msra.mxu0 %v2741
        %2826 = vmatpush.bf16.msra.mxu0 %v2740
        %2827 = vmatmul.bf16.gmra.mxu0 %v2583
        %v2828 = vpop.f32.mrf.mxu0
        %v2829 = vadd.f32 %v2816, %v2828
        %v2830 = vpop.f32.mrf.mxu0
        %2831 = vdwg.mxu0
        %v2832 = vadd.f32 %v2514, %v2829
        %s2833 = scalar_lea.vmem %s3, 768
        %v2834 = vld [vmem:[%s2833] sm:$0xf]
        %v2835 = vld [vmem:[%s2833 + $0x4] sm:$0xf]
        %v2836 = vld [vmem:[%s2833 + $0x8] sm:$0xf]
        %v2837 = vld [vmem:[%s2833 + $0xc] sm:$0xf]
        %v2838 = vld [vmem:[%s2833 + $0x10] sm:$0xf]
        %v2839 = vld [vmem:[%s2833 + $0x14] sm:$0xf]
        %v2840 = vld [vmem:[%s2833 + $0x18] sm:$0xf]
        %v2841 = vld [vmem:[%s2833 + $0x1c] sm:$0xf]
        %v2842 = vld [vmem:[%s2833 + $0x20] sm:$0xf]
        %v2843 = vld [vmem:[%s2833 + $0x24] sm:$0xf]
        %v2844 = vld [vmem:[%s2833 + $0x28] sm:$0xf]
        %v2845 = vld [vmem:[%s2833 + $0x2c] sm:$0xf]
        %v2846 = vld [vmem:[%s2833 + $0x30] sm:$0xf]
        %v2847 = vld [vmem:[%s2833 + $0x34] sm:$0xf]
        %v2848 = vld [vmem:[%s2833 + $0x38] sm:$0xf]
        %v2849 = vld [vmem:[%s2833 + $0x3c] sm:$0xf]
        %v2850 = vld [vmem:[%s2833 + $0x40] sm:$0xf]
        %v2851 = vld [vmem:[%s2833 + $0x44] sm:$0xf]
        %v2852 = vld [vmem:[%s2833 + $0x48] sm:$0xf]
        %v2853 = vld [vmem:[%s2833 + $0x4c] sm:$0xf]
        %v2854 = vld [vmem:[%s2833 + $0x50] sm:$0xf]
        %v2855 = vld [vmem:[%s2833 + $0x54] sm:$0xf]
        %v2856 = vld [vmem:[%s2833 + $0x58] sm:$0xf]
        %v2857 = vld [vmem:[%s2833 + $0x5c] sm:$0xf]
        %v2858 = vld [vmem:[%s2833 + $0x60] sm:$0xf]
        %v2859 = vld [vmem:[%s2833 + $0x64] sm:$0xf]
        %v2860 = vld [vmem:[%s2833 + $0x68] sm:$0xf]
        %v2861 = vld [vmem:[%s2833 + $0x6c] sm:$0xf]
        %v2862 = vld [vmem:[%s2833 + $0x70] sm:$0xf]
        %v2863 = vld [vmem:[%s2833 + $0x74] sm:$0xf]
        %v2864 = vld [vmem:[%s2833 + $0x78] sm:$0xf]
        %v2865 = vld [vmem:[%s2833 + $0x7c] sm:$0xf]
        %v2866 = vld [vmem:[%s2833 + $0x80] sm:$0xf]
        %v2867 = vld [vmem:[%s2833 + $0x84] sm:$0xf]
        %v2868 = vld [vmem:[%s2833 + $0x88] sm:$0xf]
        %v2869 = vld [vmem:[%s2833 + $0x8c] sm:$0xf]
        %v2870 = vld [vmem:[%s2833 + $0x90] sm:$0xf]
        %v2871 = vld [vmem:[%s2833 + $0x94] sm:$0xf]
        %v2872 = vld [vmem:[%s2833 + $0x98] sm:$0xf]
        %v2873 = vld [vmem:[%s2833 + $0x9c] sm:$0xf]
        %v2874 = vld [vmem:[%s2833 + $0xa0] sm:$0xf]
        %v2875 = vld [vmem:[%s2833 + $0xa4] sm:$0xf]
        %v2876 = vld [vmem:[%s2833 + $0xa8] sm:$0xf]
        %v2877 = vld [vmem:[%s2833 + $0xac] sm:$0xf]
        %v2878 = vld [vmem:[%s2833 + $0xb0] sm:$0xf]
        %v2879 = vld [vmem:[%s2833 + $0xb4] sm:$0xf]
        %v2880 = vld [vmem:[%s2833 + $0xb8] sm:$0xf]
        %v2881 = vld [vmem:[%s2833 + $0xbc] sm:$0xf]
        %v2882 = vld [vmem:[%s2833 + $0xc0] sm:$0xf]
        %v2883 = vld [vmem:[%s2833 + $0xc4] sm:$0xf]
        %v2884 = vld [vmem:[%s2833 + $0xc8] sm:$0xf]
        %v2885 = vld [vmem:[%s2833 + $0xcc] sm:$0xf]
        %v2886 = vld [vmem:[%s2833 + $0xd0] sm:$0xf]
        %v2887 = vld [vmem:[%s2833 + $0xd4] sm:$0xf]
        %v2888 = vld [vmem:[%s2833 + $0xd8] sm:$0xf]
        %v2889 = vld [vmem:[%s2833 + $0xdc] sm:$0xf]
        %v2890 = vld [vmem:[%s2833 + $0xe0] sm:$0xf]
        %v2891 = vld [vmem:[%s2833 + $0xe4] sm:$0xf]
        %v2892 = vld [vmem:[%s2833 + $0xe8] sm:$0xf]
        %v2893 = vld [vmem:[%s2833 + $0xec] sm:$0xf]
        %v2894 = vld [vmem:[%s2833 + $0xf0] sm:$0xf]
        %v2895 = vld [vmem:[%s2833 + $0xf4] sm:$0xf]
        %v2896 = vld [vmem:[%s2833 + $0xf8] sm:$0xf]
        %v2897 = vld [vmem:[%s2833 + $0xfc] sm:$0xf]
        %v2898 = vrot.slane %v2255, 1
        %v2899 = vrot.slane %v2258, 1
        %v2900 = vrot.slane %v2261, 1
        %v2901 = vrot.slane %v2264, 1
        %v2970 = vunpack.c.l.b16 %v2834
        %v2971 = vunpack.c.l.b16 %v2835
        %v2972 = vunpack.c.l.b16 %v2836
        %v2973 = vunpack.c.l.b16 %v2837
        %v2974 = vunpack.c.l.b16 %v2838
        %v2975 = vunpack.c.l.b16 %v2839
        %v2976 = vunpack.c.l.b16 %v2840
        %v2977 = vunpack.c.l.b16 %v2841
        %v2978 = vunpack.c.l.b16 %v2842
        %v2979 = vunpack.c.l.b16 %v2843
        %v2980 = vunpack.c.l.b16 %v2844
        %v2981 = vunpack.c.l.b16 %v2845
        %v2982 = vunpack.c.l.b16 %v2846
        %v2983 = vunpack.c.l.b16 %v2847
        %v2984 = vunpack.c.l.b16 %v2848
        %v2985 = vunpack.c.l.b16 %v2849
        %v2986 = vunpack.c.l.b16 %v2850
        %v2987 = vunpack.c.l.b16 %v2851
        %v2988 = vunpack.c.l.b16 %v2852
        %v2989 = vunpack.c.l.b16 %v2853
        %v2990 = vunpack.c.l.b16 %v2854
        %v2991 = vunpack.c.l.b16 %v2855
        %v2992 = vunpack.c.l.b16 %v2856
        %v2993 = vunpack.c.l.b16 %v2857
        %v2994 = vunpack.c.l.b16 %v2858
        %v2995 = vunpack.c.l.b16 %v2859
        %v2996 = vunpack.c.l.b16 %v2860
        %v2997 = vunpack.c.l.b16 %v2861
        %v2998 = vunpack.c.l.b16 %v2862
        %v2999 = vunpack.c.l.b16 %v2863
        %v3000 = vunpack.c.l.b16 %v2864
        %v3001 = vunpack.c.l.b16 %v2865
        %v3002 = vunpack.c.l.b16 %v2866
        %v3003 = vunpack.c.l.b16 %v2867
        %v3004 = vunpack.c.l.b16 %v2868
        %v3005 = vunpack.c.l.b16 %v2869
        %v3006 = vunpack.c.l.b16 %v2870
        %v3007 = vunpack.c.l.b16 %v2871
        %v3008 = vunpack.c.l.b16 %v2872
        %v3009 = vunpack.c.l.b16 %v2873
        %v3010 = vunpack.c.l.b16 %v2874
        %v3011 = vunpack.c.l.b16 %v2875
        %v3012 = vunpack.c.l.b16 %v2876
        %v3013 = vunpack.c.l.b16 %v2877
        %v3014 = vunpack.c.l.b16 %v2878
        %v3015 = vunpack.c.l.b16 %v2879
        %v3016 = vunpack.c.l.b16 %v2880
        %v3017 = vunpack.c.l.b16 %v2881
        %v3018 = vunpack.c.l.b16 %v2882
        %v3019 = vunpack.c.l.b16 %v2883
        %v3020 = vunpack.c.l.b16 %v2884
        %v3021 = vunpack.c.l.b16 %v2885
        %v3022 = vunpack.c.l.b16 %v2886
        %v3023 = vunpack.c.l.b16 %v2887
        %v3024 = vunpack.c.l.b16 %v2888
        %v3025 = vunpack.c.l.b16 %v2889
        %v3026 = vunpack.c.l.b16 %v2890
        %v3027 = vunpack.c.l.b16 %v2891
        %v3028 = vunpack.c.l.b16 %v2892
        %v3029 = vunpack.c.l.b16 %v2893
        %v3030 = vunpack.c.l.b16 %v2894
        %v3031 = vunpack.c.l.b16 %v2895
        %v3032 = vunpack.c.l.b16 %v2896
        %v3033 = vunpack.c.l.b16 %v2897
        %v3034 = vpack.c.b16 %v2971, %v2970
        %v3035 = vpack.c.b16 %v2973, %v2972
        %v3036 = vpack.c.b16 %v2975, %v2974
        %v3037 = vpack.c.b16 %v2977, %v2976
        %v3038 = vpack.c.b16 %v2979, %v2978
        %v3039 = vpack.c.b16 %v2981, %v2980
        %v3040 = vpack.c.b16 %v2983, %v2982
        %v3041 = vpack.c.b16 %v2985, %v2984
        %v3042 = vpack.c.b16 %v2987, %v2986
        %v3043 = vpack.c.b16 %v2989, %v2988
        %v3044 = vpack.c.b16 %v2991, %v2990
        %v3045 = vpack.c.b16 %v2993, %v2992
        %v3046 = vpack.c.b16 %v2995, %v2994
        %v3047 = vpack.c.b16 %v2997, %v2996
        %v3048 = vpack.c.b16 %v2999, %v2998
        %v3049 = vpack.c.b16 %v3001, %v3000
        %v3050 = vpack.c.b16 %v3003, %v3002
        %v3051 = vpack.c.b16 %v3005, %v3004
        %v3052 = vpack.c.b16 %v3007, %v3006
        %v3053 = vpack.c.b16 %v3009, %v3008
        %v3054 = vpack.c.b16 %v3011, %v3010
        %v3055 = vpack.c.b16 %v3013, %v3012
        %v3056 = vpack.c.b16 %v3015, %v3014
        %v3057 = vpack.c.b16 %v3017, %v3016
        %v3058 = vpack.c.b16 %v3019, %v3018
        %v3059 = vpack.c.b16 %v3021, %v3020
        %v3060 = vpack.c.b16 %v3023, %v3022
        %v3061 = vpack.c.b16 %v3025, %v3024
        %v3062 = vpack.c.b16 %v3027, %v3026
        %v3063 = vpack.c.b16 %v3029, %v3028
        %v3064 = vpack.c.b16 %v3031, %v3030
        %v3065 = vpack.c.b16 %v3033, %v3032
        %3098 = vmatpush.bf16.msra.mxu0 %v3041
        %3099 = vmatpush.bf16.msra.mxu0 %v3040
        %3100 = vmatpush.bf16.msra.mxu0 %v3039
        %3101 = vmatpush.bf16.msra.mxu0 %v3038
        %3102 = vmatpush.bf16.msra.mxu0 %v3037
        %3103 = vmatpush.bf16.msra.mxu0 %v3036
        %3104 = vmatpush.bf16.msra.mxu0 %v3035
        %3105 = vmatpush.bf16.msra.mxu0 %v3034
        %3106 = vmatmul.bf16.gmra.mxu0 %v2898
        %v3107 = vpop.f32.mrf.mxu0
        %v3108 = vadd.f32 0.0, %v3107
        %v3109 = vpop.f32.mrf.mxu0
        %3110 = vdwg.mxu0
        %3111 = vmatpush.bf16.msra.mxu0 %v3049
        %3112 = vmatpush.bf16.msra.mxu0 %v3048
        %3113 = vmatpush.bf16.msra.mxu0 %v3047
        %3114 = vmatpush.bf16.msra.mxu0 %v3046
        %3115 = vmatpush.bf16.msra.mxu0 %v3045
        %3116 = vmatpush.bf16.msra.mxu0 %v3044
        %3117 = vmatpush.bf16.msra.mxu0 %v3043
        %3118 = vmatpush.bf16.msra.mxu0 %v3042
        %3119 = vmatmul.bf16.gmra.mxu0 %v2899
        %v3120 = vpop.f32.mrf.mxu0
        %v3121 = vadd.f32 %v3108, %v3120
        %v3122 = vpop.f32.mrf.mxu0
        %3123 = vdwg.mxu0
        %3124 = vmatpush.bf16.msra.mxu0 %v3057
        %3125 = vmatpush.bf16.msra.mxu0 %v3056
        %3126 = vmatpush.bf16.msra.mxu0 %v3055
        %3127 = vmatpush.bf16.msra.mxu0 %v3054
        %3128 = vmatpush.bf16.msra.mxu0 %v3053
        %3129 = vmatpush.bf16.msra.mxu0 %v3052
        %3130 = vmatpush.bf16.msra.mxu0 %v3051
        %3131 = vmatpush.bf16.msra.mxu0 %v3050
        %3132 = vmatmul.bf16.gmra.mxu0 %v2900
        %v3133 = vpop.f32.mrf.mxu0
        %v3134 = vadd.f32 %v3121, %v3133
        %v3135 = vpop.f32.mrf.mxu0
        %3136 = vdwg.mxu0
        %3137 = vmatpush.bf16.msra.mxu0 %v3065
        %3138 = vmatpush.bf16.msra.mxu0 %v3064
        %3139 = vmatpush.bf16.msra.mxu0 %v3063
        %3140 = vmatpush.bf16.msra.mxu0 %v3062
        %3141 = vmatpush.bf16.msra.mxu0 %v3061
        %3142 = vmatpush.bf16.msra.mxu0 %v3060
        %3143 = vmatpush.bf16.msra.mxu0 %v3059
        %3144 = vmatpush.bf16.msra.mxu0 %v3058
        %3145 = vmatmul.bf16.gmra.mxu0 %v2901
        %v3146 = vpop.f32.mrf.mxu0
        %v3147 = vadd.f32 %v3134, %v3146
        %v3148 = vpop.f32.mrf.mxu0
        %3149 = vdwg.mxu0
        %v3150 = vadd.f32 %v2832, %v3147
        %s3151 = scalar_lea.vmem %s3, 1024
        %v3152 = vld [vmem:[%s3151] sm:$0xf]
        %v3153 = vld [vmem:[%s3151 + $0x4] sm:$0xf]
        %v3154 = vld [vmem:[%s3151 + $0x8] sm:$0xf]
        %v3155 = vld [vmem:[%s3151 + $0xc] sm:$0xf]
        %v3156 = vld [vmem:[%s3151 + $0x10] sm:$0xf]
        %v3157 = vld [vmem:[%s3151 + $0x14] sm:$0xf]
        %v3158 = vld [vmem:[%s3151 + $0x18] sm:$0xf]
        %v3159 = vld [vmem:[%s3151 + $0x1c] sm:$0xf]
        %v3160 = vld [vmem:[%s3151 + $0x20] sm:$0xf]
        %v3161 = vld [vmem:[%s3151 + $0x24] sm:$0xf]
        %v3162 = vld [vmem:[%s3151 + $0x28] sm:$0xf]
        %v3163 = vld [vmem:[%s3151 + $0x2c] sm:$0xf]
        %v3164 = vld [vmem:[%s3151 + $0x30] sm:$0xf]
        %v3165 = vld [vmem:[%s3151 + $0x34] sm:$0xf]
        %v3166 = vld [vmem:[%s3151 + $0x38] sm:$0xf]
        %v3167 = vld [vmem:[%s3151 + $0x3c] sm:$0xf]
        %v3168 = vld [vmem:[%s3151 + $0x40] sm:$0xf]
        %v3169 = vld [vmem:[%s3151 + $0x44] sm:$0xf]
        %v3170 = vld [vmem:[%s3151 + $0x48] sm:$0xf]
        %v3171 = vld [vmem:[%s3151 + $0x4c] sm:$0xf]
        %v3172 = vld [vmem:[%s3151 + $0x50] sm:$0xf]
        %v3173 = vld [vmem:[%s3151 + $0x54] sm:$0xf]
        %v3174 = vld [vmem:[%s3151 + $0x58] sm:$0xf]
        %v3175 = vld [vmem:[%s3151 + $0x5c] sm:$0xf]
        %v3176 = vld [vmem:[%s3151 + $0x60] sm:$0xf]
        %v3177 = vld [vmem:[%s3151 + $0x64] sm:$0xf]
        %v3178 = vld [vmem:[%s3151 + $0x68] sm:$0xf]
        %v3179 = vld [vmem:[%s3151 + $0x6c] sm:$0xf]
        %v3180 = vld [vmem:[%s3151 + $0x70] sm:$0xf]
        %v3181 = vld [vmem:[%s3151 + $0x74] sm:$0xf]
        %v3182 = vld [vmem:[%s3151 + $0x78] sm:$0xf]
        %v3183 = vld [vmem:[%s3151 + $0x7c] sm:$0xf]
        %v3184 = vld [vmem:[%s3151 + $0x80] sm:$0xf]
        %v3185 = vld [vmem:[%s3151 + $0x84] sm:$0xf]
        %v3186 = vld [vmem:[%s3151 + $0x88] sm:$0xf]
        %v3187 = vld [vmem:[%s3151 + $0x8c] sm:$0xf]
        %v3188 = vld [vmem:[%s3151 + $0x90] sm:$0xf]
        %v3189 = vld [vmem:[%s3151 + $0x94] sm:$0xf]
        %v3190 = vld [vmem:[%s3151 + $0x98] sm:$0xf]
        %v3191 = vld [vmem:[%s3151 + $0x9c] sm:$0xf]
        %v3192 = vld [vmem:[%s3151 + $0xa0] sm:$0xf]
        %v3193 = vld [vmem:[%s3151 + $0xa4] sm:$0xf]
        %v3194 = vld [vmem:[%s3151 + $0xa8] sm:$0xf]
        %v3195 = vld [vmem:[%s3151 + $0xac] sm:$0xf]
        %v3196 = vld [vmem:[%s3151 + $0xb0] sm:$0xf]
        %v3197 = vld [vmem:[%s3151 + $0xb4] sm:$0xf]
        %v3198 = vld [vmem:[%s3151 + $0xb8] sm:$0xf]
        %v3199 = vld [vmem:[%s3151 + $0xbc] sm:$0xf]
        %v3200 = vld [vmem:[%s3151 + $0xc0] sm:$0xf]
        %v3201 = vld [vmem:[%s3151 + $0xc4] sm:$0xf]
        %v3202 = vld [vmem:[%s3151 + $0xc8] sm:$0xf]
        %v3203 = vld [vmem:[%s3151 + $0xcc] sm:$0xf]
        %v3204 = vld [vmem:[%s3151 + $0xd0] sm:$0xf]
        %v3205 = vld [vmem:[%s3151 + $0xd4] sm:$0xf]
        %v3206 = vld [vmem:[%s3151 + $0xd8] sm:$0xf]
        %v3207 = vld [vmem:[%s3151 + $0xdc] sm:$0xf]
        %v3208 = vld [vmem:[%s3151 + $0xe0] sm:$0xf]
        %v3209 = vld [vmem:[%s3151 + $0xe4] sm:$0xf]
        %v3210 = vld [vmem:[%s3151 + $0xe8] sm:$0xf]
        %v3211 = vld [vmem:[%s3151 + $0xec] sm:$0xf]
        %v3212 = vld [vmem:[%s3151 + $0xf0] sm:$0xf]
        %v3213 = vld [vmem:[%s3151 + $0xf4] sm:$0xf]
        %v3214 = vld [vmem:[%s3151 + $0xf8] sm:$0xf]
        %v3215 = vld [vmem:[%s3151 + $0xfc] sm:$0xf]
        %v3216 = vrot.slane %v1936, 2
        %v3217 = vrot.slane %v1937, 2
        %v3218 = vrot.slane %v1938, 2
        %v3219 = vrot.slane %v1939, 2
        %v3288 = vunpack.c.l.b16 %v3152
        %v3289 = vunpack.c.l.b16 %v3153
        %v3290 = vunpack.c.l.b16 %v3154
        %v3291 = vunpack.c.l.b16 %v3155
        %v3292 = vunpack.c.l.b16 %v3156
        %v3293 = vunpack.c.l.b16 %v3157
        %v3294 = vunpack.c.l.b16 %v3158
        %v3295 = vunpack.c.l.b16 %v3159
        %v3296 = vunpack.c.l.b16 %v3160
        %v3297 = vunpack.c.l.b16 %v3161
        %v3298 = vunpack.c.l.b16 %v3162
        %v3299 = vunpack.c.l.b16 %v3163
        %v3300 = vunpack.c.l.b16 %v3164
        %v3301 = vunpack.c.l.b16 %v3165
        %v3302 = vunpack.c.l.b16 %v3166
        %v3303 = vunpack.c.l.b16 %v3167
        %v3304 = vunpack.c.l.b16 %v3168
        %v3305 = vunpack.c.l.b16 %v3169
        %v3306 = vunpack.c.l.b16 %v3170
        %v3307 = vunpack.c.l.b16 %v3171
        %v3308 = vunpack.c.l.b16 %v3172
        %v3309 = vunpack.c.l.b16 %v3173
        %v3310 = vunpack.c.l.b16 %v3174
        %v3311 = vunpack.c.l.b16 %v3175
        %v3312 = vunpack.c.l.b16 %v3176
        %v3313 = vunpack.c.l.b16 %v3177
        %v3314 = vunpack.c.l.b16 %v3178
        %v3315 = vunpack.c.l.b16 %v3179
        %v3316 = vunpack.c.l.b16 %v3180
        %v3317 = vunpack.c.l.b16 %v3181
        %v3318 = vunpack.c.l.b16 %v3182
        %v3319 = vunpack.c.l.b16 %v3183
        %v3320 = vunpack.c.l.b16 %v3184
        %v3321 = vunpack.c.l.b16 %v3185
        %v3322 = vunpack.c.l.b16 %v3186
        %v3323 = vunpack.c.l.b16 %v3187
        %v3324 = vunpack.c.l.b16 %v3188
        %v3325 = vunpack.c.l.b16 %v3189
        %v3326 = vunpack.c.l.b16 %v3190
        %v3327 = vunpack.c.l.b16 %v3191
        %v3328 = vunpack.c.l.b16 %v3192
        %v3329 = vunpack.c.l.b16 %v3193
        %v3330 = vunpack.c.l.b16 %v3194
        %v3331 = vunpack.c.l.b16 %v3195
        %v3332 = vunpack.c.l.b16 %v3196
        %v3333 = vunpack.c.l.b16 %v3197
        %v3334 = vunpack.c.l.b16 %v3198
        %v3335 = vunpack.c.l.b16 %v3199
        %v3336 = vunpack.c.l.b16 %v3200
        %v3337 = vunpack.c.l.b16 %v3201
        %v3338 = vunpack.c.l.b16 %v3202
        %v3339 = vunpack.c.l.b16 %v3203
        %v3340 = vunpack.c.l.b16 %v3204
        %v3341 = vunpack.c.l.b16 %v3205
        %v3342 = vunpack.c.l.b16 %v3206
        %v3343 = vunpack.c.l.b16 %v3207
        %v3344 = vunpack.c.l.b16 %v3208
        %v3345 = vunpack.c.l.b16 %v3209
        %v3346 = vunpack.c.l.b16 %v3210
        %v3347 = vunpack.c.l.b16 %v3211
        %v3348 = vunpack.c.l.b16 %v3212
        %v3349 = vunpack.c.l.b16 %v3213
        %v3350 = vunpack.c.l.b16 %v3214
        %v3351 = vunpack.c.l.b16 %v3215
        %v3352 = vpack.c.b16 %v3289, %v3288
        %v3353 = vpack.c.b16 %v3291, %v3290
        %v3354 = vpack.c.b16 %v3293, %v3292
        %v3355 = vpack.c.b16 %v3295, %v3294
        %v3356 = vpack.c.b16 %v3297, %v3296
        %v3357 = vpack.c.b16 %v3299, %v3298
        %v3358 = vpack.c.b16 %v3301, %v3300
        %v3359 = vpack.c.b16 %v3303, %v3302
        %v3360 = vpack.c.b16 %v3305, %v3304
        %v3361 = vpack.c.b16 %v3307, %v3306
        %v3362 = vpack.c.b16 %v3309, %v3308
        %v3363 = vpack.c.b16 %v3311, %v3310
        %v3364 = vpack.c.b16 %v3313, %v3312
        %v3365 = vpack.c.b16 %v3315, %v3314
        %v3366 = vpack.c.b16 %v3317, %v3316
        %v3367 = vpack.c.b16 %v3319, %v3318
        %v3368 = vpack.c.b16 %v3321, %v3320
        %v3369 = vpack.c.b16 %v3323, %v3322
        %v3370 = vpack.c.b16 %v3325, %v3324
        %v3371 = vpack.c.b16 %v3327, %v3326
        %v3372 = vpack.c.b16 %v3329, %v3328
        %v3373 = vpack.c.b16 %v3331, %v3330
        %v3374 = vpack.c.b16 %v3333, %v3332
        %v3375 = vpack.c.b16 %v3335, %v3334
        %v3376 = vpack.c.b16 %v3337, %v3336
        %v3377 = vpack.c.b16 %v3339, %v3338
        %v3378 = vpack.c.b16 %v3341, %v3340
        %v3379 = vpack.c.b16 %v3343, %v3342
        %v3380 = vpack.c.b16 %v3345, %v3344
        %v3381 = vpack.c.b16 %v3347, %v3346
        %v3382 = vpack.c.b16 %v3349, %v3348
        %v3383 = vpack.c.b16 %v3351, %v3350
        %3416 = vmatpush.bf16.msra.mxu0 %v3359
        %3417 = vmatpush.bf16.msra.mxu0 %v3358
        %3418 = vmatpush.bf16.msra.mxu0 %v3357
        %3419 = vmatpush.bf16.msra.mxu0 %v3356
        %3420 = vmatpush.bf16.msra.mxu0 %v3355
        %3421 = vmatpush.bf16.msra.mxu0 %v3354
        %3422 = vmatpush.bf16.msra.mxu0 %v3353
        %3423 = vmatpush.bf16.msra.mxu0 %v3352
        %3424 = vmatmul.bf16.gmra.mxu0 %v3216
        %v3425 = vpop.f32.mrf.mxu0
        %v3426 = vadd.f32 0.0, %v3425
        %v3427 = vpop.f32.mrf.mxu0
        %3428 = vdwg.mxu0
        %3429 = vmatpush.bf16.msra.mxu0 %v3367
        %3430 = vmatpush.bf16.msra.mxu0 %v3366
        %3431 = vmatpush.bf16.msra.mxu0 %v3365
        %3432 = vmatpush.bf16.msra.mxu0 %v3364
        %3433 = vmatpush.bf16.msra.mxu0 %v3363
        %3434 = vmatpush.bf16.msra.mxu0 %v3362
        %3435 = vmatpush.bf16.msra.mxu0 %v3361
        %3436 = vmatpush.bf16.msra.mxu0 %v3360
        %3437 = vmatmul.bf16.gmra.mxu0 %v3217
        %v3438 = vpop.f32.mrf.mxu0
        %v3439 = vadd.f32 %v3426, %v3438
        %v3440 = vpop.f32.mrf.mxu0
        %3441 = vdwg.mxu0
        %3442 = vmatpush.bf16.msra.mxu0 %v3375
        %3443 = vmatpush.bf16.msra.mxu0 %v3374
        %3444 = vmatpush.bf16.msra.mxu0 %v3373
        %3445 = vmatpush.bf16.msra.mxu0 %v3372
        %3446 = vmatpush.bf16.msra.mxu0 %v3371
        %3447 = vmatpush.bf16.msra.mxu0 %v3370
        %3448 = vmatpush.bf16.msra.mxu0 %v3369
        %3449 = vmatpush.bf16.msra.mxu0 %v3368
        %3450 = vmatmul.bf16.gmra.mxu0 %v3218
        %v3451 = vpop.f32.mrf.mxu0
        %v3452 = vadd.f32 %v3439, %v3451
        %v3453 = vpop.f32.mrf.mxu0
        %3454 = vdwg.mxu0
        %3455 = vmatpush.bf16.msra.mxu0 %v3383
        %3456 = vmatpush.bf16.msra.mxu0 %v3382
        %3457 = vmatpush.bf16.msra.mxu0 %v3381
        %3458 = vmatpush.bf16.msra.mxu0 %v3380
        %3459 = vmatpush.bf16.msra.mxu0 %v3379
        %3460 = vmatpush.bf16.msra.mxu0 %v3378
        %3461 = vmatpush.bf16.msra.mxu0 %v3377
        %3462 = vmatpush.bf16.msra.mxu0 %v3376
        %3463 = vmatmul.bf16.gmra.mxu0 %v3219
        %v3464 = vpop.f32.mrf.mxu0
        %v3465 = vadd.f32 %v3452, %v3464
        %v3466 = vpop.f32.mrf.mxu0
        %3467 = vdwg.mxu0
        %v3468 = vadd.f32 %v3150, %v3465
        %s3469 = scalar_lea.vmem %s3, 1280
        %v3470 = vld [vmem:[%s3469] sm:$0xf]
        %v3471 = vld [vmem:[%s3469 + $0x4] sm:$0xf]
        %v3472 = vld [vmem:[%s3469 + $0x8] sm:$0xf]
        %v3473 = vld [vmem:[%s3469 + $0xc] sm:$0xf]
        %v3474 = vld [vmem:[%s3469 + $0x10] sm:$0xf]
        %v3475 = vld [vmem:[%s3469 + $0x14] sm:$0xf]
        %v3476 = vld [vmem:[%s3469 + $0x18] sm:$0xf]
        %v3477 = vld [vmem:[%s3469 + $0x1c] sm:$0xf]
        %v3478 = vld [vmem:[%s3469 + $0x20] sm:$0xf]
        %v3479 = vld [vmem:[%s3469 + $0x24] sm:$0xf]
        %v3480 = vld [vmem:[%s3469 + $0x28] sm:$0xf]
        %v3481 = vld [vmem:[%s3469 + $0x2c] sm:$0xf]
        %v3482 = vld [vmem:[%s3469 + $0x30] sm:$0xf]
        %v3483 = vld [vmem:[%s3469 + $0x34] sm:$0xf]
        %v3484 = vld [vmem:[%s3469 + $0x38] sm:$0xf]
        %v3485 = vld [vmem:[%s3469 + $0x3c] sm:$0xf]
        %v3486 = vld [vmem:[%s3469 + $0x40] sm:$0xf]
        %v3487 = vld [vmem:[%s3469 + $0x44] sm:$0xf]
        %v3488 = vld [vmem:[%s3469 + $0x48] sm:$0xf]
        %v3489 = vld [vmem:[%s3469 + $0x4c] sm:$0xf]
        %v3490 = vld [vmem:[%s3469 + $0x50] sm:$0xf]
        %v3491 = vld [vmem:[%s3469 + $0x54] sm:$0xf]
        %v3492 = vld [vmem:[%s3469 + $0x58] sm:$0xf]
        %v3493 = vld [vmem:[%s3469 + $0x5c] sm:$0xf]
        %v3494 = vld [vmem:[%s3469 + $0x60] sm:$0xf]
        %v3495 = vld [vmem:[%s3469 + $0x64] sm:$0xf]
        %v3496 = vld [vmem:[%s3469 + $0x68] sm:$0xf]
        %v3497 = vld [vmem:[%s3469 + $0x6c] sm:$0xf]
        %v3498 = vld [vmem:[%s3469 + $0x70] sm:$0xf]
        %v3499 = vld [vmem:[%s3469 + $0x74] sm:$0xf]
        %v3500 = vld [vmem:[%s3469 + $0x78] sm:$0xf]
        %v3501 = vld [vmem:[%s3469 + $0x7c] sm:$0xf]
        %v3502 = vld [vmem:[%s3469 + $0x80] sm:$0xf]
        %v3503 = vld [vmem:[%s3469 + $0x84] sm:$0xf]
        %v3504 = vld [vmem:[%s3469 + $0x88] sm:$0xf]
        %v3505 = vld [vmem:[%s3469 + $0x8c] sm:$0xf]
        %v3506 = vld [vmem:[%s3469 + $0x90] sm:$0xf]
        %v3507 = vld [vmem:[%s3469 + $0x94] sm:$0xf]
        %v3508 = vld [vmem:[%s3469 + $0x98] sm:$0xf]
        %v3509 = vld [vmem:[%s3469 + $0x9c] sm:$0xf]
        %v3510 = vld [vmem:[%s3469 + $0xa0] sm:$0xf]
        %v3511 = vld [vmem:[%s3469 + $0xa4] sm:$0xf]
        %v3512 = vld [vmem:[%s3469 + $0xa8] sm:$0xf]
        %v3513 = vld [vmem:[%s3469 + $0xac] sm:$0xf]
        %v3514 = vld [vmem:[%s3469 + $0xb0] sm:$0xf]
        %v3515 = vld [vmem:[%s3469 + $0xb4] sm:$0xf]
        %v3516 = vld [vmem:[%s3469 + $0xb8] sm:$0xf]
        %v3517 = vld [vmem:[%s3469 + $0xbc] sm:$0xf]
        %v3518 = vld [vmem:[%s3469 + $0xc0] sm:$0xf]
        %v3519 = vld [vmem:[%s3469 + $0xc4] sm:$0xf]
        %v3520 = vld [vmem:[%s3469 + $0xc8] sm:$0xf]
        %v3521 = vld [vmem:[%s3469 + $0xcc] sm:$0xf]
        %v3522 = vld [vmem:[%s3469 + $0xd0] sm:$0xf]
        %v3523 = vld [vmem:[%s3469 + $0xd4] sm:$0xf]
        %v3524 = vld [vmem:[%s3469 + $0xd8] sm:$0xf]
        %v3525 = vld [vmem:[%s3469 + $0xdc] sm:$0xf]
        %v3526 = vld [vmem:[%s3469 + $0xe0] sm:$0xf]
        %v3527 = vld [vmem:[%s3469 + $0xe4] sm:$0xf]
        %v3528 = vld [vmem:[%s3469 + $0xe8] sm:$0xf]
        %v3529 = vld [vmem:[%s3469 + $0xec] sm:$0xf]
        %v3530 = vld [vmem:[%s3469 + $0xf0] sm:$0xf]
        %v3531 = vld [vmem:[%s3469 + $0xf4] sm:$0xf]
        %v3532 = vld [vmem:[%s3469 + $0xf8] sm:$0xf]
        %v3533 = vld [vmem:[%s3469 + $0xfc] sm:$0xf]
        %v3534 = vrot.slane %v2255, 2
        %v3535 = vrot.slane %v2258, 2
        %v3536 = vrot.slane %v2261, 2
        %v3537 = vrot.slane %v2264, 2
        %v3606 = vunpack.c.l.b16 %v3470
        %v3607 = vunpack.c.l.b16 %v3471
        %v3608 = vunpack.c.l.b16 %v3472
        %v3609 = vunpack.c.l.b16 %v3473
        %v3610 = vunpack.c.l.b16 %v3474
        %v3611 = vunpack.c.l.b16 %v3475
        %v3612 = vunpack.c.l.b16 %v3476
        %v3613 = vunpack.c.l.b16 %v3477
        %v3614 = vunpack.c.l.b16 %v3478
        %v3615 = vunpack.c.l.b16 %v3479
        %v3616 = vunpack.c.l.b16 %v3480
        %v3617 = vunpack.c.l.b16 %v3481
        %v3618 = vunpack.c.l.b16 %v3482
        %v3619 = vunpack.c.l.b16 %v3483
        %v3620 = vunpack.c.l.b16 %v3484
        %v3621 = vunpack.c.l.b16 %v3485
        %v3622 = vunpack.c.l.b16 %v3486
        %v3623 = vunpack.c.l.b16 %v3487
        %v3624 = vunpack.c.l.b16 %v3488
        %v3625 = vunpack.c.l.b16 %v3489
        %v3626 = vunpack.c.l.b16 %v3490
        %v3627 = vunpack.c.l.b16 %v3491
        %v3628 = vunpack.c.l.b16 %v3492
        %v3629 = vunpack.c.l.b16 %v3493
        %v3630 = vunpack.c.l.b16 %v3494
        %v3631 = vunpack.c.l.b16 %v3495
        %v3632 = vunpack.c.l.b16 %v3496
        %v3633 = vunpack.c.l.b16 %v3497
        %v3634 = vunpack.c.l.b16 %v3498
        %v3635 = vunpack.c.l.b16 %v3499
        %v3636 = vunpack.c.l.b16 %v3500
        %v3637 = vunpack.c.l.b16 %v3501
        %v3638 = vunpack.c.l.b16 %v3502
        %v3639 = vunpack.c.l.b16 %v3503
        %v3640 = vunpack.c.l.b16 %v3504
        %v3641 = vunpack.c.l.b16 %v3505
        %v3642 = vunpack.c.l.b16 %v3506
        %v3643 = vunpack.c.l.b16 %v3507
        %v3644 = vunpack.c.l.b16 %v3508
        %v3645 = vunpack.c.l.b16 %v3509
        %v3646 = vunpack.c.l.b16 %v3510
        %v3647 = vunpack.c.l.b16 %v3511
        %v3648 = vunpack.c.l.b16 %v3512
        %v3649 = vunpack.c.l.b16 %v3513
        %v3650 = vunpack.c.l.b16 %v3514
        %v3651 = vunpack.c.l.b16 %v3515
        %v3652 = vunpack.c.l.b16 %v3516
        %v3653 = vunpack.c.l.b16 %v3517
        %v3654 = vunpack.c.l.b16 %v3518
        %v3655 = vunpack.c.l.b16 %v3519
        %v3656 = vunpack.c.l.b16 %v3520
        %v3657 = vunpack.c.l.b16 %v3521
        %v3658 = vunpack.c.l.b16 %v3522
        %v3659 = vunpack.c.l.b16 %v3523
        %v3660 = vunpack.c.l.b16 %v3524
        %v3661 = vunpack.c.l.b16 %v3525
        %v3662 = vunpack.c.l.b16 %v3526
        %v3663 = vunpack.c.l.b16 %v3527
        %v3664 = vunpack.c.l.b16 %v3528
        %v3665 = vunpack.c.l.b16 %v3529
        %v3666 = vunpack.c.l.b16 %v3530
        %v3667 = vunpack.c.l.b16 %v3531
        %v3668 = vunpack.c.l.b16 %v3532
        %v3669 = vunpack.c.l.b16 %v3533
        %v3670 = vpack.c.b16 %v3607, %v3606
        %v3671 = vpack.c.b16 %v3609, %v3608
        %v3672 = vpack.c.b16 %v3611, %v3610
        %v3673 = vpack.c.b16 %v3613, %v3612
        %v3674 = vpack.c.b16 %v3615, %v3614
        %v3675 = vpack.c.b16 %v3617, %v3616
        %v3676 = vpack.c.b16 %v3619, %v3618
        %v3677 = vpack.c.b16 %v3621, %v3620
        %v3678 = vpack.c.b16 %v3623, %v3622
        %v3679 = vpack.c.b16 %v3625, %v3624
        %v3680 = vpack.c.b16 %v3627, %v3626
        %v3681 = vpack.c.b16 %v3629, %v3628
        %v3682 = vpack.c.b16 %v3631, %v3630
        %v3683 = vpack.c.b16 %v3633, %v3632
        %v3684 = vpack.c.b16 %v3635, %v3634
        %v3685 = vpack.c.b16 %v3637, %v3636
        %v3686 = vpack.c.b16 %v3639, %v3638
        %v3687 = vpack.c.b16 %v3641, %v3640
        %v3688 = vpack.c.b16 %v3643, %v3642
        %v3689 = vpack.c.b16 %v3645, %v3644
        %v3690 = vpack.c.b16 %v3647, %v3646
        %v3691 = vpack.c.b16 %v3649, %v3648
        %v3692 = vpack.c.b16 %v3651, %v3650
        %v3693 = vpack.c.b16 %v3653, %v3652
        %v3694 = vpack.c.b16 %v3655, %v3654
        %v3695 = vpack.c.b16 %v3657, %v3656
        %v3696 = vpack.c.b16 %v3659, %v3658
        %v3697 = vpack.c.b16 %v3661, %v3660
        %v3698 = vpack.c.b16 %v3663, %v3662
        %v3699 = vpack.c.b16 %v3665, %v3664
        %v3700 = vpack.c.b16 %v3667, %v3666
        %v3701 = vpack.c.b16 %v3669, %v3668
        %3734 = vmatpush.bf16.msra.mxu0 %v3677
        %3735 = vmatpush.bf16.msra.mxu0 %v3676
        %3736 = vmatpush.bf16.msra.mxu0 %v3675
        %3737 = vmatpush.bf16.msra.mxu0 %v3674
        %3738 = vmatpush.bf16.msra.mxu0 %v3673
        %3739 = vmatpush.bf16.msra.mxu0 %v3672
        %3740 = vmatpush.bf16.msra.mxu0 %v3671
        %3741 = vmatpush.bf16.msra.mxu0 %v3670
        %3742 = vmatmul.bf16.gmra.mxu0 %v3534
        %v3743 = vpop.f32.mrf.mxu0
        %v3744 = vadd.f32 0.0, %v3743
        %v3745 = vpop.f32.mrf.mxu0
        %3746 = vdwg.mxu0
        %3747 = vmatpush.bf16.msra.mxu0 %v3685
        %3748 = vmatpush.bf16.msra.mxu0 %v3684
        %3749 = vmatpush.bf16.msra.mxu0 %v3683
        %3750 = vmatpush.bf16.msra.mxu0 %v3682
        %3751 = vmatpush.bf16.msra.mxu0 %v3681
        %3752 = vmatpush.bf16.msra.mxu0 %v3680
        %3753 = vmatpush.bf16.msra.mxu0 %v3679
        %3754 = vmatpush.bf16.msra.mxu0 %v3678
        %3755 = vmatmul.bf16.gmra.mxu0 %v3535
        %v3756 = vpop.f32.mrf.mxu0
        %v3757 = vadd.f32 %v3744, %v3756
        %v3758 = vpop.f32.mrf.mxu0
        %3759 = vdwg.mxu0
        %3760 = vmatpush.bf16.msra.mxu0 %v3693
        %3761 = vmatpush.bf16.msra.mxu0 %v3692
        %3762 = vmatpush.bf16.msra.mxu0 %v3691
        %3763 = vmatpush.bf16.msra.mxu0 %v3690
        %3764 = vmatpush.bf16.msra.mxu0 %v3689
        %3765 = vmatpush.bf16.msra.mxu0 %v3688
        %3766 = vmatpush.bf16.msra.mxu0 %v3687
        %3767 = vmatpush.bf16.msra.mxu0 %v3686
        %3768 = vmatmul.bf16.gmra.mxu0 %v3536
        %v3769 = vpop.f32.mrf.mxu0
        %v3770 = vadd.f32 %v3757, %v3769
        %v3771 = vpop.f32.mrf.mxu0
        %3772 = vdwg.mxu0
        %3773 = vmatpush.bf16.msra.mxu0 %v3701
        %3774 = vmatpush.bf16.msra.mxu0 %v3700
        %3775 = vmatpush.bf16.msra.mxu0 %v3699
        %3776 = vmatpush.bf16.msra.mxu0 %v3698
        %3777 = vmatpush.bf16.msra.mxu0 %v3697
        %3778 = vmatpush.bf16.msra.mxu0 %v3696
        %3779 = vmatpush.bf16.msra.mxu0 %v3695
        %3780 = vmatpush.bf16.msra.mxu0 %v3694
        %3781 = vmatmul.bf16.gmra.mxu0 %v3537
        %v3782 = vpop.f32.mrf.mxu0
        %v3783 = vadd.f32 %v3770, %v3782
        %v3784 = vpop.f32.mrf.mxu0
        %3785 = vdwg.mxu0
        %v3786 = vadd.f32 %v3468, %v3783
        %s3787 = scalar_lea.vmem %s3, 1536
        %v3788 = vld [vmem:[%s3787] sm:$0xf]
        %v3789 = vld [vmem:[%s3787 + $0x4] sm:$0xf]
        %v3790 = vld [vmem:[%s3787 + $0x8] sm:$0xf]
        %v3791 = vld [vmem:[%s3787 + $0xc] sm:$0xf]
        %v3792 = vld [vmem:[%s3787 + $0x10] sm:$0xf]
        %v3793 = vld [vmem:[%s3787 + $0x14] sm:$0xf]
        %v3794 = vld [vmem:[%s3787 + $0x18] sm:$0xf]
        %v3795 = vld [vmem:[%s3787 + $0x1c] sm:$0xf]
        %v3796 = vld [vmem:[%s3787 + $0x20] sm:$0xf]
        %v3797 = vld [vmem:[%s3787 + $0x24] sm:$0xf]
        %v3798 = vld [vmem:[%s3787 + $0x28] sm:$0xf]
        %v3799 = vld [vmem:[%s3787 + $0x2c] sm:$0xf]
        %v3800 = vld [vmem:[%s3787 + $0x30] sm:$0xf]
        %v3801 = vld [vmem:[%s3787 + $0x34] sm:$0xf]
        %v3802 = vld [vmem:[%s3787 + $0x38] sm:$0xf]
        %v3803 = vld [vmem:[%s3787 + $0x3c] sm:$0xf]
        %v3804 = vld [vmem:[%s3787 + $0x40] sm:$0xf]
        %v3805 = vld [vmem:[%s3787 + $0x44] sm:$0xf]
        %v3806 = vld [vmem:[%s3787 + $0x48] sm:$0xf]
        %v3807 = vld [vmem:[%s3787 + $0x4c] sm:$0xf]
        %v3808 = vld [vmem:[%s3787 + $0x50] sm:$0xf]
        %v3809 = vld [vmem:[%s3787 + $0x54] sm:$0xf]
        %v3810 = vld [vmem:[%s3787 + $0x58] sm:$0xf]
        %v3811 = vld [vmem:[%s3787 + $0x5c] sm:$0xf]
        %v3812 = vld [vmem:[%s3787 + $0x60] sm:$0xf]
        %v3813 = vld [vmem:[%s3787 + $0x64] sm:$0xf]
        %v3814 = vld [vmem:[%s3787 + $0x68] sm:$0xf]
        %v3815 = vld [vmem:[%s3787 + $0x6c] sm:$0xf]
        %v3816 = vld [vmem:[%s3787 + $0x70] sm:$0xf]
        %v3817 = vld [vmem:[%s3787 + $0x74] sm:$0xf]
        %v3818 = vld [vmem:[%s3787 + $0x78] sm:$0xf]
        %v3819 = vld [vmem:[%s3787 + $0x7c] sm:$0xf]
        %v3820 = vld [vmem:[%s3787 + $0x80] sm:$0xf]
        %v3821 = vld [vmem:[%s3787 + $0x84] sm:$0xf]
        %v3822 = vld [vmem:[%s3787 + $0x88] sm:$0xf]
        %v3823 = vld [vmem:[%s3787 + $0x8c] sm:$0xf]
        %v3824 = vld [vmem:[%s3787 + $0x90] sm:$0xf]
        %v3825 = vld [vmem:[%s3787 + $0x94] sm:$0xf]
        %v3826 = vld [vmem:[%s3787 + $0x98] sm:$0xf]
        %v3827 = vld [vmem:[%s3787 + $0x9c] sm:$0xf]
        %v3828 = vld [vmem:[%s3787 + $0xa0] sm:$0xf]
        %v3829 = vld [vmem:[%s3787 + $0xa4] sm:$0xf]
        %v3830 = vld [vmem:[%s3787 + $0xa8] sm:$0xf]
        %v3831 = vld [vmem:[%s3787 + $0xac] sm:$0xf]
        %v3832 = vld [vmem:[%s3787 + $0xb0] sm:$0xf]
        %v3833 = vld [vmem:[%s3787 + $0xb4] sm:$0xf]
        %v3834 = vld [vmem:[%s3787 + $0xb8] sm:$0xf]
        %v3835 = vld [vmem:[%s3787 + $0xbc] sm:$0xf]
        %v3836 = vld [vmem:[%s3787 + $0xc0] sm:$0xf]
        %v3837 = vld [vmem:[%s3787 + $0xc4] sm:$0xf]
        %v3838 = vld [vmem:[%s3787 + $0xc8] sm:$0xf]
        %v3839 = vld [vmem:[%s3787 + $0xcc] sm:$0xf]
        %v3840 = vld [vmem:[%s3787 + $0xd0] sm:$0xf]
        %v3841 = vld [vmem:[%s3787 + $0xd4] sm:$0xf]
        %v3842 = vld [vmem:[%s3787 + $0xd8] sm:$0xf]
        %v3843 = vld [vmem:[%s3787 + $0xdc] sm:$0xf]
        %v3844 = vld [vmem:[%s3787 + $0xe0] sm:$0xf]
        %v3845 = vld [vmem:[%s3787 + $0xe4] sm:$0xf]
        %v3846 = vld [vmem:[%s3787 + $0xe8] sm:$0xf]
        %v3847 = vld [vmem:[%s3787 + $0xec] sm:$0xf]
        %v3848 = vld [vmem:[%s3787 + $0xf0] sm:$0xf]
        %v3849 = vld [vmem:[%s3787 + $0xf4] sm:$0xf]
        %v3850 = vld [vmem:[%s3787 + $0xf8] sm:$0xf]
        %v3851 = vld [vmem:[%s3787 + $0xfc] sm:$0xf]
        %v3852 = vrot.slane %v1936, 3
        %v3853 = vrot.slane %v1937, 3
        %v3854 = vrot.slane %v1938, 3
        %v3855 = vrot.slane %v1939, 3
        %v3924 = vunpack.c.l.b16 %v3788
        %v3925 = vunpack.c.l.b16 %v3789
        %v3926 = vunpack.c.l.b16 %v3790
        %v3927 = vunpack.c.l.b16 %v3791
        %v3928 = vunpack.c.l.b16 %v3792
        %v3929 = vunpack.c.l.b16 %v3793
        %v3930 = vunpack.c.l.b16 %v3794
        %v3931 = vunpack.c.l.b16 %v3795
        %v3932 = vunpack.c.l.b16 %v3796
        %v3933 = vunpack.c.l.b16 %v3797
        %v3934 = vunpack.c.l.b16 %v3798
        %v3935 = vunpack.c.l.b16 %v3799
        %v3936 = vunpack.c.l.b16 %v3800
        %v3937 = vunpack.c.l.b16 %v3801
        %v3938 = vunpack.c.l.b16 %v3802
        %v3939 = vunpack.c.l.b16 %v3803
        %v3940 = vunpack.c.l.b16 %v3804
        %v3941 = vunpack.c.l.b16 %v3805
        %v3942 = vunpack.c.l.b16 %v3806
        %v3943 = vunpack.c.l.b16 %v3807
        %v3944 = vunpack.c.l.b16 %v3808
        %v3945 = vunpack.c.l.b16 %v3809
        %v3946 = vunpack.c.l.b16 %v3810
        %v3947 = vunpack.c.l.b16 %v3811
        %v3948 = vunpack.c.l.b16 %v3812
        %v3949 = vunpack.c.l.b16 %v3813
        %v3950 = vunpack.c.l.b16 %v3814
        %v3951 = vunpack.c.l.b16 %v3815
        %v3952 = vunpack.c.l.b16 %v3816
        %v3953 = vunpack.c.l.b16 %v3817
        %v3954 = vunpack.c.l.b16 %v3818
        %v3955 = vunpack.c.l.b16 %v3819
        %v3956 = vunpack.c.l.b16 %v3820
        %v3957 = vunpack.c.l.b16 %v3821
        %v3958 = vunpack.c.l.b16 %v3822
        %v3959 = vunpack.c.l.b16 %v3823
        %v3960 = vunpack.c.l.b16 %v3824
        %v3961 = vunpack.c.l.b16 %v3825
        %v3962 = vunpack.c.l.b16 %v3826
        %v3963 = vunpack.c.l.b16 %v3827
        %v3964 = vunpack.c.l.b16 %v3828
        %v3965 = vunpack.c.l.b16 %v3829
        %v3966 = vunpack.c.l.b16 %v3830
        %v3967 = vunpack.c.l.b16 %v3831
        %v3968 = vunpack.c.l.b16 %v3832
        %v3969 = vunpack.c.l.b16 %v3833
        %v3970 = vunpack.c.l.b16 %v3834
        %v3971 = vunpack.c.l.b16 %v3835
        %v3972 = vunpack.c.l.b16 %v3836
        %v3973 = vunpack.c.l.b16 %v3837
        %v3974 = vunpack.c.l.b16 %v3838
        %v3975 = vunpack.c.l.b16 %v3839
        %v3976 = vunpack.c.l.b16 %v3840
        %v3977 = vunpack.c.l.b16 %v3841
        %v3978 = vunpack.c.l.b16 %v3842
        %v3979 = vunpack.c.l.b16 %v3843
        %v3980 = vunpack.c.l.b16 %v3844
        %v3981 = vunpack.c.l.b16 %v3845
        %v3982 = vunpack.c.l.b16 %v3846
        %v3983 = vunpack.c.l.b16 %v3847
        %v3984 = vunpack.c.l.b16 %v3848
        %v3985 = vunpack.c.l.b16 %v3849
        %v3986 = vunpack.c.l.b16 %v3850
        %v3987 = vunpack.c.l.b16 %v3851
        %v3988 = vpack.c.b16 %v3925, %v3924
        %v3989 = vpack.c.b16 %v3927, %v3926
        %v3990 = vpack.c.b16 %v3929, %v3928
        %v3991 = vpack.c.b16 %v3931, %v3930
        %v3992 = vpack.c.b16 %v3933, %v3932
        %v3993 = vpack.c.b16 %v3935, %v3934
        %v3994 = vpack.c.b16 %v3937, %v3936
        %v3995 = vpack.c.b16 %v3939, %v3938
        %v3996 = vpack.c.b16 %v3941, %v3940
        %v3997 = vpack.c.b16 %v3943, %v3942
        %v3998 = vpack.c.b16 %v3945, %v3944
        %v3999 = vpack.c.b16 %v3947, %v3946
        %v4000 = vpack.c.b16 %v3949, %v3948
        %v4001 = vpack.c.b16 %v3951, %v3950
        %v4002 = vpack.c.b16 %v3953, %v3952
        %v4003 = vpack.c.b16 %v3955, %v3954
        %v4004 = vpack.c.b16 %v3957, %v3956
        %v4005 = vpack.c.b16 %v3959, %v3958
        %v4006 = vpack.c.b16 %v3961, %v3960
        %v4007 = vpack.c.b16 %v3963, %v3962
        %v4008 = vpack.c.b16 %v3965, %v3964
        %v4009 = vpack.c.b16 %v3967, %v3966
        %v4010 = vpack.c.b16 %v3969, %v3968
        %v4011 = vpack.c.b16 %v3971, %v3970
        %v4012 = vpack.c.b16 %v3973, %v3972
        %v4013 = vpack.c.b16 %v3975, %v3974
        %v4014 = vpack.c.b16 %v3977, %v3976
        %v4015 = vpack.c.b16 %v3979, %v3978
        %v4016 = vpack.c.b16 %v3981, %v3980
        %v4017 = vpack.c.b16 %v3983, %v3982
        %v4018 = vpack.c.b16 %v3985, %v3984
        %v4019 = vpack.c.b16 %v3987, %v3986
        %4052 = vmatpush.bf16.msra.mxu0 %v3995
        %4053 = vmatpush.bf16.msra.mxu0 %v3994
        %4054 = vmatpush.bf16.msra.mxu0 %v3993
        %4055 = vmatpush.bf16.msra.mxu0 %v3992
        %4056 = vmatpush.bf16.msra.mxu0 %v3991
        %4057 = vmatpush.bf16.msra.mxu0 %v3990
        %4058 = vmatpush.bf16.msra.mxu0 %v3989
        %4059 = vmatpush.bf16.msra.mxu0 %v3988
        %4060 = vmatmul.bf16.gmra.mxu0 %v3852
        %v4061 = vpop.f32.mrf.mxu0
        %v4062 = vadd.f32 0.0, %v4061
        %v4063 = vpop.f32.mrf.mxu0
        %4064 = vdwg.mxu0
        %4065 = vmatpush.bf16.msra.mxu0 %v4003
        %4066 = vmatpush.bf16.msra.mxu0 %v4002
        %4067 = vmatpush.bf16.msra.mxu0 %v4001
        %4068 = vmatpush.bf16.msra.mxu0 %v4000
        %4069 = vmatpush.bf16.msra.mxu0 %v3999
        %4070 = vmatpush.bf16.msra.mxu0 %v3998
        %4071 = vmatpush.bf16.msra.mxu0 %v3997
        %4072 = vmatpush.bf16.msra.mxu0 %v3996
        %4073 = vmatmul.bf16.gmra.mxu0 %v3853
        %v4074 = vpop.f32.mrf.mxu0
        %v4075 = vadd.f32 %v4062, %v4074
        %v4076 = vpop.f32.mrf.mxu0
        %4077 = vdwg.mxu0
        %4078 = vmatpush.bf16.msra.mxu0 %v4011
        %4079 = vmatpush.bf16.msra.mxu0 %v4010
        %4080 = vmatpush.bf16.msra.mxu0 %v4009
        %4081 = vmatpush.bf16.msra.mxu0 %v4008
        %4082 = vmatpush.bf16.msra.mxu0 %v4007
        %4083 = vmatpush.bf16.msra.mxu0 %v4006
        %4084 = vmatpush.bf16.msra.mxu0 %v4005
        %4085 = vmatpush.bf16.msra.mxu0 %v4004
        %4086 = vmatmul.bf16.gmra.mxu0 %v3854
        %v4087 = vpop.f32.mrf.mxu0
        %v4088 = vadd.f32 %v4075, %v4087
        %v4089 = vpop.f32.mrf.mxu0
        %4090 = vdwg.mxu0
        %4091 = vmatpush.bf16.msra.mxu0 %v4019
        %4092 = vmatpush.bf16.msra.mxu0 %v4018
        %4093 = vmatpush.bf16.msra.mxu0 %v4017
        %4094 = vmatpush.bf16.msra.mxu0 %v4016
        %4095 = vmatpush.bf16.msra.mxu0 %v4015
        %4096 = vmatpush.bf16.msra.mxu0 %v4014
        %4097 = vmatpush.bf16.msra.mxu0 %v4013
        %4098 = vmatpush.bf16.msra.mxu0 %v4012
        %4099 = vmatmul.bf16.gmra.mxu0 %v3855
        %v4100 = vpop.f32.mrf.mxu0
        %v4101 = vadd.f32 %v4088, %v4100
        %v4102 = vpop.f32.mrf.mxu0
        %4103 = vdwg.mxu0
        %v4104 = vadd.f32 %v3786, %v4101
        %s4105 = scalar_lea.vmem %s3, 1792
        %v4106 = vld [vmem:[%s4105] sm:$0xf]
        %v4107 = vld [vmem:[%s4105 + $0x4] sm:$0xf]
        %v4108 = vld [vmem:[%s4105 + $0x8] sm:$0xf]
        %v4109 = vld [vmem:[%s4105 + $0xc] sm:$0xf]
        %v4110 = vld [vmem:[%s4105 + $0x10] sm:$0xf]
        %v4111 = vld [vmem:[%s4105 + $0x14] sm:$0xf]
        %v4112 = vld [vmem:[%s4105 + $0x18] sm:$0xf]
        %v4113 = vld [vmem:[%s4105 + $0x1c] sm:$0xf]
        %v4114 = vld [vmem:[%s4105 + $0x20] sm:$0xf]
        %v4115 = vld [vmem:[%s4105 + $0x24] sm:$0xf]
        %v4116 = vld [vmem:[%s4105 + $0x28] sm:$0xf]
        %v4117 = vld [vmem:[%s4105 + $0x2c] sm:$0xf]
        %v4118 = vld [vmem:[%s4105 + $0x30] sm:$0xf]
        %v4119 = vld [vmem:[%s4105 + $0x34] sm:$0xf]
        %v4120 = vld [vmem:[%s4105 + $0x38] sm:$0xf]
        %v4121 = vld [vmem:[%s4105 + $0x3c] sm:$0xf]
        %v4122 = vld [vmem:[%s4105 + $0x40] sm:$0xf]
        %v4123 = vld [vmem:[%s4105 + $0x44] sm:$0xf]
        %v4124 = vld [vmem:[%s4105 + $0x48] sm:$0xf]
        %v4125 = vld [vmem:[%s4105 + $0x4c] sm:$0xf]
        %v4126 = vld [vmem:[%s4105 + $0x50] sm:$0xf]
        %v4127 = vld [vmem:[%s4105 + $0x54] sm:$0xf]
        %v4128 = vld [vmem:[%s4105 + $0x58] sm:$0xf]
        %v4129 = vld [vmem:[%s4105 + $0x5c] sm:$0xf]
        %v4130 = vld [vmem:[%s4105 + $0x60] sm:$0xf]
        %v4131 = vld [vmem:[%s4105 + $0x64] sm:$0xf]
        %v4132 = vld [vmem:[%s4105 + $0x68] sm:$0xf]
        %v4133 = vld [vmem:[%s4105 + $0x6c] sm:$0xf]
        %v4134 = vld [vmem:[%s4105 + $0x70] sm:$0xf]
        %v4135 = vld [vmem:[%s4105 + $0x74] sm:$0xf]
        %v4136 = vld [vmem:[%s4105 + $0x78] sm:$0xf]
        %v4137 = vld [vmem:[%s4105 + $0x7c] sm:$0xf]
        %v4138 = vld [vmem:[%s4105 + $0x80] sm:$0xf]
        %v4139 = vld [vmem:[%s4105 + $0x84] sm:$0xf]
        %v4140 = vld [vmem:[%s4105 + $0x88] sm:$0xf]
        %v4141 = vld [vmem:[%s4105 + $0x8c] sm:$0xf]
        %v4142 = vld [vmem:[%s4105 + $0x90] sm:$0xf]
        %v4143 = vld [vmem:[%s4105 + $0x94] sm:$0xf]
        %v4144 = vld [vmem:[%s4105 + $0x98] sm:$0xf]
        %v4145 = vld [vmem:[%s4105 + $0x9c] sm:$0xf]
        %v4146 = vld [vmem:[%s4105 + $0xa0] sm:$0xf]
        %v4147 = vld [vmem:[%s4105 + $0xa4] sm:$0xf]
        %v4148 = vld [vmem:[%s4105 + $0xa8] sm:$0xf]
        %v4149 = vld [vmem:[%s4105 + $0xac] sm:$0xf]
        %v4150 = vld [vmem:[%s4105 + $0xb0] sm:$0xf]
        %v4151 = vld [vmem:[%s4105 + $0xb4] sm:$0xf]
        %v4152 = vld [vmem:[%s4105 + $0xb8] sm:$0xf]
        %v4153 = vld [vmem:[%s4105 + $0xbc] sm:$0xf]
        %v4154 = vld [vmem:[%s4105 + $0xc0] sm:$0xf]
        %v4155 = vld [vmem:[%s4105 + $0xc4] sm:$0xf]
        %v4156 = vld [vmem:[%s4105 + $0xc8] sm:$0xf]
        %v4157 = vld [vmem:[%s4105 + $0xcc] sm:$0xf]
        %v4158 = vld [vmem:[%s4105 + $0xd0] sm:$0xf]
        %v4159 = vld [vmem:[%s4105 + $0xd4] sm:$0xf]
        %v4160 = vld [vmem:[%s4105 + $0xd8] sm:$0xf]
        %v4161 = vld [vmem:[%s4105 + $0xdc] sm:$0xf]
        %v4162 = vld [vmem:[%s4105 + $0xe0] sm:$0xf]
        %v4163 = vld [vmem:[%s4105 + $0xe4] sm:$0xf]
        %v4164 = vld [vmem:[%s4105 + $0xe8] sm:$0xf]
        %v4165 = vld [vmem:[%s4105 + $0xec] sm:$0xf]
        %v4166 = vld [vmem:[%s4105 + $0xf0] sm:$0xf]
        %v4167 = vld [vmem:[%s4105 + $0xf4] sm:$0xf]
        %v4168 = vld [vmem:[%s4105 + $0xf8] sm:$0xf]
        %v4169 = vld [vmem:[%s4105 + $0xfc] sm:$0xf]
        %v4170 = vrot.slane %v2255, 3
        %v4171 = vrot.slane %v2258, 3
        %v4172 = vrot.slane %v2261, 3
        %v4173 = vrot.slane %v2264, 3
        %v4242 = vunpack.c.l.b16 %v4106
        %v4243 = vunpack.c.l.b16 %v4107
        %v4244 = vunpack.c.l.b16 %v4108
        %v4245 = vunpack.c.l.b16 %v4109
        %v4246 = vunpack.c.l.b16 %v4110
        %v4247 = vunpack.c.l.b16 %v4111
        %v4248 = vunpack.c.l.b16 %v4112
        %v4249 = vunpack.c.l.b16 %v4113
        %v4250 = vunpack.c.l.b16 %v4114
        %v4251 = vunpack.c.l.b16 %v4115
        %v4252 = vunpack.c.l.b16 %v4116
        %v4253 = vunpack.c.l.b16 %v4117
        %v4254 = vunpack.c.l.b16 %v4118
        %v4255 = vunpack.c.l.b16 %v4119
        %v4256 = vunpack.c.l.b16 %v4120
        %v4257 = vunpack.c.l.b16 %v4121
        %v4258 = vunpack.c.l.b16 %v4122
        %v4259 = vunpack.c.l.b16 %v4123
        %v4260 = vunpack.c.l.b16 %v4124
        %v4261 = vunpack.c.l.b16 %v4125
        %v4262 = vunpack.c.l.b16 %v4126
        %v4263 = vunpack.c.l.b16 %v4127
        %v4264 = vunpack.c.l.b16 %v4128
        %v4265 = vunpack.c.l.b16 %v4129
        %v4266 = vunpack.c.l.b16 %v4130
        %v4267 = vunpack.c.l.b16 %v4131
        %v4268 = vunpack.c.l.b16 %v4132
        %v4269 = vunpack.c.l.b16 %v4133
        %v4270 = vunpack.c.l.b16 %v4134
        %v4271 = vunpack.c.l.b16 %v4135
        %v4272 = vunpack.c.l.b16 %v4136
        %v4273 = vunpack.c.l.b16 %v4137
        %v4274 = vunpack.c.l.b16 %v4138
        %v4275 = vunpack.c.l.b16 %v4139
        %v4276 = vunpack.c.l.b16 %v4140
        %v4277 = vunpack.c.l.b16 %v4141
        %v4278 = vunpack.c.l.b16 %v4142
        %v4279 = vunpack.c.l.b16 %v4143
        %v4280 = vunpack.c.l.b16 %v4144
        %v4281 = vunpack.c.l.b16 %v4145
        %v4282 = vunpack.c.l.b16 %v4146
        %v4283 = vunpack.c.l.b16 %v4147
        %v4284 = vunpack.c.l.b16 %v4148
        %v4285 = vunpack.c.l.b16 %v4149
        %v4286 = vunpack.c.l.b16 %v4150
        %v4287 = vunpack.c.l.b16 %v4151
        %v4288 = vunpack.c.l.b16 %v4152
        %v4289 = vunpack.c.l.b16 %v4153
        %v4290 = vunpack.c.l.b16 %v4154
        %v4291 = vunpack.c.l.b16 %v4155
        %v4292 = vunpack.c.l.b16 %v4156
        %v4293 = vunpack.c.l.b16 %v4157
        %v4294 = vunpack.c.l.b16 %v4158
        %v4295 = vunpack.c.l.b16 %v4159
        %v4296 = vunpack.c.l.b16 %v4160
        %v4297 = vunpack.c.l.b16 %v4161
        %v4298 = vunpack.c.l.b16 %v4162
        %v4299 = vunpack.c.l.b16 %v4163
        %v4300 = vunpack.c.l.b16 %v4164
        %v4301 = vunpack.c.l.b16 %v4165
        %v4302 = vunpack.c.l.b16 %v4166
        %v4303 = vunpack.c.l.b16 %v4167
        %v4304 = vunpack.c.l.b16 %v4168
        %v4305 = vunpack.c.l.b16 %v4169
        %v4306 = vpack.c.b16 %v4243, %v4242
        %v4307 = vpack.c.b16 %v4245, %v4244
        %v4308 = vpack.c.b16 %v4247, %v4246
        %v4309 = vpack.c.b16 %v4249, %v4248
        %v4310 = vpack.c.b16 %v4251, %v4250
        %v4311 = vpack.c.b16 %v4253, %v4252
        %v4312 = vpack.c.b16 %v4255, %v4254
        %v4313 = vpack.c.b16 %v4257, %v4256
        %v4314 = vpack.c.b16 %v4259, %v4258
        %v4315 = vpack.c.b16 %v4261, %v4260
        %v4316 = vpack.c.b16 %v4263, %v4262
        %v4317 = vpack.c.b16 %v4265, %v4264
        %v4318 = vpack.c.b16 %v4267, %v4266
        %v4319 = vpack.c.b16 %v4269, %v4268
        %v4320 = vpack.c.b16 %v4271, %v4270
        %v4321 = vpack.c.b16 %v4273, %v4272
        %v4322 = vpack.c.b16 %v4275, %v4274
        %v4323 = vpack.c.b16 %v4277, %v4276
        %v4324 = vpack.c.b16 %v4279, %v4278
        %v4325 = vpack.c.b16 %v4281, %v4280
        %v4326 = vpack.c.b16 %v4283, %v4282
        %v4327 = vpack.c.b16 %v4285, %v4284
        %v4328 = vpack.c.b16 %v4287, %v4286
        %v4329 = vpack.c.b16 %v4289, %v4288
        %v4330 = vpack.c.b16 %v4291, %v4290
        %v4331 = vpack.c.b16 %v4293, %v4292
        %v4332 = vpack.c.b16 %v4295, %v4294
        %v4333 = vpack.c.b16 %v4297, %v4296
        %v4334 = vpack.c.b16 %v4299, %v4298
        %v4335 = vpack.c.b16 %v4301, %v4300
        %v4336 = vpack.c.b16 %v4303, %v4302
        %v4337 = vpack.c.b16 %v4305, %v4304
        %4370 = vmatpush.bf16.msra.mxu0 %v4313
        %4371 = vmatpush.bf16.msra.mxu0 %v4312
        %4372 = vmatpush.bf16.msra.mxu0 %v4311
        %4373 = vmatpush.bf16.msra.mxu0 %v4310
        %4374 = vmatpush.bf16.msra.mxu0 %v4309
        %4375 = vmatpush.bf16.msra.mxu0 %v4308
        %4376 = vmatpush.bf16.msra.mxu0 %v4307
        %4377 = vmatpush.bf16.msra.mxu0 %v4306
        %4378 = vmatmul.bf16.gmra.mxu0 %v4170
        %v4379 = vpop.f32.mrf.mxu0
        %v4380 = vadd.f32 0.0, %v4379
        %v4381 = vpop.f32.mrf.mxu0
        %4382 = vdwg.mxu0
        %4383 = vmatpush.bf16.msra.mxu0 %v4321
        %4384 = vmatpush.bf16.msra.mxu0 %v4320
        %4385 = vmatpush.bf16.msra.mxu0 %v4319
        %4386 = vmatpush.bf16.msra.mxu0 %v4318
        %4387 = vmatpush.bf16.msra.mxu0 %v4317
        %4388 = vmatpush.bf16.msra.mxu0 %v4316
        %4389 = vmatpush.bf16.msra.mxu0 %v4315
        %4390 = vmatpush.bf16.msra.mxu0 %v4314
        %4391 = vmatmul.bf16.gmra.mxu0 %v4171
        %v4392 = vpop.f32.mrf.mxu0
        %v4393 = vadd.f32 %v4380, %v4392
        %v4394 = vpop.f32.mrf.mxu0
        %4395 = vdwg.mxu0
        %4396 = vmatpush.bf16.msra.mxu0 %v4329
        %4397 = vmatpush.bf16.msra.mxu0 %v4328
        %4398 = vmatpush.bf16.msra.mxu0 %v4327
        %4399 = vmatpush.bf16.msra.mxu0 %v4326
        %4400 = vmatpush.bf16.msra.mxu0 %v4325
        %4401 = vmatpush.bf16.msra.mxu0 %v4324
        %4402 = vmatpush.bf16.msra.mxu0 %v4323
        %4403 = vmatpush.bf16.msra.mxu0 %v4322
        %4404 = vmatmul.bf16.gmra.mxu0 %v4172
        %v4405 = vpop.f32.mrf.mxu0
        %v4406 = vadd.f32 %v4393, %v4405
        %v4407 = vpop.f32.mrf.mxu0
        %4408 = vdwg.mxu0
        %4409 = vmatpush.bf16.msra.mxu0 %v4337
        %4410 = vmatpush.bf16.msra.mxu0 %v4336
        %4411 = vmatpush.bf16.msra.mxu0 %v4335
        %4412 = vmatpush.bf16.msra.mxu0 %v4334
        %4413 = vmatpush.bf16.msra.mxu0 %v4333
        %4414 = vmatpush.bf16.msra.mxu0 %v4332
        %4415 = vmatpush.bf16.msra.mxu0 %v4331
        %4416 = vmatpush.bf16.msra.mxu0 %v4330
        %4417 = vmatmul.bf16.gmra.mxu0 %v4173
        %v4418 = vpop.f32.mrf.mxu0
        %v4419 = vadd.f32 %v4406, %v4418
        %v4420 = vpop.f32.mrf.mxu0
        %4421 = vdwg.mxu0
        %v4422 = vadd.f32 %v4104, %v4419
        %s4423 = scalar_lea.vmem %s3, 2048
        %v4424 = vld [vmem:[%s4423] sm:$0xf]
        %v4425 = vld [vmem:[%s4423 + $0x4] sm:$0xf]
        %v4426 = vld [vmem:[%s4423 + $0x8] sm:$0xf]
        %v4427 = vld [vmem:[%s4423 + $0xc] sm:$0xf]
        %v4428 = vld [vmem:[%s4423 + $0x10] sm:$0xf]
        %v4429 = vld [vmem:[%s4423 + $0x14] sm:$0xf]
        %v4430 = vld [vmem:[%s4423 + $0x18] sm:$0xf]
        %v4431 = vld [vmem:[%s4423 + $0x1c] sm:$0xf]
        %v4432 = vld [vmem:[%s4423 + $0x20] sm:$0xf]
        %v4433 = vld [vmem:[%s4423 + $0x24] sm:$0xf]
        %v4434 = vld [vmem:[%s4423 + $0x28] sm:$0xf]
        %v4435 = vld [vmem:[%s4423 + $0x2c] sm:$0xf]
        %v4436 = vld [vmem:[%s4423 + $0x30] sm:$0xf]
        %v4437 = vld [vmem:[%s4423 + $0x34] sm:$0xf]
        %v4438 = vld [vmem:[%s4423 + $0x38] sm:$0xf]
        %v4439 = vld [vmem:[%s4423 + $0x3c] sm:$0xf]
        %v4440 = vld [vmem:[%s4423 + $0x40] sm:$0xf]
        %v4441 = vld [vmem:[%s4423 + $0x44] sm:$0xf]
        %v4442 = vld [vmem:[%s4423 + $0x48] sm:$0xf]
        %v4443 = vld [vmem:[%s4423 + $0x4c] sm:$0xf]
        %v4444 = vld [vmem:[%s4423 + $0x50] sm:$0xf]
        %v4445 = vld [vmem:[%s4423 + $0x54] sm:$0xf]
        %v4446 = vld [vmem:[%s4423 + $0x58] sm:$0xf]
        %v4447 = vld [vmem:[%s4423 + $0x5c] sm:$0xf]
        %v4448 = vld [vmem:[%s4423 + $0x60] sm:$0xf]
        %v4449 = vld [vmem:[%s4423 + $0x64] sm:$0xf]
        %v4450 = vld [vmem:[%s4423 + $0x68] sm:$0xf]
        %v4451 = vld [vmem:[%s4423 + $0x6c] sm:$0xf]
        %v4452 = vld [vmem:[%s4423 + $0x70] sm:$0xf]
        %v4453 = vld [vmem:[%s4423 + $0x74] sm:$0xf]
        %v4454 = vld [vmem:[%s4423 + $0x78] sm:$0xf]
        %v4455 = vld [vmem:[%s4423 + $0x7c] sm:$0xf]
        %v4456 = vld [vmem:[%s4423 + $0x80] sm:$0xf]
        %v4457 = vld [vmem:[%s4423 + $0x84] sm:$0xf]
        %v4458 = vld [vmem:[%s4423 + $0x88] sm:$0xf]
        %v4459 = vld [vmem:[%s4423 + $0x8c] sm:$0xf]
        %v4460 = vld [vmem:[%s4423 + $0x90] sm:$0xf]
        %v4461 = vld [vmem:[%s4423 + $0x94] sm:$0xf]
        %v4462 = vld [vmem:[%s4423 + $0x98] sm:$0xf]
        %v4463 = vld [vmem:[%s4423 + $0x9c] sm:$0xf]
        %v4464 = vld [vmem:[%s4423 + $0xa0] sm:$0xf]
        %v4465 = vld [vmem:[%s4423 + $0xa4] sm:$0xf]
        %v4466 = vld [vmem:[%s4423 + $0xa8] sm:$0xf]
        %v4467 = vld [vmem:[%s4423 + $0xac] sm:$0xf]
        %v4468 = vld [vmem:[%s4423 + $0xb0] sm:$0xf]
        %v4469 = vld [vmem:[%s4423 + $0xb4] sm:$0xf]
        %v4470 = vld [vmem:[%s4423 + $0xb8] sm:$0xf]
        %v4471 = vld [vmem:[%s4423 + $0xbc] sm:$0xf]
        %v4472 = vld [vmem:[%s4423 + $0xc0] sm:$0xf]
        %v4473 = vld [vmem:[%s4423 + $0xc4] sm:$0xf]
        %v4474 = vld [vmem:[%s4423 + $0xc8] sm:$0xf]
        %v4475 = vld [vmem:[%s4423 + $0xcc] sm:$0xf]
        %v4476 = vld [vmem:[%s4423 + $0xd0] sm:$0xf]
        %v4477 = vld [vmem:[%s4423 + $0xd4] sm:$0xf]
        %v4478 = vld [vmem:[%s4423 + $0xd8] sm:$0xf]
        %v4479 = vld [vmem:[%s4423 + $0xdc] sm:$0xf]
        %v4480 = vld [vmem:[%s4423 + $0xe0] sm:$0xf]
        %v4481 = vld [vmem:[%s4423 + $0xe4] sm:$0xf]
        %v4482 = vld [vmem:[%s4423 + $0xe8] sm:$0xf]
        %v4483 = vld [vmem:[%s4423 + $0xec] sm:$0xf]
        %v4484 = vld [vmem:[%s4423 + $0xf0] sm:$0xf]
        %v4485 = vld [vmem:[%s4423 + $0xf4] sm:$0xf]
        %v4486 = vld [vmem:[%s4423 + $0xf8] sm:$0xf]
        %v4487 = vld [vmem:[%s4423 + $0xfc] sm:$0xf]
        %v4490 = vunpack.c.l.b16 %v1863
        %v4491 = vunpack.c.h.b16 %v1863
        %v4492 = vunpack.c.l.b16 %v1864
        %v4493 = vunpack.c.h.b16 %v1864
        %v4494 = vpack.c.b16 %v4490, %v4490
        %v4495 = vpack.c.b16 %v4491, %v4491
        %v4496 = vpack.c.b16 %v4492, %v4492
        %v4497 = vpack.c.b16 %v4493, %v4493
        %v4566 = vunpack.c.l.b16 %v4424
        %v4567 = vunpack.c.l.b16 %v4425
        %v4568 = vunpack.c.l.b16 %v4426
        %v4569 = vunpack.c.l.b16 %v4427
        %v4570 = vunpack.c.l.b16 %v4428
        %v4571 = vunpack.c.l.b16 %v4429
        %v4572 = vunpack.c.l.b16 %v4430
        %v4573 = vunpack.c.l.b16 %v4431
        %v4574 = vunpack.c.l.b16 %v4432
        %v4575 = vunpack.c.l.b16 %v4433
        %v4576 = vunpack.c.l.b16 %v4434
        %v4577 = vunpack.c.l.b16 %v4435
        %v4578 = vunpack.c.l.b16 %v4436
        %v4579 = vunpack.c.l.b16 %v4437
        %v4580 = vunpack.c.l.b16 %v4438
        %v4581 = vunpack.c.l.b16 %v4439
        %v4582 = vunpack.c.l.b16 %v4440
        %v4583 = vunpack.c.l.b16 %v4441
        %v4584 = vunpack.c.l.b16 %v4442
        %v4585 = vunpack.c.l.b16 %v4443
        %v4586 = vunpack.c.l.b16 %v4444
        %v4587 = vunpack.c.l.b16 %v4445
        %v4588 = vunpack.c.l.b16 %v4446
        %v4589 = vunpack.c.l.b16 %v4447
        %v4590 = vunpack.c.l.b16 %v4448
        %v4591 = vunpack.c.l.b16 %v4449
        %v4592 = vunpack.c.l.b16 %v4450
        %v4593 = vunpack.c.l.b16 %v4451
        %v4594 = vunpack.c.l.b16 %v4452
        %v4595 = vunpack.c.l.b16 %v4453
        %v4596 = vunpack.c.l.b16 %v4454
        %v4597 = vunpack.c.l.b16 %v4455
        %v4598 = vunpack.c.l.b16 %v4456
        %v4599 = vunpack.c.l.b16 %v4457
        %v4600 = vunpack.c.l.b16 %v4458
        %v4601 = vunpack.c.l.b16 %v4459
        %v4602 = vunpack.c.l.b16 %v4460
        %v4603 = vunpack.c.l.b16 %v4461
        %v4604 = vunpack.c.l.b16 %v4462
        %v4605 = vunpack.c.l.b16 %v4463
        %v4606 = vunpack.c.l.b16 %v4464
        %v4607 = vunpack.c.l.b16 %v4465
        %v4608 = vunpack.c.l.b16 %v4466
        %v4609 = vunpack.c.l.b16 %v4467
        %v4610 = vunpack.c.l.b16 %v4468
        %v4611 = vunpack.c.l.b16 %v4469
        %v4612 = vunpack.c.l.b16 %v4470
        %v4613 = vunpack.c.l.b16 %v4471
        %v4614 = vunpack.c.l.b16 %v4472
        %v4615 = vunpack.c.l.b16 %v4473
        %v4616 = vunpack.c.l.b16 %v4474
        %v4617 = vunpack.c.l.b16 %v4475
        %v4618 = vunpack.c.l.b16 %v4476
        %v4619 = vunpack.c.l.b16 %v4477
        %v4620 = vunpack.c.l.b16 %v4478
        %v4621 = vunpack.c.l.b16 %v4479
        %v4622 = vunpack.c.l.b16 %v4480
        %v4623 = vunpack.c.l.b16 %v4481
        %v4624 = vunpack.c.l.b16 %v4482
        %v4625 = vunpack.c.l.b16 %v4483
        %v4626 = vunpack.c.l.b16 %v4484
        %v4627 = vunpack.c.l.b16 %v4485
        %v4628 = vunpack.c.l.b16 %v4486
        %v4629 = vunpack.c.l.b16 %v4487
        %v4630 = vpack.c.b16 %v4567, %v4566
        %v4631 = vpack.c.b16 %v4569, %v4568
        %v4632 = vpack.c.b16 %v4571, %v4570
        %v4633 = vpack.c.b16 %v4573, %v4572
        %v4634 = vpack.c.b16 %v4575, %v4574
        %v4635 = vpack.c.b16 %v4577, %v4576
        %v4636 = vpack.c.b16 %v4579, %v4578
        %v4637 = vpack.c.b16 %v4581, %v4580
        %v4638 = vpack.c.b16 %v4583, %v4582
        %v4639 = vpack.c.b16 %v4585, %v4584
        %v4640 = vpack.c.b16 %v4587, %v4586
        %v4641 = vpack.c.b16 %v4589, %v4588
        %v4642 = vpack.c.b16 %v4591, %v4590
        %v4643 = vpack.c.b16 %v4593, %v4592
        %v4644 = vpack.c.b16 %v4595, %v4594
        %v4645 = vpack.c.b16 %v4597, %v4596
        %v4646 = vpack.c.b16 %v4599, %v4598
        %v4647 = vpack.c.b16 %v4601, %v4600
        %v4648 = vpack.c.b16 %v4603, %v4602
        %v4649 = vpack.c.b16 %v4605, %v4604
        %v4650 = vpack.c.b16 %v4607, %v4606
        %v4651 = vpack.c.b16 %v4609, %v4608
        %v4652 = vpack.c.b16 %v4611, %v4610
        %v4653 = vpack.c.b16 %v4613, %v4612
        %v4654 = vpack.c.b16 %v4615, %v4614
        %v4655 = vpack.c.b16 %v4617, %v4616
        %v4656 = vpack.c.b16 %v4619, %v4618
        %v4657 = vpack.c.b16 %v4621, %v4620
        %v4658 = vpack.c.b16 %v4623, %v4622
        %v4659 = vpack.c.b16 %v4625, %v4624
        %v4660 = vpack.c.b16 %v4627, %v4626
        %v4661 = vpack.c.b16 %v4629, %v4628
        %4694 = vmatpush.bf16.msra.mxu0 %v4637
        %4695 = vmatpush.bf16.msra.mxu0 %v4636
        %4696 = vmatpush.bf16.msra.mxu0 %v4635
        %4697 = vmatpush.bf16.msra.mxu0 %v4634
        %4698 = vmatpush.bf16.msra.mxu0 %v4633
        %4699 = vmatpush.bf16.msra.mxu0 %v4632
        %4700 = vmatpush.bf16.msra.mxu0 %v4631
        %4701 = vmatpush.bf16.msra.mxu0 %v4630
        %4702 = vmatmul.bf16.gmra.mxu0 %v4494
        %v4703 = vpop.f32.mrf.mxu0
        %v4704 = vadd.f32 0.0, %v4703
        %v4705 = vpop.f32.mrf.mxu0
        %4706 = vdwg.mxu0
        %4707 = vmatpush.bf16.msra.mxu0 %v4645
        %4708 = vmatpush.bf16.msra.mxu0 %v4644
        %4709 = vmatpush.bf16.msra.mxu0 %v4643
        %4710 = vmatpush.bf16.msra.mxu0 %v4642
        %4711 = vmatpush.bf16.msra.mxu0 %v4641
        %4712 = vmatpush.bf16.msra.mxu0 %v4640
        %4713 = vmatpush.bf16.msra.mxu0 %v4639
        %4714 = vmatpush.bf16.msra.mxu0 %v4638
        %4715 = vmatmul.bf16.gmra.mxu0 %v4495
        %v4716 = vpop.f32.mrf.mxu0
        %v4717 = vadd.f32 %v4704, %v4716
        %v4718 = vpop.f32.mrf.mxu0
        %4719 = vdwg.mxu0
        %4720 = vmatpush.bf16.msra.mxu0 %v4653
        %4721 = vmatpush.bf16.msra.mxu0 %v4652
        %4722 = vmatpush.bf16.msra.mxu0 %v4651
        %4723 = vmatpush.bf16.msra.mxu0 %v4650
        %4724 = vmatpush.bf16.msra.mxu0 %v4649
        %4725 = vmatpush.bf16.msra.mxu0 %v4648
        %4726 = vmatpush.bf16.msra.mxu0 %v4647
        %4727 = vmatpush.bf16.msra.mxu0 %v4646
        %4728 = vmatmul.bf16.gmra.mxu0 %v4496
        %v4729 = vpop.f32.mrf.mxu0
        %v4730 = vadd.f32 %v4717, %v4729
        %v4731 = vpop.f32.mrf.mxu0
        %4732 = vdwg.mxu0
        %4733 = vmatpush.bf16.msra.mxu0 %v4661
        %4734 = vmatpush.bf16.msra.mxu0 %v4660
        %4735 = vmatpush.bf16.msra.mxu0 %v4659
        %4736 = vmatpush.bf16.msra.mxu0 %v4658
        %4737 = vmatpush.bf16.msra.mxu0 %v4657
        %4738 = vmatpush.bf16.msra.mxu0 %v4656
        %4739 = vmatpush.bf16.msra.mxu0 %v4655
        %4740 = vmatpush.bf16.msra.mxu0 %v4654
        %4741 = vmatmul.bf16.gmra.mxu0 %v4497
        %v4742 = vpop.f32.mrf.mxu0
        %v4743 = vadd.f32 %v4730, %v4742
        %v4744 = vpop.f32.mrf.mxu0
        %4745 = vdwg.mxu0
        %v4746 = vadd.f32 %v4422, %v4743
        %s4747 = scalar_lea.vmem %s3, 2304
        %v4748 = vld [vmem:[%s4747] sm:$0xf]
        %v4749 = vld [vmem:[%s4747 + $0x4] sm:$0xf]
        %v4750 = vld [vmem:[%s4747 + $0x8] sm:$0xf]
        %v4751 = vld [vmem:[%s4747 + $0xc] sm:$0xf]
        %v4752 = vld [vmem:[%s4747 + $0x10] sm:$0xf]
        %v4753 = vld [vmem:[%s4747 + $0x14] sm:$0xf]
        %v4754 = vld [vmem:[%s4747 + $0x18] sm:$0xf]
        %v4755 = vld [vmem:[%s4747 + $0x1c] sm:$0xf]
        %v4756 = vld [vmem:[%s4747 + $0x20] sm:$0xf]
        %v4757 = vld [vmem:[%s4747 + $0x24] sm:$0xf]
        %v4758 = vld [vmem:[%s4747 + $0x28] sm:$0xf]
        %v4759 = vld [vmem:[%s4747 + $0x2c] sm:$0xf]
        %v4760 = vld [vmem:[%s4747 + $0x30] sm:$0xf]
        %v4761 = vld [vmem:[%s4747 + $0x34] sm:$0xf]
        %v4762 = vld [vmem:[%s4747 + $0x38] sm:$0xf]
        %v4763 = vld [vmem:[%s4747 + $0x3c] sm:$0xf]
        %v4764 = vld [vmem:[%s4747 + $0x40] sm:$0xf]
        %v4765 = vld [vmem:[%s4747 + $0x44] sm:$0xf]
        %v4766 = vld [vmem:[%s4747 + $0x48] sm:$0xf]
        %v4767 = vld [vmem:[%s4747 + $0x4c] sm:$0xf]
        %v4768 = vld [vmem:[%s4747 + $0x50] sm:$0xf]
        %v4769 = vld [vmem:[%s4747 + $0x54] sm:$0xf]
        %v4770 = vld [vmem:[%s4747 + $0x58] sm:$0xf]
        %v4771 = vld [vmem:[%s4747 + $0x5c] sm:$0xf]
        %v4772 = vld [vmem:[%s4747 + $0x60] sm:$0xf]
        %v4773 = vld [vmem:[%s4747 + $0x64] sm:$0xf]
        %v4774 = vld [vmem:[%s4747 + $0x68] sm:$0xf]
        %v4775 = vld [vmem:[%s4747 + $0x6c] sm:$0xf]
        %v4776 = vld [vmem:[%s4747 + $0x70] sm:$0xf]
        %v4777 = vld [vmem:[%s4747 + $0x74] sm:$0xf]
        %v4778 = vld [vmem:[%s4747 + $0x78] sm:$0xf]
        %v4779 = vld [vmem:[%s4747 + $0x7c] sm:$0xf]
        %v4780 = vld [vmem:[%s4747 + $0x80] sm:$0xf]
        %v4781 = vld [vmem:[%s4747 + $0x84] sm:$0xf]
        %v4782 = vld [vmem:[%s4747 + $0x88] sm:$0xf]
        %v4783 = vld [vmem:[%s4747 + $0x8c] sm:$0xf]
        %v4784 = vld [vmem:[%s4747 + $0x90] sm:$0xf]
        %v4785 = vld [vmem:[%s4747 + $0x94] sm:$0xf]
        %v4786 = vld [vmem:[%s4747 + $0x98] sm:$0xf]
        %v4787 = vld [vmem:[%s4747 + $0x9c] sm:$0xf]
        %v4788 = vld [vmem:[%s4747 + $0xa0] sm:$0xf]
        %v4789 = vld [vmem:[%s4747 + $0xa4] sm:$0xf]
        %v4790 = vld [vmem:[%s4747 + $0xa8] sm:$0xf]
        %v4791 = vld [vmem:[%s4747 + $0xac] sm:$0xf]
        %v4792 = vld [vmem:[%s4747 + $0xb0] sm:$0xf]
        %v4793 = vld [vmem:[%s4747 + $0xb4] sm:$0xf]
        %v4794 = vld [vmem:[%s4747 + $0xb8] sm:$0xf]
        %v4795 = vld [vmem:[%s4747 + $0xbc] sm:$0xf]
        %v4796 = vld [vmem:[%s4747 + $0xc0] sm:$0xf]
        %v4797 = vld [vmem:[%s4747 + $0xc4] sm:$0xf]
        %v4798 = vld [vmem:[%s4747 + $0xc8] sm:$0xf]
        %v4799 = vld [vmem:[%s4747 + $0xcc] sm:$0xf]
        %v4800 = vld [vmem:[%s4747 + $0xd0] sm:$0xf]
        %v4801 = vld [vmem:[%s4747 + $0xd4] sm:$0xf]
        %v4802 = vld [vmem:[%s4747 + $0xd8] sm:$0xf]
        %v4803 = vld [vmem:[%s4747 + $0xdc] sm:$0xf]
        %v4804 = vld [vmem:[%s4747 + $0xe0] sm:$0xf]
        %v4805 = vld [vmem:[%s4747 + $0xe4] sm:$0xf]
        %v4806 = vld [vmem:[%s4747 + $0xe8] sm:$0xf]
        %v4807 = vld [vmem:[%s4747 + $0xec] sm:$0xf]
        %v4808 = vld [vmem:[%s4747 + $0xf0] sm:$0xf]
        %v4809 = vld [vmem:[%s4747 + $0xf4] sm:$0xf]
        %v4810 = vld [vmem:[%s4747 + $0xf8] sm:$0xf]
        %v4811 = vld [vmem:[%s4747 + $0xfc] sm:$0xf]
        %v4813 = vshrl.u32 %v4494, 16
        %v4816 = vshrl.u32 %v4495, 16
        %v4819 = vshrl.u32 %v4496, 16
        %v4822 = vshrl.u32 %v4497, 16
        %v4892 = vunpack.c.l.b16 %v4748
        %v4893 = vunpack.c.l.b16 %v4749
        %v4894 = vunpack.c.l.b16 %v4750
        %v4895 = vunpack.c.l.b16 %v4751
        %v4896 = vunpack.c.l.b16 %v4752
        %v4897 = vunpack.c.l.b16 %v4753
        %v4898 = vunpack.c.l.b16 %v4754
        %v4899 = vunpack.c.l.b16 %v4755
        %v4900 = vunpack.c.l.b16 %v4756
        %v4901 = vunpack.c.l.b16 %v4757
        %v4902 = vunpack.c.l.b16 %v4758
        %v4903 = vunpack.c.l.b16 %v4759
        %v4904 = vunpack.c.l.b16 %v4760
        %v4905 = vunpack.c.l.b16 %v4761
        %v4906 = vunpack.c.l.b16 %v4762
        %v4907 = vunpack.c.l.b16 %v4763
        %v4908 = vunpack.c.l.b16 %v4764
        %v4909 = vunpack.c.l.b16 %v4765
        %v4910 = vunpack.c.l.b16 %v4766
        %v4911 = vunpack.c.l.b16 %v4767
        %v4912 = vunpack.c.l.b16 %v4768
        %v4913 = vunpack.c.l.b16 %v4769
        %v4914 = vunpack.c.l.b16 %v4770
        %v4915 = vunpack.c.l.b16 %v4771
        %v4916 = vunpack.c.l.b16 %v4772
        %v4917 = vunpack.c.l.b16 %v4773
        %v4918 = vunpack.c.l.b16 %v4774
        %v4919 = vunpack.c.l.b16 %v4775
        %v4920 = vunpack.c.l.b16 %v4776
        %v4921 = vunpack.c.l.b16 %v4777
        %v4922 = vunpack.c.l.b16 %v4778
        %v4923 = vunpack.c.l.b16 %v4779
        %v4924 = vunpack.c.l.b16 %v4780
        %v4925 = vunpack.c.l.b16 %v4781
        %v4926 = vunpack.c.l.b16 %v4782
        %v4927 = vunpack.c.l.b16 %v4783
        %v4928 = vunpack.c.l.b16 %v4784
        %v4929 = vunpack.c.l.b16 %v4785
        %v4930 = vunpack.c.l.b16 %v4786
        %v4931 = vunpack.c.l.b16 %v4787
        %v4932 = vunpack.c.l.b16 %v4788
        %v4933 = vunpack.c.l.b16 %v4789
        %v4934 = vunpack.c.l.b16 %v4790
        %v4935 = vunpack.c.l.b16 %v4791
        %v4936 = vunpack.c.l.b16 %v4792
        %v4937 = vunpack.c.l.b16 %v4793
        %v4938 = vunpack.c.l.b16 %v4794
        %v4939 = vunpack.c.l.b16 %v4795
        %v4940 = vunpack.c.l.b16 %v4796
        %v4941 = vunpack.c.l.b16 %v4797
        %v4942 = vunpack.c.l.b16 %v4798
        %v4943 = vunpack.c.l.b16 %v4799
        %v4944 = vunpack.c.l.b16 %v4800
        %v4945 = vunpack.c.l.b16 %v4801
        %v4946 = vunpack.c.l.b16 %v4802
        %v4947 = vunpack.c.l.b16 %v4803
        %v4948 = vunpack.c.l.b16 %v4804
        %v4949 = vunpack.c.l.b16 %v4805
        %v4950 = vunpack.c.l.b16 %v4806
        %v4951 = vunpack.c.l.b16 %v4807
        %v4952 = vunpack.c.l.b16 %v4808
        %v4953 = vunpack.c.l.b16 %v4809
        %v4954 = vunpack.c.l.b16 %v4810
        %v4955 = vunpack.c.l.b16 %v4811
        %v4956 = vpack.c.b16 %v4893, %v4892
        %v4957 = vpack.c.b16 %v4895, %v4894
        %v4958 = vpack.c.b16 %v4897, %v4896
        %v4959 = vpack.c.b16 %v4899, %v4898
        %v4960 = vpack.c.b16 %v4901, %v4900
        %v4961 = vpack.c.b16 %v4903, %v4902
        %v4962 = vpack.c.b16 %v4905, %v4904
        %v4963 = vpack.c.b16 %v4907, %v4906
        %v4964 = vpack.c.b16 %v4909, %v4908
        %v4965 = vpack.c.b16 %v4911, %v4910
        %v4966 = vpack.c.b16 %v4913, %v4912
        %v4967 = vpack.c.b16 %v4915, %v4914
        %v4968 = vpack.c.b16 %v4917, %v4916
        %v4969 = vpack.c.b16 %v4919, %v4918
        %v4970 = vpack.c.b16 %v4921, %v4920
        %v4971 = vpack.c.b16 %v4923, %v4922
        %v4972 = vpack.c.b16 %v4925, %v4924
        %v4973 = vpack.c.b16 %v4927, %v4926
        %v4974 = vpack.c.b16 %v4929, %v4928
        %v4975 = vpack.c.b16 %v4931, %v4930
        %v4976 = vpack.c.b16 %v4933, %v4932
        %v4977 = vpack.c.b16 %v4935, %v4934
        %v4978 = vpack.c.b16 %v4937, %v4936
        %v4979 = vpack.c.b16 %v4939, %v4938
        %v4980 = vpack.c.b16 %v4941, %v4940
        %v4981 = vpack.c.b16 %v4943, %v4942
        %v4982 = vpack.c.b16 %v4945, %v4944
        %v4983 = vpack.c.b16 %v4947, %v4946
        %v4984 = vpack.c.b16 %v4949, %v4948
        %v4985 = vpack.c.b16 %v4951, %v4950
        %v4986 = vpack.c.b16 %v4953, %v4952
        %v4987 = vpack.c.b16 %v4955, %v4954
        %5020 = vmatpush.bf16.msra.mxu0 %v4963
        %5021 = vmatpush.bf16.msra.mxu0 %v4962
        %5022 = vmatpush.bf16.msra.mxu0 %v4961
        %5023 = vmatpush.bf16.msra.mxu0 %v4960
        %5024 = vmatpush.bf16.msra.mxu0 %v4959
        %5025 = vmatpush.bf16.msra.mxu0 %v4958
        %5026 = vmatpush.bf16.msra.mxu0 %v4957
        %5027 = vmatpush.bf16.msra.mxu0 %v4956
        %5028 = vmatmul.bf16.gmra.mxu0 %v4813
        %v5029 = vpop.f32.mrf.mxu0
        %v5030 = vadd.f32 0.0, %v5029
        %v5031 = vpop.f32.mrf.mxu0
        %5032 = vdwg.mxu0
        %5033 = vmatpush.bf16.msra.mxu0 %v4971
        %5034 = vmatpush.bf16.msra.mxu0 %v4970
        %5035 = vmatpush.bf16.msra.mxu0 %v4969
        %5036 = vmatpush.bf16.msra.mxu0 %v4968
        %5037 = vmatpush.bf16.msra.mxu0 %v4967
        %5038 = vmatpush.bf16.msra.mxu0 %v4966
        %5039 = vmatpush.bf16.msra.mxu0 %v4965
        %5040 = vmatpush.bf16.msra.mxu0 %v4964
        %5041 = vmatmul.bf16.gmra.mxu0 %v4816
        %v5042 = vpop.f32.mrf.mxu0
        %v5043 = vadd.f32 %v5030, %v5042
        %v5044 = vpop.f32.mrf.mxu0
        %5045 = vdwg.mxu0
        %5046 = vmatpush.bf16.msra.mxu0 %v4979
        %5047 = vmatpush.bf16.msra.mxu0 %v4978
        %5048 = vmatpush.bf16.msra.mxu0 %v4977
        %5049 = vmatpush.bf16.msra.mxu0 %v4976
        %5050 = vmatpush.bf16.msra.mxu0 %v4975
        %5051 = vmatpush.bf16.msra.mxu0 %v4974
        %5052 = vmatpush.bf16.msra.mxu0 %v4973
        %5053 = vmatpush.bf16.msra.mxu0 %v4972
        %5054 = vmatmul.bf16.gmra.mxu0 %v4819
        %v5055 = vpop.f32.mrf.mxu0
        %v5056 = vadd.f32 %v5043, %v5055
        %v5057 = vpop.f32.mrf.mxu0
        %5058 = vdwg.mxu0
        %5059 = vmatpush.bf16.msra.mxu0 %v4987
        %5060 = vmatpush.bf16.msra.mxu0 %v4986
        %5061 = vmatpush.bf16.msra.mxu0 %v4985
        %5062 = vmatpush.bf16.msra.mxu0 %v4984
        %5063 = vmatpush.bf16.msra.mxu0 %v4983
        %5064 = vmatpush.bf16.msra.mxu0 %v4982
        %5065 = vmatpush.bf16.msra.mxu0 %v4981
        %5066 = vmatpush.bf16.msra.mxu0 %v4980
        %5067 = vmatmul.bf16.gmra.mxu0 %v4822
        %v5068 = vpop.f32.mrf.mxu0
        %v5069 = vadd.f32 %v5056, %v5068
        %v5070 = vpop.f32.mrf.mxu0
        %5071 = vdwg.mxu0
        %v5072 = vadd.f32 %v4746, %v5069
        %s5073 = scalar_lea.vmem %s3, 2560
        %v5074 = vld [vmem:[%s5073] sm:$0xf]
        %v5075 = vld [vmem:[%s5073 + $0x4] sm:$0xf]
        %v5076 = vld [vmem:[%s5073 + $0x8] sm:$0xf]
        %v5077 = vld [vmem:[%s5073 + $0xc] sm:$0xf]
        %v5078 = vld [vmem:[%s5073 + $0x10] sm:$0xf]
        %v5079 = vld [vmem:[%s5073 + $0x14] sm:$0xf]
        %v5080 = vld [vmem:[%s5073 + $0x18] sm:$0xf]
        %v5081 = vld [vmem:[%s5073 + $0x1c] sm:$0xf]
        %v5082 = vld [vmem:[%s5073 + $0x20] sm:$0xf]
        %v5083 = vld [vmem:[%s5073 + $0x24] sm:$0xf]
        %v5084 = vld [vmem:[%s5073 + $0x28] sm:$0xf]
        %v5085 = vld [vmem:[%s5073 + $0x2c] sm:$0xf]
        %v5086 = vld [vmem:[%s5073 + $0x30] sm:$0xf]
        %v5087 = vld [vmem:[%s5073 + $0x34] sm:$0xf]
        %v5088 = vld [vmem:[%s5073 + $0x38] sm:$0xf]
        %v5089 = vld [vmem:[%s5073 + $0x3c] sm:$0xf]
        %v5090 = vld [vmem:[%s5073 + $0x40] sm:$0xf]
        %v5091 = vld [vmem:[%s5073 + $0x44] sm:$0xf]
        %v5092 = vld [vmem:[%s5073 + $0x48] sm:$0xf]
        %v5093 = vld [vmem:[%s5073 + $0x4c] sm:$0xf]
        %v5094 = vld [vmem:[%s5073 + $0x50] sm:$0xf]
        %v5095 = vld [vmem:[%s5073 + $0x54] sm:$0xf]
        %v5096 = vld [vmem:[%s5073 + $0x58] sm:$0xf]
        %v5097 = vld [vmem:[%s5073 + $0x5c] sm:$0xf]
        %v5098 = vld [vmem:[%s5073 + $0x60] sm:$0xf]
        %v5099 = vld [vmem:[%s5073 + $0x64] sm:$0xf]
        %v5100 = vld [vmem:[%s5073 + $0x68] sm:$0xf]
        %v5101 = vld [vmem:[%s5073 + $0x6c] sm:$0xf]
        %v5102 = vld [vmem:[%s5073 + $0x70] sm:$0xf]
        %v5103 = vld [vmem:[%s5073 + $0x74] sm:$0xf]
        %v5104 = vld [vmem:[%s5073 + $0x78] sm:$0xf]
        %v5105 = vld [vmem:[%s5073 + $0x7c] sm:$0xf]
        %v5106 = vld [vmem:[%s5073 + $0x80] sm:$0xf]
        %v5107 = vld [vmem:[%s5073 + $0x84] sm:$0xf]
        %v5108 = vld [vmem:[%s5073 + $0x88] sm:$0xf]
        %v5109 = vld [vmem:[%s5073 + $0x8c] sm:$0xf]
        %v5110 = vld [vmem:[%s5073 + $0x90] sm:$0xf]
        %v5111 = vld [vmem:[%s5073 + $0x94] sm:$0xf]
        %v5112 = vld [vmem:[%s5073 + $0x98] sm:$0xf]
        %v5113 = vld [vmem:[%s5073 + $0x9c] sm:$0xf]
        %v5114 = vld [vmem:[%s5073 + $0xa0] sm:$0xf]
        %v5115 = vld [vmem:[%s5073 + $0xa4] sm:$0xf]
        %v5116 = vld [vmem:[%s5073 + $0xa8] sm:$0xf]
        %v5117 = vld [vmem:[%s5073 + $0xac] sm:$0xf]
        %v5118 = vld [vmem:[%s5073 + $0xb0] sm:$0xf]
        %v5119 = vld [vmem:[%s5073 + $0xb4] sm:$0xf]
        %v5120 = vld [vmem:[%s5073 + $0xb8] sm:$0xf]
        %v5121 = vld [vmem:[%s5073 + $0xbc] sm:$0xf]
        %v5122 = vld [vmem:[%s5073 + $0xc0] sm:$0xf]
        %v5123 = vld [vmem:[%s5073 + $0xc4] sm:$0xf]
        %v5124 = vld [vmem:[%s5073 + $0xc8] sm:$0xf]
        %v5125 = vld [vmem:[%s5073 + $0xcc] sm:$0xf]
        %v5126 = vld [vmem:[%s5073 + $0xd0] sm:$0xf]
        %v5127 = vld [vmem:[%s5073 + $0xd4] sm:$0xf]
        %v5128 = vld [vmem:[%s5073 + $0xd8] sm:$0xf]
        %v5129 = vld [vmem:[%s5073 + $0xdc] sm:$0xf]
        %v5130 = vld [vmem:[%s5073 + $0xe0] sm:$0xf]
        %v5131 = vld [vmem:[%s5073 + $0xe4] sm:$0xf]
        %v5132 = vld [vmem:[%s5073 + $0xe8] sm:$0xf]
        %v5133 = vld [vmem:[%s5073 + $0xec] sm:$0xf]
        %v5134 = vld [vmem:[%s5073 + $0xf0] sm:$0xf]
        %v5135 = vld [vmem:[%s5073 + $0xf4] sm:$0xf]
        %v5136 = vld [vmem:[%s5073 + $0xf8] sm:$0xf]
        %v5137 = vld [vmem:[%s5073 + $0xfc] sm:$0xf]
        %v5138 = vrot.slane %v4494, 1
        %v5139 = vrot.slane %v4495, 1
        %v5140 = vrot.slane %v4496, 1
        %v5141 = vrot.slane %v4497, 1
        %v5210 = vunpack.c.l.b16 %v5074
        %v5211 = vunpack.c.l.b16 %v5075
        %v5212 = vunpack.c.l.b16 %v5076
        %v5213 = vunpack.c.l.b16 %v5077
        %v5214 = vunpack.c.l.b16 %v5078
        %v5215 = vunpack.c.l.b16 %v5079
        %v5216 = vunpack.c.l.b16 %v5080
        %v5217 = vunpack.c.l.b16 %v5081
        %v5218 = vunpack.c.l.b16 %v5082
        %v5219 = vunpack.c.l.b16 %v5083
        %v5220 = vunpack.c.l.b16 %v5084
        %v5221 = vunpack.c.l.b16 %v5085
        %v5222 = vunpack.c.l.b16 %v5086
        %v5223 = vunpack.c.l.b16 %v5087
        %v5224 = vunpack.c.l.b16 %v5088
        %v5225 = vunpack.c.l.b16 %v5089
        %v5226 = vunpack.c.l.b16 %v5090
        %v5227 = vunpack.c.l.b16 %v5091
        %v5228 = vunpack.c.l.b16 %v5092
        %v5229 = vunpack.c.l.b16 %v5093
        %v5230 = vunpack.c.l.b16 %v5094
        %v5231 = vunpack.c.l.b16 %v5095
        %v5232 = vunpack.c.l.b16 %v5096
        %v5233 = vunpack.c.l.b16 %v5097
        %v5234 = vunpack.c.l.b16 %v5098
        %v5235 = vunpack.c.l.b16 %v5099
        %v5236 = vunpack.c.l.b16 %v5100
        %v5237 = vunpack.c.l.b16 %v5101
        %v5238 = vunpack.c.l.b16 %v5102
        %v5239 = vunpack.c.l.b16 %v5103
        %v5240 = vunpack.c.l.b16 %v5104
        %v5241 = vunpack.c.l.b16 %v5105
        %v5242 = vunpack.c.l.b16 %v5106
        %v5243 = vunpack.c.l.b16 %v5107
        %v5244 = vunpack.c.l.b16 %v5108
        %v5245 = vunpack.c.l.b16 %v5109
        %v5246 = vunpack.c.l.b16 %v5110
        %v5247 = vunpack.c.l.b16 %v5111
        %v5248 = vunpack.c.l.b16 %v5112
        %v5249 = vunpack.c.l.b16 %v5113
        %v5250 = vunpack.c.l.b16 %v5114
        %v5251 = vunpack.c.l.b16 %v5115
        %v5252 = vunpack.c.l.b16 %v5116
        %v5253 = vunpack.c.l.b16 %v5117
        %v5254 = vunpack.c.l.b16 %v5118
        %v5255 = vunpack.c.l.b16 %v5119
        %v5256 = vunpack.c.l.b16 %v5120
        %v5257 = vunpack.c.l.b16 %v5121
        %v5258 = vunpack.c.l.b16 %v5122
        %v5259 = vunpack.c.l.b16 %v5123
        %v5260 = vunpack.c.l.b16 %v5124
        %v5261 = vunpack.c.l.b16 %v5125
        %v5262 = vunpack.c.l.b16 %v5126
        %v5263 = vunpack.c.l.b16 %v5127
        %v5264 = vunpack.c.l.b16 %v5128
        %v5265 = vunpack.c.l.b16 %v5129
        %v5266 = vunpack.c.l.b16 %v5130
        %v5267 = vunpack.c.l.b16 %v5131
        %v5268 = vunpack.c.l.b16 %v5132
        %v5269 = vunpack.c.l.b16 %v5133
        %v5270 = vunpack.c.l.b16 %v5134
        %v5271 = vunpack.c.l.b16 %v5135
        %v5272 = vunpack.c.l.b16 %v5136
        %v5273 = vunpack.c.l.b16 %v5137
        %v5274 = vpack.c.b16 %v5211, %v5210
        %v5275 = vpack.c.b16 %v5213, %v5212
        %v5276 = vpack.c.b16 %v5215, %v5214
        %v5277 = vpack.c.b16 %v5217, %v5216
        %v5278 = vpack.c.b16 %v5219, %v5218
        %v5279 = vpack.c.b16 %v5221, %v5220
        %v5280 = vpack.c.b16 %v5223, %v5222
        %v5281 = vpack.c.b16 %v5225, %v5224
        %v5282 = vpack.c.b16 %v5227, %v5226
        %v5283 = vpack.c.b16 %v5229, %v5228
        %v5284 = vpack.c.b16 %v5231, %v5230
        %v5285 = vpack.c.b16 %v5233, %v5232
        %v5286 = vpack.c.b16 %v5235, %v5234
        %v5287 = vpack.c.b16 %v5237, %v5236
        %v5288 = vpack.c.b16 %v5239, %v5238
        %v5289 = vpack.c.b16 %v5241, %v5240
        %v5290 = vpack.c.b16 %v5243, %v5242
        %v5291 = vpack.c.b16 %v5245, %v5244
        %v5292 = vpack.c.b16 %v5247, %v5246
        %v5293 = vpack.c.b16 %v5249, %v5248
        %v5294 = vpack.c.b16 %v5251, %v5250
        %v5295 = vpack.c.b16 %v5253, %v5252
        %v5296 = vpack.c.b16 %v5255, %v5254
        %v5297 = vpack.c.b16 %v5257, %v5256
        %v5298 = vpack.c.b16 %v5259, %v5258
        %v5299 = vpack.c.b16 %v5261, %v5260
        %v5300 = vpack.c.b16 %v5263, %v5262
        %v5301 = vpack.c.b16 %v5265, %v5264
        %v5302 = vpack.c.b16 %v5267, %v5266
        %v5303 = vpack.c.b16 %v5269, %v5268
        %v5304 = vpack.c.b16 %v5271, %v5270
        %v5305 = vpack.c.b16 %v5273, %v5272
        %5338 = vmatpush.bf16.msra.mxu0 %v5281
        %5339 = vmatpush.bf16.msra.mxu0 %v5280
        %5340 = vmatpush.bf16.msra.mxu0 %v5279
        %5341 = vmatpush.bf16.msra.mxu0 %v5278
        %5342 = vmatpush.bf16.msra.mxu0 %v5277
        %5343 = vmatpush.bf16.msra.mxu0 %v5276
        %5344 = vmatpush.bf16.msra.mxu0 %v5275
        %5345 = vmatpush.bf16.msra.mxu0 %v5274
        %5346 = vmatmul.bf16.gmra.mxu0 %v5138
        %v5347 = vpop.f32.mrf.mxu0
        %v5348 = vadd.f32 0.0, %v5347
        %v5349 = vpop.f32.mrf.mxu0
        %5350 = vdwg.mxu0
        %5351 = vmatpush.bf16.msra.mxu0 %v5289
        %5352 = vmatpush.bf16.msra.mxu0 %v5288
        %5353 = vmatpush.bf16.msra.mxu0 %v5287
        %5354 = vmatpush.bf16.msra.mxu0 %v5286
        %5355 = vmatpush.bf16.msra.mxu0 %v5285
        %5356 = vmatpush.bf16.msra.mxu0 %v5284
        %5357 = vmatpush.bf16.msra.mxu0 %v5283
        %5358 = vmatpush.bf16.msra.mxu0 %v5282
        %5359 = vmatmul.bf16.gmra.mxu0 %v5139
        %v5360 = vpop.f32.mrf.mxu0
        %v5361 = vadd.f32 %v5348, %v5360
        %v5362 = vpop.f32.mrf.mxu0
        %5363 = vdwg.mxu0
        %5364 = vmatpush.bf16.msra.mxu0 %v5297
        %5365 = vmatpush.bf16.msra.mxu0 %v5296
        %5366 = vmatpush.bf16.msra.mxu0 %v5295
        %5367 = vmatpush.bf16.msra.mxu0 %v5294
        %5368 = vmatpush.bf16.msra.mxu0 %v5293
        %5369 = vmatpush.bf16.msra.mxu0 %v5292
        %5370 = vmatpush.bf16.msra.mxu0 %v5291
        %5371 = vmatpush.bf16.msra.mxu0 %v5290
        %5372 = vmatmul.bf16.gmra.mxu0 %v5140
        %v5373 = vpop.f32.mrf.mxu0
        %v5374 = vadd.f32 %v5361, %v5373
        %v5375 = vpop.f32.mrf.mxu0
        %5376 = vdwg.mxu0
        %5377 = vmatpush.bf16.msra.mxu0 %v5305
        %5378 = vmatpush.bf16.msra.mxu0 %v5304
        %5379 = vmatpush.bf16.msra.mxu0 %v5303
        %5380 = vmatpush.bf16.msra.mxu0 %v5302
        %5381 = vmatpush.bf16.msra.mxu0 %v5301
        %5382 = vmatpush.bf16.msra.mxu0 %v5300
        %5383 = vmatpush.bf16.msra.mxu0 %v5299
        %5384 = vmatpush.bf16.msra.mxu0 %v5298
        %5385 = vmatmul.bf16.gmra.mxu0 %v5141
        %v5386 = vpop.f32.mrf.mxu0
        %v5387 = vadd.f32 %v5374, %v5386
        %v5388 = vpop.f32.mrf.mxu0
        %5389 = vdwg.mxu0
        %v5390 = vadd.f32 %v5072, %v5387
        %s5391 = scalar_lea.vmem %s3, 2816
        %v5392 = vld [vmem:[%s5391] sm:$0xf]
        %v5393 = vld [vmem:[%s5391 + $0x4] sm:$0xf]
        %v5394 = vld [vmem:[%s5391 + $0x8] sm:$0xf]
        %v5395 = vld [vmem:[%s5391 + $0xc] sm:$0xf]
        %v5396 = vld [vmem:[%s5391 + $0x10] sm:$0xf]
        %v5397 = vld [vmem:[%s5391 + $0x14] sm:$0xf]
        %v5398 = vld [vmem:[%s5391 + $0x18] sm:$0xf]
        %v5399 = vld [vmem:[%s5391 + $0x1c] sm:$0xf]
        %v5400 = vld [vmem:[%s5391 + $0x20] sm:$0xf]
        %v5401 = vld [vmem:[%s5391 + $0x24] sm:$0xf]
        %v5402 = vld [vmem:[%s5391 + $0x28] sm:$0xf]
        %v5403 = vld [vmem:[%s5391 + $0x2c] sm:$0xf]
        %v5404 = vld [vmem:[%s5391 + $0x30] sm:$0xf]
        %v5405 = vld [vmem:[%s5391 + $0x34] sm:$0xf]
        %v5406 = vld [vmem:[%s5391 + $0x38] sm:$0xf]
        %v5407 = vld [vmem:[%s5391 + $0x3c] sm:$0xf]
        %v5408 = vld [vmem:[%s5391 + $0x40] sm:$0xf]
        %v5409 = vld [vmem:[%s5391 + $0x44] sm:$0xf]
        %v5410 = vld [vmem:[%s5391 + $0x48] sm:$0xf]
        %v5411 = vld [vmem:[%s5391 + $0x4c] sm:$0xf]
        %v5412 = vld [vmem:[%s5391 + $0x50] sm:$0xf]
        %v5413 = vld [vmem:[%s5391 + $0x54] sm:$0xf]
        %v5414 = vld [vmem:[%s5391 + $0x58] sm:$0xf]
        %v5415 = vld [vmem:[%s5391 + $0x5c] sm:$0xf]
        %v5416 = vld [vmem:[%s5391 + $0x60] sm:$0xf]
        %v5417 = vld [vmem:[%s5391 + $0x64] sm:$0xf]
        %v5418 = vld [vmem:[%s5391 + $0x68] sm:$0xf]
        %v5419 = vld [vmem:[%s5391 + $0x6c] sm:$0xf]
        %v5420 = vld [vmem:[%s5391 + $0x70] sm:$0xf]
        %v5421 = vld [vmem:[%s5391 + $0x74] sm:$0xf]
        %v5422 = vld [vmem:[%s5391 + $0x78] sm:$0xf]
        %v5423 = vld [vmem:[%s5391 + $0x7c] sm:$0xf]
        %v5424 = vld [vmem:[%s5391 + $0x80] sm:$0xf]
        %v5425 = vld [vmem:[%s5391 + $0x84] sm:$0xf]
        %v5426 = vld [vmem:[%s5391 + $0x88] sm:$0xf]
        %v5427 = vld [vmem:[%s5391 + $0x8c] sm:$0xf]
        %v5428 = vld [vmem:[%s5391 + $0x90] sm:$0xf]
        %v5429 = vld [vmem:[%s5391 + $0x94] sm:$0xf]
        %v5430 = vld [vmem:[%s5391 + $0x98] sm:$0xf]
        %v5431 = vld [vmem:[%s5391 + $0x9c] sm:$0xf]
        %v5432 = vld [vmem:[%s5391 + $0xa0] sm:$0xf]
        %v5433 = vld [vmem:[%s5391 + $0xa4] sm:$0xf]
        %v5434 = vld [vmem:[%s5391 + $0xa8] sm:$0xf]
        %v5435 = vld [vmem:[%s5391 + $0xac] sm:$0xf]
        %v5436 = vld [vmem:[%s5391 + $0xb0] sm:$0xf]
        %v5437 = vld [vmem:[%s5391 + $0xb4] sm:$0xf]
        %v5438 = vld [vmem:[%s5391 + $0xb8] sm:$0xf]
        %v5439 = vld [vmem:[%s5391 + $0xbc] sm:$0xf]
        %v5440 = vld [vmem:[%s5391 + $0xc0] sm:$0xf]
        %v5441 = vld [vmem:[%s5391 + $0xc4] sm:$0xf]
        %v5442 = vld [vmem:[%s5391 + $0xc8] sm:$0xf]
        %v5443 = vld [vmem:[%s5391 + $0xcc] sm:$0xf]
        %v5444 = vld [vmem:[%s5391 + $0xd0] sm:$0xf]
        %v5445 = vld [vmem:[%s5391 + $0xd4] sm:$0xf]
        %v5446 = vld [vmem:[%s5391 + $0xd8] sm:$0xf]
        %v5447 = vld [vmem:[%s5391 + $0xdc] sm:$0xf]
        %v5448 = vld [vmem:[%s5391 + $0xe0] sm:$0xf]
        %v5449 = vld [vmem:[%s5391 + $0xe4] sm:$0xf]
        %v5450 = vld [vmem:[%s5391 + $0xe8] sm:$0xf]
        %v5451 = vld [vmem:[%s5391 + $0xec] sm:$0xf]
        %v5452 = vld [vmem:[%s5391 + $0xf0] sm:$0xf]
        %v5453 = vld [vmem:[%s5391 + $0xf4] sm:$0xf]
        %v5454 = vld [vmem:[%s5391 + $0xf8] sm:$0xf]
        %v5455 = vld [vmem:[%s5391 + $0xfc] sm:$0xf]
        %v5456 = vrot.slane %v4813, 1
        %v5457 = vrot.slane %v4816, 1
        %v5458 = vrot.slane %v4819, 1
        %v5459 = vrot.slane %v4822, 1
        %v5528 = vunpack.c.l.b16 %v5392
        %v5529 = vunpack.c.l.b16 %v5393
        %v5530 = vunpack.c.l.b16 %v5394
        %v5531 = vunpack.c.l.b16 %v5395
        %v5532 = vunpack.c.l.b16 %v5396
        %v5533 = vunpack.c.l.b16 %v5397
        %v5534 = vunpack.c.l.b16 %v5398
        %v5535 = vunpack.c.l.b16 %v5399
        %v5536 = vunpack.c.l.b16 %v5400
        %v5537 = vunpack.c.l.b16 %v5401
        %v5538 = vunpack.c.l.b16 %v5402
        %v5539 = vunpack.c.l.b16 %v5403
        %v5540 = vunpack.c.l.b16 %v5404
        %v5541 = vunpack.c.l.b16 %v5405
        %v5542 = vunpack.c.l.b16 %v5406
        %v5543 = vunpack.c.l.b16 %v5407
        %v5544 = vunpack.c.l.b16 %v5408
        %v5545 = vunpack.c.l.b16 %v5409
        %v5546 = vunpack.c.l.b16 %v5410
        %v5547 = vunpack.c.l.b16 %v5411
        %v5548 = vunpack.c.l.b16 %v5412
        %v5549 = vunpack.c.l.b16 %v5413
        %v5550 = vunpack.c.l.b16 %v5414
        %v5551 = vunpack.c.l.b16 %v5415
        %v5552 = vunpack.c.l.b16 %v5416
        %v5553 = vunpack.c.l.b16 %v5417
        %v5554 = vunpack.c.l.b16 %v5418
        %v5555 = vunpack.c.l.b16 %v5419
        %v5556 = vunpack.c.l.b16 %v5420
        %v5557 = vunpack.c.l.b16 %v5421
        %v5558 = vunpack.c.l.b16 %v5422
        %v5559 = vunpack.c.l.b16 %v5423
        %v5560 = vunpack.c.l.b16 %v5424
        %v5561 = vunpack.c.l.b16 %v5425
        %v5562 = vunpack.c.l.b16 %v5426
        %v5563 = vunpack.c.l.b16 %v5427
        %v5564 = vunpack.c.l.b16 %v5428
        %v5565 = vunpack.c.l.b16 %v5429
        %v5566 = vunpack.c.l.b16 %v5430
        %v5567 = vunpack.c.l.b16 %v5431
        %v5568 = vunpack.c.l.b16 %v5432
        %v5569 = vunpack.c.l.b16 %v5433
        %v5570 = vunpack.c.l.b16 %v5434
        %v5571 = vunpack.c.l.b16 %v5435
        %v5572 = vunpack.c.l.b16 %v5436
        %v5573 = vunpack.c.l.b16 %v5437
        %v5574 = vunpack.c.l.b16 %v5438
        %v5575 = vunpack.c.l.b16 %v5439
        %v5576 = vunpack.c.l.b16 %v5440
        %v5577 = vunpack.c.l.b16 %v5441
        %v5578 = vunpack.c.l.b16 %v5442
        %v5579 = vunpack.c.l.b16 %v5443
        %v5580 = vunpack.c.l.b16 %v5444
        %v5581 = vunpack.c.l.b16 %v5445
        %v5582 = vunpack.c.l.b16 %v5446
        %v5583 = vunpack.c.l.b16 %v5447
        %v5584 = vunpack.c.l.b16 %v5448
        %v5585 = vunpack.c.l.b16 %v5449
        %v5586 = vunpack.c.l.b16 %v5450
        %v5587 = vunpack.c.l.b16 %v5451
        %v5588 = vunpack.c.l.b16 %v5452
        %v5589 = vunpack.c.l.b16 %v5453
        %v5590 = vunpack.c.l.b16 %v5454
        %v5591 = vunpack.c.l.b16 %v5455
        %v5592 = vpack.c.b16 %v5529, %v5528
        %v5593 = vpack.c.b16 %v5531, %v5530
        %v5594 = vpack.c.b16 %v5533, %v5532
        %v5595 = vpack.c.b16 %v5535, %v5534
        %v5596 = vpack.c.b16 %v5537, %v5536
        %v5597 = vpack.c.b16 %v5539, %v5538
        %v5598 = vpack.c.b16 %v5541, %v5540
        %v5599 = vpack.c.b16 %v5543, %v5542
        %v5600 = vpack.c.b16 %v5545, %v5544
        %v5601 = vpack.c.b16 %v5547, %v5546
        %v5602 = vpack.c.b16 %v5549, %v5548
        %v5603 = vpack.c.b16 %v5551, %v5550
        %v5604 = vpack.c.b16 %v5553, %v5552
        %v5605 = vpack.c.b16 %v5555, %v5554
        %v5606 = vpack.c.b16 %v5557, %v5556
        %v5607 = vpack.c.b16 %v5559, %v5558
        %v5608 = vpack.c.b16 %v5561, %v5560
        %v5609 = vpack.c.b16 %v5563, %v5562
        %v5610 = vpack.c.b16 %v5565, %v5564
        %v5611 = vpack.c.b16 %v5567, %v5566
        %v5612 = vpack.c.b16 %v5569, %v5568
        %v5613 = vpack.c.b16 %v5571, %v5570
        %v5614 = vpack.c.b16 %v5573, %v5572
        %v5615 = vpack.c.b16 %v5575, %v5574
        %v5616 = vpack.c.b16 %v5577, %v5576
        %v5617 = vpack.c.b16 %v5579, %v5578
        %v5618 = vpack.c.b16 %v5581, %v5580
        %v5619 = vpack.c.b16 %v5583, %v5582
        %v5620 = vpack.c.b16 %v5585, %v5584
        %v5621 = vpack.c.b16 %v5587, %v5586
        %v5622 = vpack.c.b16 %v5589, %v5588
        %v5623 = vpack.c.b16 %v5591, %v5590
        %5656 = vmatpush.bf16.msra.mxu0 %v5599
        %5657 = vmatpush.bf16.msra.mxu0 %v5598
        %5658 = vmatpush.bf16.msra.mxu0 %v5597
        %5659 = vmatpush.bf16.msra.mxu0 %v5596
        %5660 = vmatpush.bf16.msra.mxu0 %v5595
        %5661 = vmatpush.bf16.msra.mxu0 %v5594
        %5662 = vmatpush.bf16.msra.mxu0 %v5593
        %5663 = vmatpush.bf16.msra.mxu0 %v5592
        %5664 = vmatmul.bf16.gmra.mxu0 %v5456
        %v5665 = vpop.f32.mrf.mxu0
        %v5666 = vadd.f32 0.0, %v5665
        %v5667 = vpop.f32.mrf.mxu0
        %5668 = vdwg.mxu0
        %5669 = vmatpush.bf16.msra.mxu0 %v5607
        %5670 = vmatpush.bf16.msra.mxu0 %v5606
        %5671 = vmatpush.bf16.msra.mxu0 %v5605
        %5672 = vmatpush.bf16.msra.mxu0 %v5604
        %5673 = vmatpush.bf16.msra.mxu0 %v5603
        %5674 = vmatpush.bf16.msra.mxu0 %v5602
        %5675 = vmatpush.bf16.msra.mxu0 %v5601
        %5676 = vmatpush.bf16.msra.mxu0 %v5600
        %5677 = vmatmul.bf16.gmra.mxu0 %v5457
        %v5678 = vpop.f32.mrf.mxu0
        %v5679 = vadd.f32 %v5666, %v5678
        %v5680 = vpop.f32.mrf.mxu0
        %5681 = vdwg.mxu0
        %5682 = vmatpush.bf16.msra.mxu0 %v5615
        %5683 = vmatpush.bf16.msra.mxu0 %v5614
        %5684 = vmatpush.bf16.msra.mxu0 %v5613
        %5685 = vmatpush.bf16.msra.mxu0 %v5612
        %5686 = vmatpush.bf16.msra.mxu0 %v5611
        %5687 = vmatpush.bf16.msra.mxu0 %v5610
        %5688 = vmatpush.bf16.msra.mxu0 %v5609
        %5689 = vmatpush.bf16.msra.mxu0 %v5608
        %5690 = vmatmul.bf16.gmra.mxu0 %v5458
        %v5691 = vpop.f32.mrf.mxu0
        %v5692 = vadd.f32 %v5679, %v5691
        %v5693 = vpop.f32.mrf.mxu0
        %5694 = vdwg.mxu0
        %5695 = vmatpush.bf16.msra.mxu0 %v5623
        %5696 = vmatpush.bf16.msra.mxu0 %v5622
        %5697 = vmatpush.bf16.msra.mxu0 %v5621
        %5698 = vmatpush.bf16.msra.mxu0 %v5620
        %5699 = vmatpush.bf16.msra.mxu0 %v5619
        %5700 = vmatpush.bf16.msra.mxu0 %v5618
        %5701 = vmatpush.bf16.msra.mxu0 %v5617
        %5702 = vmatpush.bf16.msra.mxu0 %v5616
        %5703 = vmatmul.bf16.gmra.mxu0 %v5459
        %v5704 = vpop.f32.mrf.mxu0
        %v5705 = vadd.f32 %v5692, %v5704
        %v5706 = vpop.f32.mrf.mxu0
        %5707 = vdwg.mxu0
        %v5708 = vadd.f32 %v5390, %v5705
        %s5709 = scalar_lea.vmem %s3, 3072
        %v5710 = vld [vmem:[%s5709] sm:$0xf]
        %v5711 = vld [vmem:[%s5709 + $0x4] sm:$0xf]
        %v5712 = vld [vmem:[%s5709 + $0x8] sm:$0xf]
        %v5713 = vld [vmem:[%s5709 + $0xc] sm:$0xf]
        %v5714 = vld [vmem:[%s5709 + $0x10] sm:$0xf]
        %v5715 = vld [vmem:[%s5709 + $0x14] sm:$0xf]
        %v5716 = vld [vmem:[%s5709 + $0x18] sm:$0xf]
        %v5717 = vld [vmem:[%s5709 + $0x1c] sm:$0xf]
        %v5718 = vld [vmem:[%s5709 + $0x20] sm:$0xf]
        %v5719 = vld [vmem:[%s5709 + $0x24] sm:$0xf]
        %v5720 = vld [vmem:[%s5709 + $0x28] sm:$0xf]
        %v5721 = vld [vmem:[%s5709 + $0x2c] sm:$0xf]
        %v5722 = vld [vmem:[%s5709 + $0x30] sm:$0xf]
        %v5723 = vld [vmem:[%s5709 + $0x34] sm:$0xf]
        %v5724 = vld [vmem:[%s5709 + $0x38] sm:$0xf]
        %v5725 = vld [vmem:[%s5709 + $0x3c] sm:$0xf]
        %v5726 = vld [vmem:[%s5709 + $0x40] sm:$0xf]
        %v5727 = vld [vmem:[%s5709 + $0x44] sm:$0xf]
        %v5728 = vld [vmem:[%s5709 + $0x48] sm:$0xf]
        %v5729 = vld [vmem:[%s5709 + $0x4c] sm:$0xf]
        %v5730 = vld [vmem:[%s5709 + $0x50] sm:$0xf]
        %v5731 = vld [vmem:[%s5709 + $0x54] sm:$0xf]
        %v5732 = vld [vmem:[%s5709 + $0x58] sm:$0xf]
        %v5733 = vld [vmem:[%s5709 + $0x5c] sm:$0xf]
        %v5734 = vld [vmem:[%s5709 + $0x60] sm:$0xf]
        %v5735 = vld [vmem:[%s5709 + $0x64] sm:$0xf]
        %v5736 = vld [vmem:[%s5709 + $0x68] sm:$0xf]
        %v5737 = vld [vmem:[%s5709 + $0x6c] sm:$0xf]
        %v5738 = vld [vmem:[%s5709 + $0x70] sm:$0xf]
        %v5739 = vld [vmem:[%s5709 + $0x74] sm:$0xf]
        %v5740 = vld [vmem:[%s5709 + $0x78] sm:$0xf]
        %v5741 = vld [vmem:[%s5709 + $0x7c] sm:$0xf]
        %v5742 = vld [vmem:[%s5709 + $0x80] sm:$0xf]
        %v5743 = vld [vmem:[%s5709 + $0x84] sm:$0xf]
        %v5744 = vld [vmem:[%s5709 + $0x88] sm:$0xf]
        %v5745 = vld [vmem:[%s5709 + $0x8c] sm:$0xf]
        %v5746 = vld [vmem:[%s5709 + $0x90] sm:$0xf]
        %v5747 = vld [vmem:[%s5709 + $0x94] sm:$0xf]
        %v5748 = vld [vmem:[%s5709 + $0x98] sm:$0xf]
        %v5749 = vld [vmem:[%s5709 + $0x9c] sm:$0xf]
        %v5750 = vld [vmem:[%s5709 + $0xa0] sm:$0xf]
        %v5751 = vld [vmem:[%s5709 + $0xa4] sm:$0xf]
        %v5752 = vld [vmem:[%s5709 + $0xa8] sm:$0xf]
        %v5753 = vld [vmem:[%s5709 + $0xac] sm:$0xf]
        %v5754 = vld [vmem:[%s5709 + $0xb0] sm:$0xf]
        %v5755 = vld [vmem:[%s5709 + $0xb4] sm:$0xf]
        %v5756 = vld [vmem:[%s5709 + $0xb8] sm:$0xf]
        %v5757 = vld [vmem:[%s5709 + $0xbc] sm:$0xf]
        %v5758 = vld [vmem:[%s5709 + $0xc0] sm:$0xf]
        %v5759 = vld [vmem:[%s5709 + $0xc4] sm:$0xf]
        %v5760 = vld [vmem:[%s5709 + $0xc8] sm:$0xf]
        %v5761 = vld [vmem:[%s5709 + $0xcc] sm:$0xf]
        %v5762 = vld [vmem:[%s5709 + $0xd0] sm:$0xf]
        %v5763 = vld [vmem:[%s5709 + $0xd4] sm:$0xf]
        %v5764 = vld [vmem:[%s5709 + $0xd8] sm:$0xf]
        %v5765 = vld [vmem:[%s5709 + $0xdc] sm:$0xf]
        %v5766 = vld [vmem:[%s5709 + $0xe0] sm:$0xf]
        %v5767 = vld [vmem:[%s5709 + $0xe4] sm:$0xf]
        %v5768 = vld [vmem:[%s5709 + $0xe8] sm:$0xf]
        %v5769 = vld [vmem:[%s5709 + $0xec] sm:$0xf]
        %v5770 = vld [vmem:[%s5709 + $0xf0] sm:$0xf]
        %v5771 = vld [vmem:[%s5709 + $0xf4] sm:$0xf]
        %v5772 = vld [vmem:[%s5709 + $0xf8] sm:$0xf]
        %v5773 = vld [vmem:[%s5709 + $0xfc] sm:$0xf]
        %v5774 = vrot.slane %v4494, 2
        %v5775 = vrot.slane %v4495, 2
        %v5776 = vrot.slane %v4496, 2
        %v5777 = vrot.slane %v4497, 2
        %v5846 = vunpack.c.l.b16 %v5710
        %v5847 = vunpack.c.l.b16 %v5711
        %v5848 = vunpack.c.l.b16 %v5712
        %v5849 = vunpack.c.l.b16 %v5713
        %v5850 = vunpack.c.l.b16 %v5714
        %v5851 = vunpack.c.l.b16 %v5715
        %v5852 = vunpack.c.l.b16 %v5716
        %v5853 = vunpack.c.l.b16 %v5717
        %v5854 = vunpack.c.l.b16 %v5718
        %v5855 = vunpack.c.l.b16 %v5719
        %v5856 = vunpack.c.l.b16 %v5720
        %v5857 = vunpack.c.l.b16 %v5721
        %v5858 = vunpack.c.l.b16 %v5722
        %v5859 = vunpack.c.l.b16 %v5723
        %v5860 = vunpack.c.l.b16 %v5724
        %v5861 = vunpack.c.l.b16 %v5725
        %v5862 = vunpack.c.l.b16 %v5726
        %v5863 = vunpack.c.l.b16 %v5727
        %v5864 = vunpack.c.l.b16 %v5728
        %v5865 = vunpack.c.l.b16 %v5729
        %v5866 = vunpack.c.l.b16 %v5730
        %v5867 = vunpack.c.l.b16 %v5731
        %v5868 = vunpack.c.l.b16 %v5732
        %v5869 = vunpack.c.l.b16 %v5733
        %v5870 = vunpack.c.l.b16 %v5734
        %v5871 = vunpack.c.l.b16 %v5735
        %v5872 = vunpack.c.l.b16 %v5736
        %v5873 = vunpack.c.l.b16 %v5737
        %v5874 = vunpack.c.l.b16 %v5738
        %v5875 = vunpack.c.l.b16 %v5739
        %v5876 = vunpack.c.l.b16 %v5740
        %v5877 = vunpack.c.l.b16 %v5741
        %v5878 = vunpack.c.l.b16 %v5742
        %v5879 = vunpack.c.l.b16 %v5743
        %v5880 = vunpack.c.l.b16 %v5744
        %v5881 = vunpack.c.l.b16 %v5745
        %v5882 = vunpack.c.l.b16 %v5746
        %v5883 = vunpack.c.l.b16 %v5747
        %v5884 = vunpack.c.l.b16 %v5748
        %v5885 = vunpack.c.l.b16 %v5749
        %v5886 = vunpack.c.l.b16 %v5750
        %v5887 = vunpack.c.l.b16 %v5751
        %v5888 = vunpack.c.l.b16 %v5752
        %v5889 = vunpack.c.l.b16 %v5753
        %v5890 = vunpack.c.l.b16 %v5754
        %v5891 = vunpack.c.l.b16 %v5755
        %v5892 = vunpack.c.l.b16 %v5756
        %v5893 = vunpack.c.l.b16 %v5757
        %v5894 = vunpack.c.l.b16 %v5758
        %v5895 = vunpack.c.l.b16 %v5759
        %v5896 = vunpack.c.l.b16 %v5760
        %v5897 = vunpack.c.l.b16 %v5761
        %v5898 = vunpack.c.l.b16 %v5762
        %v5899 = vunpack.c.l.b16 %v5763
        %v5900 = vunpack.c.l.b16 %v5764
        %v5901 = vunpack.c.l.b16 %v5765
        %v5902 = vunpack.c.l.b16 %v5766
        %v5903 = vunpack.c.l.b16 %v5767
        %v5904 = vunpack.c.l.b16 %v5768
        %v5905 = vunpack.c.l.b16 %v5769
        %v5906 = vunpack.c.l.b16 %v5770
        %v5907 = vunpack.c.l.b16 %v5771
        %v5908 = vunpack.c.l.b16 %v5772
        %v5909 = vunpack.c.l.b16 %v5773
        %v5910 = vpack.c.b16 %v5847, %v5846
        %v5911 = vpack.c.b16 %v5849, %v5848
        %v5912 = vpack.c.b16 %v5851, %v5850
        %v5913 = vpack.c.b16 %v5853, %v5852
        %v5914 = vpack.c.b16 %v5855, %v5854
        %v5915 = vpack.c.b16 %v5857, %v5856
        %v5916 = vpack.c.b16 %v5859, %v5858
        %v5917 = vpack.c.b16 %v5861, %v5860
        %v5918 = vpack.c.b16 %v5863, %v5862
        %v5919 = vpack.c.b16 %v5865, %v5864
        %v5920 = vpack.c.b16 %v5867, %v5866
        %v5921 = vpack.c.b16 %v5869, %v5868
        %v5922 = vpack.c.b16 %v5871, %v5870
        %v5923 = vpack.c.b16 %v5873, %v5872
        %v5924 = vpack.c.b16 %v5875, %v5874
        %v5925 = vpack.c.b16 %v5877, %v5876
        %v5926 = vpack.c.b16 %v5879, %v5878
        %v5927 = vpack.c.b16 %v5881, %v5880
        %v5928 = vpack.c.b16 %v5883, %v5882
        %v5929 = vpack.c.b16 %v5885, %v5884
        %v5930 = vpack.c.b16 %v5887, %v5886
        %v5931 = vpack.c.b16 %v5889, %v5888
        %v5932 = vpack.c.b16 %v5891, %v5890
        %v5933 = vpack.c.b16 %v5893, %v5892
        %v5934 = vpack.c.b16 %v5895, %v5894
        %v5935 = vpack.c.b16 %v5897, %v5896
        %v5936 = vpack.c.b16 %v5899, %v5898
        %v5937 = vpack.c.b16 %v5901, %v5900
        %v5938 = vpack.c.b16 %v5903, %v5902
        %v5939 = vpack.c.b16 %v5905, %v5904
        %v5940 = vpack.c.b16 %v5907, %v5906
        %v5941 = vpack.c.b16 %v5909, %v5908
        %5974 = vmatpush.bf16.msra.mxu0 %v5917
        %5975 = vmatpush.bf16.msra.mxu0 %v5916
        %5976 = vmatpush.bf16.msra.mxu0 %v5915
        %5977 = vmatpush.bf16.msra.mxu0 %v5914
        %5978 = vmatpush.bf16.msra.mxu0 %v5913
        %5979 = vmatpush.bf16.msra.mxu0 %v5912
        %5980 = vmatpush.bf16.msra.mxu0 %v5911
        %5981 = vmatpush.bf16.msra.mxu0 %v5910
        %5982 = vmatmul.bf16.gmra.mxu0 %v5774
        %v5983 = vpop.f32.mrf.mxu0
        %v5984 = vadd.f32 0.0, %v5983
        %v5985 = vpop.f32.mrf.mxu0
        %5986 = vdwg.mxu0
        %5987 = vmatpush.bf16.msra.mxu0 %v5925
        %5988 = vmatpush.bf16.msra.mxu0 %v5924
        %5989 = vmatpush.bf16.msra.mxu0 %v5923
        %5990 = vmatpush.bf16.msra.mxu0 %v5922
        %5991 = vmatpush.bf16.msra.mxu0 %v5921
        %5992 = vmatpush.bf16.msra.mxu0 %v5920
        %5993 = vmatpush.bf16.msra.mxu0 %v5919
        %5994 = vmatpush.bf16.msra.mxu0 %v5918
        %5995 = vmatmul.bf16.gmra.mxu0 %v5775
        %v5996 = vpop.f32.mrf.mxu0
        %v5997 = vadd.f32 %v5984, %v5996
        %v5998 = vpop.f32.mrf.mxu0
        %5999 = vdwg.mxu0
        %6000 = vmatpush.bf16.msra.mxu0 %v5933
        %6001 = vmatpush.bf16.msra.mxu0 %v5932
        %6002 = vmatpush.bf16.msra.mxu0 %v5931
        %6003 = vmatpush.bf16.msra.mxu0 %v5930
        %6004 = vmatpush.bf16.msra.mxu0 %v5929
        %6005 = vmatpush.bf16.msra.mxu0 %v5928
        %6006 = vmatpush.bf16.msra.mxu0 %v5927
        %6007 = vmatpush.bf16.msra.mxu0 %v5926
        %6008 = vmatmul.bf16.gmra.mxu0 %v5776
        %v6009 = vpop.f32.mrf.mxu0
        %v6010 = vadd.f32 %v5997, %v6009
        %v6011 = vpop.f32.mrf.mxu0
        %6012 = vdwg.mxu0
        %6013 = vmatpush.bf16.msra.mxu0 %v5941
        %6014 = vmatpush.bf16.msra.mxu0 %v5940
        %6015 = vmatpush.bf16.msra.mxu0 %v5939
        %6016 = vmatpush.bf16.msra.mxu0 %v5938
        %6017 = vmatpush.bf16.msra.mxu0 %v5937
        %6018 = vmatpush.bf16.msra.mxu0 %v5936
        %6019 = vmatpush.bf16.msra.mxu0 %v5935
        %6020 = vmatpush.bf16.msra.mxu0 %v5934
        %6021 = vmatmul.bf16.gmra.mxu0 %v5777
        %v6022 = vpop.f32.mrf.mxu0
        %v6023 = vadd.f32 %v6010, %v6022
        %v6024 = vpop.f32.mrf.mxu0
        %6025 = vdwg.mxu0
        %v6026 = vadd.f32 %v5708, %v6023
        %s6027 = scalar_lea.vmem %s3, 3328
        %v6028 = vld [vmem:[%s6027] sm:$0xf]
        %v6029 = vld [vmem:[%s6027 + $0x4] sm:$0xf]
        %v6030 = vld [vmem:[%s6027 + $0x8] sm:$0xf]
        %v6031 = vld [vmem:[%s6027 + $0xc] sm:$0xf]
        %v6032 = vld [vmem:[%s6027 + $0x10] sm:$0xf]
        %v6033 = vld [vmem:[%s6027 + $0x14] sm:$0xf]
        %v6034 = vld [vmem:[%s6027 + $0x18] sm:$0xf]
        %v6035 = vld [vmem:[%s6027 + $0x1c] sm:$0xf]
        %v6036 = vld [vmem:[%s6027 + $0x20] sm:$0xf]
        %v6037 = vld [vmem:[%s6027 + $0x24] sm:$0xf]
        %v6038 = vld [vmem:[%s6027 + $0x28] sm:$0xf]
        %v6039 = vld [vmem:[%s6027 + $0x2c] sm:$0xf]
        %v6040 = vld [vmem:[%s6027 + $0x30] sm:$0xf]
        %v6041 = vld [vmem:[%s6027 + $0x34] sm:$0xf]
        %v6042 = vld [vmem:[%s6027 + $0x38] sm:$0xf]
        %v6043 = vld [vmem:[%s6027 + $0x3c] sm:$0xf]
        %v6044 = vld [vmem:[%s6027 + $0x40] sm:$0xf]
        %v6045 = vld [vmem:[%s6027 + $0x44] sm:$0xf]
        %v6046 = vld [vmem:[%s6027 + $0x48] sm:$0xf]
        %v6047 = vld [vmem:[%s6027 + $0x4c] sm:$0xf]
        %v6048 = vld [vmem:[%s6027 + $0x50] sm:$0xf]
        %v6049 = vld [vmem:[%s6027 + $0x54] sm:$0xf]
        %v6050 = vld [vmem:[%s6027 + $0x58] sm:$0xf]
        %v6051 = vld [vmem:[%s6027 + $0x5c] sm:$0xf]
        %v6052 = vld [vmem:[%s6027 + $0x60] sm:$0xf]
        %v6053 = vld [vmem:[%s6027 + $0x64] sm:$0xf]
        %v6054 = vld [vmem:[%s6027 + $0x68] sm:$0xf]
        %v6055 = vld [vmem:[%s6027 + $0x6c] sm:$0xf]
        %v6056 = vld [vmem:[%s6027 + $0x70] sm:$0xf]
        %v6057 = vld [vmem:[%s6027 + $0x74] sm:$0xf]
        %v6058 = vld [vmem:[%s6027 + $0x78] sm:$0xf]
        %v6059 = vld [vmem:[%s6027 + $0x7c] sm:$0xf]
        %v6060 = vld [vmem:[%s6027 + $0x80] sm:$0xf]
        %v6061 = vld [vmem:[%s6027 + $0x84] sm:$0xf]
        %v6062 = vld [vmem:[%s6027 + $0x88] sm:$0xf]
        %v6063 = vld [vmem:[%s6027 + $0x8c] sm:$0xf]
        %v6064 = vld [vmem:[%s6027 + $0x90] sm:$0xf]
        %v6065 = vld [vmem:[%s6027 + $0x94] sm:$0xf]
        %v6066 = vld [vmem:[%s6027 + $0x98] sm:$0xf]
        %v6067 = vld [vmem:[%s6027 + $0x9c] sm:$0xf]
        %v6068 = vld [vmem:[%s6027 + $0xa0] sm:$0xf]
        %v6069 = vld [vmem:[%s6027 + $0xa4] sm:$0xf]
        %v6070 = vld [vmem:[%s6027 + $0xa8] sm:$0xf]
        %v6071 = vld [vmem:[%s6027 + $0xac] sm:$0xf]
        %v6072 = vld [vmem:[%s6027 + $0xb0] sm:$0xf]
        %v6073 = vld [vmem:[%s6027 + $0xb4] sm:$0xf]
        %v6074 = vld [vmem:[%s6027 + $0xb8] sm:$0xf]
        %v6075 = vld [vmem:[%s6027 + $0xbc] sm:$0xf]
        %v6076 = vld [vmem:[%s6027 + $0xc0] sm:$0xf]
        %v6077 = vld [vmem:[%s6027 + $0xc4] sm:$0xf]
        %v6078 = vld [vmem:[%s6027 + $0xc8] sm:$0xf]
        %v6079 = vld [vmem:[%s6027 + $0xcc] sm:$0xf]
        %v6080 = vld [vmem:[%s6027 + $0xd0] sm:$0xf]
        %v6081 = vld [vmem:[%s6027 + $0xd4] sm:$0xf]
        %v6082 = vld [vmem:[%s6027 + $0xd8] sm:$0xf]
        %v6083 = vld [vmem:[%s6027 + $0xdc] sm:$0xf]
        %v6084 = vld [vmem:[%s6027 + $0xe0] sm:$0xf]
        %v6085 = vld [vmem:[%s6027 + $0xe4] sm:$0xf]
        %v6086 = vld [vmem:[%s6027 + $0xe8] sm:$0xf]
        %v6087 = vld [vmem:[%s6027 + $0xec] sm:$0xf]
        %v6088 = vld [vmem:[%s6027 + $0xf0] sm:$0xf]
        %v6089 = vld [vmem:[%s6027 + $0xf4] sm:$0xf]
        %v6090 = vld [vmem:[%s6027 + $0xf8] sm:$0xf]
        %v6091 = vld [vmem:[%s6027 + $0xfc] sm:$0xf]
        %v6092 = vrot.slane %v4813, 2
        %v6093 = vrot.slane %v4816, 2
        %v6094 = vrot.slane %v4819, 2
        %v6095 = vrot.slane %v4822, 2
        %v6164 = vunpack.c.l.b16 %v6028
        %v6165 = vunpack.c.l.b16 %v6029
        %v6166 = vunpack.c.l.b16 %v6030
        %v6167 = vunpack.c.l.b16 %v6031
        %v6168 = vunpack.c.l.b16 %v6032
        %v6169 = vunpack.c.l.b16 %v6033
        %v6170 = vunpack.c.l.b16 %v6034
        %v6171 = vunpack.c.l.b16 %v6035
        %v6172 = vunpack.c.l.b16 %v6036
        %v6173 = vunpack.c.l.b16 %v6037
        %v6174 = vunpack.c.l.b16 %v6038
        %v6175 = vunpack.c.l.b16 %v6039
        %v6176 = vunpack.c.l.b16 %v6040
        %v6177 = vunpack.c.l.b16 %v6041
        %v6178 = vunpack.c.l.b16 %v6042
        %v6179 = vunpack.c.l.b16 %v6043
        %v6180 = vunpack.c.l.b16 %v6044
        %v6181 = vunpack.c.l.b16 %v6045
        %v6182 = vunpack.c.l.b16 %v6046
        %v6183 = vunpack.c.l.b16 %v6047
        %v6184 = vunpack.c.l.b16 %v6048
        %v6185 = vunpack.c.l.b16 %v6049
        %v6186 = vunpack.c.l.b16 %v6050
        %v6187 = vunpack.c.l.b16 %v6051
        %v6188 = vunpack.c.l.b16 %v6052
        %v6189 = vunpack.c.l.b16 %v6053
        %v6190 = vunpack.c.l.b16 %v6054
        %v6191 = vunpack.c.l.b16 %v6055
        %v6192 = vunpack.c.l.b16 %v6056
        %v6193 = vunpack.c.l.b16 %v6057
        %v6194 = vunpack.c.l.b16 %v6058
        %v6195 = vunpack.c.l.b16 %v6059
        %v6196 = vunpack.c.l.b16 %v6060
        %v6197 = vunpack.c.l.b16 %v6061
        %v6198 = vunpack.c.l.b16 %v6062
        %v6199 = vunpack.c.l.b16 %v6063
        %v6200 = vunpack.c.l.b16 %v6064
        %v6201 = vunpack.c.l.b16 %v6065
        %v6202 = vunpack.c.l.b16 %v6066
        %v6203 = vunpack.c.l.b16 %v6067
        %v6204 = vunpack.c.l.b16 %v6068
        %v6205 = vunpack.c.l.b16 %v6069
        %v6206 = vunpack.c.l.b16 %v6070
        %v6207 = vunpack.c.l.b16 %v6071
        %v6208 = vunpack.c.l.b16 %v6072
        %v6209 = vunpack.c.l.b16 %v6073
        %v6210 = vunpack.c.l.b16 %v6074
        %v6211 = vunpack.c.l.b16 %v6075
        %v6212 = vunpack.c.l.b16 %v6076
        %v6213 = vunpack.c.l.b16 %v6077
        %v6214 = vunpack.c.l.b16 %v6078
        %v6215 = vunpack.c.l.b16 %v6079
        %v6216 = vunpack.c.l.b16 %v6080
        %v6217 = vunpack.c.l.b16 %v6081
        %v6218 = vunpack.c.l.b16 %v6082
        %v6219 = vunpack.c.l.b16 %v6083
        %v6220 = vunpack.c.l.b16 %v6084
        %v6221 = vunpack.c.l.b16 %v6085
        %v6222 = vunpack.c.l.b16 %v6086
        %v6223 = vunpack.c.l.b16 %v6087
        %v6224 = vunpack.c.l.b16 %v6088
        %v6225 = vunpack.c.l.b16 %v6089
        %v6226 = vunpack.c.l.b16 %v6090
        %v6227 = vunpack.c.l.b16 %v6091
        %v6228 = vpack.c.b16 %v6165, %v6164
        %v6229 = vpack.c.b16 %v6167, %v6166
        %v6230 = vpack.c.b16 %v6169, %v6168
        %v6231 = vpack.c.b16 %v6171, %v6170
        %v6232 = vpack.c.b16 %v6173, %v6172
        %v6233 = vpack.c.b16 %v6175, %v6174
        %v6234 = vpack.c.b16 %v6177, %v6176
        %v6235 = vpack.c.b16 %v6179, %v6178
        %v6236 = vpack.c.b16 %v6181, %v6180
        %v6237 = vpack.c.b16 %v6183, %v6182
        %v6238 = vpack.c.b16 %v6185, %v6184
        %v6239 = vpack.c.b16 %v6187, %v6186
        %v6240 = vpack.c.b16 %v6189, %v6188
        %v6241 = vpack.c.b16 %v6191, %v6190
        %v6242 = vpack.c.b16 %v6193, %v6192
        %v6243 = vpack.c.b16 %v6195, %v6194
        %v6244 = vpack.c.b16 %v6197, %v6196
        %v6245 = vpack.c.b16 %v6199, %v6198
        %v6246 = vpack.c.b16 %v6201, %v6200
        %v6247 = vpack.c.b16 %v6203, %v6202
        %v6248 = vpack.c.b16 %v6205, %v6204
        %v6249 = vpack.c.b16 %v6207, %v6206
        %v6250 = vpack.c.b16 %v6209, %v6208
        %v6251 = vpack.c.b16 %v6211, %v6210
        %v6252 = vpack.c.b16 %v6213, %v6212
        %v6253 = vpack.c.b16 %v6215, %v6214
        %v6254 = vpack.c.b16 %v6217, %v6216
        %v6255 = vpack.c.b16 %v6219, %v6218
        %v6256 = vpack.c.b16 %v6221, %v6220
        %v6257 = vpack.c.b16 %v6223, %v6222
        %v6258 = vpack.c.b16 %v6225, %v6224
        %v6259 = vpack.c.b16 %v6227, %v6226
        %6292 = vmatpush.bf16.msra.mxu0 %v6235
        %6293 = vmatpush.bf16.msra.mxu0 %v6234
        %6294 = vmatpush.bf16.msra.mxu0 %v6233
        %6295 = vmatpush.bf16.msra.mxu0 %v6232
        %6296 = vmatpush.bf16.msra.mxu0 %v6231
        %6297 = vmatpush.bf16.msra.mxu0 %v6230
        %6298 = vmatpush.bf16.msra.mxu0 %v6229
        %6299 = vmatpush.bf16.msra.mxu0 %v6228
        %6300 = vmatmul.bf16.gmra.mxu0 %v6092
        %v6301 = vpop.f32.mrf.mxu0
        %v6302 = vadd.f32 0.0, %v6301
        %v6303 = vpop.f32.mrf.mxu0
        %6304 = vdwg.mxu0
        %6305 = vmatpush.bf16.msra.mxu0 %v6243
        %6306 = vmatpush.bf16.msra.mxu0 %v6242
        %6307 = vmatpush.bf16.msra.mxu0 %v6241
        %6308 = vmatpush.bf16.msra.mxu0 %v6240
        %6309 = vmatpush.bf16.msra.mxu0 %v6239
        %6310 = vmatpush.bf16.msra.mxu0 %v6238
        %6311 = vmatpush.bf16.msra.mxu0 %v6237
        %6312 = vmatpush.bf16.msra.mxu0 %v6236
        %6313 = vmatmul.bf16.gmra.mxu0 %v6093
        %v6314 = vpop.f32.mrf.mxu0
        %v6315 = vadd.f32 %v6302, %v6314
        %v6316 = vpop.f32.mrf.mxu0
        %6317 = vdwg.mxu0
        %6318 = vmatpush.bf16.msra.mxu0 %v6251
        %6319 = vmatpush.bf16.msra.mxu0 %v6250
        %6320 = vmatpush.bf16.msra.mxu0 %v6249
        %6321 = vmatpush.bf16.msra.mxu0 %v6248
        %6322 = vmatpush.bf16.msra.mxu0 %v6247
        %6323 = vmatpush.bf16.msra.mxu0 %v6246
        %6324 = vmatpush.bf16.msra.mxu0 %v6245
        %6325 = vmatpush.bf16.msra.mxu0 %v6244
        %6326 = vmatmul.bf16.gmra.mxu0 %v6094
        %v6327 = vpop.f32.mrf.mxu0
        %v6328 = vadd.f32 %v6315, %v6327
        %v6329 = vpop.f32.mrf.mxu0
        %6330 = vdwg.mxu0
        %6331 = vmatpush.bf16.msra.mxu0 %v6259
        %6332 = vmatpush.bf16.msra.mxu0 %v6258
        %6333 = vmatpush.bf16.msra.mxu0 %v6257
        %6334 = vmatpush.bf16.msra.mxu0 %v6256
        %6335 = vmatpush.bf16.msra.mxu0 %v6255
        %6336 = vmatpush.bf16.msra.mxu0 %v6254
        %6337 = vmatpush.bf16.msra.mxu0 %v6253
        %6338 = vmatpush.bf16.msra.mxu0 %v6252
        %6339 = vmatmul.bf16.gmra.mxu0 %v6095
        %v6340 = vpop.f32.mrf.mxu0
        %v6341 = vadd.f32 %v6328, %v6340
        %v6342 = vpop.f32.mrf.mxu0
        %6343 = vdwg.mxu0
        %v6344 = vadd.f32 %v6026, %v6341
        %s6345 = scalar_lea.vmem %s3, 3584
        %v6346 = vld [vmem:[%s6345] sm:$0xf]
        %v6347 = vld [vmem:[%s6345 + $0x4] sm:$0xf]
        %v6348 = vld [vmem:[%s6345 + $0x8] sm:$0xf]
        %v6349 = vld [vmem:[%s6345 + $0xc] sm:$0xf]
        %v6350 = vld [vmem:[%s6345 + $0x10] sm:$0xf]
        %v6351 = vld [vmem:[%s6345 + $0x14] sm:$0xf]
        %v6352 = vld [vmem:[%s6345 + $0x18] sm:$0xf]
        %v6353 = vld [vmem:[%s6345 + $0x1c] sm:$0xf]
        %v6354 = vld [vmem:[%s6345 + $0x20] sm:$0xf]
        %v6355 = vld [vmem:[%s6345 + $0x24] sm:$0xf]
        %v6356 = vld [vmem:[%s6345 + $0x28] sm:$0xf]
        %v6357 = vld [vmem:[%s6345 + $0x2c] sm:$0xf]
        %v6358 = vld [vmem:[%s6345 + $0x30] sm:$0xf]
        %v6359 = vld [vmem:[%s6345 + $0x34] sm:$0xf]
        %v6360 = vld [vmem:[%s6345 + $0x38] sm:$0xf]
        %v6361 = vld [vmem:[%s6345 + $0x3c] sm:$0xf]
        %v6362 = vld [vmem:[%s6345 + $0x40] sm:$0xf]
        %v6363 = vld [vmem:[%s6345 + $0x44] sm:$0xf]
        %v6364 = vld [vmem:[%s6345 + $0x48] sm:$0xf]
        %v6365 = vld [vmem:[%s6345 + $0x4c] sm:$0xf]
        %v6366 = vld [vmem:[%s6345 + $0x50] sm:$0xf]
        %v6367 = vld [vmem:[%s6345 + $0x54] sm:$0xf]
        %v6368 = vld [vmem:[%s6345 + $0x58] sm:$0xf]
        %v6369 = vld [vmem:[%s6345 + $0x5c] sm:$0xf]
        %v6370 = vld [vmem:[%s6345 + $0x60] sm:$0xf]
        %v6371 = vld [vmem:[%s6345 + $0x64] sm:$0xf]
        %v6372 = vld [vmem:[%s6345 + $0x68] sm:$0xf]
        %v6373 = vld [vmem:[%s6345 + $0x6c] sm:$0xf]
        %v6374 = vld [vmem:[%s6345 + $0x70] sm:$0xf]
        %v6375 = vld [vmem:[%s6345 + $0x74] sm:$0xf]
        %v6376 = vld [vmem:[%s6345 + $0x78] sm:$0xf]
        %v6377 = vld [vmem:[%s6345 + $0x7c] sm:$0xf]
        %v6378 = vld [vmem:[%s6345 + $0x80] sm:$0xf]
        %v6379 = vld [vmem:[%s6345 + $0x84] sm:$0xf]
        %v6380 = vld [vmem:[%s6345 + $0x88] sm:$0xf]
        %v6381 = vld [vmem:[%s6345 + $0x8c] sm:$0xf]
        %v6382 = vld [vmem:[%s6345 + $0x90] sm:$0xf]
        %v6383 = vld [vmem:[%s6345 + $0x94] sm:$0xf]
        %v6384 = vld [vmem:[%s6345 + $0x98] sm:$0xf]
        %v6385 = vld [vmem:[%s6345 + $0x9c] sm:$0xf]
        %v6386 = vld [vmem:[%s6345 + $0xa0] sm:$0xf]
        %v6387 = vld [vmem:[%s6345 + $0xa4] sm:$0xf]
        %v6388 = vld [vmem:[%s6345 + $0xa8] sm:$0xf]
        %v6389 = vld [vmem:[%s6345 + $0xac] sm:$0xf]
        %v6390 = vld [vmem:[%s6345 + $0xb0] sm:$0xf]
        %v6391 = vld [vmem:[%s6345 + $0xb4] sm:$0xf]
        %v6392 = vld [vmem:[%s6345 + $0xb8] sm:$0xf]
        %v6393 = vld [vmem:[%s6345 + $0xbc] sm:$0xf]
        %v6394 = vld [vmem:[%s6345 + $0xc0] sm:$0xf]
        %v6395 = vld [vmem:[%s6345 + $0xc4] sm:$0xf]
        %v6396 = vld [vmem:[%s6345 + $0xc8] sm:$0xf]
        %v6397 = vld [vmem:[%s6345 + $0xcc] sm:$0xf]
        %v6398 = vld [vmem:[%s6345 + $0xd0] sm:$0xf]
        %v6399 = vld [vmem:[%s6345 + $0xd4] sm:$0xf]
        %v6400 = vld [vmem:[%s6345 + $0xd8] sm:$0xf]
        %v6401 = vld [vmem:[%s6345 + $0xdc] sm:$0xf]
        %v6402 = vld [vmem:[%s6345 + $0xe0] sm:$0xf]
        %v6403 = vld [vmem:[%s6345 + $0xe4] sm:$0xf]
        %v6404 = vld [vmem:[%s6345 + $0xe8] sm:$0xf]
        %v6405 = vld [vmem:[%s6345 + $0xec] sm:$0xf]
        %v6406 = vld [vmem:[%s6345 + $0xf0] sm:$0xf]
        %v6407 = vld [vmem:[%s6345 + $0xf4] sm:$0xf]
        %v6408 = vld [vmem:[%s6345 + $0xf8] sm:$0xf]
        %v6409 = vld [vmem:[%s6345 + $0xfc] sm:$0xf]
        %v6410 = vrot.slane %v4494, 3
        %v6411 = vrot.slane %v4495, 3
        %v6412 = vrot.slane %v4496, 3
        %v6413 = vrot.slane %v4497, 3
        %v6482 = vunpack.c.l.b16 %v6346
        %v6483 = vunpack.c.l.b16 %v6347
        %v6484 = vunpack.c.l.b16 %v6348
        %v6485 = vunpack.c.l.b16 %v6349
        %v6486 = vunpack.c.l.b16 %v6350
        %v6487 = vunpack.c.l.b16 %v6351
        %v6488 = vunpack.c.l.b16 %v6352
        %v6489 = vunpack.c.l.b16 %v6353
        %v6490 = vunpack.c.l.b16 %v6354
        %v6491 = vunpack.c.l.b16 %v6355
        %v6492 = vunpack.c.l.b16 %v6356
        %v6493 = vunpack.c.l.b16 %v6357
        %v6494 = vunpack.c.l.b16 %v6358
        %v6495 = vunpack.c.l.b16 %v6359
        %v6496 = vunpack.c.l.b16 %v6360
        %v6497 = vunpack.c.l.b16 %v6361
        %v6498 = vunpack.c.l.b16 %v6362
        %v6499 = vunpack.c.l.b16 %v6363
        %v6500 = vunpack.c.l.b16 %v6364
        %v6501 = vunpack.c.l.b16 %v6365
        %v6502 = vunpack.c.l.b16 %v6366
        %v6503 = vunpack.c.l.b16 %v6367
        %v6504 = vunpack.c.l.b16 %v6368
        %v6505 = vunpack.c.l.b16 %v6369
        %v6506 = vunpack.c.l.b16 %v6370
        %v6507 = vunpack.c.l.b16 %v6371
        %v6508 = vunpack.c.l.b16 %v6372
        %v6509 = vunpack.c.l.b16 %v6373
        %v6510 = vunpack.c.l.b16 %v6374
        %v6511 = vunpack.c.l.b16 %v6375
        %v6512 = vunpack.c.l.b16 %v6376
        %v6513 = vunpack.c.l.b16 %v6377
        %v6514 = vunpack.c.l.b16 %v6378
        %v6515 = vunpack.c.l.b16 %v6379
        %v6516 = vunpack.c.l.b16 %v6380
        %v6517 = vunpack.c.l.b16 %v6381
        %v6518 = vunpack.c.l.b16 %v6382
        %v6519 = vunpack.c.l.b16 %v6383
        %v6520 = vunpack.c.l.b16 %v6384
        %v6521 = vunpack.c.l.b16 %v6385
        %v6522 = vunpack.c.l.b16 %v6386
        %v6523 = vunpack.c.l.b16 %v6387
        %v6524 = vunpack.c.l.b16 %v6388
        %v6525 = vunpack.c.l.b16 %v6389
        %v6526 = vunpack.c.l.b16 %v6390
        %v6527 = vunpack.c.l.b16 %v6391
        %v6528 = vunpack.c.l.b16 %v6392
        %v6529 = vunpack.c.l.b16 %v6393
        %v6530 = vunpack.c.l.b16 %v6394
        %v6531 = vunpack.c.l.b16 %v6395
        %v6532 = vunpack.c.l.b16 %v6396
        %v6533 = vunpack.c.l.b16 %v6397
        %v6534 = vunpack.c.l.b16 %v6398
        %v6535 = vunpack.c.l.b16 %v6399
        %v6536 = vunpack.c.l.b16 %v6400
        %v6537 = vunpack.c.l.b16 %v6401
        %v6538 = vunpack.c.l.b16 %v6402
        %v6539 = vunpack.c.l.b16 %v6403
        %v6540 = vunpack.c.l.b16 %v6404
        %v6541 = vunpack.c.l.b16 %v6405
        %v6542 = vunpack.c.l.b16 %v6406
        %v6543 = vunpack.c.l.b16 %v6407
        %v6544 = vunpack.c.l.b16 %v6408
        %v6545 = vunpack.c.l.b16 %v6409
        %v6546 = vpack.c.b16 %v6483, %v6482
        %v6547 = vpack.c.b16 %v6485, %v6484
        %v6548 = vpack.c.b16 %v6487, %v6486
        %v6549 = vpack.c.b16 %v6489, %v6488
        %v6550 = vpack.c.b16 %v6491, %v6490
        %v6551 = vpack.c.b16 %v6493, %v6492
        %v6552 = vpack.c.b16 %v6495, %v6494
        %v6553 = vpack.c.b16 %v6497, %v6496
        %v6554 = vpack.c.b16 %v6499, %v6498
        %v6555 = vpack.c.b16 %v6501, %v6500
        %v6556 = vpack.c.b16 %v6503, %v6502
        %v6557 = vpack.c.b16 %v6505, %v6504
        %v6558 = vpack.c.b16 %v6507, %v6506
        %v6559 = vpack.c.b16 %v6509, %v6508
        %v6560 = vpack.c.b16 %v6511, %v6510
        %v6561 = vpack.c.b16 %v6513, %v6512
        %v6562 = vpack.c.b16 %v6515, %v6514
        %v6563 = vpack.c.b16 %v6517, %v6516
        %v6564 = vpack.c.b16 %v6519, %v6518
        %v6565 = vpack.c.b16 %v6521, %v6520
        %v6566 = vpack.c.b16 %v6523, %v6522
        %v6567 = vpack.c.b16 %v6525, %v6524
        %v6568 = vpack.c.b16 %v6527, %v6526
        %v6569 = vpack.c.b16 %v6529, %v6528
        %v6570 = vpack.c.b16 %v6531, %v6530
        %v6571 = vpack.c.b16 %v6533, %v6532
        %v6572 = vpack.c.b16 %v6535, %v6534
        %v6573 = vpack.c.b16 %v6537, %v6536
        %v6574 = vpack.c.b16 %v6539, %v6538
        %v6575 = vpack.c.b16 %v6541, %v6540
        %v6576 = vpack.c.b16 %v6543, %v6542
        %v6577 = vpack.c.b16 %v6545, %v6544
        %6610 = vmatpush.bf16.msra.mxu0 %v6553
        %6611 = vmatpush.bf16.msra.mxu0 %v6552
        %6612 = vmatpush.bf16.msra.mxu0 %v6551
        %6613 = vmatpush.bf16.msra.mxu0 %v6550
        %6614 = vmatpush.bf16.msra.mxu0 %v6549
        %6615 = vmatpush.bf16.msra.mxu0 %v6548
        %6616 = vmatpush.bf16.msra.mxu0 %v6547
        %6617 = vmatpush.bf16.msra.mxu0 %v6546
        %6618 = vmatmul.bf16.gmra.mxu0 %v6410
        %v6619 = vpop.f32.mrf.mxu0
        %v6620 = vadd.f32 0.0, %v6619
        %v6621 = vpop.f32.mrf.mxu0
        %6622 = vdwg.mxu0
        %6623 = vmatpush.bf16.msra.mxu0 %v6561
        %6624 = vmatpush.bf16.msra.mxu0 %v6560
        %6625 = vmatpush.bf16.msra.mxu0 %v6559
        %6626 = vmatpush.bf16.msra.mxu0 %v6558
        %6627 = vmatpush.bf16.msra.mxu0 %v6557
        %6628 = vmatpush.bf16.msra.mxu0 %v6556
        %6629 = vmatpush.bf16.msra.mxu0 %v6555
        %6630 = vmatpush.bf16.msra.mxu0 %v6554
        %6631 = vmatmul.bf16.gmra.mxu0 %v6411
        %v6632 = vpop.f32.mrf.mxu0
        %v6633 = vadd.f32 %v6620, %v6632
        %v6634 = vpop.f32.mrf.mxu0
        %6635 = vdwg.mxu0
        %6636 = vmatpush.bf16.msra.mxu0 %v6569
        %6637 = vmatpush.bf16.msra.mxu0 %v6568
        %6638 = vmatpush.bf16.msra.mxu0 %v6567
        %6639 = vmatpush.bf16.msra.mxu0 %v6566
        %6640 = vmatpush.bf16.msra.mxu0 %v6565
        %6641 = vmatpush.bf16.msra.mxu0 %v6564
        %6642 = vmatpush.bf16.msra.mxu0 %v6563
        %6643 = vmatpush.bf16.msra.mxu0 %v6562
        %6644 = vmatmul.bf16.gmra.mxu0 %v6412
        %v6645 = vpop.f32.mrf.mxu0
        %v6646 = vadd.f32 %v6633, %v6645
        %v6647 = vpop.f32.mrf.mxu0
        %6648 = vdwg.mxu0
        %6649 = vmatpush.bf16.msra.mxu0 %v6577
        %6650 = vmatpush.bf16.msra.mxu0 %v6576
        %6651 = vmatpush.bf16.msra.mxu0 %v6575
        %6652 = vmatpush.bf16.msra.mxu0 %v6574
        %6653 = vmatpush.bf16.msra.mxu0 %v6573
        %6654 = vmatpush.bf16.msra.mxu0 %v6572
        %6655 = vmatpush.bf16.msra.mxu0 %v6571
        %6656 = vmatpush.bf16.msra.mxu0 %v6570
        %6657 = vmatmul.bf16.gmra.mxu0 %v6413
        %v6658 = vpop.f32.mrf.mxu0
        %v6659 = vadd.f32 %v6646, %v6658
        %v6660 = vpop.f32.mrf.mxu0
        %6661 = vdwg.mxu0
        %v6662 = vadd.f32 %v6344, %v6659
        %s6663 = scalar_lea.vmem %s3, 3840
        %v6664 = vld [vmem:[%s6663] sm:$0xf]
        %v6665 = vld [vmem:[%s6663 + $0x4] sm:$0xf]
        %v6666 = vld [vmem:[%s6663 + $0x8] sm:$0xf]
        %v6667 = vld [vmem:[%s6663 + $0xc] sm:$0xf]
        %v6668 = vld [vmem:[%s6663 + $0x10] sm:$0xf]
        %v6669 = vld [vmem:[%s6663 + $0x14] sm:$0xf]
        %v6670 = vld [vmem:[%s6663 + $0x18] sm:$0xf]
        %v6671 = vld [vmem:[%s6663 + $0x1c] sm:$0xf]
        %v6672 = vld [vmem:[%s6663 + $0x20] sm:$0xf]
        %v6673 = vld [vmem:[%s6663 + $0x24] sm:$0xf]
        %v6674 = vld [vmem:[%s6663 + $0x28] sm:$0xf]
        %v6675 = vld [vmem:[%s6663 + $0x2c] sm:$0xf]
        %v6676 = vld [vmem:[%s6663 + $0x30] sm:$0xf]
        %v6677 = vld [vmem:[%s6663 + $0x34] sm:$0xf]
        %v6678 = vld [vmem:[%s6663 + $0x38] sm:$0xf]
        %v6679 = vld [vmem:[%s6663 + $0x3c] sm:$0xf]
        %v6680 = vld [vmem:[%s6663 + $0x40] sm:$0xf]
        %v6681 = vld [vmem:[%s6663 + $0x44] sm:$0xf]
        %v6682 = vld [vmem:[%s6663 + $0x48] sm:$0xf]
        %v6683 = vld [vmem:[%s6663 + $0x4c] sm:$0xf]
        %v6684 = vld [vmem:[%s6663 + $0x50] sm:$0xf]
        %v6685 = vld [vmem:[%s6663 + $0x54] sm:$0xf]
        %v6686 = vld [vmem:[%s6663 + $0x58] sm:$0xf]
        %v6687 = vld [vmem:[%s6663 + $0x5c] sm:$0xf]
        %v6688 = vld [vmem:[%s6663 + $0x60] sm:$0xf]
        %v6689 = vld [vmem:[%s6663 + $0x64] sm:$0xf]
        %v6690 = vld [vmem:[%s6663 + $0x68] sm:$0xf]
        %v6691 = vld [vmem:[%s6663 + $0x6c] sm:$0xf]
        %v6692 = vld [vmem:[%s6663 + $0x70] sm:$0xf]
        %v6693 = vld [vmem:[%s6663 + $0x74] sm:$0xf]
        %v6694 = vld [vmem:[%s6663 + $0x78] sm:$0xf]
        %v6695 = vld [vmem:[%s6663 + $0x7c] sm:$0xf]
        %v6696 = vld [vmem:[%s6663 + $0x80] sm:$0xf]
        %v6697 = vld [vmem:[%s6663 + $0x84] sm:$0xf]
        %v6698 = vld [vmem:[%s6663 + $0x88] sm:$0xf]
        %v6699 = vld [vmem:[%s6663 + $0x8c] sm:$0xf]
        %v6700 = vld [vmem:[%s6663 + $0x90] sm:$0xf]
        %v6701 = vld [vmem:[%s6663 + $0x94] sm:$0xf]
        %v6702 = vld [vmem:[%s6663 + $0x98] sm:$0xf]
        %v6703 = vld [vmem:[%s6663 + $0x9c] sm:$0xf]
        %v6704 = vld [vmem:[%s6663 + $0xa0] sm:$0xf]
        %v6705 = vld [vmem:[%s6663 + $0xa4] sm:$0xf]
        %v6706 = vld [vmem:[%s6663 + $0xa8] sm:$0xf]
        %v6707 = vld [vmem:[%s6663 + $0xac] sm:$0xf]
        %v6708 = vld [vmem:[%s6663 + $0xb0] sm:$0xf]
        %v6709 = vld [vmem:[%s6663 + $0xb4] sm:$0xf]
        %v6710 = vld [vmem:[%s6663 + $0xb8] sm:$0xf]
        %v6711 = vld [vmem:[%s6663 + $0xbc] sm:$0xf]
        %v6712 = vld [vmem:[%s6663 + $0xc0] sm:$0xf]
        %v6713 = vld [vmem:[%s6663 + $0xc4] sm:$0xf]
        %v6714 = vld [vmem:[%s6663 + $0xc8] sm:$0xf]
        %v6715 = vld [vmem:[%s6663 + $0xcc] sm:$0xf]
        %v6716 = vld [vmem:[%s6663 + $0xd0] sm:$0xf]
        %v6717 = vld [vmem:[%s6663 + $0xd4] sm:$0xf]
        %v6718 = vld [vmem:[%s6663 + $0xd8] sm:$0xf]
        %v6719 = vld [vmem:[%s6663 + $0xdc] sm:$0xf]
        %v6720 = vld [vmem:[%s6663 + $0xe0] sm:$0xf]
        %v6721 = vld [vmem:[%s6663 + $0xe4] sm:$0xf]
        %v6722 = vld [vmem:[%s6663 + $0xe8] sm:$0xf]
        %v6723 = vld [vmem:[%s6663 + $0xec] sm:$0xf]
        %v6724 = vld [vmem:[%s6663 + $0xf0] sm:$0xf]
        %v6725 = vld [vmem:[%s6663 + $0xf4] sm:$0xf]
        %v6726 = vld [vmem:[%s6663 + $0xf8] sm:$0xf]
        %v6727 = vld [vmem:[%s6663 + $0xfc] sm:$0xf]
        %v6728 = vrot.slane %v4813, 3
        %v6729 = vrot.slane %v4816, 3
        %v6730 = vrot.slane %v4819, 3
        %v6731 = vrot.slane %v4822, 3
        %v6800 = vunpack.c.l.b16 %v6664
        %v6801 = vunpack.c.l.b16 %v6665
        %v6802 = vunpack.c.l.b16 %v6666
        %v6803 = vunpack.c.l.b16 %v6667
        %v6804 = vunpack.c.l.b16 %v6668
        %v6805 = vunpack.c.l.b16 %v6669
        %v6806 = vunpack.c.l.b16 %v6670
        %v6807 = vunpack.c.l.b16 %v6671
        %v6808 = vunpack.c.l.b16 %v6672
        %v6809 = vunpack.c.l.b16 %v6673
        %v6810 = vunpack.c.l.b16 %v6674
        %v6811 = vunpack.c.l.b16 %v6675
        %v6812 = vunpack.c.l.b16 %v6676
        %v6813 = vunpack.c.l.b16 %v6677
        %v6814 = vunpack.c.l.b16 %v6678
        %v6815 = vunpack.c.l.b16 %v6679
        %v6816 = vunpack.c.l.b16 %v6680
        %v6817 = vunpack.c.l.b16 %v6681
        %v6818 = vunpack.c.l.b16 %v6682
        %v6819 = vunpack.c.l.b16 %v6683
        %v6820 = vunpack.c.l.b16 %v6684
        %v6821 = vunpack.c.l.b16 %v6685
        %v6822 = vunpack.c.l.b16 %v6686
        %v6823 = vunpack.c.l.b16 %v6687
        %v6824 = vunpack.c.l.b16 %v6688
        %v6825 = vunpack.c.l.b16 %v6689
        %v6826 = vunpack.c.l.b16 %v6690
        %v6827 = vunpack.c.l.b16 %v6691
        %v6828 = vunpack.c.l.b16 %v6692
        %v6829 = vunpack.c.l.b16 %v6693
        %v6830 = vunpack.c.l.b16 %v6694
        %v6831 = vunpack.c.l.b16 %v6695
        %v6832 = vunpack.c.l.b16 %v6696
        %v6833 = vunpack.c.l.b16 %v6697
        %v6834 = vunpack.c.l.b16 %v6698
        %v6835 = vunpack.c.l.b16 %v6699
        %v6836 = vunpack.c.l.b16 %v6700
        %v6837 = vunpack.c.l.b16 %v6701
        %v6838 = vunpack.c.l.b16 %v6702
        %v6839 = vunpack.c.l.b16 %v6703
        %v6840 = vunpack.c.l.b16 %v6704
        %v6841 = vunpack.c.l.b16 %v6705
        %v6842 = vunpack.c.l.b16 %v6706
        %v6843 = vunpack.c.l.b16 %v6707
        %v6844 = vunpack.c.l.b16 %v6708
        %v6845 = vunpack.c.l.b16 %v6709
        %v6846 = vunpack.c.l.b16 %v6710
        %v6847 = vunpack.c.l.b16 %v6711
        %v6848 = vunpack.c.l.b16 %v6712
        %v6849 = vunpack.c.l.b16 %v6713
        %v6850 = vunpack.c.l.b16 %v6714
        %v6851 = vunpack.c.l.b16 %v6715
        %v6852 = vunpack.c.l.b16 %v6716
        %v6853 = vunpack.c.l.b16 %v6717
        %v6854 = vunpack.c.l.b16 %v6718
        %v6855 = vunpack.c.l.b16 %v6719
        %v6856 = vunpack.c.l.b16 %v6720
        %v6857 = vunpack.c.l.b16 %v6721
        %v6858 = vunpack.c.l.b16 %v6722
        %v6859 = vunpack.c.l.b16 %v6723
        %v6860 = vunpack.c.l.b16 %v6724
        %v6861 = vunpack.c.l.b16 %v6725
        %v6862 = vunpack.c.l.b16 %v6726
        %v6863 = vunpack.c.l.b16 %v6727
        %v6864 = vpack.c.b16 %v6801, %v6800
        %v6865 = vpack.c.b16 %v6803, %v6802
        %v6866 = vpack.c.b16 %v6805, %v6804
        %v6867 = vpack.c.b16 %v6807, %v6806
        %v6868 = vpack.c.b16 %v6809, %v6808
        %v6869 = vpack.c.b16 %v6811, %v6810
        %v6870 = vpack.c.b16 %v6813, %v6812
        %v6871 = vpack.c.b16 %v6815, %v6814
        %v6872 = vpack.c.b16 %v6817, %v6816
        %v6873 = vpack.c.b16 %v6819, %v6818
        %v6874 = vpack.c.b16 %v6821, %v6820
        %v6875 = vpack.c.b16 %v6823, %v6822
        %v6876 = vpack.c.b16 %v6825, %v6824
        %v6877 = vpack.c.b16 %v6827, %v6826
        %v6878 = vpack.c.b16 %v6829, %v6828
        %v6879 = vpack.c.b16 %v6831, %v6830
        %v6880 = vpack.c.b16 %v6833, %v6832
        %v6881 = vpack.c.b16 %v6835, %v6834
        %v6882 = vpack.c.b16 %v6837, %v6836
        %v6883 = vpack.c.b16 %v6839, %v6838
        %v6884 = vpack.c.b16 %v6841, %v6840
        %v6885 = vpack.c.b16 %v6843, %v6842
        %v6886 = vpack.c.b16 %v6845, %v6844
        %v6887 = vpack.c.b16 %v6847, %v6846
        %v6888 = vpack.c.b16 %v6849, %v6848
        %v6889 = vpack.c.b16 %v6851, %v6850
        %v6890 = vpack.c.b16 %v6853, %v6852
        %v6891 = vpack.c.b16 %v6855, %v6854
        %v6892 = vpack.c.b16 %v6857, %v6856
        %v6893 = vpack.c.b16 %v6859, %v6858
        %v6894 = vpack.c.b16 %v6861, %v6860
        %v6895 = vpack.c.b16 %v6863, %v6862
        %6928 = vmatpush.bf16.msra.mxu0 %v6871
        %6929 = vmatpush.bf16.msra.mxu0 %v6870
        %6930 = vmatpush.bf16.msra.mxu0 %v6869
        %6931 = vmatpush.bf16.msra.mxu0 %v6868
        %6932 = vmatpush.bf16.msra.mxu0 %v6867
        %6933 = vmatpush.bf16.msra.mxu0 %v6866
        %6934 = vmatpush.bf16.msra.mxu0 %v6865
        %6935 = vmatpush.bf16.msra.mxu0 %v6864
        %6936 = vmatmul.bf16.gmra.mxu0 %v6728
        %v6937 = vpop.f32.mrf.mxu0
        %v6938 = vadd.f32 0.0, %v6937
        %v6939 = vpop.f32.mrf.mxu0
        %6940 = vdwg.mxu0
        %6941 = vmatpush.bf16.msra.mxu0 %v6879
        %6942 = vmatpush.bf16.msra.mxu0 %v6878
        %6943 = vmatpush.bf16.msra.mxu0 %v6877
        %6944 = vmatpush.bf16.msra.mxu0 %v6876
        %6945 = vmatpush.bf16.msra.mxu0 %v6875
        %6946 = vmatpush.bf16.msra.mxu0 %v6874
        %6947 = vmatpush.bf16.msra.mxu0 %v6873
        %6948 = vmatpush.bf16.msra.mxu0 %v6872
        %6949 = vmatmul.bf16.gmra.mxu0 %v6729
        %v6950 = vpop.f32.mrf.mxu0
        %v6951 = vadd.f32 %v6938, %v6950
        %v6952 = vpop.f32.mrf.mxu0
        %6953 = vdwg.mxu0
        %6954 = vmatpush.bf16.msra.mxu0 %v6887
        %6955 = vmatpush.bf16.msra.mxu0 %v6886
        %6956 = vmatpush.bf16.msra.mxu0 %v6885
        %6957 = vmatpush.bf16.msra.mxu0 %v6884
        %6958 = vmatpush.bf16.msra.mxu0 %v6883
        %6959 = vmatpush.bf16.msra.mxu0 %v6882
        %6960 = vmatpush.bf16.msra.mxu0 %v6881
        %6961 = vmatpush.bf16.msra.mxu0 %v6880
        %6962 = vmatmul.bf16.gmra.mxu0 %v6730
        %v6963 = vpop.f32.mrf.mxu0
        %v6964 = vadd.f32 %v6951, %v6963
        %v6965 = vpop.f32.mrf.mxu0
        %6966 = vdwg.mxu0
        %6967 = vmatpush.bf16.msra.mxu0 %v6895
        %6968 = vmatpush.bf16.msra.mxu0 %v6894
        %6969 = vmatpush.bf16.msra.mxu0 %v6893
        %6970 = vmatpush.bf16.msra.mxu0 %v6892
        %6971 = vmatpush.bf16.msra.mxu0 %v6891
        %6972 = vmatpush.bf16.msra.mxu0 %v6890
        %6973 = vmatpush.bf16.msra.mxu0 %v6889
        %6974 = vmatpush.bf16.msra.mxu0 %v6888
        %6975 = vmatmul.bf16.gmra.mxu0 %v6731
        %v6976 = vpop.f32.mrf.mxu0
        %v6977 = vadd.f32 %v6964, %v6976
        %v6978 = vpop.f32.mrf.mxu0
        %6979 = vdwg.mxu0
        %v6980 = vadd.f32 %v6662, %v6977
        %v6981 = vmax.f32 %v6980, 0.0
        %v6982 = vpack.c.bf16 %v6981, %v6981
        %v6983 = vld [vmem:[%s5] sm:$0xf]
        %v6984 = vld [vmem:[%s5 + $0x4] sm:$0xf]
        %v6985 = vld [vmem:[%s5 + $0x8] sm:$0xf]
        %v6986 = vld [vmem:[%s5 + $0xc] sm:$0xf]
        %v6987 = vld [vmem:[%s5 + $0x10] sm:$0xf]
        %v6988 = vld [vmem:[%s5 + $0x14] sm:$0xf]
        %v6989 = vld [vmem:[%s5 + $0x18] sm:$0xf]
        %v6990 = vld [vmem:[%s5 + $0x1c] sm:$0xf]
        %v6991 = vld [vmem:[%s5 + $0x20] sm:$0xf]
        %v6992 = vld [vmem:[%s5 + $0x24] sm:$0xf]
        %v6993 = vld [vmem:[%s5 + $0x28] sm:$0xf]
        %v6994 = vld [vmem:[%s5 + $0x2c] sm:$0xf]
        %v6995 = vld [vmem:[%s5 + $0x30] sm:$0xf]
        %v6996 = vld [vmem:[%s5 + $0x34] sm:$0xf]
        %v6997 = vld [vmem:[%s5 + $0x38] sm:$0xf]
        %v6998 = vld [vmem:[%s6] sm:$0x1]
        %v7014 = vunpack.c.l.b16 %v6983
        %v7015 = vunpack.c.l.b16 %v6984
        %v7016 = vunpack.c.l.b16 %v6985
        %v7017 = vunpack.c.l.b16 %v6986
        %v7018 = vunpack.c.l.b16 %v6987
        %v7019 = vunpack.c.l.b16 %v6988
        %v7020 = vunpack.c.l.b16 %v6989
        %v7021 = vunpack.c.l.b16 %v6990
        %v7022 = vunpack.c.l.b16 %v6991
        %v7023 = vunpack.c.l.b16 %v6992
        %v7024 = vunpack.c.l.b16 %v6993
        %v7025 = vunpack.c.l.b16 %v6994
        %v7026 = vunpack.c.l.b16 %v6995
        %v7027 = vunpack.c.l.b16 %v6996
        %v7028 = vunpack.c.l.b16 %v6997
        %v7029 = vpack.c.b16 %v7015, %v7014
        %v7030 = vpack.c.b16 %v7017, %v7016
        %v7031 = vpack.c.b16 %v7019, %v7018
        %v7032 = vpack.c.b16 %v7021, %v7020
        %v7033 = vpack.c.b16 %v7023, %v7022
        %v7034 = vpack.c.b16 %v7025, %v7024
        %v7035 = vpack.c.b16 %v7027, %v7026
        %v7036 = vpack.c.b16 %v7028, %v7028
        %vm7044 = vcmask 982016
        %v7046 = vsel %vm7044, %v6982, 0
        %vm7048 = vcmask 1043456
        %v7050 = vsel %vm7048, %v7036, 0
        %7052 = vmatpush.bf16.msra.mxu0 %v7050
        %7053 = vmatpush.bf16.msra.mxu0 %v7035
        %7054 = vmatpush.bf16.msra.mxu0 %v7034
        %7055 = vmatpush.bf16.msra.mxu0 %v7033
        %7056 = vmatpush.bf16.msra.mxu0 %v7032
        %7057 = vmatpush.bf16.msra.mxu0 %v7031
        %7058 = vmatpush.bf16.msra.mxu0 %v7030
        %7059 = vmatpush.bf16.msra.mxu0 %v7029
        %7060 = vmatmul.bf16.gmra.mxu0 %v7046
        %v7061 = vpop.f32.mrf.mxu0
        %v7062 = vadd.f32 %v6998, %v7061
        %v7063 = vpop.f32.mrf.mxu0
        %7064 = vdwg.mxu0
        %v7065 = vmax.f32 %v7062, 0.0
        %v7066 = vpack.c.bf16 %v7065, %v7065
        %v7067 = vld [vmem:[%s7] sm:$0xf]
        %v7068 = vld [vmem:[%s7 + $0x4] sm:$0xf]
        %v7069 = vld [vmem:[%s7 + $0x8] sm:$0xf]
        %v7070 = vld [vmem:[%s7 + $0xc] sm:$0xf]
        %v7071 = vld [vmem:[%s7 + $0x10] sm:$0xf]
        %v7072 = vld [vmem:[%s7 + $0x14] sm:$0xf]
        %v7073 = vld [vmem:[%s7 + $0x18] sm:$0xf]
        %v7074 = vld [vmem:[%s7 + $0x1c] sm:$0xf]
        %v7075 = vld [vmem:[%s7 + $0x20] sm:$0xf]
        %v7076 = vld [vmem:[%s7 + $0x24] sm:$0xf]
        %v7077 = vld [vmem:[%s7 + $0x28] sm:$0x3]
        %v7078 = vld [vmem:[%s8] sm:$0x1]
        %v7090 = vunpack.c.l.b16 %v7067
        %v7091 = vunpack.c.l.b16 %v7068
        %v7092 = vunpack.c.l.b16 %v7069
        %v7093 = vunpack.c.l.b16 %v7070
        %v7094 = vunpack.c.l.b16 %v7071
        %v7095 = vunpack.c.l.b16 %v7072
        %v7096 = vunpack.c.l.b16 %v7073
        %v7097 = vunpack.c.l.b16 %v7074
        %v7098 = vunpack.c.l.b16 %v7075
        %v7099 = vunpack.c.l.b16 %v7076
        %v7100 = vunpack.c.l.b16 %v7077
        %v7101 = vpack.c.b16 %v7091, %v7090
        %v7102 = vpack.c.b16 %v7093, %v7092
        %v7103 = vpack.c.b16 %v7095, %v7094
        %v7104 = vpack.c.b16 %v7097, %v7096
        %v7105 = vpack.c.b16 %v7099, %v7098
        %v7106 = vpack.c.b16 %v7100, %v7100
        %vm7112 = vcmask 687104
        %v7114 = vsel %vm7112, %v7066, 0
        %vm7116 = vcmask 1041408
        %v7118 = vsel %vm7116, %v7106, 0
        %7120 = vmatpush.bf16.msra.mxu0 0
        %7121 = vmatpush.bf16.msra.mxu0 0
        %7122 = vmatpush.bf16.msra.mxu0 %v7118
        %7123 = vmatpush.bf16.msra.mxu0 %v7105
        %7124 = vmatpush.bf16.msra.mxu0 %v7104
        %7125 = vmatpush.bf16.msra.mxu0 %v7103
        %7126 = vmatpush.bf16.msra.mxu0 %v7102
        %7127 = vmatpush.bf16.msra.mxu0 %v7101
        %7128 = vmatmul.bf16.gmra.mxu0 %v7114
        %v7129 = vpop.f32.mrf.mxu0
        %v7130 = vadd.f32 %v7078, %v7129
        %v7131 = vpop.f32.mrf.mxu0
        %7132 = vdwg.mxu0
        %v7133 = vmax.f32 %v7130, 0.0
        %v7134 = vpack.c.bf16 %v7133, %v7133
        %v7135 = vld [vmem:[%s9] sm:$0xf]
        %v7136 = vld [vmem:[%s9 + $0x4] sm:$0x1]
        %v7137 = vld [vmem:[%s10] sm:$0x1]
        %v7140 = vunpack.c.l.b16 %v7135
        %v7141 = vunpack.c.l.b16 %v7136
        %v7142 = vpack.c.b16 %v7141, %v7140
        %vm7143 = vcmask 80896
        %v7145 = vsel %vm7143, %v7134, 0
        %vm7147 = vcmask 1044480
        %v7149 = vsel %vm7147, %v7142, 0
        %7151 = vmatpush.bf16.msra.mxu0 0
        %7152 = vmatpush.bf16.msra.mxu0 0
        %7153 = vmatpush.bf16.msra.mxu0 0
        %7154 = vmatpush.bf16.msra.mxu0 0
        %7155 = vmatpush.bf16.msra.mxu0 0
        %7156 = vmatpush.bf16.msra.mxu0 0
        %7157 = vmatpush.bf16.msra.mxu0 0
        %7158 = vmatpush.bf16.msra.mxu0 %v7149
        %7159 = vmatmul.bf16.gmra.mxu0 %v7145
        %v7160 = vpop.f32.mrf.mxu0
        %v7161 = vadd.f32 %v7137, %v7160
        %v7162 = vpop.f32.mrf.mxu0
        %7163 = vdwg.mxu0
        %vm7164 = vcmask 8192
        %7165 = vst.msk [vmem:[%s378] sm:$0x1] %vm7164, %v7161
        %s7166 = sand.u32 %s269, 1
        %s7167 = scalar_lea.sflag [#allocation3], %s7166
        %s7168 = sand.u32 %s269, 1
        %s7169 = scalar_lea.vmem [#allocation2], %s7168
        // Predicated region
        $region65: #{civilnet_forward.3} parent=63 // pred_check
          %p7170 = pneg %p279
        $region66: #{civilnet_forward.3} parent=63 // pred_check_branch
          %7172 = sbr.rel (%p7170) target = $region68
        $region67: #{civilnet_forward.3} parent=63 // pred_region
          %7174 = vsyncadd %s7167, 0
          %s7175 = scalar_lea.hbm %s11, %s25
          %s7177 = sshll.u32 %s7169, 4
          %s7178 = int_to_ptr.vmem [resolvable:$true] %s7177
          %s7179 = sshll.u32 %s7175, 4
          %s7180 = int_to_ptr.hbm [resolvable:$true] %s7179
          %7182 = dma.vmem_to_hbm [thread:$0]  %s7178, 16, %s7180, %s7167
        $region68: #{civilnet_forward.3} parent=63 // pred_fallthru
          _
      $region64: #{civilnet_forward.3} parent=5 // pred_fallthru
        _
      %p7183 = scmp.le.s32.totalorder 2, %s20
      // Predicated region
      $region69: #{civilnet_forward.3} parent=5 // pred_check
        %p7184 = pneg %p7183
      $region70: #{civilnet_forward.3} parent=5 // pred_check_branch
        %7186 = sbr.rel (%p7184) target = $region72
      $region71: #{civilnet_forward.3} parent=5 // pred_region
        %s7187 = ssub.s32 %s20, 2
        // Predicated region
        $region73: #{civilnet_forward.3} parent=71 // pred_check
          %p7188 = pneg %p285
        $region74: #{civilnet_forward.3} parent=71 // pred_check_branch
          %7190 = sbr.rel (%p7188) target = $region76
        $region75: #{civilnet_forward.3} parent=71 // pred_region
          %s7191 = sand.u32 %s270, 1
          %s7192 = scalar_lea.sflag [#allocation3], %s7191
          %s7193 = sand.u32 %s270, 1
          %s7194 = scalar_lea.vmem [#allocation2], %s7193
          %7196 = dma.done %s7192, 16
        $region76: #{civilnet_forward.3} parent=71 // pred_fallthru
          _
      $region72: #{civilnet_forward.3} parent=5 // pred_fallthru
        _
    $region6: #{civilnet_forward.3} parent=1 // loop_footer
      %s24 = sadd.s32 1, %s20
    $region7: #{civilnet_forward.3} parent=1 // loop_footer_branch
      %19 = sbr.rel target = $region3
    $region8: #{civilnet_forward.3} parent=1 // loop_exit
      _
    %7197 = vsyncpa [#allocation3], 1
    %s7198 = scalar_lea.sflag [#allocation3], 1
    %7199 = vsyncpa %s7198, 1

</llo_original>
